<compile_context>
chip_gen: v5e
topology: v5e:2x2
jax: 0.10.0
libtpu: 0.0.40
codegen_flags: <defaults>
</compile_context>

<pallas_src>
from collections import namedtuple
from functools import partial

import numpy as np
import jax
import jax.numpy as jnp
from jax import lax
from jax.experimental import pallas as pl
from jax.experimental.pallas import tpu as pltpu

# ----------------------------------------------------------------------------- config
X_SIZE = 128      # encoder input feature size
H_SIZE = 128      # hidden size
V_SIZE = 128      # decoder output size
NODE_PAD = 128    # pad node axis to a multiple of this (128 fills v5e MXU rows; use 256 on v6e/v7x
                  # when batching many trees)

Tree = namedtuple("Tree", ["num_nodes", "num_levels", "edges", "tree_id",
                           "parent_mat", "level_idx", "root_ids"])
# edges: list of (src, dst) — message flows src -> dst
# parent_mat[i, j] = 1 if node i aggregates node j's state at its level (block-diagonal per tree),
#                    stored bf16 once at build time
# level_idx[i, 0]  = schedule step at which node i is updated (-1 for padding nodes), int32
# root_ids         = encoder-root node indices (out_degree == 0), computed statically


# ----------------------------------------------------------------------------- kernels
def _encoder_kernel(lvl_ref, p_ref, x_ref, nmask_ref, w_ref, u_ref, b_ref,
                    h_out_ref, *, num_levels):
    """Child-sum-style TreeLSTM encoder, all levels in one invocation.

    lvl_ref : (N, 1)  int32  per-node level index (-1 = padding)
    p_ref   : (N, N)  bf16   block-diagonal child->parent aggregation matrix
    x_ref   : (N, X)  f32    node input features
    nmask   : (N, 1)  f32    input (leaf) mask
    w_ref   : (X, 4H) bf16   fused input weights  [i | o | u | f]
    u_ref   : (H, 4H) bf16   fused recurrent weights
    b_ref   : (1, 4H) f32    fused bias
    h_out   : (N, H)  bf16   node hidden states
    """
    N = p_ref.shape[0]
    H = u_ref.shape[0]

    # ---- hoisted, level-invariant input projection: (N, 4H) -------------------
    xm = (x_ref[...] * nmask_ref[...]).astype(jnp.bfloat16)
    x_proj = jnp.dot(xm, w_ref[...], preferred_element_type=jnp.float32) + b_ref[...]

    p_mat = p_ref[...]                                       # bf16 (N, N)
    u_mat = u_ref[...]                                       # bf16 (H, 4H)
    lvl = lvl_ref[...]                                       # int32 (N, 1)

    def level_step(t, carry):
        h, c = carry                                         # each (N, H) f32
        # one fused adjacency matmul gives both summed child h and summed child c;
        # only the bf16 MXU operand is stacked — the f32 carries stay separate.
        hc_bf = jnp.concatenate([h.astype(jnp.bfloat16), c.astype(jnp.bfloat16)], axis=1)
        hc_sum = jnp.dot(p_mat, hc_bf, preferred_element_type=jnp.float32)   # (N, 2H)
        h_sum = hc_sum[:, 0:H]
        c_sum = hc_sum[:, H:2 * H]

        gates = x_proj + jnp.dot(h_sum.astype(jnp.bfloat16), u_mat,
                                 preferred_element_type=jnp.float32)          # (N, 4H)
        i_g = jax.nn.sigmoid(gates[:, 0 * H:1 * H])
        o_g = jax.nn.sigmoid(gates[:, 1 * H:2 * H])
        u_g = jnp.tanh(gates[:, 2 * H:3 * H])
        # TODO(synk): canonical Child-Sum TreeLSTM uses per-child forget gates
        #             f_k = sigma(Wf x + Uf h_k); this cell uses a single gate on sum(c_k).
        f_g = jax.nn.sigmoid(gates[:, 3 * H:4 * H])

        c_new = i_g * u_g + f_g * c_sum
        h_new = o_g * jnp.tanh(c_new)

        upd = lvl == t                                       # (N, 1) bool — free VPU compare
        return (jnp.where(upd, h_new, h), jnp.where(upd, c_new, c))

    h0 = jnp.zeros((N, H), jnp.float32)
    c0 = jnp.zeros((N, H), jnp.float32)
    unroll = num_levels if num_levels <= 8 else 2
    h, _ = lax.fori_loop(0, num_levels, level_step, (h0, c0), unroll=unroll)
    h_out_ref[...] = h.astype(h_out_ref.dtype)


def _decoder_kernel(lvl_ref, p_ref, sel_ref, henc_ref, w_d_ref, u_d_ref, b_d_ref,
                    w_out_ref, b_out_ref, h_out_ref, y_out_ref, *, num_levels):
    """Top-down recurrent tree decoder, all levels in one invocation.

    lvl_ref  : (N, 1)      int32  per-node level index, root -> leaves (-1 = padding)
    p_ref    : (N, N)      bf16   parent-selection matrix (node i reads its parent's state)
    sel_ref  : (N, N_enc)  bf16   0/1 matrix mapping decoder node -> encoder root node
    henc_ref : (N_enc, H)  bf16   encoder node hidden states
    """
    N = p_ref.shape[0]
    H = u_d_ref.shape[0]

    # ---- in-kernel root-encoding gather (one MXU matmul) + conditioning projection ----
    enc_per_node = jnp.dot(sel_ref[...], henc_ref[...],
                           preferred_element_type=jnp.float32)               # (N, H)
    enc_proj = (jnp.dot(enc_per_node.astype(jnp.bfloat16), w_d_ref[...],
                        preferred_element_type=jnp.float32)
                + b_d_ref[...])                                              # (N, H)

    p_mat = p_ref[...]                                       # bf16 (N, N)
    u_mat = u_d_ref[...]                                     # bf16 (H, H)
    lvl = lvl_ref[...]                                       # int32 (N, 1)

    def level_step(t, h):
        h_par = jnp.dot(p_mat, h.astype(jnp.bfloat16),
                        preferred_element_type=jnp.float32)                  # (N, H)
        h_new = jnp.tanh(enc_proj
                         + jnp.dot(h_par.astype(jnp.bfloat16), u_mat,
                                   preferred_element_type=jnp.float32))
        return jnp.where(lvl == t, h_new, h)

    unroll = num_levels if num_levels <= 8 else 2
    h = lax.fori_loop(0, num_levels, level_step,
                      jnp.zeros((N, H), jnp.float32), unroll=unroll)
    h_out_ref[...] = h.astype(h_out_ref.dtype)
    y_out_ref[...] = (jnp.dot(h.astype(jnp.bfloat16), w_out_ref[...],
                              preferred_element_type=jnp.float32)
                      + b_out_ref[...])


# ----------------------------------------------------------------------------- wrappers
def _vmem_limit(byte_estimate):
    # real footprint + headroom, clamped well below physical VMEM
    return int(min(max(2 * byte_estimate + (4 << 20), 32 << 20), 100 << 20))


def tree_lstm_encode(level_idx, parent_mat, x_enc, mask_enc, params, num_levels):
    N = parent_mat.shape[0]
    X, H = X_SIZE, H_SIZE
    est = (N * 128 * 4                    # level idx (lane-padded)
           + N * N * 2                    # adjacency bf16
           + N * X * 4 + N * 128 * 4      # x, mask
           + X * 4 * H * 2 + H * 4 * H * 2 + 4 * H * 4   # weights/bias
           + N * H * 2                    # bf16 output
           + N * 4 * H * 4 * 2            # x_proj + gates
           + 2 * N * H * 4 + N * 2 * H * 2 + N * 2 * H * 4)  # h/c carry, hc_bf, hc_sum
    return pl.pallas_call(
        partial(_encoder_kernel, num_levels=num_levels),
        out_shape=jax.ShapeDtypeStruct((N, H_SIZE), jnp.bfloat16),
        compiler_params=pltpu.CompilerParams(vmem_limit_bytes=_vmem_limit(est)),
    )(level_idx, parent_mat, x_enc, mask_enc, params["W"], params["U"], params["b"])


def tree_decode(level_idx, parent_mat, dec_sel, h_enc, params, num_levels):
    N = parent_mat.shape[0]
    N_enc = h_enc.shape[0]
    H, V = H_SIZE, V_SIZE
    est = (N * 128 * 4
           + N * N * 2 + N * N_enc * 2 + N_enc * H * 2
           + H * H * 2 * 2 + H * V * 2 + (H + V) * 4
           + N * H * 2 + N * V * 4
           + 3 * N * H * 4)
    h_dec, logits = pl.pallas_call(
        partial(_decoder_kernel, num_levels=num_levels),
        out_shape=(jax.ShapeDtypeStruct((N, H_SIZE), jnp.bfloat16),
                   jax.ShapeDtypeStruct((N, V_SIZE), jnp.float32)),
        compiler_params=pltpu.CompilerParams(vmem_limit_bytes=_vmem_limit(est)),
    )(level_idx, parent_mat, dec_sel, h_enc,
      params["W_d"], params["U_d"], params["b_d"],
      params["W_out"], params["b_out"])
    return h_dec, logits


@partial(jax.jit, static_argnames=("num_levels_enc", "num_levels_dec"))
def _tree2tree_jit(enc_level_idx, enc_parent_mat, x_enc, mask_enc,
                   dec_level_idx, dec_parent_mat, dec_sel,
                   enc_params, dec_params, *, num_levels_enc, num_levels_dec):
    # 1) encoder over g_enc                           -> (N_enc, H) bf16
    h_enc = tree_lstm_encode(enc_level_idx, enc_parent_mat, x_enc, mask_enc,
                             enc_params, num_levels_enc)
    # 2)+3) root-state extraction fused into the decoder via the static selection matrix
    return tree_decode(dec_level_idx, dec_parent_mat, dec_sel, h_enc,
                       dec_params, num_levels_dec)


def tree2tree_forward(g_enc: Tree, x_enc, mask_enc, g_dec: Tree, dec_sel,
                      enc_params, dec_params):
    return _tree2tree_jit(g_enc.level_idx, g_enc.parent_mat, x_enc, mask_enc,
                          g_dec.level_idx, g_dec.parent_mat, dec_sel,
                          enc_params, dec_params,
                          num_levels_enc=g_enc.num_levels,
                          num_levels_dec=g_dec.num_levels)


# ----------------------------------------------------------------------------- tree / param builders
def build_trees(parent_lists, bottom_up):
    """Batch several trees block-diagonally along the node axis (static, host-side, once).

    parent_lists[b][i] = parent index of node i in tree b (or -1 for root).
    bottom_up=True  -> encoder schedule (leaves -> root, aggregate children)
    bottom_up=False -> decoder schedule (root -> leaves, read parent)
    """
    sizes = [len(p) for p in parent_lists]
    offsets = np.concatenate([[0], np.cumsum(sizes)])
    n_real = int(offsets[-1])
    N = ((n_real + NODE_PAD - 1) // NODE_PAD) * NODE_PAD     # fill MXU rows

    pm = np.zeros((N, N), np.float32)
    levels = np.full(N, -1, np.int64)
    tree_id = np.full(N, -1, np.int64)
    edges = []

    for b, parent_of in enumerate(parent_lists):
        off = int(offsets[b])
        n = sizes[b]
        children = {i: [] for i in range(n)}
        for c, p in enumerate(parent_of):
            if p >= 0:
                children[p].append(c)

        if bottom_up:
            def height(i):
                return 0 if not children[i] else 1 + max(height(c) for c in children[i])
            for i in range(n):
                levels[off + i] = height(i)
                tree_id[off + i] = b
            for p, cs in children.items():
                for c in cs:
                    pm[off + p, off + c] = 1.0               # parent aggregates child states
                    edges.append((off + c, off + p))
        else:
            def depth(i):
                return 0 if parent_of[i] < 0 else 1 + depth(parent_of[i])
            for i in range(n):
                levels[off + i] = depth(i)
                tree_id[off + i] = b
            for c, p in enumerate(parent_of):
                if p >= 0:
                    pm[off + c, off + p] = 1.0               # child reads its parent's state
                    edges.append((off + p, off + c))

    num_levels = int(levels.max()) + 1

    # static root extraction (spec: out_degree == 0) for later decoder conditioning
    out_deg = np.zeros(N, np.int64)
    for (src, _dst) in edges:
        out_deg[src] += 1
    root_ids = [i for i in range(N) if out_deg[i] == 0 and tree_id[i] >= 0]

    return Tree(num_nodes=N,
                num_levels=num_levels,
                edges=edges,
                tree_id=tree_id,
                parent_mat=jnp.asarray(pm, dtype=jnp.bfloat16),          # stored bf16 once
                level_idx=jnp.asarray(levels.reshape(N, 1), dtype=jnp.int32),
                root_ids=root_ids)


def build_dec_to_enc_selection(g_enc: Tree, g_dec: Tree):
    """Static (N_dec, N_enc) 0/1 selection matrix: decoder node -> encoder root of its tree."""
    sel = np.zeros((g_dec.num_nodes, g_enc.num_nodes), np.float32)
    tree_to_root = {}
    for r in g_enc.root_ids:
        tree_to_root.setdefault(int(g_enc.tree_id[r]), int(r))
    fallback = int(g_enc.root_ids[0]) if g_enc.root_ids else 0
    for i in range(g_dec.num_nodes):
        t = int(g_dec.tree_id[i])
        if t < 0:
            continue                                          # padding node: zero conditioning
        sel[i, tree_to_root.get(t, fallback)] = 1.0
    return jnp.asarray(sel, dtype=jnp.bfloat16)


def _init_params(key):
    ks = jax.random.split(key, 8)
    s = 0.05
    # encoder gates fused as [i | o | u | f]; forget bias initialised to 1
    b_gates = jnp.concatenate([jnp.zeros((1, 3 * H_SIZE), jnp.float32),
                               jnp.ones((1, H_SIZE), jnp.float32)], axis=1)
    enc = {
        "W": (s * jax.random.normal(ks[0], (X_SIZE, 4 * H_SIZE), jnp.float32)).astype(jnp.bfloat16),
        "U": (s * jax.random.normal(ks[1], (H_SIZE, 4 * H_SIZE), jnp.float32)).astype(jnp.bfloat16),
        "b": b_gates,
    }
    dec = {
        "W_d": (s * jax.random.normal(ks[2], (H_SIZE, H_SIZE), jnp.float32)).astype(jnp.bfloat16),
        "U_d": (s * jax.random.normal(ks[3], (H_SIZE, H_SIZE), jnp.float32)).astype(jnp.bfloat16),
        "b_d": jnp.zeros((1, H_SIZE), jnp.float32),
        "W_out": (s * jax.random.normal(ks[4], (H_SIZE, V_SIZE), jnp.float32)).astype(jnp.bfloat16),
        "b_out": jnp.zeros((1, V_SIZE), jnp.float32),
    }
    return enc, dec


# ----------------------------------------------------------------------------- main
if __name__ == "__main__":
    key = jax.random.PRNGKey(0)
    k_x, k_p = jax.random.split(key)

    # two small trees batched block-diagonally (node axis is then padded to 128 for MXU fill)
    enc_parents = [[-1, 0, 0, 1, 1, 2, 2, 3],
                   [-1, 0, 0, 0, 1, 1, 2, 3]]
    dec_parents = [[-1, 0, 0, 1, 1, 2, 2, 3],
                   [-1, 0, 0, 0, 1, 1, 2, 3]]

    g_enc = build_trees(enc_parents, bottom_up=True)
    g_dec = build_trees(dec_parents, bottom_up=False)
    dec_sel = build_dec_to_enc_selection(g_enc, g_dec)

    x_enc = jax.random.normal(k_x, (g_enc.num_nodes, X_SIZE), jnp.float32)

    # DGL-style mask: only leaves carry input embeddings
    is_leaf = np.zeros((g_enc.num_nodes, 1), np.float32)
    off = 0
    for parent_of in enc_parents:
        n = len(parent_of)
        for i in range(n):
            if all(p != i for p in parent_of):
                is_leaf[off + i, 0] = 1.0
        off += n
    mask_enc = jnp.asarray(is_leaf)

    enc_params, dec_params = _init_params(k_p)

    h_dec, logits = tree2tree_forward(g_enc, x_enc, mask_enc, g_dec, dec_sel,
                                      enc_params, dec_params)
    jax.block_until_ready((h_dec, logits))

    assert h_dec.shape == (g_dec.num_nodes, H_SIZE)
    assert logits.shape == (g_dec.num_nodes, V_SIZE)
    assert bool(jnp.all(jnp.isfinite(h_dec.astype(jnp.float32)))) and bool(jnp.all(jnp.isfinite(logits)))
    print("KERNEL_OK")
</pallas_src>

<mosaic_0001>
module attributes {stable_mosaic.version = 11 : i64} {
  func.func @_encoder_kernel(%arg0: memref<128x1xi32, #tpu.memory_space<vmem>>, %arg1: memref<128x128xbf16, #tpu.memory_space<vmem>>, %arg2: memref<128x128xf32, #tpu.memory_space<vmem>>, %arg3: memref<128x1xf32, #tpu.memory_space<vmem>>, %arg4: memref<128x512xbf16, #tpu.memory_space<vmem>>, %arg5: memref<128x512xbf16, #tpu.memory_space<vmem>>, %arg6: memref<1x512xf32, #tpu.memory_space<vmem>>, %arg7: memref<128x128xbf16, #tpu.memory_space<vmem>>) attributes {dimension_semantics = [], scalar_prefetch = 0 : i64, scratch_operands = 0 : i64, tpu.core_type = #tpu.core_type<tc>} {
    %c0 = arith.constant 0 : index
    %c0_0 = arith.constant 0 : index
    %0 = vector.load %arg2[%c0, %c0_0] : memref<128x128xf32, #tpu.memory_space<vmem>>, vector<128x128xf32>
    %c0_1 = arith.constant 0 : index
    %c0_2 = arith.constant 0 : index
    %1 = vector.load %arg3[%c0_1, %c0_2] : memref<128x1xf32, #tpu.memory_space<vmem>>, vector<128x1xf32>
    %2 = vector.broadcast %1 : vector<128x1xf32> to vector<128x128xf32>
    %3 = arith.mulf %0, %2 : vector<128x128xf32>
    %4 = arith.truncf %3 : vector<128x128xf32> to vector<128x128xbf16>
    %c0_3 = arith.constant 0 : index
    %c0_4 = arith.constant 0 : index
    %5 = vector.load %arg4[%c0_3, %c0_4] : memref<128x512xbf16, #tpu.memory_space<vmem>>, vector<128x512xbf16>
    %cst = arith.constant dense<0.000000e+00> : vector<128x512xf32>
    %6 = tpu.matmul %4, %5, %cst {dimension_numbers = #tpu.dot_dimension_numbers<[1], [0], [0], [1], [0, 0, 1, 1], [], []>} : vector<128x128xbf16>, vector<128x512xbf16>, vector<128x512xf32> -> vector<128x512xf32>
    %c0_5 = arith.constant 0 : index
    %c0_6 = arith.constant 0 : index
    %7 = vector.load %arg6[%c0_5, %c0_6] : memref<1x512xf32, #tpu.memory_space<vmem>>, vector<1x512xf32>
    %8 = vector.broadcast %7 : vector<1x512xf32> to vector<128x512xf32>
    %9 = arith.addf %6, %8 : vector<128x512xf32>
    %c0_7 = arith.constant 0 : index
    %c0_8 = arith.constant 0 : index
    %10 = vector.load %arg1[%c0_7, %c0_8] : memref<128x128xbf16, #tpu.memory_space<vmem>>, vector<128x128xbf16>
    %c0_9 = arith.constant 0 : index
    %c0_10 = arith.constant 0 : index
    %11 = vector.load %arg5[%c0_9, %c0_10] : memref<128x512xbf16, #tpu.memory_space<vmem>>, vector<128x512xbf16>
    %c0_11 = arith.constant 0 : index
    %c0_12 = arith.constant 0 : index
    %12 = vector.load %arg0[%c0_11, %c0_12] : memref<128x1xi32, #tpu.memory_space<vmem>>, vector<128x1xi32>
    %cst_13 = arith.constant 0.000000e+00 : f32
    %13 = vector.broadcast %cst_13 : f32 to vector<128x128xf32>
    %cst_14 = arith.constant 0.000000e+00 : f32
    %14 = vector.broadcast %cst_14 : f32 to vector<128x128xf32>
    %c0_i32 = arith.constant 0 : i32
    %15 = arith.truncf %13 : vector<128x128xf32> to vector<128x128xbf16>
    %16 = arith.truncf %14 : vector<128x128xf32> to vector<128x128xbf16>
    %17 = tpu.concatenate %15, %16 in 1 : vector<128x128xbf16>, vector<128x128xbf16> -> vector<128x256xbf16>
    %cst_15 = arith.constant dense<0.000000e+00> : vector<128x256xf32>
    %18 = tpu.matmul %10, %17, %cst_15 {dimension_numbers = #tpu.dot_dimension_numbers<[1], [0], [0], [1], [0, 0, 1, 1], [], []>} : vector<128x128xbf16>, vector<128x256xbf16>, vector<128x256xf32> -> vector<128x256xf32>
    %19 = vector.extract_strided_slice %18 {offsets = [0, 0], sizes = [128, 128], strides = [1, 1]} : vector<128x256xf32> to vector<128x128xf32>
    %20 = vector.extract_strided_slice %18 {offsets = [0, 128], sizes = [128, 128], strides = [1, 1]} : vector<128x256xf32> to vector<128x128xf32>
    %21 = arith.truncf %19 : vector<128x128xf32> to vector<128x128xbf16>
    %cst_16 = arith.constant dense<0.000000e+00> : vector<128x512xf32>
    %22 = tpu.matmul %21, %11, %cst_16 {dimension_numbers = #tpu.dot_dimension_numbers<[1], [0], [0], [1], [0, 0, 1, 1], [], []>} : vector<128x128xbf16>, vector<128x512xbf16>, vector<128x512xf32> -> vector<128x512xf32>
    %23 = arith.addf %9, %22 : vector<128x512xf32>
    %24 = vector.extract_strided_slice %23 {offsets = [0, 0], sizes = [128, 128], strides = [1, 1]} : vector<128x512xf32> to vector<128x128xf32>
    %25 = arith.negf %24 : vector<128x128xf32>
    %26 = math.exp %25 : vector<128x128xf32>
    %cst_17 = arith.constant 1.000000e+00 : f32
    %27 = vector.broadcast %cst_17 : f32 to vector<128x128xf32>
    %28 = arith.addf %27, %26 : vector<128x128xf32>
    %29 = arith.divf %27, %28 : vector<128x128xf32>
    %30 = vector.extract_strided_slice %23 {offsets = [0, 128], sizes = [128, 128], strides = [1, 1]} : vector<128x512xf32> to vector<128x128xf32>
    %31 = arith.negf %30 : vector<128x128xf32>
    %32 = math.exp %31 : vector<128x128xf32>
    %cst_18 = arith.constant 1.000000e+00 : f32
    %33 = vector.broadcast %cst_18 : f32 to vector<128x128xf32>
    %34 = arith.addf %33, %32 : vector<128x128xf32>
    %35 = arith.divf %33, %34 : vector<128x128xf32>
    %36 = vector.extract_strided_slice %23 {offsets = [0, 256], sizes = [128, 128], strides = [1, 1]} : vector<128x512xf32> to vector<128x128xf32>
    %37 = math.tanh %36 : vector<128x128xf32>
    %38 = vector.extract_strided_slice %23 {offsets = [0, 384], sizes = [128, 128], strides = [1, 1]} : vector<128x512xf32> to vector<128x128xf32>
    %39 = arith.negf %38 : vector<128x128xf32>
    %40 = math.exp %39 : vector<128x128xf32>
    %cst_19 = arith.constant 1.000000e+00 : f32
    %41 = vector.broadcast %cst_19 : f32 to vector<128x128xf32>
    %42 = arith.addf %41, %40 : vector<128x128xf32>
    %43 = arith.divf %41, %42 : vector<128x128xf32>
    %44 = arith.mulf %29, %37 : vector<128x128xf32>
    %45 = arith.mulf %43, %20 : vector<128x128xf32>
    %46 = arith.addf %44, %45 : vector<128x128xf32>
    %47 = math.tanh %46 : vector<128x128xf32>
    %48 = arith.mulf %35, %47 : vector<128x128xf32>
    %49 = vector.broadcast %c0_i32 : i32 to vector<128x1xi32>
    %50 = arith.cmpi eq, %12, %49 : vector<128x1xi32>
    %51 = vector.shape_cast %50 : vector<128x1xi1> to vector<128x1xi1>
    %52 = vector.broadcast %51 : vector<128x1xi1> to vector<128x128xi1>
    %53 = arith.select %52, %48, %13 : vector<128x128xi1>, vector<128x128xf32>
    %54 = vector.shape_cast %50 : vector<128x1xi1> to vector<128x1xi1>
    %55 = vector.broadcast %54 : vector<128x1xi1> to vector<128x128xi1>
    %56 = arith.select %55, %46, %14 : vector<128x128xi1>, vector<128x128xf32>
    %c1_i32 = arith.constant 1 : i32
    %57 = arith.truncf %53 : vector<128x128xf32> to vector<128x128xbf16>
    %58 = arith.truncf %56 : vector<128x128xf32> to vector<128x128xbf16>
    %59 = tpu.concatenate %57, %58 in 1 : vector<128x128xbf16>, vector<128x128xbf16> -> vector<128x256xbf16>
    %cst_20 = arith.constant dense<0.000000e+00> : vector<128x256xf32>
    %60 = tpu.matmul %10, %59, %cst_20 {dimension_numbers = #tpu.dot_dimension_numbers<[1], [0], [0], [1], [0, 0, 1, 1], [], []>} : vector<128x128xbf16>, vector<128x256xbf16>, vector<128x256xf32> -> vector<128x256xf32>
    %61 = vector.extract_strided_slice %60 {offsets = [0, 0], sizes = [128, 128], strides = [1, 1]} : vector<128x256xf32> to vector<128x128xf32>
    %62 = vector.extract_strided_slice %60 {offsets = [0, 128], sizes = [128, 128], strides = [1, 1]} : vector<128x256xf32> to vector<128x128xf32>
    %63 = arith.truncf %61 : vector<128x128xf32> to vector<128x128xbf16>
    %cst_21 = arith.constant dense<0.000000e+00> : vector<128x512xf32>
    %64 = tpu.matmul %63, %11, %cst_21 {dimension_numbers = #tpu.dot_dimension_numbers<[1], [0], [0], [1], [0, 0, 1, 1], [], []>} : vector<128x128xbf16>, vector<128x512xbf16>, vector<128x512xf32> -> vector<128x512xf32>
    %65 = arith.addf %9, %64 : vector<128x512xf32>
    %66 = vector.extract_strided_slice %65 {offsets = [0, 0], sizes = [128, 128], strides = [1, 1]} : vector<128x512xf32> to vector<128x128xf32>
    %67 = arith.negf %66 : vector<128x128xf32>
    %68 = math.exp %67 : vector<128x128xf32>
    %cst_22 = arith.constant 1.000000e+00 : f32
    %69 = vector.broadcast %cst_22 : f32 to vector<128x128xf32>
    %70 = arith.addf %69, %68 : vector<128x128xf32>
    %71 = arith.divf %69, %70 : vector<128x128xf32>
    %72 = vector.extract_strided_slice %65 {offsets = [0, 128], sizes = [128, 128], strides = [1, 1]} : vector<128x512xf32> to vector<128x128xf32>
    %73 = arith.negf %72 : vector<128x128xf32>
    %74 = math.exp %73 : vector<128x128xf32>
    %cst_23 = arith.constant 1.000000e+00 : f32
    %75 = vector.broadcast %cst_23 : f32 to vector<128x128xf32>
    %76 = arith.addf %75, %74 : vector<128x128xf32>
    %77 = arith.divf %75, %76 : vector<128x128xf32>
    %78 = vector.extract_strided_slice %65 {offsets = [0, 256], sizes = [128, 128], strides = [1, 1]} : vector<128x512xf32> to vector<128x128xf32>
    %79 = math.tanh %78 : vector<128x128xf32>
    %80 = vector.extract_strided_slice %65 {offsets = [0, 384], sizes = [128, 128], strides = [1, 1]} : vector<128x512xf32> to vector<128x128xf32>
    %81 = arith.negf %80 : vector<128x128xf32>
    %82 = math.exp %81 : vector<128x128xf32>
    %cst_24 = arith.constant 1.000000e+00 : f32
    %83 = vector.broadcast %cst_24 : f32 to vector<128x128xf32>
    %84 = arith.addf %83, %82 : vector<128x128xf32>
    %85 = arith.divf %83, %84 : vector<128x128xf32>
    %86 = arith.mulf %71, %79 : vector<128x128xf32>
    %87 = arith.mulf %85, %62 : vector<128x128xf32>
    %88 = arith.addf %86, %87 : vector<128x128xf32>
    %89 = math.tanh %88 : vector<128x128xf32>
    %90 = arith.mulf %77, %89 : vector<128x128xf32>
    %91 = vector.broadcast %c1_i32 : i32 to vector<128x1xi32>
    %92 = arith.cmpi eq, %12, %91 : vector<128x1xi32>
    %93 = vector.shape_cast %92 : vector<128x1xi1> to vector<128x1xi1>
    %94 = vector.broadcast %93 : vector<128x1xi1> to vector<128x128xi1>
    %95 = arith.select %94, %90, %53 : vector<128x128xi1>, vector<128x128xf32>
    %96 = vector.shape_cast %92 : vector<128x1xi1> to vector<128x1xi1>
    %97 = vector.broadcast %96 : vector<128x1xi1> to vector<128x128xi1>
    %98 = arith.select %97, %88, %56 : vector<128x128xi1>, vector<128x128xf32>
    %c2_i32 = arith.constant 2 : i32
    %99 = arith.truncf %95 : vector<128x128xf32> to vector<128x128xbf16>
    %100 = arith.truncf %98 : vector<128x128xf32> to vector<128x128xbf16>
    %101 = tpu.concatenate %99, %100 in 1 : vector<128x128xbf16>, vector<128x128xbf16> -> vector<128x256xbf16>
    %cst_25 = arith.constant dense<0.000000e+00> : vector<128x256xf32>
    %102 = tpu.matmul %10, %101, %cst_25 {dimension_numbers = #tpu.dot_dimension_numbers<[1], [0], [0], [1], [0, 0, 1, 1], [], []>} : vector<128x128xbf16>, vector<128x256xbf16>, vector<128x256xf32> -> vector<128x256xf32>
    %103 = vector.extract_strided_slice %102 {offsets = [0, 0], sizes = [128, 128], strides = [1, 1]} : vector<128x256xf32> to vector<128x128xf32>
    %104 = vector.extract_strided_slice %102 {offsets = [0, 128], sizes = [128, 128], strides = [1, 1]} : vector<128x256xf32> to vector<128x128xf32>
    %105 = arith.truncf %103 : vector<128x128xf32> to vector<128x128xbf16>
    %cst_26 = arith.constant dense<0.000000e+00> : vector<128x512xf32>
    %106 = tpu.matmul %105, %11, %cst_26 {dimension_numbers = #tpu.dot_dimension_numbers<[1], [0], [0], [1], [0, 0, 1, 1], [], []>} : vector<128x128xbf16>, vector<128x512xbf16>, vector<128x512xf32> -> vector<128x512xf32>
    %107 = arith.addf %9, %106 : vector<128x512xf32>
    %108 = vector.extract_strided_slice %107 {offsets = [0, 0], sizes = [128, 128], strides = [1, 1]} : vector<128x512xf32> to vector<128x128xf32>
    %109 = arith.negf %108 : vector<128x128xf32>
    %110 = math.exp %109 : vector<128x128xf32>
    %cst_27 = arith.constant 1.000000e+00 : f32
    %111 = vector.broadcast %cst_27 : f32 to vector<128x128xf32>
    %112 = arith.addf %111, %110 : vector<128x128xf32>
    %113 = arith.divf %111, %112 : vector<128x128xf32>
    %114 = vector.extract_strided_slice %107 {offsets = [0, 128], sizes = [128, 128], strides = [1, 1]} : vector<128x512xf32> to vector<128x128xf32>
    %115 = arith.negf %114 : vector<128x128xf32>
    %116 = math.exp %115 : vector<128x128xf32>
    %cst_28 = arith.constant 1.000000e+00 : f32
    %117 = vector.broadcast %cst_28 : f32 to vector<128x128xf32>
    %118 = arith.addf %117, %116 : vector<128x128xf32>
    %119 = arith.divf %117, %118 : vector<128x128xf32>
    %120 = vector.extract_strided_slice %107 {offsets = [0, 256], sizes = [128, 128], strides = [1, 1]} : vector<128x512xf32> to vector<128x128xf32>
    %121 = math.tanh %120 : vector<128x128xf32>
    %122 = vector.extract_strided_slice %107 {offsets = [0, 384], sizes = [128, 128], strides = [1, 1]} : vector<128x512xf32> to vector<128x128xf32>
    %123 = arith.negf %122 : vector<128x128xf32>
    %124 = math.exp %123 : vector<128x128xf32>
    %cst_29 = arith.constant 1.000000e+00 : f32
    %125 = vector.broadcast %cst_29 : f32 to vector<128x128xf32>
    %126 = arith.addf %125, %124 : vector<128x128xf32>
    %127 = arith.divf %125, %126 : vector<128x128xf32>
    %128 = arith.mulf %113, %121 : vector<128x128xf32>
    %129 = arith.mulf %127, %104 : vector<128x128xf32>
    %130 = arith.addf %128, %129 : vector<128x128xf32>
    %131 = math.tanh %130 : vector<128x128xf32>
    %132 = arith.mulf %119, %131 : vector<128x128xf32>
    %133 = vector.broadcast %c2_i32 : i32 to vector<128x1xi32>
    %134 = arith.cmpi eq, %12, %133 : vector<128x1xi32>
    %135 = vector.shape_cast %134 : vector<128x1xi1> to vector<128x1xi1>
    %136 = vector.broadcast %135 : vector<128x1xi1> to vector<128x128xi1>
    %137 = arith.select %136, %132, %95 : vector<128x128xi1>, vector<128x128xf32>
    %138 = vector.shape_cast %134 : vector<128x1xi1> to vector<128x1xi1>
    %139 = vector.broadcast %138 : vector<128x1xi1> to vector<128x128xi1>
    %140 = arith.select %139, %130, %98 : vector<128x128xi1>, vector<128x128xf32>
    %c3_i32 = arith.constant 3 : i32
    %141 = arith.truncf %137 : vector<128x128xf32> to vector<128x128xbf16>
    %142 = arith.truncf %140 : vector<128x128xf32> to vector<128x128xbf16>
    %143 = tpu.concatenate %141, %142 in 1 : vector<128x128xbf16>, vector<128x128xbf16> -> vector<128x256xbf16>
    %cst_30 = arith.constant dense<0.000000e+00> : vector<128x256xf32>
    %144 = tpu.matmul %10, %143, %cst_30 {dimension_numbers = #tpu.dot_dimension_numbers<[1], [0], [0], [1], [0, 0, 1, 1], [], []>} : vector<128x128xbf16>, vector<128x256xbf16>, vector<128x256xf32> -> vector<128x256xf32>
    %145 = vector.extract_strided_slice %144 {offsets = [0, 0], sizes = [128, 128], strides = [1, 1]} : vector<128x256xf32> to vector<128x128xf32>
    %146 = vector.extract_strided_slice %144 {offsets = [0, 128], sizes = [128, 128], strides = [1, 1]} : vector<128x256xf32> to vector<128x128xf32>
    %147 = arith.truncf %145 : vector<128x128xf32> to vector<128x128xbf16>
    %cst_31 = arith.constant dense<0.000000e+00> : vector<128x512xf32>
    %148 = tpu.matmul %147, %11, %cst_31 {dimension_numbers = #tpu.dot_dimension_numbers<[1], [0], [0], [1], [0, 0, 1, 1], [], []>} : vector<128x128xbf16>, vector<128x512xbf16>, vector<128x512xf32> -> vector<128x512xf32>
    %149 = arith.addf %9, %148 : vector<128x512xf32>
    %150 = vector.extract_strided_slice %149 {offsets = [0, 0], sizes = [128, 128], strides = [1, 1]} : vector<128x512xf32> to vector<128x128xf32>
    %151 = arith.negf %150 : vector<128x128xf32>
    %152 = math.exp %151 : vector<128x128xf32>
    %cst_32 = arith.constant 1.000000e+00 : f32
    %153 = vector.broadcast %cst_32 : f32 to vector<128x128xf32>
    %154 = arith.addf %153, %152 : vector<128x128xf32>
    %155 = arith.divf %153, %154 : vector<128x128xf32>
    %156 = vector.extract_strided_slice %149 {offsets = [0, 128], sizes = [128, 128], strides = [1, 1]} : vector<128x512xf32> to vector<128x128xf32>
    %157 = arith.negf %156 : vector<128x128xf32>
    %158 = math.exp %157 : vector<128x128xf32>
    %cst_33 = arith.constant 1.000000e+00 : f32
    %159 = vector.broadcast %cst_33 : f32 to vector<128x128xf32>
    %160 = arith.addf %159, %158 : vector<128x128xf32>
    %161 = arith.divf %159, %160 : vector<128x128xf32>
    %162 = vector.extract_strided_slice %149 {offsets = [0, 256], sizes = [128, 128], strides = [1, 1]} : vector<128x512xf32> to vector<128x128xf32>
    %163 = math.tanh %162 : vector<128x128xf32>
    %164 = vector.extract_strided_slice %149 {offsets = [0, 384], sizes = [128, 128], strides = [1, 1]} : vector<128x512xf32> to vector<128x128xf32>
    %165 = arith.negf %164 : vector<128x128xf32>
    %166 = math.exp %165 : vector<128x128xf32>
    %cst_34 = arith.constant 1.000000e+00 : f32
    %167 = vector.broadcast %cst_34 : f32 to vector<128x128xf32>
    %168 = arith.addf %167, %166 : vector<128x128xf32>
    %169 = arith.divf %167, %168 : vector<128x128xf32>
    %170 = arith.mulf %155, %163 : vector<128x128xf32>
    %171 = arith.mulf %169, %146 : vector<128x128xf32>
    %172 = arith.addf %170, %171 : vector<128x128xf32>
    %173 = math.tanh %172 : vector<128x128xf32>
    %174 = arith.mulf %161, %173 : vector<128x128xf32>
    %175 = vector.broadcast %c3_i32 : i32 to vector<128x1xi32>
    %176 = arith.cmpi eq, %12, %175 : vector<128x1xi32>
    %177 = vector.shape_cast %176 : vector<128x1xi1> to vector<128x1xi1>
    %178 = vector.broadcast %177 : vector<128x1xi1> to vector<128x128xi1>
    %179 = arith.select %178, %174, %137 : vector<128x128xi1>, vector<128x128xf32>
    %180 = vector.shape_cast %176 : vector<128x1xi1> to vector<128x1xi1>
    %181 = vector.broadcast %180 : vector<128x1xi1> to vector<128x128xi1>
    %182 = arith.select %181, %172, %140 : vector<128x128xi1>, vector<128x128xf32>
    %c4_i32 = arith.constant 4 : i32
    %183 = arith.truncf %179 : vector<128x128xf32> to vector<128x128xbf16>
    %c0_35 = arith.constant 0 : index
    %c0_36 = arith.constant 0 : index
    %184 = vector.load %arg7[%c0_35, %c0_36] : memref<128x128xbf16, #tpu.memory_space<vmem>>, vector<128x128xbf16>
    tpu.vector_store %arg7[%c0_35, %c0_36], %183 {strides = array<i32>} : memref<128x128xbf16, #tpu.memory_space<vmem>>, vector<128x128xbf16>,
    return
  }
}

module attributes {stable_mosaic.version = 11 : i64} {
  func.func @_decoder_kernel(%arg0: memref<128x1xi32, #tpu.memory_space<vmem>>, %arg1: memref<128x128xbf16, #tpu.memory_space<vmem>>, %arg2: memref<128x128xbf16, #tpu.memory_space<vmem>>, %arg3: memref<128x128xbf16, #tpu.memory_space<vmem>>, %arg4: memref<128x128xbf16, #tpu.memory_space<vmem>>, %arg5: memref<128x128xbf16, #tpu.memory_space<vmem>>, %arg6: memref<1x128xf32, #tpu.memory_space<vmem>>, %arg7: memref<128x128xbf16, #tpu.memory_space<vmem>>, %arg8: memref<1x128xf32, #tpu.memory_space<vmem>>, %arg9: memref<128x128xbf16, #tpu.memory_space<vmem>>, %arg10: memref<128x128xf32, #tpu.memory_space<vmem>>) attributes {dimension_semantics = [], scalar_prefetch = 0 : i64, scratch_operands = 0 : i64, tpu.core_type = #tpu.core_type<tc>} {
    %c0 = arith.constant 0 : index
    %c0_0 = arith.constant 0 : index
    %0 = vector.load %arg2[%c0, %c0_0] : memref<128x128xbf16, #tpu.memory_space<vmem>>, vector<128x128xbf16>
    %c0_1 = arith.constant 0 : index
    %c0_2 = arith.constant 0 : index
    %1 = vector.load %arg3[%c0_1, %c0_2] : memref<128x128xbf16, #tpu.memory_space<vmem>>, vector<128x128xbf16>
    %cst = arith.constant dense<0.000000e+00> : vector<128x128xf32>
    %2 = tpu.matmul %0, %1, %cst {dimension_numbers = #tpu.dot_dimension_numbers<[1], [0], [0], [1], [0, 0, 1, 1], [], []>} : vector<128x128xbf16>, vector<128x128xbf16>, vector<128x128xf32> -> vector<128x128xf32>
    %3 = arith.truncf %2 : vector<128x128xf32> to vector<128x128xbf16>
    %c0_3 = arith.constant 0 : index
    %c0_4 = arith.constant 0 : index
    %4 = vector.load %arg4[%c0_3, %c0_4] : memref<128x128xbf16, #tpu.memory_space<vmem>>, vector<128x128xbf16>
    %cst_5 = arith.constant dense<0.000000e+00> : vector<128x128xf32>
    %5 = tpu.matmul %3, %4, %cst_5 {dimension_numbers = #tpu.dot_dimension_numbers<[1], [0], [0], [1], [0, 0, 1, 1], [], []>} : vector<128x128xbf16>, vector<128x128xbf16>, vector<128x128xf32> -> vector<128x128xf32>
    %c0_6 = arith.constant 0 : index
    %c0_7 = arith.constant 0 : index
    %6 = vector.load %arg6[%c0_6, %c0_7] : memref<1x128xf32, #tpu.memory_space<vmem>>, vector<1x128xf32>
    %7 = vector.broadcast %6 : vector<1x128xf32> to vector<128x128xf32>
    %8 = arith.addf %5, %7 : vector<128x128xf32>
    %c0_8 = arith.constant 0 : index
    %c0_9 = arith.constant 0 : index
    %9 = vector.load %arg1[%c0_8, %c0_9] : memref<128x128xbf16, #tpu.memory_space<vmem>>, vector<128x128xbf16>
    %c0_10 = arith.constant 0 : index
    %c0_11 = arith.constant 0 : index
    %10 = vector.load %arg5[%c0_10, %c0_11] : memref<128x128xbf16, #tpu.memory_space<vmem>>, vector<128x128xbf16>
    %c0_12 = arith.constant 0 : index
    %c0_13 = arith.constant 0 : index
    %11 = vector.load %arg0[%c0_12, %c0_13] : memref<128x1xi32, #tpu.memory_space<vmem>>, vector<128x1xi32>
    %cst_14 = arith.constant 0.000000e+00 : f32
    %12 = vector.broadcast %cst_14 : f32 to vector<128x128xf32>
    %c0_i32 = arith.constant 0 : i32
    %13 = arith.truncf %12 : vector<128x128xf32> to vector<128x128xbf16>
    %cst_15 = arith.constant dense<0.000000e+00> : vector<128x128xf32>
    %14 = tpu.matmul %9, %13, %cst_15 {dimension_numbers = #tpu.dot_dimension_numbers<[1], [0], [0], [1], [0, 0, 1, 1], [], []>} : vector<128x128xbf16>, vector<128x128xbf16>, vector<128x128xf32> -> vector<128x128xf32>
    %15 = arith.truncf %14 : vector<128x128xf32> to vector<128x128xbf16>
    %cst_16 = arith.constant dense<0.000000e+00> : vector<128x128xf32>
    %16 = tpu.matmul %15, %10, %cst_16 {dimension_numbers = #tpu.dot_dimension_numbers<[1], [0], [0], [1], [0, 0, 1, 1], [], []>} : vector<128x128xbf16>, vector<128x128xbf16>, vector<128x128xf32> -> vector<128x128xf32>
    %17 = arith.addf %8, %16 : vector<128x128xf32>
    %18 = math.tanh %17 : vector<128x128xf32>
    %19 = vector.broadcast %c0_i32 : i32 to vector<128x1xi32>
    %20 = arith.cmpi eq, %11, %19 : vector<128x1xi32>
    %21 = vector.shape_cast %20 : vector<128x1xi1> to vector<128x1xi1>
    %22 = vector.broadcast %21 : vector<128x1xi1> to vector<128x128xi1>
    %23 = arith.select %22, %18, %12 : vector<128x128xi1>, vector<128x128xf32>
    %c1_i32 = arith.constant 1 : i32
    %24 = arith.truncf %23 : vector<128x128xf32> to vector<128x128xbf16>
    %cst_17 = arith.constant dense<0.000000e+00> : vector<128x128xf32>
    %25 = tpu.matmul %9, %24, %cst_17 {dimension_numbers = #tpu.dot_dimension_numbers<[1], [0], [0], [1], [0, 0, 1, 1], [], []>} : vector<128x128xbf16>, vector<128x128xbf16>, vector<128x128xf32> -> vector<128x128xf32>
    %26 = arith.truncf %25 : vector<128x128xf32> to vector<128x128xbf16>
    %cst_18 = arith.constant dense<0.000000e+00> : vector<128x128xf32>
    %27 = tpu.matmul %26, %10, %cst_18 {dimension_numbers = #tpu.dot_dimension_numbers<[1], [0], [0], [1], [0, 0, 1, 1], [], []>} : vector<128x128xbf16>, vector<128x128xbf16>, vector<128x128xf32> -> vector<128x128xf32>
    %28 = arith.addf %8, %27 : vector<128x128xf32>
    %29 = math.tanh %28 : vector<128x128xf32>
    %30 = vector.broadcast %c1_i32 : i32 to vector<128x1xi32>
    %31 = arith.cmpi eq, %11, %30 : vector<128x1xi32>
    %32 = vector.shape_cast %31 : vector<128x1xi1> to vector<128x1xi1>
    %33 = vector.broadcast %32 : vector<128x1xi1> to vector<128x128xi1>
    %34 = arith.select %33, %29, %23 : vector<128x128xi1>, vector<128x128xf32>
    %c2_i32 = arith.constant 2 : i32
    %35 = arith.truncf %34 : vector<128x128xf32> to vector<128x128xbf16>
    %cst_19 = arith.constant dense<0.000000e+00> : vector<128x128xf32>
    %36 = tpu.matmul %9, %35, %cst_19 {dimension_numbers = #tpu.dot_dimension_numbers<[1], [0], [0], [1], [0, 0, 1, 1], [], []>} : vector<128x128xbf16>, vector<128x128xbf16>, vector<128x128xf32> -> vector<128x128xf32>
    %37 = arith.truncf %36 : vector<128x128xf32> to vector<128x128xbf16>
    %cst_20 = arith.constant dense<0.000000e+00> : vector<128x128xf32>
    %38 = tpu.matmul %37, %10, %cst_20 {dimension_numbers = #tpu.dot_dimension_numbers<[1], [0], [0], [1], [0, 0, 1, 1], [], []>} : vector<128x128xbf16>, vector<128x128xbf16>, vector<128x128xf32> -> vector<128x128xf32>
    %39 = arith.addf %8, %38 : vector<128x128xf32>
    %40 = math.tanh %39 : vector<128x128xf32>
    %41 = vector.broadcast %c2_i32 : i32 to vector<128x1xi32>
    %42 = arith.cmpi eq, %11, %41 : vector<128x1xi32>
    %43 = vector.shape_cast %42 : vector<128x1xi1> to vector<128x1xi1>
    %44 = vector.broadcast %43 : vector<128x1xi1> to vector<128x128xi1>
    %45 = arith.select %44, %40, %34 : vector<128x128xi1>, vector<128x128xf32>
    %c3_i32 = arith.constant 3 : i32
    %46 = arith.truncf %45 : vector<128x128xf32> to vector<128x128xbf16>
    %cst_21 = arith.constant dense<0.000000e+00> : vector<128x128xf32>
    %47 = tpu.matmul %9, %46, %cst_21 {dimension_numbers = #tpu.dot_dimension_numbers<[1], [0], [0], [1], [0, 0, 1, 1], [], []>} : vector<128x128xbf16>, vector<128x128xbf16>, vector<128x128xf32> -> vector<128x128xf32>
    %48 = arith.truncf %47 : vector<128x128xf32> to vector<128x128xbf16>
    %cst_22 = arith.constant dense<0.000000e+00> : vector<128x128xf32>
    %49 = tpu.matmul %48, %10, %cst_22 {dimension_numbers = #tpu.dot_dimension_numbers<[1], [0], [0], [1], [0, 0, 1, 1], [], []>} : vector<128x128xbf16>, vector<128x128xbf16>, vector<128x128xf32> -> vector<128x128xf32>
    %50 = arith.addf %8, %49 : vector<128x128xf32>
    %51 = math.tanh %50 : vector<128x128xf32>
    %52 = vector.broadcast %c3_i32 : i32 to vector<128x1xi32>
    %53 = arith.cmpi eq, %11, %52 : vector<128x1xi32>
    %54 = vector.shape_cast %53 : vector<128x1xi1> to vector<128x1xi1>
    %55 = vector.broadcast %54 : vector<128x1xi1> to vector<128x128xi1>
    %56 = arith.select %55, %51, %45 : vector<128x128xi1>, vector<128x128xf32>
    %c4_i32 = arith.constant 4 : i32
    %57 = arith.truncf %56 : vector<128x128xf32> to vector<128x128xbf16>
    %c0_23 = arith.constant 0 : index
    %c0_24 = arith.constant 0 : index
    %58 = vector.load %arg9[%c0_23, %c0_24] : memref<128x128xbf16, #tpu.memory_space<vmem>>, vector<128x128xbf16>
    tpu.vector_store %arg9[%c0_23, %c0_24], %57 {strides = array<i32>} : memref<128x128xbf16, #tpu.memory_space<vmem>>, vector<128x128xbf16>,
    %59 = arith.truncf %56 : vector<128x128xf32> to vector<128x128xbf16>
    %c0_25 = arith.constant 0 : index
    %c0_26 = arith.constant 0 : index
    %60 = vector.load %arg7[%c0_25, %c0_26] : memref<128x128xbf16, #tpu.memory_space<vmem>>, vector<128x128xbf16>
    %cst_27 = arith.constant dense<0.000000e+00> : vector<128x128xf32>
    %61 = tpu.matmul %59, %60, %cst_27 {dimension_numbers = #tpu.dot_dimension_numbers<[1], [0], [0], [1], [0, 0, 1, 1], [], []>} : vector<128x128xbf16>, vector<128x128xbf16>, vector<128x128xf32> -> vector<128x128xf32>
    %c0_28 = arith.constant 0 : index
    %c0_29 = arith.constant 0 : index
    %62 = vector.load %arg8[%c0_28, %c0_29] : memref<1x128xf32, #tpu.memory_space<vmem>>, vector<1x128xf32>
    %63 = vector.broadcast %62 : vector<1x128xf32> to vector<128x128xf32>
    %64 = arith.addf %61, %63 : vector<128x128xf32>
    %c0_30 = arith.constant 0 : index
    %c0_31 = arith.constant 0 : index
    %65 = vector.load %arg10[%c0_30, %c0_31] : memref<128x128xf32, #tpu.memory_space<vmem>>, vector<128x128xf32>
    tpu.vector_store %arg10[%c0_30, %c0_31], %64 {strides = array<i32>} : memref<128x128xf32, #tpu.memory_space<vmem>>, vector<128x128xf32>,
    return
  }
}

</mosaic_0001>

<llo_original>
// kernel: _tree2tree_jit.3
$region0: #{_tree2tree_jit.3}
  #allocation0 [shape = 'u32[]', space=smem, size = 0x4, offset = 0x4, fixed_abs, tag = 'smem constant byte address 0x4 - core index']
  #allocation1 [shape = 'u32[72,128]{1,0:T(1,128)}', space=vmem, size = 0x9000, scoped, tag = 'internal scratch']
  %s0 = inlined_call_operand.vmem [shape: s32[128,1], index: 0, kind: input, shape index: {}]
  %s1 = inlined_call_operand.vmem [shape: bf16[128,128], index: 1, kind: input, shape index: {}]
  %s2 = inlined_call_operand.vmem [shape: bf16[128,128], index: 2, kind: input, shape index: {}]
  %s3 = inlined_call_operand.vmem [shape: bf16[128,128], index: 3, kind: input, shape index: {}]
  %s4 = inlined_call_operand.hbm [shape: bf16[128,128], index: 4, kind: input, shape index: {}]
  %s5 = inlined_call_operand.hbm [shape: bf16[128,128], index: 5, kind: input, shape index: {}]
  %s6 = inlined_call_operand.vmem [shape: f32[1,128], index: 6, kind: input, shape index: {}]
  %s7 = inlined_call_operand.hbm [shape: bf16[128,128], index: 7, kind: input, shape index: {}]
  %s8 = inlined_call_operand.vmem [shape: f32[1,128], index: 8, kind: input, shape index: {}]
  %s9 = inlined_call_operand.hbm [shape: bf16[128,128], index: 9, kind: output, shape index: {0}]
  %s10 = inlined_call_operand.hbm [shape: f32[128,128], index: 10, kind: output, shape index: {1}]
  %11 = xla_tuple %s9, %s10
  %s12 = sld [smem:[#allocation0]]
  $region66: #{_tree2tree_jit.3} parent=0
    _
  %s14 = ssub.s32 1, %s12
  %s15 = scalar_select 0, %s14, %s12
  $region1: #{_tree2tree_jit.3} parent=0
    #allocation2 [shape = 'u8[32768]{0}', space=vmem, size = 0x8000, scoped, tag = 'input window, operand 4, single buffered']
    #allocation3 [shape = 's32[1]{0}', space=sflag, size = 0x4, scoped, tag = 'scoped memory for _tree2tree_jit.3']
    #allocation4 [shape = 's32[1]{0}', space=sflag, size = 0x4, scoped, tag = 'scoped memory for _tree2tree_jit.3']
    #allocation5 [shape = 'u8[32768]{0}', space=vmem, size = 0x8000, scoped, tag = 'input window, operand 5, single buffered']
    #allocation6 [shape = 's32[1]{0}', space=sflag, size = 0x4, scoped, tag = 'scoped memory for _tree2tree_jit.3']
    #allocation7 [shape = 'u8[32768]{0}', space=vmem, size = 0x8000, scoped, tag = 'input window, operand 7, single buffered']
    #allocation8 [shape = 'u8[32768]{0}', space=vmem, size = 0x8000, scoped, tag = 'output window, operand 0, single buffered']
    #allocation9 [shape = 'u8[65536]{0}', space=vmem, size = 0x10000, scoped, tag = 'output window, operand 1, single buffered']
    #allocation10 [shape = 's32[1]{0}', space=sflag, size = 0x4, scoped, tag = 'scoped memory for _tree2tree_jit.3']
    %16 = vsyncpa [#allocation3], 0
    %17 = vsyncpa [#allocation6], 0
    %18 = vsyncpa [#allocation4], 0
    %19 = vsyncpa [#allocation10], 0
    // Predicated region
    $region2: #{_tree2tree_jit.3} parent=1 // pred_check
      _
    $region3: #{_tree2tree_jit.3} parent=1 // pred_check_branch
      %21 = sbr.rel (0) target = $region5
    $region4: #{_tree2tree_jit.3} parent=1 // pred_region
      _
    $region5: #{_tree2tree_jit.3} parent=1 // pred_fallthru
      _
    // Predicated region
    $region6: #{_tree2tree_jit.3} parent=1 // pred_check
      _
    $region7: #{_tree2tree_jit.3} parent=1 // pred_check_branch
      %23 = sbr.rel (0) target = $region9
    $region8: #{_tree2tree_jit.3} parent=1 // pred_region
      _
    $region9: #{_tree2tree_jit.3} parent=1 // pred_fallthru
      _
    // Predicated region
    $region10: #{_tree2tree_jit.3} parent=1 // pred_check
      _
    $region11: #{_tree2tree_jit.3} parent=1 // pred_check_branch
      %25 = sbr.rel (0) target = $region13
    $region12: #{_tree2tree_jit.3} parent=1 // pred_region
      _
    $region13: #{_tree2tree_jit.3} parent=1 // pred_fallthru
      _
    // Predicated region
    $region14: #{_tree2tree_jit.3} parent=1 // pred_check
      _
    $region15: #{_tree2tree_jit.3} parent=1 // pred_check_branch
      %27 = sbr.rel (0) target = $region17
    $region16: #{_tree2tree_jit.3} parent=1 // pred_region
      _
    $region17: #{_tree2tree_jit.3} parent=1 // pred_fallthru
      _
    // Predicated region
    $region18: #{_tree2tree_jit.3} parent=1 // pred_check
      _
    $region19: #{_tree2tree_jit.3} parent=1 // pred_check_branch
      %29 = sbr.rel (0) target = $region21
    $region20: #{_tree2tree_jit.3} parent=1 // pred_region
      %31 = vsyncadd [#allocation3], 0
      %s32 = sshll.u32 %s4, 4
      %s33 = int_to_ptr.hbm [resolvable:$true] %s32
      %s34 = sshll.u32 [#allocation2], 4
      %s35 = int_to_ptr.vmem [resolvable:$true] %s34
      %40 = dma.hbm_to_vmem [thread:$0]  %s33, 1024, %s35, [#allocation3], 64, 64, 4
    $region21: #{_tree2tree_jit.3} parent=1 // pred_fallthru
      _
    // Predicated region
    $region22: #{_tree2tree_jit.3} parent=1 // pred_check
      _
    $region23: #{_tree2tree_jit.3} parent=1 // pred_check_branch
      %42 = sbr.rel (0) target = $region25
    $region24: #{_tree2tree_jit.3} parent=1 // pred_region
      %44 = vsyncadd [#allocation6], 0
      %s45 = sshll.u32 %s5, 4
      %s46 = int_to_ptr.hbm [resolvable:$true] %s45
      %s47 = sshll.u32 [#allocation5], 4
      %s48 = int_to_ptr.vmem [resolvable:$true] %s47
      %53 = dma.hbm_to_vmem [thread:$0]  %s46, 1024, %s48, [#allocation6], 64, 64, 4
    $region25: #{_tree2tree_jit.3} parent=1 // pred_fallthru
      _
    // Predicated region
    $region26: #{_tree2tree_jit.3} parent=1 // pred_check
      _
    $region27: #{_tree2tree_jit.3} parent=1 // pred_check_branch
      %55 = sbr.rel (0) target = $region29
    $region28: #{_tree2tree_jit.3} parent=1 // pred_region
      _
    $region29: #{_tree2tree_jit.3} parent=1 // pred_fallthru
      _
    // Predicated region
    $region30: #{_tree2tree_jit.3} parent=1 // pred_check
      _
    $region31: #{_tree2tree_jit.3} parent=1 // pred_check_branch
      %57 = sbr.rel (0) target = $region33
    $region32: #{_tree2tree_jit.3} parent=1 // pred_region
      %59 = vsyncadd [#allocation6], 0
      %s60 = sshll.u32 %s7, 4
      %s61 = int_to_ptr.hbm [resolvable:$true] %s60
      %s62 = sshll.u32 [#allocation7], 4
      %s63 = int_to_ptr.vmem [resolvable:$true] %s62
      %68 = dma.hbm_to_vmem [thread:$0]  %s61, 1024, %s63, [#allocation6], 64, 64, 4
    $region33: #{_tree2tree_jit.3} parent=1 // pred_fallthru
      _
    // Predicated region
    $region34: #{_tree2tree_jit.3} parent=1 // pred_check
      _
    $region35: #{_tree2tree_jit.3} parent=1 // pred_check_branch
      %70 = sbr.rel (0) target = $region37
    $region36: #{_tree2tree_jit.3} parent=1 // pred_region
      _
    $region37: #{_tree2tree_jit.3} parent=1 // pred_fallthru
      _
    // Predicated region
    $region38: #{_tree2tree_jit.3} parent=1 // pred_check
      _
    $region39: #{_tree2tree_jit.3} parent=1 // pred_check_branch
      %72 = sbr.rel (0) target = $region41
    $region40: #{_tree2tree_jit.3} parent=1 // pred_region
      %74 = dma.done [#allocation3], 1024
    $region41: #{_tree2tree_jit.3} parent=1 // pred_fallthru
      _
    // Predicated region
    $region42: #{_tree2tree_jit.3} parent=1 // pred_check
      _
    $region43: #{_tree2tree_jit.3} parent=1 // pred_check_branch
      %76 = sbr.rel (0) target = $region45
    $region44: #{_tree2tree_jit.3} parent=1 // pred_region
      %78 = dma.done [#allocation6], 1024
    $region45: #{_tree2tree_jit.3} parent=1 // pred_fallthru
      _
    // Predicated region
    $region46: #{_tree2tree_jit.3} parent=1 // pred_check
      _
    $region47: #{_tree2tree_jit.3} parent=1 // pred_check_branch
      %80 = sbr.rel (0) target = $region49
    $region48: #{_tree2tree_jit.3} parent=1 // pred_region
      %82 = dma.done [#allocation6], 1024
    $region49: #{_tree2tree_jit.3} parent=1 // pred_fallthru
      _
    %v84 = vld [vmem:[%s2] sm:$0xf]
    %v85 = vld [vmem:[%s2 + $0x4] sm:$0xf]
    %v86 = vld [vmem:[%s2 + $0x8] sm:$0xf]
    %v87 = vld [vmem:[%s2 + $0xc] sm:$0xf]
    %v88 = vld [vmem:[%s2 + $0x10] sm:$0xf]
    %v89 = vld [vmem:[%s2 + $0x14] sm:$0xf]
    %v90 = vld [vmem:[%s2 + $0x18] sm:$0xf]
    %v91 = vld [vmem:[%s2 + $0x1c] sm:$0xf]
    %v92 = vld [vmem:[%s2 + $0x20] sm:$0xf]
    %v93 = vld [vmem:[%s2 + $0x24] sm:$0xf]
    %v94 = vld [vmem:[%s2 + $0x28] sm:$0xf]
    %v95 = vld [vmem:[%s2 + $0x2c] sm:$0xf]
    %v96 = vld [vmem:[%s2 + $0x30] sm:$0xf]
    %v97 = vld [vmem:[%s2 + $0x34] sm:$0xf]
    %v98 = vld [vmem:[%s2 + $0x38] sm:$0xf]
    %v99 = vld [vmem:[%s2 + $0x3c] sm:$0xf]
    %v100 = vld [vmem:[%s3] sm:$0xf]
    %v101 = vld [vmem:[%s3 + $0x4] sm:$0xf]
    %v102 = vld [vmem:[%s3 + $0x8] sm:$0xf]
    %v103 = vld [vmem:[%s3 + $0xc] sm:$0xf]
    %v104 = vld [vmem:[%s3 + $0x10] sm:$0xf]
    %v105 = vld [vmem:[%s3 + $0x14] sm:$0xf]
    %v106 = vld [vmem:[%s3 + $0x18] sm:$0xf]
    %v107 = vld [vmem:[%s3 + $0x1c] sm:$0xf]
    %v108 = vld [vmem:[%s3 + $0x20] sm:$0xf]
    %v109 = vld [vmem:[%s3 + $0x24] sm:$0xf]
    %v110 = vld [vmem:[%s3 + $0x28] sm:$0xf]
    %v111 = vld [vmem:[%s3 + $0x2c] sm:$0xf]
    %v112 = vld [vmem:[%s3 + $0x30] sm:$0xf]
    %v113 = vld [vmem:[%s3 + $0x34] sm:$0xf]
    %v114 = vld [vmem:[%s3 + $0x38] sm:$0xf]
    %v115 = vld [vmem:[%s3 + $0x3c] sm:$0xf]
    %v132 = vunpack.c.l.b16 %v84
    %v133 = vunpack.c.l.b16 %v85
    %v134 = vunpack.c.l.b16 %v86
    %v135 = vunpack.c.l.b16 %v87
    %v136 = vunpack.c.l.b16 %v88
    %v137 = vunpack.c.l.b16 %v89
    %v138 = vunpack.c.l.b16 %v90
    %v139 = vunpack.c.l.b16 %v91
    %v140 = vunpack.c.l.b16 %v92
    %v141 = vunpack.c.l.b16 %v93
    %v142 = vunpack.c.l.b16 %v94
    %v143 = vunpack.c.l.b16 %v95
    %v144 = vunpack.c.l.b16 %v96
    %v145 = vunpack.c.l.b16 %v97
    %v146 = vunpack.c.l.b16 %v98
    %v147 = vunpack.c.l.b16 %v99
    %v148 = vpack.c.b16 %v133, %v132
    %v149 = vpack.c.b16 %v135, %v134
    %v150 = vpack.c.b16 %v137, %v136
    %v151 = vpack.c.b16 %v139, %v138
    %v152 = vpack.c.b16 %v141, %v140
    %v153 = vpack.c.b16 %v143, %v142
    %v154 = vpack.c.b16 %v145, %v144
    %v155 = vpack.c.b16 %v147, %v146
    %v180 = vunpack.c.l.b16 %v100
    %v181 = vunpack.c.l.b16 %v101
    %v182 = vunpack.c.l.b16 %v102
    %v183 = vunpack.c.l.b16 %v103
    %v184 = vunpack.c.l.b16 %v104
    %v185 = vunpack.c.l.b16 %v105
    %v186 = vunpack.c.l.b16 %v106
    %v187 = vunpack.c.l.b16 %v107
    %v188 = vunpack.c.l.b16 %v108
    %v189 = vunpack.c.l.b16 %v109
    %v190 = vunpack.c.l.b16 %v110
    %v191 = vunpack.c.l.b16 %v111
    %v192 = vunpack.c.l.b16 %v112
    %v193 = vunpack.c.l.b16 %v113
    %v194 = vunpack.c.l.b16 %v114
    %v195 = vunpack.c.l.b16 %v115
    %v196 = vpack.c.b16 %v181, %v180
    %v197 = vpack.c.b16 %v183, %v182
    %v198 = vpack.c.b16 %v185, %v184
    %v199 = vpack.c.b16 %v187, %v186
    %v200 = vpack.c.b16 %v189, %v188
    %v201 = vpack.c.b16 %v191, %v190
    %v202 = vpack.c.b16 %v193, %v192
    %v203 = vpack.c.b16 %v195, %v194
    %212 = vmatpush.bf16.msra.mxu0 %v203
    %213 = vmatpush.bf16.msra.mxu0 %v202
    %214 = vmatpush.bf16.msra.mxu0 %v201
    %215 = vmatpush.bf16.msra.mxu0 %v200
    %216 = vmatpush.bf16.msra.mxu0 %v199
    %217 = vmatpush.bf16.msra.mxu0 %v198
    %218 = vmatpush.bf16.msra.mxu0 %v197
    %219 = vmatpush.bf16.msra.mxu0 %v196
    %220 = vmatmul.bf16.gmra.mxu0 %v148
    %v221 = vpop.f32.mrf.mxu0
    %v222 = vadd.f32 0.0, %v221
    %v223 = vpop.f32.mrf.mxu0
    %v224 = vadd.f32 0.0, %v223
    %225 = vmatmul.bf16.gmra.mxu0 %v149
    %v226 = vpop.f32.mrf.mxu0
    %v227 = vadd.f32 0.0, %v226
    %v228 = vpop.f32.mrf.mxu0
    %v229 = vadd.f32 0.0, %v228
    %230 = vmatmul.bf16.gmra.mxu0 %v150
    %v231 = vpop.f32.mrf.mxu0
    %v232 = vadd.f32 0.0, %v231
    %v233 = vpop.f32.mrf.mxu0
    %v234 = vadd.f32 0.0, %v233
    %235 = vmatmul.bf16.gmra.mxu0 %v151
    %v236 = vpop.f32.mrf.mxu0
    %v237 = vadd.f32 0.0, %v236
    %v238 = vpop.f32.mrf.mxu0
    %v239 = vadd.f32 0.0, %v238
    %240 = vmatmul.bf16.gmra.mxu0 %v152
    %v241 = vpop.f32.mrf.mxu0
    %v242 = vadd.f32 0.0, %v241
    %v243 = vpop.f32.mrf.mxu0
    %v244 = vadd.f32 0.0, %v243
    %245 = vmatmul.bf16.gmra.mxu0 %v153
    %v246 = vpop.f32.mrf.mxu0
    %v247 = vadd.f32 0.0, %v246
    %v248 = vpop.f32.mrf.mxu0
    %v249 = vadd.f32 0.0, %v248
    %250 = vmatmul.bf16.gmra.mxu0 %v154
    %v251 = vpop.f32.mrf.mxu0
    %v252 = vadd.f32 0.0, %v251
    %v253 = vpop.f32.mrf.mxu0
    %v254 = vadd.f32 0.0, %v253
    %255 = vmatmul.bf16.gmra.mxu0 %v155
    %v256 = vpop.f32.mrf.mxu0
    %v257 = vadd.f32 0.0, %v256
    %v258 = vpop.f32.mrf.mxu0
    %v259 = vadd.f32 0.0, %v258
    %260 = vdwg.mxu0
    %v261 = vpack.c.bf16 %v224, %v222
    %v262 = vpack.c.bf16 %v229, %v227
    %v263 = vpack.c.bf16 %v234, %v232
    %v264 = vpack.c.bf16 %v239, %v237
    %v265 = vpack.c.bf16 %v244, %v242
    %v266 = vpack.c.bf16 %v249, %v247
    %v267 = vpack.c.bf16 %v254, %v252
    %v268 = vpack.c.bf16 %v259, %v257
    %v269 = vld [vmem:[#allocation2] sm:$0xf]
    %v270 = vld [vmem:[#allocation2 + $0x4] sm:$0xf]
    %v271 = vld [vmem:[#allocation2 + $0x8] sm:$0xf]
    %v272 = vld [vmem:[#allocation2 + $0xc] sm:$0xf]
    %v273 = vld [vmem:[#allocation2 + $0x10] sm:$0xf]
    %v274 = vld [vmem:[#allocation2 + $0x14] sm:$0xf]
    %v275 = vld [vmem:[#allocation2 + $0x18] sm:$0xf]
    %v276 = vld [vmem:[#allocation2 + $0x1c] sm:$0xf]
    %v277 = vld [vmem:[#allocation2 + $0x20] sm:$0xf]
    %v278 = vld [vmem:[#allocation2 + $0x24] sm:$0xf]
    %v279 = vld [vmem:[#allocation2 + $0x28] sm:$0xf]
    %v280 = vld [vmem:[#allocation2 + $0x2c] sm:$0xf]
    %v281 = vld [vmem:[#allocation2 + $0x30] sm:$0xf]
    %v282 = vld [vmem:[#allocation2 + $0x34] sm:$0xf]
    %v283 = vld [vmem:[#allocation2 + $0x38] sm:$0xf]
    %v284 = vld [vmem:[#allocation2 + $0x3c] sm:$0xf]
    %v285 = vld [vmem:[%s6] sm:$0x1]
    %v287 = vperm.slane %v285, 0
    %v305 = vunpack.c.l.b16 %v269
    %v306 = vunpack.c.l.b16 %v270
    %v307 = vunpack.c.l.b16 %v271
    %v308 = vunpack.c.l.b16 %v272
    %v309 = vunpack.c.l.b16 %v273
    %v310 = vunpack.c.l.b16 %v274
    %v311 = vunpack.c.l.b16 %v275
    %v312 = vunpack.c.l.b16 %v276
    %v313 = vunpack.c.l.b16 %v277
    %v314 = vunpack.c.l.b16 %v278
    %v315 = vunpack.c.l.b16 %v279
    %v316 = vunpack.c.l.b16 %v280
    %v317 = vunpack.c.l.b16 %v281
    %v318 = vunpack.c.l.b16 %v282
    %v319 = vunpack.c.l.b16 %v283
    %v320 = vunpack.c.l.b16 %v284
    %v321 = vpack.c.b16 %v306, %v305
    %v322 = vpack.c.b16 %v308, %v307
    %v323 = vpack.c.b16 %v310, %v309
    %v324 = vpack.c.b16 %v312, %v311
    %v325 = vpack.c.b16 %v314, %v313
    %v326 = vpack.c.b16 %v316, %v315
    %v327 = vpack.c.b16 %v318, %v317
    %v328 = vpack.c.b16 %v320, %v319
    %337 = vmatpush.bf16.msra.mxu0 %v328
    %338 = vmatpush.bf16.msra.mxu0 %v327
    %339 = vmatpush.bf16.msra.mxu0 %v326
    %340 = vmatpush.bf16.msra.mxu0 %v325
    %341 = vmatpush.bf16.msra.mxu0 %v324
    %342 = vmatpush.bf16.msra.mxu0 %v323
    %343 = vmatpush.bf16.msra.mxu0 %v322
    %344 = vmatpush.bf16.msra.mxu0 %v321
    %345 = vmatmul.bf16.gmra.mxu0 %v261
    %v346 = vpop.f32.mrf.mxu0
    %v347 = vadd.f32 %v287, %v346
    %v348 = vpop.f32.mrf.mxu0
    %v349 = vadd.f32 %v287, %v348
    %350 = vmatmul.bf16.gmra.mxu0 %v262
    %v351 = vpop.f32.mrf.mxu0
    %v352 = vadd.f32 %v287, %v351
    %v353 = vpop.f32.mrf.mxu0
    %v354 = vadd.f32 %v287, %v353
    %355 = vmatmul.bf16.gmra.mxu0 %v263
    %v356 = vpop.f32.mrf.mxu0
    %v357 = vadd.f32 %v287, %v356
    %v358 = vpop.f32.mrf.mxu0
    %v359 = vadd.f32 %v287, %v358
    %360 = vmatmul.bf16.gmra.mxu0 %v264
    %v361 = vpop.f32.mrf.mxu0
    %v362 = vadd.f32 %v287, %v361
    %v363 = vpop.f32.mrf.mxu0
    %v364 = vadd.f32 %v287, %v363
    %365 = vmatmul.bf16.gmra.mxu0 %v265
    %v366 = vpop.f32.mrf.mxu0
    %v367 = vadd.f32 %v287, %v366
    %v368 = vpop.f32.mrf.mxu0
    %v369 = vadd.f32 %v287, %v368
    %370 = vmatmul.bf16.gmra.mxu0 %v266
    %v371 = vpop.f32.mrf.mxu0
    %v372 = vadd.f32 %v287, %v371
    %v373 = vpop.f32.mrf.mxu0
    %v374 = vadd.f32 %v287, %v373
    %375 = vmatmul.bf16.gmra.mxu0 %v267
    %v376 = vpop.f32.mrf.mxu0
    %v377 = vadd.f32 %v287, %v376
    %v378 = vpop.f32.mrf.mxu0
    %v379 = vadd.f32 %v287, %v378
    %380 = vmatmul.bf16.gmra.mxu0 %v268
    %v381 = vpop.f32.mrf.mxu0
    %v382 = vadd.f32 %v287, %v381
    %v383 = vpop.f32.mrf.mxu0
    %v384 = vadd.f32 %v287, %v383
    %385 = vdwg.mxu0
    %v386 = vld [vmem:[%s1] sm:$0xf]
    %v387 = vld [vmem:[%s1 + $0x4] sm:$0xf]
    %v388 = vld [vmem:[%s1 + $0x8] sm:$0xf]
    %v389 = vld [vmem:[%s1 + $0xc] sm:$0xf]
    %v390 = vld [vmem:[%s1 + $0x10] sm:$0xf]
    %v391 = vld [vmem:[%s1 + $0x14] sm:$0xf]
    %v392 = vld [vmem:[%s1 + $0x18] sm:$0xf]
    %v393 = vld [vmem:[%s1 + $0x1c] sm:$0xf]
    %v394 = vld [vmem:[%s1 + $0x20] sm:$0xf]
    %v395 = vld [vmem:[%s1 + $0x24] sm:$0xf]
    %v396 = vld [vmem:[%s1 + $0x28] sm:$0xf]
    %v397 = vld [vmem:[%s1 + $0x2c] sm:$0xf]
    %v398 = vld [vmem:[%s1 + $0x30] sm:$0xf]
    %v399 = vld [vmem:[%s1 + $0x34] sm:$0xf]
    %v400 = vld [vmem:[%s1 + $0x38] sm:$0xf]
    %v401 = vld [vmem:[%s1 + $0x3c] sm:$0xf]
    %v402 = vld [vmem:[#allocation5] sm:$0xf]
    %v403 = vld [vmem:[#allocation5 + $0x4] sm:$0xf]
    %v404 = vld [vmem:[#allocation5 + $0x8] sm:$0xf]
    %v405 = vld [vmem:[#allocation5 + $0xc] sm:$0xf]
    %v406 = vld [vmem:[#allocation5 + $0x10] sm:$0xf]
    %v407 = vld [vmem:[#allocation5 + $0x14] sm:$0xf]
    %v408 = vld [vmem:[#allocation5 + $0x18] sm:$0xf]
    %v409 = vld [vmem:[#allocation5 + $0x1c] sm:$0xf]
    %v410 = vld [vmem:[#allocation5 + $0x20] sm:$0xf]
    %v411 = vld [vmem:[#allocation5 + $0x24] sm:$0xf]
    %v412 = vld [vmem:[#allocation5 + $0x28] sm:$0xf]
    %v413 = vld [vmem:[#allocation5 + $0x2c] sm:$0xf]
    %v414 = vld [vmem:[#allocation5 + $0x30] sm:$0xf]
    %v415 = vld [vmem:[#allocation5 + $0x34] sm:$0xf]
    %v416 = vld [vmem:[#allocation5 + $0x38] sm:$0xf]
    %v417 = vld [vmem:[#allocation5 + $0x3c] sm:$0xf]
    %v418 = vld [vmem:[%s0] sm:$0xff]
    %v419 = vld [vmem:[%s0 + $0x8] sm:$0xff]
    %v420 = vld [vmem:[%s0 + $0x10] sm:$0xff]
    %v421 = vld [vmem:[%s0 + $0x18] sm:$0xff]
    %v422 = vld [vmem:[%s0 + $0x20] sm:$0xff]
    %v423 = vld [vmem:[%s0 + $0x28] sm:$0xff]
    %v424 = vld [vmem:[%s0 + $0x30] sm:$0xff]
    %v425 = vld [vmem:[%s0 + $0x38] sm:$0xff]
    %v426 = vld [vmem:[%s0 + $0x40] sm:$0xff]
    %v427 = vld [vmem:[%s0 + $0x48] sm:$0xff]
    %v428 = vld [vmem:[%s0 + $0x50] sm:$0xff]
    %v429 = vld [vmem:[%s0 + $0x58] sm:$0xff]
    %v430 = vld [vmem:[%s0 + $0x60] sm:$0xff]
    %v431 = vld [vmem:[%s0 + $0x68] sm:$0xff]
    %v432 = vld [vmem:[%s0 + $0x70] sm:$0xff]
    %v433 = vld [vmem:[%s0 + $0x78] sm:$0xff]
    %v450 = vunpack.c.l.b16 %v386
    %v451 = vunpack.c.l.b16 %v387
    %v452 = vunpack.c.l.b16 %v388
    %v453 = vunpack.c.l.b16 %v389
    %v454 = vunpack.c.l.b16 %v390
    %v455 = vunpack.c.l.b16 %v391
    %v456 = vunpack.c.l.b16 %v392
    %v457 = vunpack.c.l.b16 %v393
    %v458 = vunpack.c.l.b16 %v394
    %v459 = vunpack.c.l.b16 %v395
    %v460 = vunpack.c.l.b16 %v396
    %v461 = vunpack.c.l.b16 %v397
    %v462 = vunpack.c.l.b16 %v398
    %v463 = vunpack.c.l.b16 %v399
    %v464 = vunpack.c.l.b16 %v400
    %v465 = vunpack.c.l.b16 %v401
    %v466 = vpack.c.b16 %v451, %v450
    %v467 = vpack.c.b16 %v453, %v452
    %v468 = vpack.c.b16 %v455, %v454
    %v469 = vpack.c.b16 %v457, %v456
    %v470 = vpack.c.b16 %v459, %v458
    %v471 = vpack.c.b16 %v461, %v460
    %v472 = vpack.c.b16 %v463, %v462
    %v473 = vpack.c.b16 %v465, %v464
    %482 = vmatpush.bf16.msra.mxu0 0
    %483 = vmatpush.bf16.msra.mxu0 0
    %484 = vmatpush.bf16.msra.mxu0 0
    %485 = vmatpush.bf16.msra.mxu0 0
    %486 = vmatpush.bf16.msra.mxu0 0
    %487 = vmatpush.bf16.msra.mxu0 0
    %488 = vmatpush.bf16.msra.mxu0 0
    %489 = vmatpush.bf16.msra.mxu0 0
    %490 = vmatmul.bf16.gmra.mxu0 %v466
    %v491 = vpop.f32.mrf.mxu0
    %v492 = vadd.f32 0.0, %v491
    %v493 = vpop.f32.mrf.mxu0
    %v494 = vadd.f32 0.0, %v493
    %495 = vmatmul.bf16.gmra.mxu0 %v467
    %v496 = vpop.f32.mrf.mxu0
    %v497 = vadd.f32 0.0, %v496
    %v498 = vpop.f32.mrf.mxu0
    %v499 = vadd.f32 0.0, %v498
    %500 = vmatmul.bf16.gmra.mxu0 %v468
    %v501 = vpop.f32.mrf.mxu0
    %v502 = vadd.f32 0.0, %v501
    %v503 = vpop.f32.mrf.mxu0
    %v504 = vadd.f32 0.0, %v503
    %505 = vmatmul.bf16.gmra.mxu0 %v469
    %v506 = vpop.f32.mrf.mxu0
    %v507 = vadd.f32 0.0, %v506
    %v508 = vpop.f32.mrf.mxu0
    %v509 = vadd.f32 0.0, %v508
    %510 = vmatmul.bf16.gmra.mxu0 %v470
    %v511 = vpop.f32.mrf.mxu0
    %v512 = vadd.f32 0.0, %v511
    %v513 = vpop.f32.mrf.mxu0
    %v514 = vadd.f32 0.0, %v513
    %515 = vmatmul.bf16.gmra.mxu0 %v471
    %v516 = vpop.f32.mrf.mxu0
    %v517 = vadd.f32 0.0, %v516
    %v518 = vpop.f32.mrf.mxu0
    %v519 = vadd.f32 0.0, %v518
    %520 = vmatmul.bf16.gmra.mxu0 %v472
    %v521 = vpop.f32.mrf.mxu0
    %v522 = vadd.f32 0.0, %v521
    %v523 = vpop.f32.mrf.mxu0
    %v524 = vadd.f32 0.0, %v523
    %525 = vmatmul.bf16.gmra.mxu0 %v473
    %v526 = vpop.f32.mrf.mxu0
    %v527 = vadd.f32 0.0, %v526
    %v528 = vpop.f32.mrf.mxu0
    %v529 = vadd.f32 0.0, %v528
    %530 = vdwg.mxu0
    %v531 = vpack.c.bf16 %v494, %v492
    %v532 = vpack.c.bf16 %v499, %v497
    %v533 = vpack.c.bf16 %v504, %v502
    %v534 = vpack.c.bf16 %v509, %v507
    %v535 = vpack.c.bf16 %v514, %v512
    %v536 = vpack.c.bf16 %v519, %v517
    %v537 = vpack.c.bf16 %v524, %v522
    %v538 = vpack.c.bf16 %v529, %v527
    %v555 = vunpack.c.l.b16 %v402
    %v556 = vunpack.c.l.b16 %v403
    %v557 = vunpack.c.l.b16 %v404
    %v558 = vunpack.c.l.b16 %v405
    %v559 = vunpack.c.l.b16 %v406
    %v560 = vunpack.c.l.b16 %v407
    %v561 = vunpack.c.l.b16 %v408
    %v562 = vunpack.c.l.b16 %v409
    %v563 = vunpack.c.l.b16 %v410
    %v564 = vunpack.c.l.b16 %v411
    %v565 = vunpack.c.l.b16 %v412
    %v566 = vunpack.c.l.b16 %v413
    %v567 = vunpack.c.l.b16 %v414
    %v568 = vunpack.c.l.b16 %v415
    %v569 = vunpack.c.l.b16 %v416
    %v570 = vunpack.c.l.b16 %v417
    %v571 = vpack.c.b16 %v556, %v555
    %v572 = vpack.c.b16 %v558, %v557
    %v573 = vpack.c.b16 %v560, %v559
    %v574 = vpack.c.b16 %v562, %v561
    %v575 = vpack.c.b16 %v564, %v563
    %v576 = vpack.c.b16 %v566, %v565
    %v577 = vpack.c.b16 %v568, %v567
    %v578 = vpack.c.b16 %v570, %v569
    %587 = vmatpush.bf16.msra.mxu0 %v578
    %588 = vmatpush.bf16.msra.mxu0 %v577
    %589 = vmatpush.bf16.msra.mxu0 %v576
    %590 = vmatpush.bf16.msra.mxu0 %v575
    %591 = vmatpush.bf16.msra.mxu0 %v574
    %592 = vmatpush.bf16.msra.mxu0 %v573
    %593 = vmatpush.bf16.msra.mxu0 %v572
    %594 = vmatpush.bf16.msra.mxu0 %v571
    %595 = vmatmul.bf16.gmra.mxu0 %v531
    %v596 = vpop.f32.mrf.mxu0
    %v597 = vadd.f32 0.0, %v596
    %v598 = vpop.f32.mrf.mxu0
    %v599 = vadd.f32 0.0, %v598
    %600 = vmatmul.bf16.gmra.mxu0 %v532
    %v601 = vpop.f32.mrf.mxu0
    %v602 = vadd.f32 0.0, %v601
    %v603 = vpop.f32.mrf.mxu0
    %v604 = vadd.f32 0.0, %v603
    %605 = vmatmul.bf16.gmra.mxu0 %v533
    %v606 = vpop.f32.mrf.mxu0
    %v607 = vadd.f32 0.0, %v606
    %v608 = vpop.f32.mrf.mxu0
    %v609 = vadd.f32 0.0, %v608
    %610 = vmatmul.bf16.gmra.mxu0 %v534
    %v611 = vpop.f32.mrf.mxu0
    %v612 = vadd.f32 0.0, %v611
    %v613 = vpop.f32.mrf.mxu0
    %v614 = vadd.f32 0.0, %v613
    %615 = vmatmul.bf16.gmra.mxu0 %v535
    %v616 = vpop.f32.mrf.mxu0
    %v617 = vadd.f32 0.0, %v616
    %v618 = vpop.f32.mrf.mxu0
    %v619 = vadd.f32 0.0, %v618
    %620 = vmatmul.bf16.gmra.mxu0 %v536
    %v621 = vpop.f32.mrf.mxu0
    %v622 = vadd.f32 0.0, %v621
    %v623 = vpop.f32.mrf.mxu0
    %v624 = vadd.f32 0.0, %v623
    %625 = vmatmul.bf16.gmra.mxu0 %v537
    %v626 = vpop.f32.mrf.mxu0
    %v627 = vadd.f32 0.0, %v626
    %v628 = vpop.f32.mrf.mxu0
    %v629 = vadd.f32 0.0, %v628
    %630 = vmatmul.bf16.gmra.mxu0 %v538
    %v631 = vpop.f32.mrf.mxu0
    %v632 = vadd.f32 0.0, %v631
    %v633 = vpop.f32.mrf.mxu0
    %v634 = vadd.f32 0.0, %v633
    %635 = vdwg.mxu0
    %v636 = vadd.f32 %v347, %v597
    %v637 = vadd.f32 %v349, %v599
    %v638 = vadd.f32 %v352, %v602
    %v639 = vadd.f32 %v354, %v604
    %v640 = vadd.f32 %v357, %v607
    %v641 = vadd.f32 %v359, %v609
    %v642 = vadd.f32 %v362, %v612
    %v643 = vadd.f32 %v364, %v614
    %v644 = vadd.f32 %v367, %v617
    %v645 = vadd.f32 %v369, %v619
    %v646 = vadd.f32 %v372, %v622
    %v647 = vadd.f32 %v374, %v624
    %v648 = vadd.f32 %v377, %v627
    %v649 = vadd.f32 %v379, %v629
    %v650 = vadd.f32 %v382, %v632
    %v651 = vadd.f32 %v384, %v634
    %v652 = vtanh.pop %v636
    %v653 = vtanh.pop %v637
    %v654 = vtanh.pop %v638
    %v655 = vtanh.pop %v639
    %v656 = vtanh.pop %v640
    %v657 = vtanh.pop %v641
    %v658 = vtanh.pop %v642
    %v659 = vtanh.pop %v643
    %v660 = vtanh.pop %v644
    %v661 = vtanh.pop %v645
    %v662 = vtanh.pop %v646
    %v663 = vtanh.pop %v647
    %v664 = vtanh.pop %v648
    %v665 = vtanh.pop %v649
    %v666 = vtanh.pop %v650
    %v667 = vtanh.pop %v651
    %vm668 = vcmp.eq.s32.totalorder %v418, 0
    %vm669 = vcmp.eq.s32.totalorder %v419, 0
    %vm670 = vcmp.eq.s32.totalorder %v420, 0
    %vm671 = vcmp.eq.s32.totalorder %v421, 0
    %vm672 = vcmp.eq.s32.totalorder %v422, 0
    %vm673 = vcmp.eq.s32.totalorder %v423, 0
    %vm674 = vcmp.eq.s32.totalorder %v424, 0
    %vm675 = vcmp.eq.s32.totalorder %v425, 0
    %vm676 = vcmp.eq.s32.totalorder %v426, 0
    %vm677 = vcmp.eq.s32.totalorder %v427, 0
    %vm678 = vcmp.eq.s32.totalorder %v428, 0
    %vm679 = vcmp.eq.s32.totalorder %v429, 0
    %vm680 = vcmp.eq.s32.totalorder %v430, 0
    %vm681 = vcmp.eq.s32.totalorder %v431, 0
    %vm682 = vcmp.eq.s32.totalorder %v432, 0
    %vm683 = vcmp.eq.s32.totalorder %v433, 0
    %v684 = vsel %vm668, 1, 0
    %v685 = vsel %vm669, 1, 0
    %v686 = vsel %vm670, 1, 0
    %v687 = vsel %vm671, 1, 0
    %v688 = vsel %vm672, 1, 0
    %v689 = vsel %vm673, 1, 0
    %v690 = vsel %vm674, 1, 0
    %v691 = vsel %vm675, 1, 0
    %v692 = vsel %vm676, 1, 0
    %v693 = vsel %vm677, 1, 0
    %v694 = vsel %vm678, 1, 0
    %v695 = vsel %vm679, 1, 0
    %v696 = vsel %vm680, 1, 0
    %v697 = vsel %vm681, 1, 0
    %v698 = vsel %vm682, 1, 0
    %v699 = vsel %vm683, 1, 0
    %700 = vset.pattern.permute.xlu0 0
    %701 = vperm.xlu0 %700, %v684
    %v702 = vpop.permute.xlu0 %701
    %703 = vset.pattern.permute.xlu0 0
    %704 = vperm.xlu0 %703, %v685
    %v705 = vpop.permute.xlu0 %704
    %706 = vset.pattern.permute.xlu0 0
    %707 = vperm.xlu0 %706, %v686
    %v708 = vpop.permute.xlu0 %707
    %709 = vset.pattern.permute.xlu0 0
    %710 = vperm.xlu0 %709, %v687
    %v711 = vpop.permute.xlu0 %710
    %712 = vset.pattern.permute.xlu0 0
    %713 = vperm.xlu0 %712, %v688
    %v714 = vpop.permute.xlu0 %713
    %715 = vset.pattern.permute.xlu0 0
    %716 = vperm.xlu0 %715, %v689
    %v717 = vpop.permute.xlu0 %716
    %718 = vset.pattern.permute.xlu0 0
    %719 = vperm.xlu0 %718, %v690
    %v720 = vpop.permute.xlu0 %719
    %721 = vset.pattern.permute.xlu0 0
    %722 = vperm.xlu0 %721, %v691
    %v723 = vpop.permute.xlu0 %722
    %724 = vset.pattern.permute.xlu0 0
    %725 = vperm.xlu0 %724, %v692
    %v726 = vpop.permute.xlu0 %725
    %727 = vset.pattern.permute.xlu0 0
    %728 = vperm.xlu0 %727, %v693
    %v729 = vpop.permute.xlu0 %728
    %730 = vset.pattern.permute.xlu0 0
    %731 = vperm.xlu0 %730, %v694
    %v732 = vpop.permute.xlu0 %731
    %733 = vset.pattern.permute.xlu0 0
    %734 = vperm.xlu0 %733, %v695
    %v735 = vpop.permute.xlu0 %734
    %736 = vset.pattern.permute.xlu0 0
    %737 = vperm.xlu0 %736, %v696
    %v738 = vpop.permute.xlu0 %737
    %739 = vset.pattern.permute.xlu0 0
    %740 = vperm.xlu0 %739, %v697
    %v741 = vpop.permute.xlu0 %740
    %742 = vset.pattern.permute.xlu0 0
    %743 = vperm.xlu0 %742, %v698
    %v744 = vpop.permute.xlu0 %743
    %745 = vset.pattern.permute.xlu0 0
    %746 = vperm.xlu0 %745, %v699
    %v747 = vpop.permute.xlu0 %746
    %vm748 = vcmp.eq.s32.totalorder %v702, 1
    %vm749 = vcmp.eq.s32.totalorder %v705, 1
    %vm750 = vcmp.eq.s32.totalorder %v708, 1
    %vm751 = vcmp.eq.s32.totalorder %v711, 1
    %vm752 = vcmp.eq.s32.totalorder %v714, 1
    %vm753 = vcmp.eq.s32.totalorder %v717, 1
    %vm754 = vcmp.eq.s32.totalorder %v720, 1
    %vm755 = vcmp.eq.s32.totalorder %v723, 1
    %vm756 = vcmp.eq.s32.totalorder %v726, 1
    %vm757 = vcmp.eq.s32.totalorder %v729, 1
    %vm758 = vcmp.eq.s32.totalorder %v732, 1
    %vm759 = vcmp.eq.s32.totalorder %v735, 1
    %vm760 = vcmp.eq.s32.totalorder %v738, 1
    %vm761 = vcmp.eq.s32.totalorder %v741, 1
    %vm762 = vcmp.eq.s32.totalorder %v744, 1
    %vm763 = vcmp.eq.s32.totalorder %v747, 1
    %v764 = vsel %vm748, %v652, 0.0
    %v765 = vsel %vm749, %v653, 0.0
    %v766 = vsel %vm750, %v654, 0.0
    %v767 = vsel %vm751, %v655, 0.0
    %v768 = vsel %vm752, %v656, 0.0
    %v769 = vsel %vm753, %v657, 0.0
    %v770 = vsel %vm754, %v658, 0.0
    %v771 = vsel %vm755, %v659, 0.0
    %v772 = vsel %vm756, %v660, 0.0
    %v773 = vsel %vm757, %v661, 0.0
    %v774 = vsel %vm758, %v662, 0.0
    %v775 = vsel %vm759, %v663, 0.0
    %v776 = vsel %vm760, %v664, 0.0
    %v777 = vsel %vm761, %v665, 0.0
    %v778 = vsel %vm762, %v666, 0.0
    %v779 = vsel %vm763, %v667, 0.0
    %v780 = vpack.c.bf16 %v765, %v764
    %v781 = vpack.c.bf16 %v767, %v766
    %v782 = vpack.c.bf16 %v769, %v768
    %v783 = vpack.c.bf16 %v771, %v770
    %v784 = vpack.c.bf16 %v773, %v772
    %v785 = vpack.c.bf16 %v775, %v774
    %v786 = vpack.c.bf16 %v777, %v776
    %v787 = vpack.c.bf16 %v779, %v778
    %788 = vmatpush.bf16.msra.mxu0 %v787
    %789 = vmatpush.bf16.msra.mxu0 %v786
    %790 = vmatpush.bf16.msra.mxu0 %v785
    %791 = vmatpush.bf16.msra.mxu0 %v784
    %792 = vmatpush.bf16.msra.mxu0 %v783
    %793 = vmatpush.bf16.msra.mxu0 %v782
    %794 = vmatpush.bf16.msra.mxu0 %v781
    %795 = vmatpush.bf16.msra.mxu0 %v780
    %796 = vmatmul.bf16.gmra.mxu0 %v466
    %v797 = vpop.f32.mrf.mxu0
    %v798 = vadd.f32 0.0, %v797
    %v799 = vpop.f32.mrf.mxu0
    %v800 = vadd.f32 0.0, %v799
    %801 = vmatmul.bf16.gmra.mxu0 %v467
    %v802 = vpop.f32.mrf.mxu0
    %v803 = vadd.f32 0.0, %v802
    %v804 = vpop.f32.mrf.mxu0
    %v805 = vadd.f32 0.0, %v804
    %806 = vmatmul.bf16.gmra.mxu0 %v468
    %v807 = vpop.f32.mrf.mxu0
    %v808 = vadd.f32 0.0, %v807
    %v809 = vpop.f32.mrf.mxu0
    %v810 = vadd.f32 0.0, %v809
    %811 = vmatmul.bf16.gmra.mxu0 %v469
    %v812 = vpop.f32.mrf.mxu0
    %v813 = vadd.f32 0.0, %v812
    %v814 = vpop.f32.mrf.mxu0
    %v815 = vadd.f32 0.0, %v814
    %816 = vmatmul.bf16.gmra.mxu0 %v470
    %v817 = vpop.f32.mrf.mxu0
    %v818 = vadd.f32 0.0, %v817
    %v819 = vpop.f32.mrf.mxu0
    %v820 = vadd.f32 0.0, %v819
    %821 = vmatmul.bf16.gmra.mxu0 %v471
    %v822 = vpop.f32.mrf.mxu0
    %v823 = vadd.f32 0.0, %v822
    %v824 = vpop.f32.mrf.mxu0
    %v825 = vadd.f32 0.0, %v824
    %826 = vmatmul.bf16.gmra.mxu0 %v472
    %v827 = vpop.f32.mrf.mxu0
    %v828 = vadd.f32 0.0, %v827
    %v829 = vpop.f32.mrf.mxu0
    %v830 = vadd.f32 0.0, %v829
    %831 = vmatmul.bf16.gmra.mxu0 %v473
    %v832 = vpop.f32.mrf.mxu0
    %v833 = vadd.f32 0.0, %v832
    %v834 = vpop.f32.mrf.mxu0
    %v835 = vadd.f32 0.0, %v834
    %836 = vdwg.mxu0
    %v837 = vpack.c.bf16 %v800, %v798
    %v838 = vpack.c.bf16 %v805, %v803
    %v839 = vpack.c.bf16 %v810, %v808
    %v840 = vpack.c.bf16 %v815, %v813
    %v841 = vpack.c.bf16 %v820, %v818
    %v842 = vpack.c.bf16 %v825, %v823
    %v843 = vpack.c.bf16 %v830, %v828
    %v844 = vpack.c.bf16 %v835, %v833
    %845 = vmatpush.bf16.msra.mxu0 %v578
    %846 = vmatpush.bf16.msra.mxu0 %v577
    %847 = vmatpush.bf16.msra.mxu0 %v576
    %848 = vmatpush.bf16.msra.mxu0 %v575
    %849 = vmatpush.bf16.msra.mxu0 %v574
    %850 = vmatpush.bf16.msra.mxu0 %v573
    %851 = vmatpush.bf16.msra.mxu0 %v572
    %852 = vmatpush.bf16.msra.mxu0 %v571
    %853 = vmatmul.bf16.gmra.mxu0 %v837
    %v854 = vpop.f32.mrf.mxu0
    %v855 = vadd.f32 0.0, %v854
    %v856 = vpop.f32.mrf.mxu0
    %v857 = vadd.f32 0.0, %v856
    %858 = vmatmul.bf16.gmra.mxu0 %v838
    %v859 = vpop.f32.mrf.mxu0
    %v860 = vadd.f32 0.0, %v859
    %v861 = vpop.f32.mrf.mxu0
    %v862 = vadd.f32 0.0, %v861
    %863 = vmatmul.bf16.gmra.mxu0 %v839
    %v864 = vpop.f32.mrf.mxu0
    %v865 = vadd.f32 0.0, %v864
    %v866 = vpop.f32.mrf.mxu0
    %v867 = vadd.f32 0.0, %v866
    %868 = vmatmul.bf16.gmra.mxu0 %v840
    %v869 = vpop.f32.mrf.mxu0
    %v870 = vadd.f32 0.0, %v869
    %v871 = vpop.f32.mrf.mxu0
    %v872 = vadd.f32 0.0, %v871
    %873 = vmatmul.bf16.gmra.mxu0 %v841
    %v874 = vpop.f32.mrf.mxu0
    %v875 = vadd.f32 0.0, %v874
    %v876 = vpop.f32.mrf.mxu0
    %v877 = vadd.f32 0.0, %v876
    %878 = vmatmul.bf16.gmra.mxu0 %v842
    %v879 = vpop.f32.mrf.mxu0
    %v880 = vadd.f32 0.0, %v879
    %v881 = vpop.f32.mrf.mxu0
    %v882 = vadd.f32 0.0, %v881
    %883 = vmatmul.bf16.gmra.mxu0 %v843
    %v884 = vpop.f32.mrf.mxu0
    %v885 = vadd.f32 0.0, %v884
    %v886 = vpop.f32.mrf.mxu0
    %v887 = vadd.f32 0.0, %v886
    %888 = vmatmul.bf16.gmra.mxu0 %v844
    %v889 = vpop.f32.mrf.mxu0
    %v890 = vadd.f32 0.0, %v889
    %v891 = vpop.f32.mrf.mxu0
    %v892 = vadd.f32 0.0, %v891
    %893 = vdwg.mxu0
    %v894 = vadd.f32 %v347, %v855
    %v895 = vadd.f32 %v349, %v857
    %v896 = vadd.f32 %v352, %v860
    %v897 = vadd.f32 %v354, %v862
    %v898 = vadd.f32 %v357, %v865
    %v899 = vadd.f32 %v359, %v867
    %v900 = vadd.f32 %v362, %v870
    %v901 = vadd.f32 %v364, %v872
    %v902 = vadd.f32 %v367, %v875
    %v903 = vadd.f32 %v369, %v877
    %v904 = vadd.f32 %v372, %v880
    %v905 = vadd.f32 %v374, %v882
    %v906 = vadd.f32 %v377, %v885
    %v907 = vadd.f32 %v379, %v887
    %v908 = vadd.f32 %v382, %v890
    %v909 = vadd.f32 %v384, %v892
    %v910 = vtanh.pop %v894
    %v911 = vtanh.pop %v895
    %v912 = vtanh.pop %v896
    %v913 = vtanh.pop %v897
    %v914 = vtanh.pop %v898
    %v915 = vtanh.pop %v899
    %v916 = vtanh.pop %v900
    %v917 = vtanh.pop %v901
    %v918 = vtanh.pop %v902
    %v919 = vtanh.pop %v903
    %v920 = vtanh.pop %v904
    %v921 = vtanh.pop %v905
    %v922 = vtanh.pop %v906
    %v923 = vtanh.pop %v907
    %v924 = vtanh.pop %v908
    %v925 = vtanh.pop %v909
    %vm926 = vcmp.eq.s32.totalorder %v418, 1
    %vm927 = vcmp.eq.s32.totalorder %v419, 1
    %vm928 = vcmp.eq.s32.totalorder %v420, 1
    %vm929 = vcmp.eq.s32.totalorder %v421, 1
    %vm930 = vcmp.eq.s32.totalorder %v422, 1
    %vm931 = vcmp.eq.s32.totalorder %v423, 1
    %vm932 = vcmp.eq.s32.totalorder %v424, 1
    %vm933 = vcmp.eq.s32.totalorder %v425, 1
    %vm934 = vcmp.eq.s32.totalorder %v426, 1
    %vm935 = vcmp.eq.s32.totalorder %v427, 1
    %vm936 = vcmp.eq.s32.totalorder %v428, 1
    %vm937 = vcmp.eq.s32.totalorder %v429, 1
    %vm938 = vcmp.eq.s32.totalorder %v430, 1
    %vm939 = vcmp.eq.s32.totalorder %v431, 1
    %vm940 = vcmp.eq.s32.totalorder %v432, 1
    %vm941 = vcmp.eq.s32.totalorder %v433, 1
    %v942 = vsel %vm926, 1, 0
    %v943 = vsel %vm927, 1, 0
    %v944 = vsel %vm928, 1, 0
    %v945 = vsel %vm929, 1, 0
    %v946 = vsel %vm930, 1, 0
    %v947 = vsel %vm931, 1, 0
    %v948 = vsel %vm932, 1, 0
    %v949 = vsel %vm933, 1, 0
    %v950 = vsel %vm934, 1, 0
    %v951 = vsel %vm935, 1, 0
    %v952 = vsel %vm936, 1, 0
    %v953 = vsel %vm937, 1, 0
    %v954 = vsel %vm938, 1, 0
    %v955 = vsel %vm939, 1, 0
    %v956 = vsel %vm940, 1, 0
    %v957 = vsel %vm941, 1, 0
    %958 = vset.pattern.permute.xlu0 0
    %959 = vperm.xlu0 %958, %v942
    %v960 = vpop.permute.xlu0 %959
    %961 = vset.pattern.permute.xlu0 0
    %962 = vperm.xlu0 %961, %v943
    %v963 = vpop.permute.xlu0 %962
    %964 = vset.pattern.permute.xlu0 0
    %965 = vperm.xlu0 %964, %v944
    %v966 = vpop.permute.xlu0 %965
    %967 = vset.pattern.permute.xlu0 0
    %968 = vperm.xlu0 %967, %v945
    %v969 = vpop.permute.xlu0 %968
    %970 = vset.pattern.permute.xlu0 0
    %971 = vperm.xlu0 %970, %v946
    %v972 = vpop.permute.xlu0 %971
    %973 = vset.pattern.permute.xlu0 0
    %974 = vperm.xlu0 %973, %v947
    %v975 = vpop.permute.xlu0 %974
    %976 = vset.pattern.permute.xlu0 0
    %977 = vperm.xlu0 %976, %v948
    %v978 = vpop.permute.xlu0 %977
    %979 = vset.pattern.permute.xlu0 0
    %980 = vperm.xlu0 %979, %v949
    %v981 = vpop.permute.xlu0 %980
    %982 = vset.pattern.permute.xlu0 0
    %983 = vperm.xlu0 %982, %v950
    %v984 = vpop.permute.xlu0 %983
    %985 = vset.pattern.permute.xlu0 0
    %986 = vperm.xlu0 %985, %v951
    %v987 = vpop.permute.xlu0 %986
    %988 = vset.pattern.permute.xlu0 0
    %989 = vperm.xlu0 %988, %v952
    %v990 = vpop.permute.xlu0 %989
    %991 = vset.pattern.permute.xlu0 0
    %992 = vperm.xlu0 %991, %v953
    %v993 = vpop.permute.xlu0 %992
    %994 = vset.pattern.permute.xlu0 0
    %995 = vperm.xlu0 %994, %v954
    %v996 = vpop.permute.xlu0 %995
    %997 = vset.pattern.permute.xlu0 0
    %998 = vperm.xlu0 %997, %v955
    %v999 = vpop.permute.xlu0 %998
    %1000 = vset.pattern.permute.xlu0 0
    %1001 = vperm.xlu0 %1000, %v956
    %v1002 = vpop.permute.xlu0 %1001
    %1003 = vset.pattern.permute.xlu0 0
    %1004 = vperm.xlu0 %1003, %v957
    %v1005 = vpop.permute.xlu0 %1004
    %vm1006 = vcmp.eq.s32.totalorder %v960, 1
    %vm1007 = vcmp.eq.s32.totalorder %v963, 1
    %vm1008 = vcmp.eq.s32.totalorder %v966, 1
    %vm1009 = vcmp.eq.s32.totalorder %v969, 1
    %vm1010 = vcmp.eq.s32.totalorder %v972, 1
    %vm1011 = vcmp.eq.s32.totalorder %v975, 1
    %vm1012 = vcmp.eq.s32.totalorder %v978, 1
    %vm1013 = vcmp.eq.s32.totalorder %v981, 1
    %vm1014 = vcmp.eq.s32.totalorder %v984, 1
    %vm1015 = vcmp.eq.s32.totalorder %v987, 1
    %vm1016 = vcmp.eq.s32.totalorder %v990, 1
    %vm1017 = vcmp.eq.s32.totalorder %v993, 1
    %vm1018 = vcmp.eq.s32.totalorder %v996, 1
    %vm1019 = vcmp.eq.s32.totalorder %v999, 1
    %vm1020 = vcmp.eq.s32.totalorder %v1002, 1
    %vm1021 = vcmp.eq.s32.totalorder %v1005, 1
    %v1022 = vsel %vm1006, %v910, %v764
    %v1023 = vsel %vm1007, %v911, %v765
    %v1024 = vsel %vm1008, %v912, %v766
    %v1025 = vsel %vm1009, %v913, %v767
    %v1026 = vsel %vm1010, %v914, %v768
    %v1027 = vsel %vm1011, %v915, %v769
    %v1028 = vsel %vm1012, %v916, %v770
    %v1029 = vsel %vm1013, %v917, %v771
    %v1030 = vsel %vm1014, %v918, %v772
    %v1031 = vsel %vm1015, %v919, %v773
    %v1032 = vsel %vm1016, %v920, %v774
    %v1033 = vsel %vm1017, %v921, %v775
    %v1034 = vsel %vm1018, %v922, %v776
    %v1035 = vsel %vm1019, %v923, %v777
    %v1036 = vsel %vm1020, %v924, %v778
    %v1037 = vsel %vm1021, %v925, %v779
    %v1038 = vpack.c.bf16 %v1023, %v1022
    %v1039 = vpack.c.bf16 %v1025, %v1024
    %v1040 = vpack.c.bf16 %v1027, %v1026
    %v1041 = vpack.c.bf16 %v1029, %v1028
    %v1042 = vpack.c.bf16 %v1031, %v1030
    %v1043 = vpack.c.bf16 %v1033, %v1032
    %v1044 = vpack.c.bf16 %v1035, %v1034
    %v1045 = vpack.c.bf16 %v1037, %v1036
    %1046 = vmatpush.bf16.msra.mxu0 %v1045
    %1047 = vmatpush.bf16.msra.mxu0 %v1044
    %1048 = vmatpush.bf16.msra.mxu0 %v1043
    %1049 = vmatpush.bf16.msra.mxu0 %v1042
    %1050 = vmatpush.bf16.msra.mxu0 %v1041
    %1051 = vmatpush.bf16.msra.mxu0 %v1040
    %1052 = vmatpush.bf16.msra.mxu0 %v1039
    %1053 = vmatpush.bf16.msra.mxu0 %v1038
    %1054 = vmatmul.bf16.gmra.mxu0 %v466
    %v1055 = vpop.f32.mrf.mxu0
    %v1056 = vadd.f32 0.0, %v1055
    %v1057 = vpop.f32.mrf.mxu0
    %v1058 = vadd.f32 0.0, %v1057
    %1059 = vmatmul.bf16.gmra.mxu0 %v467
    %v1060 = vpop.f32.mrf.mxu0
    %v1061 = vadd.f32 0.0, %v1060
    %v1062 = vpop.f32.mrf.mxu0
    %v1063 = vadd.f32 0.0, %v1062
    %1064 = vmatmul.bf16.gmra.mxu0 %v468
    %v1065 = vpop.f32.mrf.mxu0
    %v1066 = vadd.f32 0.0, %v1065
    %v1067 = vpop.f32.mrf.mxu0
    %v1068 = vadd.f32 0.0, %v1067
    %1069 = vmatmul.bf16.gmra.mxu0 %v469
    %v1070 = vpop.f32.mrf.mxu0
    %v1071 = vadd.f32 0.0, %v1070
    %v1072 = vpop.f32.mrf.mxu0
    %v1073 = vadd.f32 0.0, %v1072
    %1074 = vmatmul.bf16.gmra.mxu0 %v470
    %v1075 = vpop.f32.mrf.mxu0
    %v1076 = vadd.f32 0.0, %v1075
    %v1077 = vpop.f32.mrf.mxu0
    %v1078 = vadd.f32 0.0, %v1077
    %1079 = vmatmul.bf16.gmra.mxu0 %v471
    %v1080 = vpop.f32.mrf.mxu0
    %v1081 = vadd.f32 0.0, %v1080
    %v1082 = vpop.f32.mrf.mxu0
    %v1083 = vadd.f32 0.0, %v1082
    %1084 = vmatmul.bf16.gmra.mxu0 %v472
    %v1085 = vpop.f32.mrf.mxu0
    %v1086 = vadd.f32 0.0, %v1085
    %v1087 = vpop.f32.mrf.mxu0
    %v1088 = vadd.f32 0.0, %v1087
    %1089 = vmatmul.bf16.gmra.mxu0 %v473
    %v1090 = vpop.f32.mrf.mxu0
    %v1091 = vadd.f32 0.0, %v1090
    %v1092 = vpop.f32.mrf.mxu0
    %v1093 = vadd.f32 0.0, %v1092
    %1094 = vdwg.mxu0
    %v1095 = vpack.c.bf16 %v1058, %v1056
    %v1096 = vpack.c.bf16 %v1063, %v1061
    %v1097 = vpack.c.bf16 %v1068, %v1066
    %v1098 = vpack.c.bf16 %v1073, %v1071
    %v1099 = vpack.c.bf16 %v1078, %v1076
    %v1100 = vpack.c.bf16 %v1083, %v1081
    %v1101 = vpack.c.bf16 %v1088, %v1086
    %v1102 = vpack.c.bf16 %v1093, %v1091
    %1103 = vmatpush.bf16.msra.mxu0 %v578
    %1104 = vmatpush.bf16.msra.mxu0 %v577
    %1105 = vmatpush.bf16.msra.mxu0 %v576
    %1106 = vmatpush.bf16.msra.mxu0 %v575
    %1107 = vmatpush.bf16.msra.mxu0 %v574
    %1108 = vmatpush.bf16.msra.mxu0 %v573
    %1109 = vmatpush.bf16.msra.mxu0 %v572
    %1110 = vmatpush.bf16.msra.mxu0 %v571
    %1111 = vmatmul.bf16.gmra.mxu0 %v1095
    %v1112 = vpop.f32.mrf.mxu0
    %v1113 = vadd.f32 0.0, %v1112
    %v1114 = vpop.f32.mrf.mxu0
    %v1115 = vadd.f32 0.0, %v1114
    %1116 = vmatmul.bf16.gmra.mxu0 %v1096
    %v1117 = vpop.f32.mrf.mxu0
    %v1118 = vadd.f32 0.0, %v1117
    %v1119 = vpop.f32.mrf.mxu0
    %v1120 = vadd.f32 0.0, %v1119
    %1121 = vmatmul.bf16.gmra.mxu0 %v1097
    %v1122 = vpop.f32.mrf.mxu0
    %v1123 = vadd.f32 0.0, %v1122
    %v1124 = vpop.f32.mrf.mxu0
    %v1125 = vadd.f32 0.0, %v1124
    %1126 = vmatmul.bf16.gmra.mxu0 %v1098
    %v1127 = vpop.f32.mrf.mxu0
    %v1128 = vadd.f32 0.0, %v1127
    %v1129 = vpop.f32.mrf.mxu0
    %v1130 = vadd.f32 0.0, %v1129
    %1131 = vmatmul.bf16.gmra.mxu0 %v1099
    %v1132 = vpop.f32.mrf.mxu0
    %v1133 = vadd.f32 0.0, %v1132
    %v1134 = vpop.f32.mrf.mxu0
    %v1135 = vadd.f32 0.0, %v1134
    %1136 = vmatmul.bf16.gmra.mxu0 %v1100
    %v1137 = vpop.f32.mrf.mxu0
    %v1138 = vadd.f32 0.0, %v1137
    %v1139 = vpop.f32.mrf.mxu0
    %v1140 = vadd.f32 0.0, %v1139
    %1141 = vmatmul.bf16.gmra.mxu0 %v1101
    %v1142 = vpop.f32.mrf.mxu0
    %v1143 = vadd.f32 0.0, %v1142
    %v1144 = vpop.f32.mrf.mxu0
    %v1145 = vadd.f32 0.0, %v1144
    %1146 = vmatmul.bf16.gmra.mxu0 %v1102
    %v1147 = vpop.f32.mrf.mxu0
    %v1148 = vadd.f32 0.0, %v1147
    %v1149 = vpop.f32.mrf.mxu0
    %v1150 = vadd.f32 0.0, %v1149
    %1151 = vdwg.mxu0
    %v1152 = vadd.f32 %v347, %v1113
    %v1153 = vadd.f32 %v349, %v1115
    %v1154 = vadd.f32 %v352, %v1118
    %v1155 = vadd.f32 %v354, %v1120
    %v1156 = vadd.f32 %v357, %v1123
    %v1157 = vadd.f32 %v359, %v1125
    %v1158 = vadd.f32 %v362, %v1128
    %v1159 = vadd.f32 %v364, %v1130
    %v1160 = vadd.f32 %v367, %v1133
    %v1161 = vadd.f32 %v369, %v1135
    %v1162 = vadd.f32 %v372, %v1138
    %v1163 = vadd.f32 %v374, %v1140
    %v1164 = vadd.f32 %v377, %v1143
    %v1165 = vadd.f32 %v379, %v1145
    %v1166 = vadd.f32 %v382, %v1148
    %v1167 = vadd.f32 %v384, %v1150
    %v1168 = vtanh.pop %v1152
    %v1169 = vtanh.pop %v1153
    %v1170 = vtanh.pop %v1154
    %v1171 = vtanh.pop %v1155
    %v1172 = vtanh.pop %v1156
    %v1173 = vtanh.pop %v1157
    %v1174 = vtanh.pop %v1158
    %v1175 = vtanh.pop %v1159
    %v1176 = vtanh.pop %v1160
    %v1177 = vtanh.pop %v1161
    %v1178 = vtanh.pop %v1162
    %v1179 = vtanh.pop %v1163
    %v1180 = vtanh.pop %v1164
    %v1181 = vtanh.pop %v1165
    %v1182 = vtanh.pop %v1166
    %v1183 = vtanh.pop %v1167
    %vm1184 = vcmp.eq.s32.totalorder %v418, 2
    %vm1185 = vcmp.eq.s32.totalorder %v419, 2
    %vm1186 = vcmp.eq.s32.totalorder %v420, 2
    %vm1187 = vcmp.eq.s32.totalorder %v421, 2
    %vm1188 = vcmp.eq.s32.totalorder %v422, 2
    %vm1189 = vcmp.eq.s32.totalorder %v423, 2
    %vm1190 = vcmp.eq.s32.totalorder %v424, 2
    %vm1191 = vcmp.eq.s32.totalorder %v425, 2
    %vm1192 = vcmp.eq.s32.totalorder %v426, 2
    %vm1193 = vcmp.eq.s32.totalorder %v427, 2
    %vm1194 = vcmp.eq.s32.totalorder %v428, 2
    %vm1195 = vcmp.eq.s32.totalorder %v429, 2
    %vm1196 = vcmp.eq.s32.totalorder %v430, 2
    %vm1197 = vcmp.eq.s32.totalorder %v431, 2
    %vm1198 = vcmp.eq.s32.totalorder %v432, 2
    %vm1199 = vcmp.eq.s32.totalorder %v433, 2
    %v1200 = vsel %vm1184, 1, 0
    %v1201 = vsel %vm1185, 1, 0
    %v1202 = vsel %vm1186, 1, 0
    %v1203 = vsel %vm1187, 1, 0
    %v1204 = vsel %vm1188, 1, 0
    %v1205 = vsel %vm1189, 1, 0
    %v1206 = vsel %vm1190, 1, 0
    %v1207 = vsel %vm1191, 1, 0
    %v1208 = vsel %vm1192, 1, 0
    %v1209 = vsel %vm1193, 1, 0
    %v1210 = vsel %vm1194, 1, 0
    %v1211 = vsel %vm1195, 1, 0
    %v1212 = vsel %vm1196, 1, 0
    %v1213 = vsel %vm1197, 1, 0
    %v1214 = vsel %vm1198, 1, 0
    %v1215 = vsel %vm1199, 1, 0
    %1216 = vset.pattern.permute.xlu0 0
    %1217 = vperm.xlu0 %1216, %v1200
    %v1218 = vpop.permute.xlu0 %1217
    %1219 = vset.pattern.permute.xlu0 0
    %1220 = vperm.xlu0 %1219, %v1201
    %v1221 = vpop.permute.xlu0 %1220
    %1222 = vset.pattern.permute.xlu0 0
    %1223 = vperm.xlu0 %1222, %v1202
    %v1224 = vpop.permute.xlu0 %1223
    %1225 = vset.pattern.permute.xlu0 0
    %1226 = vperm.xlu0 %1225, %v1203
    %v1227 = vpop.permute.xlu0 %1226
    %1228 = vset.pattern.permute.xlu0 0
    %1229 = vperm.xlu0 %1228, %v1204
    %v1230 = vpop.permute.xlu0 %1229
    %1231 = vset.pattern.permute.xlu0 0
    %1232 = vperm.xlu0 %1231, %v1205
    %v1233 = vpop.permute.xlu0 %1232
    %1234 = vset.pattern.permute.xlu0 0
    %1235 = vperm.xlu0 %1234, %v1206
    %v1236 = vpop.permute.xlu0 %1235
    %1237 = vset.pattern.permute.xlu0 0
    %1238 = vperm.xlu0 %1237, %v1207
    %v1239 = vpop.permute.xlu0 %1238
    %1240 = vset.pattern.permute.xlu0 0
    %1241 = vperm.xlu0 %1240, %v1208
    %v1242 = vpop.permute.xlu0 %1241
    %1243 = vset.pattern.permute.xlu0 0
    %1244 = vperm.xlu0 %1243, %v1209
    %v1245 = vpop.permute.xlu0 %1244
    %1246 = vset.pattern.permute.xlu0 0
    %1247 = vperm.xlu0 %1246, %v1210
    %v1248 = vpop.permute.xlu0 %1247
    %1249 = vset.pattern.permute.xlu0 0
    %1250 = vperm.xlu0 %1249, %v1211
    %v1251 = vpop.permute.xlu0 %1250
    %1252 = vset.pattern.permute.xlu0 0
    %1253 = vperm.xlu0 %1252, %v1212
    %v1254 = vpop.permute.xlu0 %1253
    %1255 = vset.pattern.permute.xlu0 0
    %1256 = vperm.xlu0 %1255, %v1213
    %v1257 = vpop.permute.xlu0 %1256
    %1258 = vset.pattern.permute.xlu0 0
    %1259 = vperm.xlu0 %1258, %v1214
    %v1260 = vpop.permute.xlu0 %1259
    %1261 = vset.pattern.permute.xlu0 0
    %1262 = vperm.xlu0 %1261, %v1215
    %v1263 = vpop.permute.xlu0 %1262
    %vm1264 = vcmp.eq.s32.totalorder %v1218, 1
    %vm1265 = vcmp.eq.s32.totalorder %v1221, 1
    %vm1266 = vcmp.eq.s32.totalorder %v1224, 1
    %vm1267 = vcmp.eq.s32.totalorder %v1227, 1
    %vm1268 = vcmp.eq.s32.totalorder %v1230, 1
    %vm1269 = vcmp.eq.s32.totalorder %v1233, 1
    %vm1270 = vcmp.eq.s32.totalorder %v1236, 1
    %vm1271 = vcmp.eq.s32.totalorder %v1239, 1
    %vm1272 = vcmp.eq.s32.totalorder %v1242, 1
    %vm1273 = vcmp.eq.s32.totalorder %v1245, 1
    %vm1274 = vcmp.eq.s32.totalorder %v1248, 1
    %vm1275 = vcmp.eq.s32.totalorder %v1251, 1
    %vm1276 = vcmp.eq.s32.totalorder %v1254, 1
    %vm1277 = vcmp.eq.s32.totalorder %v1257, 1
    %vm1278 = vcmp.eq.s32.totalorder %v1260, 1
    %vm1279 = vcmp.eq.s32.totalorder %v1263, 1
    %v1280 = vsel %vm1264, %v1168, %v1022
    %v1281 = vsel %vm1265, %v1169, %v1023
    %v1282 = vsel %vm1266, %v1170, %v1024
    %v1283 = vsel %vm1267, %v1171, %v1025
    %v1284 = vsel %vm1268, %v1172, %v1026
    %v1285 = vsel %vm1269, %v1173, %v1027
    %v1286 = vsel %vm1270, %v1174, %v1028
    %v1287 = vsel %vm1271, %v1175, %v1029
    %v1288 = vsel %vm1272, %v1176, %v1030
    %v1289 = vsel %vm1273, %v1177, %v1031
    %v1290 = vsel %vm1274, %v1178, %v1032
    %v1291 = vsel %vm1275, %v1179, %v1033
    %v1292 = vsel %vm1276, %v1180, %v1034
    %v1293 = vsel %vm1277, %v1181, %v1035
    %v1294 = vsel %vm1278, %v1182, %v1036
    %v1295 = vsel %vm1279, %v1183, %v1037
    %v1296 = vpack.c.bf16 %v1281, %v1280
    %v1297 = vpack.c.bf16 %v1283, %v1282
    %v1298 = vpack.c.bf16 %v1285, %v1284
    %v1299 = vpack.c.bf16 %v1287, %v1286
    %v1300 = vpack.c.bf16 %v1289, %v1288
    %v1301 = vpack.c.bf16 %v1291, %v1290
    %v1302 = vpack.c.bf16 %v1293, %v1292
    %v1303 = vpack.c.bf16 %v1295, %v1294
    %1304 = vmatpush.bf16.msra.mxu0 %v1303
    %1305 = vmatpush.bf16.msra.mxu0 %v1302
    %1306 = vmatpush.bf16.msra.mxu0 %v1301
    %1307 = vmatpush.bf16.msra.mxu0 %v1300
    %1308 = vmatpush.bf16.msra.mxu0 %v1299
    %1309 = vmatpush.bf16.msra.mxu0 %v1298
    %1310 = vmatpush.bf16.msra.mxu0 %v1297
    %1311 = vmatpush.bf16.msra.mxu0 %v1296
    %1312 = vmatmul.bf16.gmra.mxu0 %v466
    %v1313 = vpop.f32.mrf.mxu0
    %v1314 = vadd.f32 0.0, %v1313
    %v1315 = vpop.f32.mrf.mxu0
    %v1316 = vadd.f32 0.0, %v1315
    %1317 = vmatmul.bf16.gmra.mxu0 %v467
    %v1318 = vpop.f32.mrf.mxu0
    %v1319 = vadd.f32 0.0, %v1318
    %v1320 = vpop.f32.mrf.mxu0
    %v1321 = vadd.f32 0.0, %v1320
    %1322 = vmatmul.bf16.gmra.mxu0 %v468
    %v1323 = vpop.f32.mrf.mxu0
    %v1324 = vadd.f32 0.0, %v1323
    %v1325 = vpop.f32.mrf.mxu0
    %v1326 = vadd.f32 0.0, %v1325
    %1327 = vmatmul.bf16.gmra.mxu0 %v469
    %v1328 = vpop.f32.mrf.mxu0
    %v1329 = vadd.f32 0.0, %v1328
    %v1330 = vpop.f32.mrf.mxu0
    %v1331 = vadd.f32 0.0, %v1330
    %1332 = vmatmul.bf16.gmra.mxu0 %v470
    %v1333 = vpop.f32.mrf.mxu0
    %v1334 = vadd.f32 0.0, %v1333
    %v1335 = vpop.f32.mrf.mxu0
    %v1336 = vadd.f32 0.0, %v1335
    %1337 = vmatmul.bf16.gmra.mxu0 %v471
    %v1338 = vpop.f32.mrf.mxu0
    %v1339 = vadd.f32 0.0, %v1338
    %v1340 = vpop.f32.mrf.mxu0
    %v1341 = vadd.f32 0.0, %v1340
    %1342 = vmatmul.bf16.gmra.mxu0 %v472
    %v1343 = vpop.f32.mrf.mxu0
    %v1344 = vadd.f32 0.0, %v1343
    %v1345 = vpop.f32.mrf.mxu0
    %v1346 = vadd.f32 0.0, %v1345
    %1347 = vmatmul.bf16.gmra.mxu0 %v473
    %v1348 = vpop.f32.mrf.mxu0
    %v1349 = vadd.f32 0.0, %v1348
    %v1350 = vpop.f32.mrf.mxu0
    %v1351 = vadd.f32 0.0, %v1350
    %1352 = vdwg.mxu0
    %v1353 = vpack.c.bf16 %v1316, %v1314
    %v1354 = vpack.c.bf16 %v1321, %v1319
    %v1355 = vpack.c.bf16 %v1326, %v1324
    %v1356 = vpack.c.bf16 %v1331, %v1329
    %v1357 = vpack.c.bf16 %v1336, %v1334
    %v1358 = vpack.c.bf16 %v1341, %v1339
    %v1359 = vpack.c.bf16 %v1346, %v1344
    %v1360 = vpack.c.bf16 %v1351, %v1349
    %1361 = vmatpush.bf16.msra.mxu0 %v578
    %1362 = vmatpush.bf16.msra.mxu0 %v577
    %1363 = vmatpush.bf16.msra.mxu0 %v576
    %1364 = vmatpush.bf16.msra.mxu0 %v575
    %1365 = vmatpush.bf16.msra.mxu0 %v574
    %1366 = vmatpush.bf16.msra.mxu0 %v573
    %1367 = vmatpush.bf16.msra.mxu0 %v572
    %1368 = vmatpush.bf16.msra.mxu0 %v571
    %1369 = vmatmul.bf16.gmra.mxu0 %v1353
    %v1370 = vpop.f32.mrf.mxu0
    %v1371 = vadd.f32 0.0, %v1370
    %v1372 = vpop.f32.mrf.mxu0
    %v1373 = vadd.f32 0.0, %v1372
    %1374 = vmatmul.bf16.gmra.mxu0 %v1354
    %v1375 = vpop.f32.mrf.mxu0
    %v1376 = vadd.f32 0.0, %v1375
    %v1377 = vpop.f32.mrf.mxu0
    %v1378 = vadd.f32 0.0, %v1377
    %1379 = vmatmul.bf16.gmra.mxu0 %v1355
    %v1380 = vpop.f32.mrf.mxu0
    %v1381 = vadd.f32 0.0, %v1380
    %v1382 = vpop.f32.mrf.mxu0
    %v1383 = vadd.f32 0.0, %v1382
    %1384 = vmatmul.bf16.gmra.mxu0 %v1356
    %v1385 = vpop.f32.mrf.mxu0
    %v1386 = vadd.f32 0.0, %v1385
    %v1387 = vpop.f32.mrf.mxu0
    %v1388 = vadd.f32 0.0, %v1387
    %1389 = vmatmul.bf16.gmra.mxu0 %v1357
    %v1390 = vpop.f32.mrf.mxu0
    %v1391 = vadd.f32 0.0, %v1390
    %v1392 = vpop.f32.mrf.mxu0
    %v1393 = vadd.f32 0.0, %v1392
    %1394 = vmatmul.bf16.gmra.mxu0 %v1358
    %v1395 = vpop.f32.mrf.mxu0
    %v1396 = vadd.f32 0.0, %v1395
    %v1397 = vpop.f32.mrf.mxu0
    %v1398 = vadd.f32 0.0, %v1397
    %1399 = vmatmul.bf16.gmra.mxu0 %v1359
    %v1400 = vpop.f32.mrf.mxu0
    %v1401 = vadd.f32 0.0, %v1400
    %v1402 = vpop.f32.mrf.mxu0
    %v1403 = vadd.f32 0.0, %v1402
    %1404 = vmatmul.bf16.gmra.mxu0 %v1360
    %v1405 = vpop.f32.mrf.mxu0
    %v1406 = vadd.f32 0.0, %v1405
    %v1407 = vpop.f32.mrf.mxu0
    %v1408 = vadd.f32 0.0, %v1407
    %1409 = vdwg.mxu0
    %v1410 = vadd.f32 %v347, %v1371
    %v1411 = vadd.f32 %v349, %v1373
    %v1412 = vadd.f32 %v352, %v1376
    %v1413 = vadd.f32 %v354, %v1378
    %v1414 = vadd.f32 %v357, %v1381
    %v1415 = vadd.f32 %v359, %v1383
    %v1416 = vadd.f32 %v362, %v1386
    %v1417 = vadd.f32 %v364, %v1388
    %v1418 = vadd.f32 %v367, %v1391
    %v1419 = vadd.f32 %v369, %v1393
    %v1420 = vadd.f32 %v372, %v1396
    %v1421 = vadd.f32 %v374, %v1398
    %v1422 = vadd.f32 %v377, %v1401
    %v1423 = vadd.f32 %v379, %v1403
    %v1424 = vadd.f32 %v382, %v1406
    %v1425 = vadd.f32 %v384, %v1408
    %v1426 = vtanh.pop %v1410
    %v1427 = vtanh.pop %v1411
    %v1428 = vtanh.pop %v1412
    %v1429 = vtanh.pop %v1413
    %v1430 = vtanh.pop %v1414
    %v1431 = vtanh.pop %v1415
    %v1432 = vtanh.pop %v1416
    %v1433 = vtanh.pop %v1417
    %v1434 = vtanh.pop %v1418
    %v1435 = vtanh.pop %v1419
    %v1436 = vtanh.pop %v1420
    %v1437 = vtanh.pop %v1421
    %v1438 = vtanh.pop %v1422
    %v1439 = vtanh.pop %v1423
    %v1440 = vtanh.pop %v1424
    %v1441 = vtanh.pop %v1425
    %vm1442 = vcmp.eq.s32.totalorder %v418, 3
    %vm1443 = vcmp.eq.s32.totalorder %v419, 3
    %vm1444 = vcmp.eq.s32.totalorder %v420, 3
    %vm1445 = vcmp.eq.s32.totalorder %v421, 3
    %vm1446 = vcmp.eq.s32.totalorder %v422, 3
    %vm1447 = vcmp.eq.s32.totalorder %v423, 3
    %vm1448 = vcmp.eq.s32.totalorder %v424, 3
    %vm1449 = vcmp.eq.s32.totalorder %v425, 3
    %vm1450 = vcmp.eq.s32.totalorder %v426, 3
    %vm1451 = vcmp.eq.s32.totalorder %v427, 3
    %vm1452 = vcmp.eq.s32.totalorder %v428, 3
    %vm1453 = vcmp.eq.s32.totalorder %v429, 3
    %vm1454 = vcmp.eq.s32.totalorder %v430, 3
    %vm1455 = vcmp.eq.s32.totalorder %v431, 3
    %vm1456 = vcmp.eq.s32.totalorder %v432, 3
    %vm1457 = vcmp.eq.s32.totalorder %v433, 3
    %v1458 = vsel %vm1442, 1, 0
    %v1459 = vsel %vm1443, 1, 0
    %v1460 = vsel %vm1444, 1, 0
    %v1461 = vsel %vm1445, 1, 0
    %v1462 = vsel %vm1446, 1, 0
    %v1463 = vsel %vm1447, 1, 0
    %v1464 = vsel %vm1448, 1, 0
    %v1465 = vsel %vm1449, 1, 0
    %v1466 = vsel %vm1450, 1, 0
    %v1467 = vsel %vm1451, 1, 0
    %v1468 = vsel %vm1452, 1, 0
    %v1469 = vsel %vm1453, 1, 0
    %v1470 = vsel %vm1454, 1, 0
    %v1471 = vsel %vm1455, 1, 0
    %v1472 = vsel %vm1456, 1, 0
    %v1473 = vsel %vm1457, 1, 0
    %1474 = vset.pattern.permute.xlu0 0
    %1475 = vperm.xlu0 %1474, %v1458
    %v1476 = vpop.permute.xlu0 %1475
    %1477 = vset.pattern.permute.xlu0 0
    %1478 = vperm.xlu0 %1477, %v1459
    %v1479 = vpop.permute.xlu0 %1478
    %1480 = vset.pattern.permute.xlu0 0
    %1481 = vperm.xlu0 %1480, %v1460
    %v1482 = vpop.permute.xlu0 %1481
    %1483 = vset.pattern.permute.xlu0 0
    %1484 = vperm.xlu0 %1483, %v1461
    %v1485 = vpop.permute.xlu0 %1484
    %1486 = vset.pattern.permute.xlu0 0
    %1487 = vperm.xlu0 %1486, %v1462
    %v1488 = vpop.permute.xlu0 %1487
    %1489 = vset.pattern.permute.xlu0 0
    %1490 = vperm.xlu0 %1489, %v1463
    %v1491 = vpop.permute.xlu0 %1490
    %1492 = vset.pattern.permute.xlu0 0
    %1493 = vperm.xlu0 %1492, %v1464
    %v1494 = vpop.permute.xlu0 %1493
    %1495 = vset.pattern.permute.xlu0 0
    %1496 = vperm.xlu0 %1495, %v1465
    %v1497 = vpop.permute.xlu0 %1496
    %1498 = vset.pattern.permute.xlu0 0
    %1499 = vperm.xlu0 %1498, %v1466
    %v1500 = vpop.permute.xlu0 %1499
    %1501 = vset.pattern.permute.xlu0 0
    %1502 = vperm.xlu0 %1501, %v1467
    %v1503 = vpop.permute.xlu0 %1502
    %1504 = vset.pattern.permute.xlu0 0
    %1505 = vperm.xlu0 %1504, %v1468
    %v1506 = vpop.permute.xlu0 %1505
    %1507 = vset.pattern.permute.xlu0 0
    %1508 = vperm.xlu0 %1507, %v1469
    %v1509 = vpop.permute.xlu0 %1508
    %1510 = vset.pattern.permute.xlu0 0
    %1511 = vperm.xlu0 %1510, %v1470
    %v1512 = vpop.permute.xlu0 %1511
    %1513 = vset.pattern.permute.xlu0 0
    %1514 = vperm.xlu0 %1513, %v1471
    %v1515 = vpop.permute.xlu0 %1514
    %1516 = vset.pattern.permute.xlu0 0
    %1517 = vperm.xlu0 %1516, %v1472
    %v1518 = vpop.permute.xlu0 %1517
    %1519 = vset.pattern.permute.xlu0 0
    %1520 = vperm.xlu0 %1519, %v1473
    %v1521 = vpop.permute.xlu0 %1520
    %vm1522 = vcmp.eq.s32.totalorder %v1476, 1
    %vm1523 = vcmp.eq.s32.totalorder %v1479, 1
    %vm1524 = vcmp.eq.s32.totalorder %v1482, 1
    %vm1525 = vcmp.eq.s32.totalorder %v1485, 1
    %vm1526 = vcmp.eq.s32.totalorder %v1488, 1
    %vm1527 = vcmp.eq.s32.totalorder %v1491, 1
    %vm1528 = vcmp.eq.s32.totalorder %v1494, 1
    %vm1529 = vcmp.eq.s32.totalorder %v1497, 1
    %vm1530 = vcmp.eq.s32.totalorder %v1500, 1
    %vm1531 = vcmp.eq.s32.totalorder %v1503, 1
    %vm1532 = vcmp.eq.s32.totalorder %v1506, 1
    %vm1533 = vcmp.eq.s32.totalorder %v1509, 1
    %vm1534 = vcmp.eq.s32.totalorder %v1512, 1
    %vm1535 = vcmp.eq.s32.totalorder %v1515, 1
    %vm1536 = vcmp.eq.s32.totalorder %v1518, 1
    %vm1537 = vcmp.eq.s32.totalorder %v1521, 1
    %v1538 = vsel %vm1522, %v1426, %v1280
    %v1539 = vsel %vm1523, %v1427, %v1281
    %v1540 = vsel %vm1524, %v1428, %v1282
    %v1541 = vsel %vm1525, %v1429, %v1283
    %v1542 = vsel %vm1526, %v1430, %v1284
    %v1543 = vsel %vm1527, %v1431, %v1285
    %v1544 = vsel %vm1528, %v1432, %v1286
    %v1545 = vsel %vm1529, %v1433, %v1287
    %v1546 = vsel %vm1530, %v1434, %v1288
    %v1547 = vsel %vm1531, %v1435, %v1289
    %v1548 = vsel %vm1532, %v1436, %v1290
    %v1549 = vsel %vm1533, %v1437, %v1291
    %v1550 = vsel %vm1534, %v1438, %v1292
    %v1551 = vsel %vm1535, %v1439, %v1293
    %v1552 = vsel %vm1536, %v1440, %v1294
    %v1553 = vsel %vm1537, %v1441, %v1295
    %v1554 = vpack.c.bf16 %v1538, %v1538
    %v1555 = vpack.c.bf16 %v1539, %v1539
    %v1556 = vpack.c.bf16 %v1540, %v1540
    %v1557 = vpack.c.bf16 %v1541, %v1541
    %v1558 = vpack.c.bf16 %v1542, %v1542
    %v1559 = vpack.c.bf16 %v1543, %v1543
    %v1560 = vpack.c.bf16 %v1544, %v1544
    %v1561 = vpack.c.bf16 %v1545, %v1545
    %v1562 = vpack.c.bf16 %v1546, %v1546
    %v1563 = vpack.c.bf16 %v1547, %v1547
    %v1564 = vpack.c.bf16 %v1548, %v1548
    %v1565 = vpack.c.bf16 %v1549, %v1549
    %v1566 = vpack.c.bf16 %v1550, %v1550
    %v1567 = vpack.c.bf16 %v1551, %v1551
    %v1568 = vpack.c.bf16 %v1552, %v1552
    %v1569 = vpack.c.bf16 %v1553, %v1553
    %1570 = vst [vmem:[#allocation8] sm:$0xf] %v1554
    %1571 = vst [vmem:[#allocation8 + $0x4] sm:$0xf] %v1555
    %1572 = vst [vmem:[#allocation8 + $0x8] sm:$0xf] %v1556
    %1573 = vst [vmem:[#allocation8 + $0xc] sm:$0xf] %v1557
    %1574 = vst [vmem:[#allocation8 + $0x10] sm:$0xf] %v1558
    %1575 = vst [vmem:[#allocation8 + $0x14] sm:$0xf] %v1559
    %1576 = vst [vmem:[#allocation8 + $0x18] sm:$0xf] %v1560
    %1577 = vst [vmem:[#allocation8 + $0x1c] sm:$0xf] %v1561
    %1578 = vst [vmem:[#allocation8 + $0x20] sm:$0xf] %v1562
    %1579 = vst [vmem:[#allocation8 + $0x24] sm:$0xf] %v1563
    %1580 = vst [vmem:[#allocation8 + $0x28] sm:$0xf] %v1564
    %1581 = vst [vmem:[#allocation8 + $0x2c] sm:$0xf] %v1565
    %1582 = vst [vmem:[#allocation8 + $0x30] sm:$0xf] %v1566
    %1583 = vst [vmem:[#allocation8 + $0x34] sm:$0xf] %v1567
    %1584 = vst [vmem:[#allocation8 + $0x38] sm:$0xf] %v1568
    %1585 = vst [vmem:[#allocation8 + $0x3c] sm:$0xf] %v1569
    %v1586 = vld [vmem:[#allocation7] sm:$0xf]
    %v1587 = vld [vmem:[#allocation7 + $0x4] sm:$0xf]
    %v1588 = vld [vmem:[#allocation7 + $0x8] sm:$0xf]
    %v1589 = vld [vmem:[#allocation7 + $0xc] sm:$0xf]
    %v1590 = vld [vmem:[#allocation7 + $0x10] sm:$0xf]
    %v1591 = vld [vmem:[#allocation7 + $0x14] sm:$0xf]
    %v1592 = vld [vmem:[#allocation7 + $0x18] sm:$0xf]
    %v1593 = vld [vmem:[#allocation7 + $0x1c] sm:$0xf]
    %v1594 = vld [vmem:[#allocation7 + $0x20] sm:$0xf]
    %v1595 = vld [vmem:[#allocation7 + $0x24] sm:$0xf]
    %v1596 = vld [vmem:[#allocation7 + $0x28] sm:$0xf]
    %v1597 = vld [vmem:[#allocation7 + $0x2c] sm:$0xf]
    %v1598 = vld [vmem:[#allocation7 + $0x30] sm:$0xf]
    %v1599 = vld [vmem:[#allocation7 + $0x34] sm:$0xf]
    %v1600 = vld [vmem:[#allocation7 + $0x38] sm:$0xf]
    %v1601 = vld [vmem:[#allocation7 + $0x3c] sm:$0xf]
    %v1602 = vld [vmem:[%s8] sm:$0x1]
    %v1604 = vperm.slane %v1602, 0
    %v1622 = vunpack.c.l.b16 %v1554
    %v1623 = vunpack.c.l.b16 %v1555
    %v1624 = vunpack.c.l.b16 %v1556
    %v1625 = vunpack.c.l.b16 %v1557
    %v1626 = vunpack.c.l.b16 %v1558
    %v1627 = vunpack.c.l.b16 %v1559
    %v1628 = vunpack.c.l.b16 %v1560
    %v1629 = vunpack.c.l.b16 %v1561
    %v1630 = vunpack.c.l.b16 %v1562
    %v1631 = vunpack.c.l.b16 %v1563
    %v1632 = vunpack.c.l.b16 %v1564
    %v1633 = vunpack.c.l.b16 %v1565
    %v1634 = vunpack.c.l.b16 %v1566
    %v1635 = vunpack.c.l.b16 %v1567
    %v1636 = vunpack.c.l.b16 %v1568
    %v1637 = vunpack.c.l.b16 %v1569
    %v1638 = vpack.c.b16 %v1623, %v1622
    %v1639 = vpack.c.b16 %v1625, %v1624
    %v1640 = vpack.c.b16 %v1627, %v1626
    %v1641 = vpack.c.b16 %v1629, %v1628
    %v1642 = vpack.c.b16 %v1631, %v1630
    %v1643 = vpack.c.b16 %v1633, %v1632
    %v1644 = vpack.c.b16 %v1635, %v1634
    %v1645 = vpack.c.b16 %v1637, %v1636
    %v1670 = vunpack.c.l.b16 %v1586
    %v1671 = vunpack.c.l.b16 %v1587
    %v1672 = vunpack.c.l.b16 %v1588
    %v1673 = vunpack.c.l.b16 %v1589
    %v1674 = vunpack.c.l.b16 %v1590
    %v1675 = vunpack.c.l.b16 %v1591
    %v1676 = vunpack.c.l.b16 %v1592
    %v1677 = vunpack.c.l.b16 %v1593
    %v1678 = vunpack.c.l.b16 %v1594
    %v1679 = vunpack.c.l.b16 %v1595
    %v1680 = vunpack.c.l.b16 %v1596
    %v1681 = vunpack.c.l.b16 %v1597
    %v1682 = vunpack.c.l.b16 %v1598
    %v1683 = vunpack.c.l.b16 %v1599
    %v1684 = vunpack.c.l.b16 %v1600
    %v1685 = vunpack.c.l.b16 %v1601
    %v1686 = vpack.c.b16 %v1671, %v1670
    %v1687 = vpack.c.b16 %v1673, %v1672
    %v1688 = vpack.c.b16 %v1675, %v1674
    %v1689 = vpack.c.b16 %v1677, %v1676
    %v1690 = vpack.c.b16 %v1679, %v1678
    %v1691 = vpack.c.b16 %v1681, %v1680
    %v1692 = vpack.c.b16 %v1683, %v1682
    %v1693 = vpack.c.b16 %v1685, %v1684
    %1702 = vmatpush.bf16.msra.mxu0 %v1693
    %1703 = vmatpush.bf16.msra.mxu0 %v1692
    %1704 = vmatpush.bf16.msra.mxu0 %v1691
    %1705 = vmatpush.bf16.msra.mxu0 %v1690
    %1706 = vmatpush.bf16.msra.mxu0 %v1689
    %1707 = vmatpush.bf16.msra.mxu0 %v1688
    %1708 = vmatpush.bf16.msra.mxu0 %v1687
    %1709 = vmatpush.bf16.msra.mxu0 %v1686
    %1710 = vmatmul.bf16.gmra.mxu0 %v1638
    %v1711 = vpop.f32.mrf.mxu0
    %v1712 = vadd.f32 %v1604, %v1711
    %v1713 = vpop.f32.mrf.mxu0
    %v1714 = vadd.f32 %v1604, %v1713
    %1715 = vmatmul.bf16.gmra.mxu0 %v1639
    %v1716 = vpop.f32.mrf.mxu0
    %v1717 = vadd.f32 %v1604, %v1716
    %v1718 = vpop.f32.mrf.mxu0
    %v1719 = vadd.f32 %v1604, %v1718
    %1720 = vmatmul.bf16.gmra.mxu0 %v1640
    %v1721 = vpop.f32.mrf.mxu0
    %v1722 = vadd.f32 %v1604, %v1721
    %v1723 = vpop.f32.mrf.mxu0
    %v1724 = vadd.f32 %v1604, %v1723
    %1725 = vmatmul.bf16.gmra.mxu0 %v1641
    %v1726 = vpop.f32.mrf.mxu0
    %v1727 = vadd.f32 %v1604, %v1726
    %v1728 = vpop.f32.mrf.mxu0
    %v1729 = vadd.f32 %v1604, %v1728
    %1730 = vmatmul.bf16.gmra.mxu0 %v1642
    %v1731 = vpop.f32.mrf.mxu0
    %v1732 = vadd.f32 %v1604, %v1731
    %v1733 = vpop.f32.mrf.mxu0
    %v1734 = vadd.f32 %v1604, %v1733
    %1735 = vmatmul.bf16.gmra.mxu0 %v1643
    %v1736 = vpop.f32.mrf.mxu0
    %v1737 = vadd.f32 %v1604, %v1736
    %v1738 = vpop.f32.mrf.mxu0
    %v1739 = vadd.f32 %v1604, %v1738
    %1740 = vmatmul.bf16.gmra.mxu0 %v1644
    %v1741 = vpop.f32.mrf.mxu0
    %v1742 = vadd.f32 %v1604, %v1741
    %v1743 = vpop.f32.mrf.mxu0
    %v1744 = vadd.f32 %v1604, %v1743
    %1745 = vmatmul.bf16.gmra.mxu0 %v1645
    %v1746 = vpop.f32.mrf.mxu0
    %v1747 = vadd.f32 %v1604, %v1746
    %v1748 = vpop.f32.mrf.mxu0
    %v1749 = vadd.f32 %v1604, %v1748
    %1750 = vdwg.mxu0
    %1751 = vst [vmem:[#allocation9] sm:$0xff] %v1712
    %1752 = vst [vmem:[#allocation9 + $0x8] sm:$0xff] %v1714
    %1753 = vst [vmem:[#allocation9 + $0x10] sm:$0xff] %v1717
    %1754 = vst [vmem:[#allocation9 + $0x18] sm:$0xff] %v1719
    %1755 = vst [vmem:[#allocation9 + $0x20] sm:$0xff] %v1722
    %1756 = vst [vmem:[#allocation9 + $0x28] sm:$0xff] %v1724
    %1757 = vst [vmem:[#allocation9 + $0x30] sm:$0xff] %v1727
    %1758 = vst [vmem:[#allocation9 + $0x38] sm:$0xff] %v1729
    %1759 = vst [vmem:[#allocation9 + $0x40] sm:$0xff] %v1732
    %1760 = vst [vmem:[#allocation9 + $0x48] sm:$0xff] %v1734
    %1761 = vst [vmem:[#allocation9 + $0x50] sm:$0xff] %v1737
    %1762 = vst [vmem:[#allocation9 + $0x58] sm:$0xff] %v1739
    %1763 = vst [vmem:[#allocation9 + $0x60] sm:$0xff] %v1742
    %1764 = vst [vmem:[#allocation9 + $0x68] sm:$0xff] %v1744
    %1765 = vst [vmem:[#allocation9 + $0x70] sm:$0xff] %v1747
    %1766 = vst [vmem:[#allocation9 + $0x78] sm:$0xff] %v1749
    // Predicated region
    $region50: #{_tree2tree_jit.3} parent=1 // pred_check
      _
    $region51: #{_tree2tree_jit.3} parent=1 // pred_check_branch
      %1768 = sbr.rel (0) target = $region53
    $region52: #{_tree2tree_jit.3} parent=1 // pred_region
      %1770 = vsyncadd [#allocation4], 0
      %s1771 = sshll.u32 [#allocation8], 4
      %s1772 = int_to_ptr.vmem [resolvable:$true] %s1771
      %s1773 = sshll.u32 %s9, 4
      %s1774 = int_to_ptr.hbm [resolvable:$true] %s1773
      %1779 = dma.vmem_to_hbm [thread:$0]  %s1772, 1024, %s1774, [#allocation4], 64, 64, 4
    $region53: #{_tree2tree_jit.3} parent=1 // pred_fallthru
      _
    // Predicated region
    $region54: #{_tree2tree_jit.3} parent=1 // pred_check
      _
    $region55: #{_tree2tree_jit.3} parent=1 // pred_check_branch
      %1781 = sbr.rel (0) target = $region57
    $region56: #{_tree2tree_jit.3} parent=1 // pred_region
      %1783 = vsyncadd [#allocation10], 0
      %s1784 = sshll.u32 [#allocation9], 4
      %s1785 = int_to_ptr.vmem [resolvable:$true] %s1784
      %s1786 = sshll.u32 %s10, 4
      %s1787 = int_to_ptr.hbm [resolvable:$true] %s1786
      %1792 = dma.vmem_to_hbm [thread:$0]  %s1785, 2048, %s1787, [#allocation10], 128, 128, 8
    $region57: #{_tree2tree_jit.3} parent=1 // pred_fallthru
      _
    // Predicated region
    $region58: #{_tree2tree_jit.3} parent=1 // pred_check
      _
    $region59: #{_tree2tree_jit.3} parent=1 // pred_check_branch
      %1794 = sbr.rel (0) target = $region61
    $region60: #{_tree2tree_jit.3} parent=1 // pred_region
      %1796 = dma.done [#allocation4], 1024
    $region61: #{_tree2tree_jit.3} parent=1 // pred_fallthru
      _
    // Predicated region
    $region62: #{_tree2tree_jit.3} parent=1 // pred_check
      _
    $region63: #{_tree2tree_jit.3} parent=1 // pred_check_branch
      %1798 = sbr.rel (0) target = $region65
    $region64: #{_tree2tree_jit.3} parent=1 // pred_region
      %1800 = dma.done [#allocation10], 2048
    $region65: #{_tree2tree_jit.3} parent=1 // pred_fallthru
      _
    %1801 = vsyncpa [#allocation3], 1
    %1802 = vsyncpa [#allocation6], 1
    %1803 = vsyncpa [#allocation4], 1
    %1804 = vsyncpa [#allocation10], 1

// kernel: _tree2tree_jit.2
$region0: #{_tree2tree_jit.2}
  #allocation0 [shape = 'u32[]', space=smem, size = 0x4, offset = 0x4, fixed_abs, tag = 'smem constant byte address 0x4 - core index']
  #allocation1 [shape = 'u32[72,128]{1,0:T(1,128)}', space=vmem, size = 0x9000, scoped, tag = 'internal scratch']
  %s0 = inlined_call_operand.vmem [shape: s32[128,1], index: 0, kind: input, shape index: {}]
  %s1 = inlined_call_operand.hbm [shape: bf16[128,128], index: 1, kind: input, shape index: {}]
  %s2 = inlined_call_operand.hbm [shape: f32[128,128], index: 2, kind: input, shape index: {}]
  %s3 = inlined_call_operand.vmem [shape: f32[128,1], index: 3, kind: input, shape index: {}]
  %s4 = inlined_call_operand.vmem [shape: bf16[128,512], index: 4, kind: input, shape index: {}]
  %s5 = inlined_call_operand.hbm [shape: bf16[128,512], index: 5, kind: input, shape index: {}]
  %s6 = inlined_call_operand.vmem [shape: f32[1,512], index: 6, kind: input, shape index: {}]
  %s7 = inlined_call_operand.vmem [shape: bf16[128,128], index: 7, kind: output, shape index: {}]
  %s8 = sld [smem:[#allocation0]]
  $region50: #{_tree2tree_jit.2} parent=0
    _
  %s10 = ssub.s32 1, %s8
  %s11 = scalar_select 0, %s10, %s8
  $region1: #{_tree2tree_jit.2} parent=0
    #allocation2 [shape = 'u8[32768]{0}', space=vmem, size = 0x8000, scoped, tag = 'input window, operand 1, single buffered']
    #allocation3 [shape = 's32[1]{0}', space=sflag, size = 0x4, scoped, tag = 'scoped memory for _tree2tree_jit.2']
    #allocation4 [shape = 'u8[65536]{0}', space=vmem, size = 0x10000, scoped, tag = 'input window, operand 2, single buffered']
    #allocation5 [shape = 's32[1]{0}', space=sflag, size = 0x4, scoped, tag = 'scoped memory for _tree2tree_jit.2']
    #allocation6 [shape = 'u8[131072]{0}', space=vmem, size = 0x20000, scoped, tag = 'input window, operand 5, single buffered']
    %12 = vsyncpa [#allocation3], 0
    %13 = vsyncpa [#allocation5], 0
    // Predicated region
    $region2: #{_tree2tree_jit.2} parent=1 // pred_check
      _
    $region3: #{_tree2tree_jit.2} parent=1 // pred_check_branch
      %15 = sbr.rel (0) target = $region5
    $region4: #{_tree2tree_jit.2} parent=1 // pred_region
      _
    $region5: #{_tree2tree_jit.2} parent=1 // pred_fallthru
      _
    // Predicated region
    $region6: #{_tree2tree_jit.2} parent=1 // pred_check
      _
    $region7: #{_tree2tree_jit.2} parent=1 // pred_check_branch
      %17 = sbr.rel (0) target = $region9
    $region8: #{_tree2tree_jit.2} parent=1 // pred_region
      %19 = vsyncadd [#allocation3], 0
      %s20 = sshll.u32 %s1, 4
      %s21 = int_to_ptr.hbm [resolvable:$true] %s20
      %s22 = sshll.u32 [#allocation2], 4
      %s23 = int_to_ptr.vmem [resolvable:$true] %s22
      %28 = dma.hbm_to_vmem [thread:$0]  %s21, 1024, %s23, [#allocation3], 64, 64, 4
    $region9: #{_tree2tree_jit.2} parent=1 // pred_fallthru
      _
    // Predicated region
    $region10: #{_tree2tree_jit.2} parent=1 // pred_check
      _
    $region11: #{_tree2tree_jit.2} parent=1 // pred_check_branch
      %30 = sbr.rel (0) target = $region13
    $region12: #{_tree2tree_jit.2} parent=1 // pred_region
      %32 = vsyncadd [#allocation5], 0
      %s33 = sshll.u32 %s2, 4
      %s34 = int_to_ptr.hbm [resolvable:$true] %s33
      %s35 = sshll.u32 [#allocation4], 4
      %s36 = int_to_ptr.vmem [resolvable:$true] %s35
      %41 = dma.hbm_to_vmem [thread:$0]  %s34, 2048, %s36, [#allocation5], 128, 128, 8
    $region13: #{_tree2tree_jit.2} parent=1 // pred_fallthru
      _
    // Predicated region
    $region14: #{_tree2tree_jit.2} parent=1 // pred_check
      _
    $region15: #{_tree2tree_jit.2} parent=1 // pred_check_branch
      %43 = sbr.rel (0) target = $region17
    $region16: #{_tree2tree_jit.2} parent=1 // pred_region
      _
    $region17: #{_tree2tree_jit.2} parent=1 // pred_fallthru
      _
    // Predicated region
    $region18: #{_tree2tree_jit.2} parent=1 // pred_check
      _
    $region19: #{_tree2tree_jit.2} parent=1 // pred_check_branch
      %45 = sbr.rel (0) target = $region21
    $region20: #{_tree2tree_jit.2} parent=1 // pred_region
      _
    $region21: #{_tree2tree_jit.2} parent=1 // pred_fallthru
      _
    // Predicated region
    $region22: #{_tree2tree_jit.2} parent=1 // pred_check
      _
    $region23: #{_tree2tree_jit.2} parent=1 // pred_check_branch
      %47 = sbr.rel (0) target = $region25
    $region24: #{_tree2tree_jit.2} parent=1 // pred_region
      %49 = vsyncadd [#allocation5], 0
      %s50 = sshll.u32 %s5, 4
      %s51 = int_to_ptr.hbm [resolvable:$true] %s50
      %s52 = sshll.u32 [#allocation6], 4
      %s53 = int_to_ptr.vmem [resolvable:$true] %s52
      %58 = dma.hbm_to_vmem [thread:$0]  %s51, 4096, %s53, [#allocation5], 256, 256, 16
    $region25: #{_tree2tree_jit.2} parent=1 // pred_fallthru
      _
    // Predicated region
    $region26: #{_tree2tree_jit.2} parent=1 // pred_check
      _
    $region27: #{_tree2tree_jit.2} parent=1 // pred_check_branch
      %60 = sbr.rel (0) target = $region29
    $region28: #{_tree2tree_jit.2} parent=1 // pred_region
      _
    $region29: #{_tree2tree_jit.2} parent=1 // pred_fallthru
      _
    // Predicated region
    $region30: #{_tree2tree_jit.2} parent=1 // pred_check
      _
    $region31: #{_tree2tree_jit.2} parent=1 // pred_check_branch
      %62 = sbr.rel (0) target = $region33
    $region32: #{_tree2tree_jit.2} parent=1 // pred_region
      %64 = dma.done [#allocation3], 1024
    $region33: #{_tree2tree_jit.2} parent=1 // pred_fallthru
      _
    // Predicated region
    $region34: #{_tree2tree_jit.2} parent=1 // pred_check
      _
    $region35: #{_tree2tree_jit.2} parent=1 // pred_check_branch
      %66 = sbr.rel (0) target = $region37
    $region36: #{_tree2tree_jit.2} parent=1 // pred_region
      %68 = dma.done [#allocation5], 2048
    $region37: #{_tree2tree_jit.2} parent=1 // pred_fallthru
      _
    // Predicated region
    $region38: #{_tree2tree_jit.2} parent=1 // pred_check
      _
    $region39: #{_tree2tree_jit.2} parent=1 // pred_check_branch
      %70 = sbr.rel (0) target = $region41
    $region40: #{_tree2tree_jit.2} parent=1 // pred_region
      %72 = dma.done [#allocation5], 4096
    $region41: #{_tree2tree_jit.2} parent=1 // pred_fallthru
      _
    %v74 = vld [vmem:[#allocation4] sm:$0xff]
    %v75 = vld [vmem:[#allocation4 + $0x8] sm:$0xff]
    %v76 = vld [vmem:[#allocation4 + $0x10] sm:$0xff]
    %v77 = vld [vmem:[#allocation4 + $0x18] sm:$0xff]
    %v78 = vld [vmem:[#allocation4 + $0x20] sm:$0xff]
    %v79 = vld [vmem:[#allocation4 + $0x28] sm:$0xff]
    %v80 = vld [vmem:[#allocation4 + $0x30] sm:$0xff]
    %v81 = vld [vmem:[#allocation4 + $0x38] sm:$0xff]
    %v82 = vld [vmem:[#allocation4 + $0x40] sm:$0xff]
    %v83 = vld [vmem:[#allocation4 + $0x48] sm:$0xff]
    %v84 = vld [vmem:[#allocation4 + $0x50] sm:$0xff]
    %v85 = vld [vmem:[#allocation4 + $0x58] sm:$0xff]
    %v86 = vld [vmem:[#allocation4 + $0x60] sm:$0xff]
    %v87 = vld [vmem:[#allocation4 + $0x68] sm:$0xff]
    %v88 = vld [vmem:[#allocation4 + $0x70] sm:$0xff]
    %v89 = vld [vmem:[#allocation4 + $0x78] sm:$0xff]
    %v90 = vld [vmem:[%s3] sm:$0xff]
    %v91 = vld [vmem:[%s3 + $0x8] sm:$0xff]
    %v92 = vld [vmem:[%s3 + $0x10] sm:$0xff]
    %v93 = vld [vmem:[%s3 + $0x18] sm:$0xff]
    %v94 = vld [vmem:[%s3 + $0x20] sm:$0xff]
    %v95 = vld [vmem:[%s3 + $0x28] sm:$0xff]
    %v96 = vld [vmem:[%s3 + $0x30] sm:$0xff]
    %v97 = vld [vmem:[%s3 + $0x38] sm:$0xff]
    %v98 = vld [vmem:[%s3 + $0x40] sm:$0xff]
    %v99 = vld [vmem:[%s3 + $0x48] sm:$0xff]
    %v100 = vld [vmem:[%s3 + $0x50] sm:$0xff]
    %v101 = vld [vmem:[%s3 + $0x58] sm:$0xff]
    %v102 = vld [vmem:[%s3 + $0x60] sm:$0xff]
    %v103 = vld [vmem:[%s3 + $0x68] sm:$0xff]
    %v104 = vld [vmem:[%s3 + $0x70] sm:$0xff]
    %v105 = vld [vmem:[%s3 + $0x78] sm:$0xff]
    %107 = vset.pattern.permute.xlu0 0
    %108 = vperm.xlu0 %107, %v90
    %v109 = vpop.permute.xlu0 %108
    %112 = vset.pattern.permute.xlu0 0
    %113 = vperm.xlu0 %112, %v91
    %v114 = vpop.permute.xlu0 %113
    %117 = vset.pattern.permute.xlu0 0
    %118 = vperm.xlu0 %117, %v92
    %v119 = vpop.permute.xlu0 %118
    %122 = vset.pattern.permute.xlu0 0
    %123 = vperm.xlu0 %122, %v93
    %v124 = vpop.permute.xlu0 %123
    %127 = vset.pattern.permute.xlu0 0
    %128 = vperm.xlu0 %127, %v94
    %v129 = vpop.permute.xlu0 %128
    %132 = vset.pattern.permute.xlu0 0
    %133 = vperm.xlu0 %132, %v95
    %v134 = vpop.permute.xlu0 %133
    %137 = vset.pattern.permute.xlu0 0
    %138 = vperm.xlu0 %137, %v96
    %v139 = vpop.permute.xlu0 %138
    %142 = vset.pattern.permute.xlu0 0
    %143 = vperm.xlu0 %142, %v97
    %v144 = vpop.permute.xlu0 %143
    %147 = vset.pattern.permute.xlu0 0
    %148 = vperm.xlu0 %147, %v98
    %v149 = vpop.permute.xlu0 %148
    %152 = vset.pattern.permute.xlu0 0
    %153 = vperm.xlu0 %152, %v99
    %v154 = vpop.permute.xlu0 %153
    %157 = vset.pattern.permute.xlu0 0
    %158 = vperm.xlu0 %157, %v100
    %v159 = vpop.permute.xlu0 %158
    %162 = vset.pattern.permute.xlu0 0
    %163 = vperm.xlu0 %162, %v101
    %v164 = vpop.permute.xlu0 %163
    %167 = vset.pattern.permute.xlu0 0
    %168 = vperm.xlu0 %167, %v102
    %v169 = vpop.permute.xlu0 %168
    %172 = vset.pattern.permute.xlu0 0
    %173 = vperm.xlu0 %172, %v103
    %v174 = vpop.permute.xlu0 %173
    %177 = vset.pattern.permute.xlu0 0
    %178 = vperm.xlu0 %177, %v104
    %v179 = vpop.permute.xlu0 %178
    %182 = vset.pattern.permute.xlu0 0
    %183 = vperm.xlu0 %182, %v105
    %v184 = vpop.permute.xlu0 %183
    %v186 = vmul.f32 %v74, %v109
    %v187 = vmul.f32 %v75, %v114
    %v188 = vmul.f32 %v76, %v119
    %v189 = vmul.f32 %v77, %v124
    %v190 = vmul.f32 %v78, %v129
    %v191 = vmul.f32 %v79, %v134
    %v192 = vmul.f32 %v80, %v139
    %v193 = vmul.f32 %v81, %v144
    %v194 = vmul.f32 %v82, %v149
    %v195 = vmul.f32 %v83, %v154
    %v196 = vmul.f32 %v84, %v159
    %v197 = vmul.f32 %v85, %v164
    %v198 = vmul.f32 %v86, %v169
    %v199 = vmul.f32 %v87, %v174
    %v200 = vmul.f32 %v88, %v179
    %v201 = vmul.f32 %v89, %v184
    %v202 = vpack.c.bf16 %v187, %v186
    %v203 = vpack.c.bf16 %v189, %v188
    %v204 = vpack.c.bf16 %v191, %v190
    %v205 = vpack.c.bf16 %v193, %v192
    %v206 = vpack.c.bf16 %v195, %v194
    %v207 = vpack.c.bf16 %v197, %v196
    %v208 = vpack.c.bf16 %v199, %v198
    %v209 = vpack.c.bf16 %v201, %v200
    %v210 = vld [vmem:[%s4] sm:$0xff]
    %v211 = vld [vmem:[%s4 + $0x8] sm:$0xff]
    %v212 = vld [vmem:[%s4 + $0x10] sm:$0xff]
    %v213 = vld [vmem:[%s4 + $0x18] sm:$0xff]
    %v214 = vld [vmem:[%s4 + $0x20] sm:$0xff]
    %v215 = vld [vmem:[%s4 + $0x28] sm:$0xff]
    %v216 = vld [vmem:[%s4 + $0x30] sm:$0xff]
    %v217 = vld [vmem:[%s4 + $0x38] sm:$0xff]
    %v218 = vld [vmem:[%s4 + $0x40] sm:$0xff]
    %v219 = vld [vmem:[%s4 + $0x48] sm:$0xff]
    %v220 = vld [vmem:[%s4 + $0x50] sm:$0xff]
    %v221 = vld [vmem:[%s4 + $0x58] sm:$0xff]
    %v222 = vld [vmem:[%s4 + $0x60] sm:$0xff]
    %v223 = vld [vmem:[%s4 + $0x68] sm:$0xff]
    %v224 = vld [vmem:[%s4 + $0x70] sm:$0xff]
    %v225 = vld [vmem:[%s4 + $0x78] sm:$0xff]
    %v226 = vld [vmem:[%s4 + $0x80] sm:$0xff]
    %v227 = vld [vmem:[%s4 + $0x88] sm:$0xff]
    %v228 = vld [vmem:[%s4 + $0x90] sm:$0xff]
    %v229 = vld [vmem:[%s4 + $0x98] sm:$0xff]
    %v230 = vld [vmem:[%s4 + $0xa0] sm:$0xff]
    %v231 = vld [vmem:[%s4 + $0xa8] sm:$0xff]
    %v232 = vld [vmem:[%s4 + $0xb0] sm:$0xff]
    %v233 = vld [vmem:[%s4 + $0xb8] sm:$0xff]
    %v234 = vld [vmem:[%s4 + $0xc0] sm:$0xff]
    %v235 = vld [vmem:[%s4 + $0xc8] sm:$0xff]
    %v236 = vld [vmem:[%s4 + $0xd0] sm:$0xff]
    %v237 = vld [vmem:[%s4 + $0xd8] sm:$0xff]
    %v238 = vld [vmem:[%s4 + $0xe0] sm:$0xff]
    %v239 = vld [vmem:[%s4 + $0xe8] sm:$0xff]
    %v240 = vld [vmem:[%s4 + $0xf0] sm:$0xff]
    %v241 = vld [vmem:[%s4 + $0xf8] sm:$0xff]
    %v242 = vld [vmem:[%s6] sm:$0xf]
    %v244 = vperm.slane %v242, 0
    %v245 = vperm.slane %v242, 1
    %v246 = vperm.slane %v242, 2
    %v247 = vperm.slane %v242, 3
    %v284 = vunpack.c.l.b16 %v210
    %v285 = vunpack.c.h.b16 %v210
    %v286 = vunpack.c.l.b16 %v211
    %v287 = vunpack.c.h.b16 %v211
    %v288 = vunpack.c.l.b16 %v212
    %v289 = vunpack.c.h.b16 %v212
    %v290 = vunpack.c.l.b16 %v213
    %v291 = vunpack.c.h.b16 %v213
    %v292 = vunpack.c.l.b16 %v214
    %v293 = vunpack.c.h.b16 %v214
    %v294 = vunpack.c.l.b16 %v215
    %v295 = vunpack.c.h.b16 %v215
    %v296 = vunpack.c.l.b16 %v216
    %v297 = vunpack.c.h.b16 %v216
    %v298 = vunpack.c.l.b16 %v217
    %v299 = vunpack.c.h.b16 %v217
    %v300 = vunpack.c.l.b16 %v218
    %v301 = vunpack.c.h.b16 %v218
    %v302 = vunpack.c.l.b16 %v219
    %v303 = vunpack.c.h.b16 %v219
    %v304 = vunpack.c.l.b16 %v220
    %v305 = vunpack.c.h.b16 %v220
    %v306 = vunpack.c.l.b16 %v221
    %v307 = vunpack.c.h.b16 %v221
    %v308 = vunpack.c.l.b16 %v222
    %v309 = vunpack.c.h.b16 %v222
    %v310 = vunpack.c.l.b16 %v223
    %v311 = vunpack.c.h.b16 %v223
    %v312 = vunpack.c.l.b16 %v224
    %v313 = vunpack.c.h.b16 %v224
    %v314 = vunpack.c.l.b16 %v225
    %v315 = vunpack.c.h.b16 %v225
    %v316 = vunpack.c.l.b16 %v226
    %v317 = vunpack.c.h.b16 %v226
    %v318 = vunpack.c.l.b16 %v227
    %v319 = vunpack.c.h.b16 %v227
    %v320 = vunpack.c.l.b16 %v228
    %v321 = vunpack.c.h.b16 %v228
    %v322 = vunpack.c.l.b16 %v229
    %v323 = vunpack.c.h.b16 %v229
    %v324 = vunpack.c.l.b16 %v230
    %v325 = vunpack.c.h.b16 %v230
    %v326 = vunpack.c.l.b16 %v231
    %v327 = vunpack.c.h.b16 %v231
    %v328 = vunpack.c.l.b16 %v232
    %v329 = vunpack.c.h.b16 %v232
    %v330 = vunpack.c.l.b16 %v233
    %v331 = vunpack.c.h.b16 %v233
    %v332 = vunpack.c.l.b16 %v234
    %v333 = vunpack.c.h.b16 %v234
    %v334 = vunpack.c.l.b16 %v235
    %v335 = vunpack.c.h.b16 %v235
    %v336 = vunpack.c.l.b16 %v236
    %v337 = vunpack.c.h.b16 %v236
    %v338 = vunpack.c.l.b16 %v237
    %v339 = vunpack.c.h.b16 %v237
    %v340 = vunpack.c.l.b16 %v238
    %v341 = vunpack.c.h.b16 %v238
    %v342 = vunpack.c.l.b16 %v239
    %v343 = vunpack.c.h.b16 %v239
    %v344 = vunpack.c.l.b16 %v240
    %v345 = vunpack.c.h.b16 %v240
    %v346 = vunpack.c.l.b16 %v241
    %v347 = vunpack.c.h.b16 %v241
    %v348 = vpack.c.b16 %v288, %v284
    %v349 = vpack.c.b16 %v289, %v285
    %v350 = vpack.c.b16 %v290, %v286
    %v351 = vpack.c.b16 %v291, %v287
    %v352 = vpack.c.b16 %v296, %v292
    %v353 = vpack.c.b16 %v297, %v293
    %v354 = vpack.c.b16 %v298, %v294
    %v355 = vpack.c.b16 %v299, %v295
    %v356 = vpack.c.b16 %v304, %v300
    %v357 = vpack.c.b16 %v305, %v301
    %v358 = vpack.c.b16 %v306, %v302
    %v359 = vpack.c.b16 %v307, %v303
    %v360 = vpack.c.b16 %v312, %v308
    %v361 = vpack.c.b16 %v313, %v309
    %v362 = vpack.c.b16 %v314, %v310
    %v363 = vpack.c.b16 %v315, %v311
    %v364 = vpack.c.b16 %v320, %v316
    %v365 = vpack.c.b16 %v321, %v317
    %v366 = vpack.c.b16 %v322, %v318
    %v367 = vpack.c.b16 %v323, %v319
    %v368 = vpack.c.b16 %v328, %v324
    %v369 = vpack.c.b16 %v329, %v325
    %v370 = vpack.c.b16 %v330, %v326
    %v371 = vpack.c.b16 %v331, %v327
    %v372 = vpack.c.b16 %v336, %v332
    %v373 = vpack.c.b16 %v337, %v333
    %v374 = vpack.c.b16 %v338, %v334
    %v375 = vpack.c.b16 %v339, %v335
    %v376 = vpack.c.b16 %v344, %v340
    %v377 = vpack.c.b16 %v345, %v341
    %v378 = vpack.c.b16 %v346, %v342
    %v379 = vpack.c.b16 %v347, %v343
    %412 = vmatpush.bf16.msra.mxu0 %v376
    %413 = vmatpush.bf16.msra.mxu0 %v372
    %414 = vmatpush.bf16.msra.mxu0 %v368
    %415 = vmatpush.bf16.msra.mxu0 %v364
    %416 = vmatpush.bf16.msra.mxu0 %v360
    %417 = vmatpush.bf16.msra.mxu0 %v356
    %418 = vmatpush.bf16.msra.mxu0 %v352
    %419 = vmatpush.bf16.msra.mxu0 %v348
    %420 = vmatmul.bf16.gmra.mxu0 %v202
    %v421 = vpop.f32.mrf.mxu0
    %v422 = vadd.f32 %v244, %v421
    %v423 = vpop.f32.mrf.mxu0
    %v424 = vadd.f32 %v244, %v423
    %425 = vmatmul.bf16.gmra.mxu0 %v203
    %v426 = vpop.f32.mrf.mxu0
    %v427 = vadd.f32 %v244, %v426
    %v428 = vpop.f32.mrf.mxu0
    %v429 = vadd.f32 %v244, %v428
    %430 = vmatmul.bf16.gmra.mxu0 %v204
    %v431 = vpop.f32.mrf.mxu0
    %v432 = vadd.f32 %v244, %v431
    %v433 = vpop.f32.mrf.mxu0
    %v434 = vadd.f32 %v244, %v433
    %435 = vmatmul.bf16.gmra.mxu0 %v205
    %v436 = vpop.f32.mrf.mxu0
    %v437 = vadd.f32 %v244, %v436
    %v438 = vpop.f32.mrf.mxu0
    %v439 = vadd.f32 %v244, %v438
    %440 = vmatmul.bf16.gmra.mxu0 %v206
    %v441 = vpop.f32.mrf.mxu0
    %v442 = vadd.f32 %v244, %v441
    %v443 = vpop.f32.mrf.mxu0
    %v444 = vadd.f32 %v244, %v443
    %445 = vmatmul.bf16.gmra.mxu0 %v207
    %v446 = vpop.f32.mrf.mxu0
    %v447 = vadd.f32 %v244, %v446
    %v448 = vpop.f32.mrf.mxu0
    %v449 = vadd.f32 %v244, %v448
    %450 = vmatmul.bf16.gmra.mxu0 %v208
    %v451 = vpop.f32.mrf.mxu0
    %v452 = vadd.f32 %v244, %v451
    %v453 = vpop.f32.mrf.mxu0
    %v454 = vadd.f32 %v244, %v453
    %455 = vmatmul.bf16.gmra.mxu0 %v209
    %v456 = vpop.f32.mrf.mxu0
    %v457 = vadd.f32 %v244, %v456
    %v458 = vpop.f32.mrf.mxu0
    %v459 = vadd.f32 %v244, %v458
    %460 = vdwg.mxu0
    %461 = vmatpush.bf16.msra.mxu0 %v377
    %462 = vmatpush.bf16.msra.mxu0 %v373
    %463 = vmatpush.bf16.msra.mxu0 %v369
    %464 = vmatpush.bf16.msra.mxu0 %v365
    %465 = vmatpush.bf16.msra.mxu0 %v361
    %466 = vmatpush.bf16.msra.mxu0 %v357
    %467 = vmatpush.bf16.msra.mxu0 %v353
    %468 = vmatpush.bf16.msra.mxu0 %v349
    %469 = vmatmul.bf16.gmra.mxu0 %v202
    %v470 = vpop.f32.mrf.mxu0
    %v471 = vadd.f32 %v245, %v470
    %v472 = vpop.f32.mrf.mxu0
    %v473 = vadd.f32 %v245, %v472
    %474 = vmatmul.bf16.gmra.mxu0 %v203
    %v475 = vpop.f32.mrf.mxu0
    %v476 = vadd.f32 %v245, %v475
    %v477 = vpop.f32.mrf.mxu0
    %v478 = vadd.f32 %v245, %v477
    %479 = vmatmul.bf16.gmra.mxu0 %v204
    %v480 = vpop.f32.mrf.mxu0
    %v481 = vadd.f32 %v245, %v480
    %v482 = vpop.f32.mrf.mxu0
    %v483 = vadd.f32 %v245, %v482
    %484 = vmatmul.bf16.gmra.mxu0 %v205
    %v485 = vpop.f32.mrf.mxu0
    %v486 = vadd.f32 %v245, %v485
    %v487 = vpop.f32.mrf.mxu0
    %v488 = vadd.f32 %v245, %v487
    %489 = vmatmul.bf16.gmra.mxu0 %v206
    %v490 = vpop.f32.mrf.mxu0
    %v491 = vadd.f32 %v245, %v490
    %v492 = vpop.f32.mrf.mxu0
    %v493 = vadd.f32 %v245, %v492
    %494 = vmatmul.bf16.gmra.mxu0 %v207
    %v495 = vpop.f32.mrf.mxu0
    %v496 = vadd.f32 %v245, %v495
    %v497 = vpop.f32.mrf.mxu0
    %v498 = vadd.f32 %v245, %v497
    %499 = vmatmul.bf16.gmra.mxu0 %v208
    %v500 = vpop.f32.mrf.mxu0
    %v501 = vadd.f32 %v245, %v500
    %v502 = vpop.f32.mrf.mxu0
    %v503 = vadd.f32 %v245, %v502
    %504 = vmatmul.bf16.gmra.mxu0 %v209
    %v505 = vpop.f32.mrf.mxu0
    %v506 = vadd.f32 %v245, %v505
    %v507 = vpop.f32.mrf.mxu0
    %v508 = vadd.f32 %v245, %v507
    %509 = vdwg.mxu0
    %510 = vmatpush.bf16.msra.mxu0 %v378
    %511 = vmatpush.bf16.msra.mxu0 %v374
    %512 = vmatpush.bf16.msra.mxu0 %v370
    %513 = vmatpush.bf16.msra.mxu0 %v366
    %514 = vmatpush.bf16.msra.mxu0 %v362
    %515 = vmatpush.bf16.msra.mxu0 %v358
    %516 = vmatpush.bf16.msra.mxu0 %v354
    %517 = vmatpush.bf16.msra.mxu0 %v350
    %518 = vmatmul.bf16.gmra.mxu0 %v202
    %v519 = vpop.f32.mrf.mxu0
    %v520 = vadd.f32 %v246, %v519
    %v521 = vpop.f32.mrf.mxu0
    %v522 = vadd.f32 %v246, %v521
    %523 = vmatmul.bf16.gmra.mxu0 %v203
    %v524 = vpop.f32.mrf.mxu0
    %v525 = vadd.f32 %v246, %v524
    %v526 = vpop.f32.mrf.mxu0
    %v527 = vadd.f32 %v246, %v526
    %528 = vmatmul.bf16.gmra.mxu0 %v204
    %v529 = vpop.f32.mrf.mxu0
    %v530 = vadd.f32 %v246, %v529
    %v531 = vpop.f32.mrf.mxu0
    %v532 = vadd.f32 %v246, %v531
    %533 = vmatmul.bf16.gmra.mxu0 %v205
    %v534 = vpop.f32.mrf.mxu0
    %v535 = vadd.f32 %v246, %v534
    %v536 = vpop.f32.mrf.mxu0
    %v537 = vadd.f32 %v246, %v536
    %538 = vmatmul.bf16.gmra.mxu0 %v206
    %v539 = vpop.f32.mrf.mxu0
    %v540 = vadd.f32 %v246, %v539
    %v541 = vpop.f32.mrf.mxu0
    %v542 = vadd.f32 %v246, %v541
    %543 = vmatmul.bf16.gmra.mxu0 %v207
    %v544 = vpop.f32.mrf.mxu0
    %v545 = vadd.f32 %v246, %v544
    %v546 = vpop.f32.mrf.mxu0
    %v547 = vadd.f32 %v246, %v546
    %548 = vmatmul.bf16.gmra.mxu0 %v208
    %v549 = vpop.f32.mrf.mxu0
    %v550 = vadd.f32 %v246, %v549
    %v551 = vpop.f32.mrf.mxu0
    %v552 = vadd.f32 %v246, %v551
    %553 = vmatmul.bf16.gmra.mxu0 %v209
    %v554 = vpop.f32.mrf.mxu0
    %v555 = vadd.f32 %v246, %v554
    %v556 = vpop.f32.mrf.mxu0
    %v557 = vadd.f32 %v246, %v556
    %558 = vdwg.mxu0
    %559 = vmatpush.bf16.msra.mxu0 %v379
    %560 = vmatpush.bf16.msra.mxu0 %v375
    %561 = vmatpush.bf16.msra.mxu0 %v371
    %562 = vmatpush.bf16.msra.mxu0 %v367
    %563 = vmatpush.bf16.msra.mxu0 %v363
    %564 = vmatpush.bf16.msra.mxu0 %v359
    %565 = vmatpush.bf16.msra.mxu0 %v355
    %566 = vmatpush.bf16.msra.mxu0 %v351
    %567 = vmatmul.bf16.gmra.mxu0 %v202
    %v568 = vpop.f32.mrf.mxu0
    %v569 = vadd.f32 %v247, %v568
    %v570 = vpop.f32.mrf.mxu0
    %v571 = vadd.f32 %v247, %v570
    %572 = vmatmul.bf16.gmra.mxu0 %v203
    %v573 = vpop.f32.mrf.mxu0
    %v574 = vadd.f32 %v247, %v573
    %v575 = vpop.f32.mrf.mxu0
    %v576 = vadd.f32 %v247, %v575
    %577 = vmatmul.bf16.gmra.mxu0 %v204
    %v578 = vpop.f32.mrf.mxu0
    %v579 = vadd.f32 %v247, %v578
    %v580 = vpop.f32.mrf.mxu0
    %v581 = vadd.f32 %v247, %v580
    %582 = vmatmul.bf16.gmra.mxu0 %v205
    %v583 = vpop.f32.mrf.mxu0
    %v584 = vadd.f32 %v247, %v583
    %v585 = vpop.f32.mrf.mxu0
    %v586 = vadd.f32 %v247, %v585
    %587 = vmatmul.bf16.gmra.mxu0 %v206
    %v588 = vpop.f32.mrf.mxu0
    %v589 = vadd.f32 %v247, %v588
    %v590 = vpop.f32.mrf.mxu0
    %v591 = vadd.f32 %v247, %v590
    %592 = vmatmul.bf16.gmra.mxu0 %v207
    %v593 = vpop.f32.mrf.mxu0
    %v594 = vadd.f32 %v247, %v593
    %v595 = vpop.f32.mrf.mxu0
    %v596 = vadd.f32 %v247, %v595
    %597 = vmatmul.bf16.gmra.mxu0 %v208
    %v598 = vpop.f32.mrf.mxu0
    %v599 = vadd.f32 %v247, %v598
    %v600 = vpop.f32.mrf.mxu0
    %v601 = vadd.f32 %v247, %v600
    %602 = vmatmul.bf16.gmra.mxu0 %v209
    %v603 = vpop.f32.mrf.mxu0
    %v604 = vadd.f32 %v247, %v603
    %v605 = vpop.f32.mrf.mxu0
    %v606 = vadd.f32 %v247, %v605
    %607 = vdwg.mxu0
    %v608 = vld [vmem:[#allocation2] sm:$0xf]
    %v609 = vld [vmem:[#allocation2 + $0x4] sm:$0xf]
    %v610 = vld [vmem:[#allocation2 + $0x8] sm:$0xf]
    %v611 = vld [vmem:[#allocation2 + $0xc] sm:$0xf]
    %v612 = vld [vmem:[#allocation2 + $0x10] sm:$0xf]
    %v613 = vld [vmem:[#allocation2 + $0x14] sm:$0xf]
    %v614 = vld [vmem:[#allocation2 + $0x18] sm:$0xf]
    %v615 = vld [vmem:[#allocation2 + $0x1c] sm:$0xf]
    %v616 = vld [vmem:[#allocation2 + $0x20] sm:$0xf]
    %v617 = vld [vmem:[#allocation2 + $0x24] sm:$0xf]
    %v618 = vld [vmem:[#allocation2 + $0x28] sm:$0xf]
    %v619 = vld [vmem:[#allocation2 + $0x2c] sm:$0xf]
    %v620 = vld [vmem:[#allocation2 + $0x30] sm:$0xf]
    %v621 = vld [vmem:[#allocation2 + $0x34] sm:$0xf]
    %v622 = vld [vmem:[#allocation2 + $0x38] sm:$0xf]
    %v623 = vld [vmem:[#allocation2 + $0x3c] sm:$0xf]
    %v624 = vld [vmem:[#allocation6] sm:$0xff]
    %v625 = vld [vmem:[#allocation6 + $0x8] sm:$0xff]
    %v626 = vld [vmem:[#allocation6 + $0x10] sm:$0xff]
    %v627 = vld [vmem:[#allocation6 + $0x18] sm:$0xff]
    %v628 = vld [vmem:[#allocation6 + $0x20] sm:$0xff]
    %v629 = vld [vmem:[#allocation6 + $0x28] sm:$0xff]
    %v630 = vld [vmem:[#allocation6 + $0x30] sm:$0xff]
    %v631 = vld [vmem:[#allocation6 + $0x38] sm:$0xff]
    %v632 = vld [vmem:[#allocation6 + $0x40] sm:$0xff]
    %v633 = vld [vmem:[#allocation6 + $0x48] sm:$0xff]
    %v634 = vld [vmem:[#allocation6 + $0x50] sm:$0xff]
    %v635 = vld [vmem:[#allocation6 + $0x58] sm:$0xff]
    %v636 = vld [vmem:[#allocation6 + $0x60] sm:$0xff]
    %v637 = vld [vmem:[#allocation6 + $0x68] sm:$0xff]
    %v638 = vld [vmem:[#allocation6 + $0x70] sm:$0xff]
    %v639 = vld [vmem:[#allocation6 + $0x78] sm:$0xff]
    %v640 = vld [vmem:[#allocation6 + $0x80] sm:$0xff]
    %v641 = vld [vmem:[#allocation6 + $0x88] sm:$0xff]
    %v642 = vld [vmem:[#allocation6 + $0x90] sm:$0xff]
    %v643 = vld [vmem:[#allocation6 + $0x98] sm:$0xff]
    %v644 = vld [vmem:[#allocation6 + $0xa0] sm:$0xff]
    %v645 = vld [vmem:[#allocation6 + $0xa8] sm:$0xff]
    %v646 = vld [vmem:[#allocation6 + $0xb0] sm:$0xff]
    %v647 = vld [vmem:[#allocation6 + $0xb8] sm:$0xff]
    %v648 = vld [vmem:[#allocation6 + $0xc0] sm:$0xff]
    %v649 = vld [vmem:[#allocation6 + $0xc8] sm:$0xff]
    %v650 = vld [vmem:[#allocation6 + $0xd0] sm:$0xff]
    %v651 = vld [vmem:[#allocation6 + $0xd8] sm:$0xff]
    %v652 = vld [vmem:[#allocation6 + $0xe0] sm:$0xff]
    %v653 = vld [vmem:[#allocation6 + $0xe8] sm:$0xff]
    %v654 = vld [vmem:[#allocation6 + $0xf0] sm:$0xff]
    %v655 = vld [vmem:[#allocation6 + $0xf8] sm:$0xff]
    %v656 = vld [vmem:[%s0] sm:$0xff]
    %v657 = vld [vmem:[%s0 + $0x8] sm:$0xff]
    %v658 = vld [vmem:[%s0 + $0x10] sm:$0xff]
    %v659 = vld [vmem:[%s0 + $0x18] sm:$0xff]
    %v660 = vld [vmem:[%s0 + $0x20] sm:$0xff]
    %v661 = vld [vmem:[%s0 + $0x28] sm:$0xff]
    %v662 = vld [vmem:[%s0 + $0x30] sm:$0xff]
    %v663 = vld [vmem:[%s0 + $0x38] sm:$0xff]
    %v664 = vld [vmem:[%s0 + $0x40] sm:$0xff]
    %v665 = vld [vmem:[%s0 + $0x48] sm:$0xff]
    %v666 = vld [vmem:[%s0 + $0x50] sm:$0xff]
    %v667 = vld [vmem:[%s0 + $0x58] sm:$0xff]
    %v668 = vld [vmem:[%s0 + $0x60] sm:$0xff]
    %v669 = vld [vmem:[%s0 + $0x68] sm:$0xff]
    %v670 = vld [vmem:[%s0 + $0x70] sm:$0xff]
    %v671 = vld [vmem:[%s0 + $0x78] sm:$0xff]
    %v688 = vunpack.c.l.b16 %v608
    %v689 = vunpack.c.l.b16 %v609
    %v690 = vunpack.c.l.b16 %v610
    %v691 = vunpack.c.l.b16 %v611
    %v692 = vunpack.c.l.b16 %v612
    %v693 = vunpack.c.l.b16 %v613
    %v694 = vunpack.c.l.b16 %v614
    %v695 = vunpack.c.l.b16 %v615
    %v696 = vunpack.c.l.b16 %v616
    %v697 = vunpack.c.l.b16 %v617
    %v698 = vunpack.c.l.b16 %v618
    %v699 = vunpack.c.l.b16 %v619
    %v700 = vunpack.c.l.b16 %v620
    %v701 = vunpack.c.l.b16 %v621
    %v702 = vunpack.c.l.b16 %v622
    %v703 = vunpack.c.l.b16 %v623
    %v704 = vpack.c.b16 %v689, %v688
    %v705 = vpack.c.b16 %v691, %v690
    %v706 = vpack.c.b16 %v693, %v692
    %v707 = vpack.c.b16 %v695, %v694
    %v708 = vpack.c.b16 %v697, %v696
    %v709 = vpack.c.b16 %v699, %v698
    %v710 = vpack.c.b16 %v701, %v700
    %v711 = vpack.c.b16 %v703, %v702
    %720 = vmatpush.bf16.msra.mxu0 0
    %721 = vmatpush.bf16.msra.mxu0 0
    %722 = vmatpush.bf16.msra.mxu0 0
    %723 = vmatpush.bf16.msra.mxu0 0
    %724 = vmatpush.bf16.msra.mxu0 0
    %725 = vmatpush.bf16.msra.mxu0 0
    %726 = vmatpush.bf16.msra.mxu0 0
    %727 = vmatpush.bf16.msra.mxu0 0
    %728 = vmatmul.bf16.gmra.mxu0 %v704
    %v729 = vpop.f32.mrf.mxu0
    %v730 = vadd.f32 0.0, %v729
    %v731 = vpop.f32.mrf.mxu0
    %v732 = vadd.f32 0.0, %v731
    %733 = vmatmul.bf16.gmra.mxu0 %v705
    %v734 = vpop.f32.mrf.mxu0
    %v735 = vadd.f32 0.0, %v734
    %v736 = vpop.f32.mrf.mxu0
    %v737 = vadd.f32 0.0, %v736
    %738 = vmatmul.bf16.gmra.mxu0 %v706
    %v739 = vpop.f32.mrf.mxu0
    %v740 = vadd.f32 0.0, %v739
    %v741 = vpop.f32.mrf.mxu0
    %v742 = vadd.f32 0.0, %v741
    %743 = vmatmul.bf16.gmra.mxu0 %v707
    %v744 = vpop.f32.mrf.mxu0
    %v745 = vadd.f32 0.0, %v744
    %v746 = vpop.f32.mrf.mxu0
    %v747 = vadd.f32 0.0, %v746
    %748 = vmatmul.bf16.gmra.mxu0 %v708
    %v749 = vpop.f32.mrf.mxu0
    %v750 = vadd.f32 0.0, %v749
    %v751 = vpop.f32.mrf.mxu0
    %v752 = vadd.f32 0.0, %v751
    %753 = vmatmul.bf16.gmra.mxu0 %v709
    %v754 = vpop.f32.mrf.mxu0
    %v755 = vadd.f32 0.0, %v754
    %v756 = vpop.f32.mrf.mxu0
    %v757 = vadd.f32 0.0, %v756
    %758 = vmatmul.bf16.gmra.mxu0 %v710
    %v759 = vpop.f32.mrf.mxu0
    %v760 = vadd.f32 0.0, %v759
    %v761 = vpop.f32.mrf.mxu0
    %v762 = vadd.f32 0.0, %v761
    %763 = vmatmul.bf16.gmra.mxu0 %v711
    %v764 = vpop.f32.mrf.mxu0
    %v765 = vadd.f32 0.0, %v764
    %v766 = vpop.f32.mrf.mxu0
    %v767 = vadd.f32 0.0, %v766
    %768 = vdwg.mxu0
    %v769 = vpack.c.bf16 %v732, %v730
    %v770 = vpack.c.bf16 %v737, %v735
    %v771 = vpack.c.bf16 %v742, %v740
    %v772 = vpack.c.bf16 %v747, %v745
    %v773 = vpack.c.bf16 %v752, %v750
    %v774 = vpack.c.bf16 %v757, %v755
    %v775 = vpack.c.bf16 %v762, %v760
    %v776 = vpack.c.bf16 %v767, %v765
    %v809 = vunpack.c.l.b16 %v624
    %v810 = vunpack.c.h.b16 %v624
    %v811 = vunpack.c.l.b16 %v625
    %v812 = vunpack.c.h.b16 %v625
    %v813 = vunpack.c.l.b16 %v626
    %v814 = vunpack.c.h.b16 %v626
    %v815 = vunpack.c.l.b16 %v627
    %v816 = vunpack.c.h.b16 %v627
    %v817 = vunpack.c.l.b16 %v628
    %v818 = vunpack.c.h.b16 %v628
    %v819 = vunpack.c.l.b16 %v629
    %v820 = vunpack.c.h.b16 %v629
    %v821 = vunpack.c.l.b16 %v630
    %v822 = vunpack.c.h.b16 %v630
    %v823 = vunpack.c.l.b16 %v631
    %v824 = vunpack.c.h.b16 %v631
    %v825 = vunpack.c.l.b16 %v632
    %v826 = vunpack.c.h.b16 %v632
    %v827 = vunpack.c.l.b16 %v633
    %v828 = vunpack.c.h.b16 %v633
    %v829 = vunpack.c.l.b16 %v634
    %v830 = vunpack.c.h.b16 %v634
    %v831 = vunpack.c.l.b16 %v635
    %v832 = vunpack.c.h.b16 %v635
    %v833 = vunpack.c.l.b16 %v636
    %v834 = vunpack.c.h.b16 %v636
    %v835 = vunpack.c.l.b16 %v637
    %v836 = vunpack.c.h.b16 %v637
    %v837 = vunpack.c.l.b16 %v638
    %v838 = vunpack.c.h.b16 %v638
    %v839 = vunpack.c.l.b16 %v639
    %v840 = vunpack.c.h.b16 %v639
    %v841 = vunpack.c.l.b16 %v640
    %v842 = vunpack.c.h.b16 %v640
    %v843 = vunpack.c.l.b16 %v641
    %v844 = vunpack.c.h.b16 %v641
    %v845 = vunpack.c.l.b16 %v642
    %v846 = vunpack.c.h.b16 %v642
    %v847 = vunpack.c.l.b16 %v643
    %v848 = vunpack.c.h.b16 %v643
    %v849 = vunpack.c.l.b16 %v644
    %v850 = vunpack.c.h.b16 %v644
    %v851 = vunpack.c.l.b16 %v645
    %v852 = vunpack.c.h.b16 %v645
    %v853 = vunpack.c.l.b16 %v646
    %v854 = vunpack.c.h.b16 %v646
    %v855 = vunpack.c.l.b16 %v647
    %v856 = vunpack.c.h.b16 %v647
    %v857 = vunpack.c.l.b16 %v648
    %v858 = vunpack.c.h.b16 %v648
    %v859 = vunpack.c.l.b16 %v649
    %v860 = vunpack.c.h.b16 %v649
    %v861 = vunpack.c.l.b16 %v650
    %v862 = vunpack.c.h.b16 %v650
    %v863 = vunpack.c.l.b16 %v651
    %v864 = vunpack.c.h.b16 %v651
    %v865 = vunpack.c.l.b16 %v652
    %v866 = vunpack.c.h.b16 %v652
    %v867 = vunpack.c.l.b16 %v653
    %v868 = vunpack.c.h.b16 %v653
    %v869 = vunpack.c.l.b16 %v654
    %v870 = vunpack.c.h.b16 %v654
    %v871 = vunpack.c.l.b16 %v655
    %v872 = vunpack.c.h.b16 %v655
    %v873 = vpack.c.b16 %v813, %v809
    %v874 = vpack.c.b16 %v814, %v810
    %v875 = vpack.c.b16 %v815, %v811
    %v876 = vpack.c.b16 %v816, %v812
    %v877 = vpack.c.b16 %v821, %v817
    %v878 = vpack.c.b16 %v822, %v818
    %v879 = vpack.c.b16 %v823, %v819
    %v880 = vpack.c.b16 %v824, %v820
    %v881 = vpack.c.b16 %v829, %v825
    %v882 = vpack.c.b16 %v830, %v826
    %v883 = vpack.c.b16 %v831, %v827
    %v884 = vpack.c.b16 %v832, %v828
    %v885 = vpack.c.b16 %v837, %v833
    %v886 = vpack.c.b16 %v838, %v834
    %v887 = vpack.c.b16 %v839, %v835
    %v888 = vpack.c.b16 %v840, %v836
    %v889 = vpack.c.b16 %v845, %v841
    %v890 = vpack.c.b16 %v846, %v842
    %v891 = vpack.c.b16 %v847, %v843
    %v892 = vpack.c.b16 %v848, %v844
    %v893 = vpack.c.b16 %v853, %v849
    %v894 = vpack.c.b16 %v854, %v850
    %v895 = vpack.c.b16 %v855, %v851
    %v896 = vpack.c.b16 %v856, %v852
    %v897 = vpack.c.b16 %v861, %v857
    %v898 = vpack.c.b16 %v862, %v858
    %v899 = vpack.c.b16 %v863, %v859
    %v900 = vpack.c.b16 %v864, %v860
    %v901 = vpack.c.b16 %v869, %v865
    %v902 = vpack.c.b16 %v870, %v866
    %v903 = vpack.c.b16 %v871, %v867
    %v904 = vpack.c.b16 %v872, %v868
    %937 = vmatpush.bf16.msra.mxu0 %v901
    %938 = vmatpush.bf16.msra.mxu0 %v897
    %939 = vmatpush.bf16.msra.mxu0 %v893
    %940 = vmatpush.bf16.msra.mxu0 %v889
    %941 = vmatpush.bf16.msra.mxu0 %v885
    %942 = vmatpush.bf16.msra.mxu0 %v881
    %943 = vmatpush.bf16.msra.mxu0 %v877
    %944 = vmatpush.bf16.msra.mxu0 %v873
    %945 = vmatmul.bf16.gmra.mxu0 %v769
    %v946 = vpop.f32.mrf.mxu0
    %v947 = vadd.f32 0.0, %v946
    %v948 = vpop.f32.mrf.mxu0
    %v949 = vadd.f32 0.0, %v948
    %950 = vmatmul.bf16.gmra.mxu0 %v770
    %v951 = vpop.f32.mrf.mxu0
    %v952 = vadd.f32 0.0, %v951
    %v953 = vpop.f32.mrf.mxu0
    %v954 = vadd.f32 0.0, %v953
    %955 = vmatmul.bf16.gmra.mxu0 %v771
    %v956 = vpop.f32.mrf.mxu0
    %v957 = vadd.f32 0.0, %v956
    %v958 = vpop.f32.mrf.mxu0
    %v959 = vadd.f32 0.0, %v958
    %960 = vmatmul.bf16.gmra.mxu0 %v772
    %v961 = vpop.f32.mrf.mxu0
    %v962 = vadd.f32 0.0, %v961
    %v963 = vpop.f32.mrf.mxu0
    %v964 = vadd.f32 0.0, %v963
    %965 = vmatmul.bf16.gmra.mxu0 %v773
    %v966 = vpop.f32.mrf.mxu0
    %v967 = vadd.f32 0.0, %v966
    %v968 = vpop.f32.mrf.mxu0
    %v969 = vadd.f32 0.0, %v968
    %970 = vmatmul.bf16.gmra.mxu0 %v774
    %v971 = vpop.f32.mrf.mxu0
    %v972 = vadd.f32 0.0, %v971
    %v973 = vpop.f32.mrf.mxu0
    %v974 = vadd.f32 0.0, %v973
    %975 = vmatmul.bf16.gmra.mxu0 %v775
    %v976 = vpop.f32.mrf.mxu0
    %v977 = vadd.f32 0.0, %v976
    %v978 = vpop.f32.mrf.mxu0
    %v979 = vadd.f32 0.0, %v978
    %980 = vmatmul.bf16.gmra.mxu0 %v776
    %v981 = vpop.f32.mrf.mxu0
    %v982 = vadd.f32 0.0, %v981
    %v983 = vpop.f32.mrf.mxu0
    %v984 = vadd.f32 0.0, %v983
    %985 = vdwg.mxu0
    %986 = vmatpush.bf16.msra.mxu0 %v902
    %987 = vmatpush.bf16.msra.mxu0 %v898
    %988 = vmatpush.bf16.msra.mxu0 %v894
    %989 = vmatpush.bf16.msra.mxu0 %v890
    %990 = vmatpush.bf16.msra.mxu0 %v886
    %991 = vmatpush.bf16.msra.mxu0 %v882
    %992 = vmatpush.bf16.msra.mxu0 %v878
    %993 = vmatpush.bf16.msra.mxu0 %v874
    %994 = vmatmul.bf16.gmra.mxu0 %v769
    %v995 = vpop.f32.mrf.mxu0
    %v996 = vadd.f32 0.0, %v995
    %v997 = vpop.f32.mrf.mxu0
    %v998 = vadd.f32 0.0, %v997
    %999 = vmatmul.bf16.gmra.mxu0 %v770
    %v1000 = vpop.f32.mrf.mxu0
    %v1001 = vadd.f32 0.0, %v1000
    %v1002 = vpop.f32.mrf.mxu0
    %v1003 = vadd.f32 0.0, %v1002
    %1004 = vmatmul.bf16.gmra.mxu0 %v771
    %v1005 = vpop.f32.mrf.mxu0
    %v1006 = vadd.f32 0.0, %v1005
    %v1007 = vpop.f32.mrf.mxu0
    %v1008 = vadd.f32 0.0, %v1007
    %1009 = vmatmul.bf16.gmra.mxu0 %v772
    %v1010 = vpop.f32.mrf.mxu0
    %v1011 = vadd.f32 0.0, %v1010
    %v1012 = vpop.f32.mrf.mxu0
    %v1013 = vadd.f32 0.0, %v1012
    %1014 = vmatmul.bf16.gmra.mxu0 %v773
    %v1015 = vpop.f32.mrf.mxu0
    %v1016 = vadd.f32 0.0, %v1015
    %v1017 = vpop.f32.mrf.mxu0
    %v1018 = vadd.f32 0.0, %v1017
    %1019 = vmatmul.bf16.gmra.mxu0 %v774
    %v1020 = vpop.f32.mrf.mxu0
    %v1021 = vadd.f32 0.0, %v1020
    %v1022 = vpop.f32.mrf.mxu0
    %v1023 = vadd.f32 0.0, %v1022
    %1024 = vmatmul.bf16.gmra.mxu0 %v775
    %v1025 = vpop.f32.mrf.mxu0
    %v1026 = vadd.f32 0.0, %v1025
    %v1027 = vpop.f32.mrf.mxu0
    %v1028 = vadd.f32 0.0, %v1027
    %1029 = vmatmul.bf16.gmra.mxu0 %v776
    %v1030 = vpop.f32.mrf.mxu0
    %v1031 = vadd.f32 0.0, %v1030
    %v1032 = vpop.f32.mrf.mxu0
    %v1033 = vadd.f32 0.0, %v1032
    %1034 = vdwg.mxu0
    %1035 = vmatpush.bf16.msra.mxu0 %v903
    %1036 = vmatpush.bf16.msra.mxu0 %v899
    %1037 = vmatpush.bf16.msra.mxu0 %v895
    %1038 = vmatpush.bf16.msra.mxu0 %v891
    %1039 = vmatpush.bf16.msra.mxu0 %v887
    %1040 = vmatpush.bf16.msra.mxu0 %v883
    %1041 = vmatpush.bf16.msra.mxu0 %v879
    %1042 = vmatpush.bf16.msra.mxu0 %v875
    %1043 = vmatmul.bf16.gmra.mxu0 %v769
    %v1044 = vpop.f32.mrf.mxu0
    %v1045 = vadd.f32 0.0, %v1044
    %v1046 = vpop.f32.mrf.mxu0
    %v1047 = vadd.f32 0.0, %v1046
    %1048 = vmatmul.bf16.gmra.mxu0 %v770
    %v1049 = vpop.f32.mrf.mxu0
    %v1050 = vadd.f32 0.0, %v1049
    %v1051 = vpop.f32.mrf.mxu0
    %v1052 = vadd.f32 0.0, %v1051
    %1053 = vmatmul.bf16.gmra.mxu0 %v771
    %v1054 = vpop.f32.mrf.mxu0
    %v1055 = vadd.f32 0.0, %v1054
    %v1056 = vpop.f32.mrf.mxu0
    %v1057 = vadd.f32 0.0, %v1056
    %1058 = vmatmul.bf16.gmra.mxu0 %v772
    %v1059 = vpop.f32.mrf.mxu0
    %v1060 = vadd.f32 0.0, %v1059
    %v1061 = vpop.f32.mrf.mxu0
    %v1062 = vadd.f32 0.0, %v1061
    %1063 = vmatmul.bf16.gmra.mxu0 %v773
    %v1064 = vpop.f32.mrf.mxu0
    %v1065 = vadd.f32 0.0, %v1064
    %v1066 = vpop.f32.mrf.mxu0
    %v1067 = vadd.f32 0.0, %v1066
    %1068 = vmatmul.bf16.gmra.mxu0 %v774
    %v1069 = vpop.f32.mrf.mxu0
    %v1070 = vadd.f32 0.0, %v1069
    %v1071 = vpop.f32.mrf.mxu0
    %v1072 = vadd.f32 0.0, %v1071
    %1073 = vmatmul.bf16.gmra.mxu0 %v775
    %v1074 = vpop.f32.mrf.mxu0
    %v1075 = vadd.f32 0.0, %v1074
    %v1076 = vpop.f32.mrf.mxu0
    %v1077 = vadd.f32 0.0, %v1076
    %1078 = vmatmul.bf16.gmra.mxu0 %v776
    %v1079 = vpop.f32.mrf.mxu0
    %v1080 = vadd.f32 0.0, %v1079
    %v1081 = vpop.f32.mrf.mxu0
    %v1082 = vadd.f32 0.0, %v1081
    %1083 = vdwg.mxu0
    %1084 = vmatpush.bf16.msra.mxu0 %v904
    %1085 = vmatpush.bf16.msra.mxu0 %v900
    %1086 = vmatpush.bf16.msra.mxu0 %v896
    %1087 = vmatpush.bf16.msra.mxu0 %v892
    %1088 = vmatpush.bf16.msra.mxu0 %v888
    %1089 = vmatpush.bf16.msra.mxu0 %v884
    %1090 = vmatpush.bf16.msra.mxu0 %v880
    %1091 = vmatpush.bf16.msra.mxu0 %v876
    %1092 = vmatmul.bf16.gmra.mxu0 %v769
    %v1093 = vpop.f32.mrf.mxu0
    %v1094 = vadd.f32 0.0, %v1093
    %v1095 = vpop.f32.mrf.mxu0
    %v1096 = vadd.f32 0.0, %v1095
    %1097 = vmatmul.bf16.gmra.mxu0 %v770
    %v1098 = vpop.f32.mrf.mxu0
    %v1099 = vadd.f32 0.0, %v1098
    %v1100 = vpop.f32.mrf.mxu0
    %v1101 = vadd.f32 0.0, %v1100
    %1102 = vmatmul.bf16.gmra.mxu0 %v771
    %v1103 = vpop.f32.mrf.mxu0
    %v1104 = vadd.f32 0.0, %v1103
    %v1105 = vpop.f32.mrf.mxu0
    %v1106 = vadd.f32 0.0, %v1105
    %1107 = vmatmul.bf16.gmra.mxu0 %v772
    %v1108 = vpop.f32.mrf.mxu0
    %v1109 = vadd.f32 0.0, %v1108
    %v1110 = vpop.f32.mrf.mxu0
    %v1111 = vadd.f32 0.0, %v1110
    %1112 = vmatmul.bf16.gmra.mxu0 %v773
    %v1113 = vpop.f32.mrf.mxu0
    %v1114 = vadd.f32 0.0, %v1113
    %v1115 = vpop.f32.mrf.mxu0
    %v1116 = vadd.f32 0.0, %v1115
    %1117 = vmatmul.bf16.gmra.mxu0 %v774
    %v1118 = vpop.f32.mrf.mxu0
    %v1119 = vadd.f32 0.0, %v1118
    %v1120 = vpop.f32.mrf.mxu0
    %v1121 = vadd.f32 0.0, %v1120
    %1122 = vmatmul.bf16.gmra.mxu0 %v775
    %v1123 = vpop.f32.mrf.mxu0
    %v1124 = vadd.f32 0.0, %v1123
    %v1125 = vpop.f32.mrf.mxu0
    %v1126 = vadd.f32 0.0, %v1125
    %1127 = vmatmul.bf16.gmra.mxu0 %v776
    %v1128 = vpop.f32.mrf.mxu0
    %v1129 = vadd.f32 0.0, %v1128
    %v1130 = vpop.f32.mrf.mxu0
    %v1131 = vadd.f32 0.0, %v1130
    %1132 = vdwg.mxu0
    %v1133 = vadd.f32 %v422, %v947
    %v1134 = vadd.f32 %v471, %v996
    %v1135 = vadd.f32 %v520, %v1045
    %v1136 = vadd.f32 %v569, %v1094
    %v1137 = vadd.f32 %v424, %v949
    %v1138 = vadd.f32 %v473, %v998
    %v1139 = vadd.f32 %v522, %v1047
    %v1140 = vadd.f32 %v571, %v1096
    %v1141 = vadd.f32 %v427, %v952
    %v1142 = vadd.f32 %v476, %v1001
    %v1143 = vadd.f32 %v525, %v1050
    %v1144 = vadd.f32 %v574, %v1099
    %v1145 = vadd.f32 %v429, %v954
    %v1146 = vadd.f32 %v478, %v1003
    %v1147 = vadd.f32 %v527, %v1052
    %v1148 = vadd.f32 %v576, %v1101
    %v1149 = vadd.f32 %v432, %v957
    %v1150 = vadd.f32 %v481, %v1006
    %v1151 = vadd.f32 %v530, %v1055
    %v1152 = vadd.f32 %v579, %v1104
    %v1153 = vadd.f32 %v434, %v959
    %v1154 = vadd.f32 %v483, %v1008
    %v1155 = vadd.f32 %v532, %v1057
    %v1156 = vadd.f32 %v581, %v1106
    %v1157 = vadd.f32 %v437, %v962
    %v1158 = vadd.f32 %v486, %v1011
    %v1159 = vadd.f32 %v535, %v1060
    %v1160 = vadd.f32 %v584, %v1109
    %v1161 = vadd.f32 %v439, %v964
    %v1162 = vadd.f32 %v488, %v1013
    %v1163 = vadd.f32 %v537, %v1062
    %v1164 = vadd.f32 %v586, %v1111
    %v1165 = vadd.f32 %v442, %v967
    %v1166 = vadd.f32 %v491, %v1016
    %v1167 = vadd.f32 %v540, %v1065
    %v1168 = vadd.f32 %v589, %v1114
    %v1169 = vadd.f32 %v444, %v969
    %v1170 = vadd.f32 %v493, %v1018
    %v1171 = vadd.f32 %v542, %v1067
    %v1172 = vadd.f32 %v591, %v1116
    %v1173 = vadd.f32 %v447, %v972
    %v1174 = vadd.f32 %v496, %v1021
    %v1175 = vadd.f32 %v545, %v1070
    %v1176 = vadd.f32 %v594, %v1119
    %v1177 = vadd.f32 %v449, %v974
    %v1178 = vadd.f32 %v498, %v1023
    %v1179 = vadd.f32 %v547, %v1072
    %v1180 = vadd.f32 %v596, %v1121
    %v1181 = vadd.f32 %v452, %v977
    %v1182 = vadd.f32 %v501, %v1026
    %v1183 = vadd.f32 %v550, %v1075
    %v1184 = vadd.f32 %v599, %v1124
    %v1185 = vadd.f32 %v454, %v979
    %v1186 = vadd.f32 %v503, %v1028
    %v1187 = vadd.f32 %v552, %v1077
    %v1188 = vadd.f32 %v601, %v1126
    %v1189 = vadd.f32 %v457, %v982
    %v1190 = vadd.f32 %v506, %v1031
    %v1191 = vadd.f32 %v555, %v1080
    %v1192 = vadd.f32 %v604, %v1129
    %v1193 = vadd.f32 %v459, %v984
    %v1194 = vadd.f32 %v508, %v1033
    %v1195 = vadd.f32 %v557, %v1082
    %v1196 = vadd.f32 %v606, %v1131
    %v1197 = vxor.u32 %v1133, 2147483648
    %v1198 = vxor.u32 %v1137, 2147483648
    %v1199 = vxor.u32 %v1141, 2147483648
    %v1200 = vxor.u32 %v1145, 2147483648
    %v1201 = vxor.u32 %v1149, 2147483648
    %v1202 = vxor.u32 %v1153, 2147483648
    %v1203 = vxor.u32 %v1157, 2147483648
    %v1204 = vxor.u32 %v1161, 2147483648
    %v1205 = vxor.u32 %v1165, 2147483648
    %v1206 = vxor.u32 %v1169, 2147483648
    %v1207 = vxor.u32 %v1173, 2147483648
    %v1208 = vxor.u32 %v1177, 2147483648
    %v1209 = vxor.u32 %v1181, 2147483648
    %v1210 = vxor.u32 %v1185, 2147483648
    %v1211 = vxor.u32 %v1189, 2147483648
    %v1212 = vxor.u32 %v1193, 2147483648
    %v1213 = vmul.f32 %v1197, 1.442695
    %v1214 = vpow.pop %v1213
    %v1215 = vmul.f32 %v1198, 1.442695
    %v1216 = vpow.pop %v1215
    %v1217 = vmul.f32 %v1199, 1.442695
    %v1218 = vpow.pop %v1217
    %v1219 = vmul.f32 %v1200, 1.442695
    %v1220 = vpow.pop %v1219
    %v1221 = vmul.f32 %v1201, 1.442695
    %v1222 = vpow.pop %v1221
    %v1223 = vmul.f32 %v1202, 1.442695
    %v1224 = vpow.pop %v1223
    %v1225 = vmul.f32 %v1203, 1.442695
    %v1226 = vpow.pop %v1225
    %v1227 = vmul.f32 %v1204, 1.442695
    %v1228 = vpow.pop %v1227
    %v1229 = vmul.f32 %v1205, 1.442695
    %v1230 = vpow.pop %v1229
    %v1231 = vmul.f32 %v1206, 1.442695
    %v1232 = vpow.pop %v1231
    %v1233 = vmul.f32 %v1207, 1.442695
    %v1234 = vpow.pop %v1233
    %v1235 = vmul.f32 %v1208, 1.442695
    %v1236 = vpow.pop %v1235
    %v1237 = vmul.f32 %v1209, 1.442695
    %v1238 = vpow.pop %v1237
    %v1239 = vmul.f32 %v1210, 1.442695
    %v1240 = vpow.pop %v1239
    %v1241 = vmul.f32 %v1211, 1.442695
    %v1242 = vpow.pop %v1241
    %v1243 = vmul.f32 %v1212, 1.442695
    %v1244 = vpow.pop %v1243
    %v1245 = vadd.f32 %v1214, 1.0
    %v1246 = vadd.f32 %v1216, 1.0
    %v1247 = vadd.f32 %v1218, 1.0
    %v1248 = vadd.f32 %v1220, 1.0
    %v1249 = vadd.f32 %v1222, 1.0
    %v1250 = vadd.f32 %v1224, 1.0
    %v1251 = vadd.f32 %v1226, 1.0
    %v1252 = vadd.f32 %v1228, 1.0
    %v1253 = vadd.f32 %v1230, 1.0
    %v1254 = vadd.f32 %v1232, 1.0
    %v1255 = vadd.f32 %v1234, 1.0
    %v1256 = vadd.f32 %v1236, 1.0
    %v1257 = vadd.f32 %v1238, 1.0
    %v1258 = vadd.f32 %v1240, 1.0
    %v1259 = vadd.f32 %v1242, 1.0
    %v1260 = vadd.f32 %v1244, 1.0
    %v1261 = vrcp.pop %v1245
    %v1262 = vmul.f32 %v1245, %v1261
    %v1263 = vsub.f32 1.0, %v1262
    %v1264 = vmul.f32 %v1261, %v1263
    %v1265 = vadd.f32 %v1261, %v1264
    %vm1266 = vweird.f32 %v1245
    %vm1267 = vweird.f32 %v1261
    %vm1268 = vmor %vm1266, %vm1267
    %v1269 = vsel %vm1268, %v1261, %v1265
    %v1270 = vand.u32 2147483647, %v1245
    %vm1271 = vcmp.eq.f32.partialorder %v1270, 8.507059e+37
    %v1272 = vand.u32 %v1245, 2147483648
    %v1273 = vor.u32 1.1754944e-38, %v1272
    %v1274 = vsel %vm1271, %v1273, %v1269
    %v1275 = vmul.f32 1.0, %v1274
    %v1276 = vrcp.pop %v1246
    %v1277 = vmul.f32 %v1246, %v1276
    %v1278 = vsub.f32 1.0, %v1277
    %v1279 = vmul.f32 %v1276, %v1278
    %v1280 = vadd.f32 %v1276, %v1279
    %vm1281 = vweird.f32 %v1246
    %vm1282 = vweird.f32 %v1276
    %vm1283 = vmor %vm1281, %vm1282
    %v1284 = vsel %vm1283, %v1276, %v1280
    %v1285 = vand.u32 2147483647, %v1246
    %vm1286 = vcmp.eq.f32.partialorder %v1285, 8.507059e+37
    %v1287 = vand.u32 %v1246, 2147483648
    %v1288 = vor.u32 1.1754944e-38, %v1287
    %v1289 = vsel %vm1286, %v1288, %v1284
    %v1290 = vmul.f32 1.0, %v1289
    %v1291 = vrcp.pop %v1247
    %v1292 = vmul.f32 %v1247, %v1291
    %v1293 = vsub.f32 1.0, %v1292
    %v1294 = vmul.f32 %v1291, %v1293
    %v1295 = vadd.f32 %v1291, %v1294
    %vm1296 = vweird.f32 %v1247
    %vm1297 = vweird.f32 %v1291
    %vm1298 = vmor %vm1296, %vm1297
    %v1299 = vsel %vm1298, %v1291, %v1295
    %v1300 = vand.u32 2147483647, %v1247
    %vm1301 = vcmp.eq.f32.partialorder %v1300, 8.507059e+37
    %v1302 = vand.u32 %v1247, 2147483648
    %v1303 = vor.u32 1.1754944e-38, %v1302
    %v1304 = vsel %vm1301, %v1303, %v1299
    %v1305 = vmul.f32 1.0, %v1304
    %v1306 = vrcp.pop %v1248
    %v1307 = vmul.f32 %v1248, %v1306
    %v1308 = vsub.f32 1.0, %v1307
    %v1309 = vmul.f32 %v1306, %v1308
    %v1310 = vadd.f32 %v1306, %v1309
    %vm1311 = vweird.f32 %v1248
    %vm1312 = vweird.f32 %v1306
    %vm1313 = vmor %vm1311, %vm1312
    %v1314 = vsel %vm1313, %v1306, %v1310
    %v1315 = vand.u32 2147483647, %v1248
    %vm1316 = vcmp.eq.f32.partialorder %v1315, 8.507059e+37
    %v1317 = vand.u32 %v1248, 2147483648
    %v1318 = vor.u32 1.1754944e-38, %v1317
    %v1319 = vsel %vm1316, %v1318, %v1314
    %v1320 = vmul.f32 1.0, %v1319
    %v1321 = vrcp.pop %v1249
    %v1322 = vmul.f32 %v1249, %v1321
    %v1323 = vsub.f32 1.0, %v1322
    %v1324 = vmul.f32 %v1321, %v1323
    %v1325 = vadd.f32 %v1321, %v1324
    %vm1326 = vweird.f32 %v1249
    %vm1327 = vweird.f32 %v1321
    %vm1328 = vmor %vm1326, %vm1327
    %v1329 = vsel %vm1328, %v1321, %v1325
    %v1330 = vand.u32 2147483647, %v1249
    %vm1331 = vcmp.eq.f32.partialorder %v1330, 8.507059e+37
    %v1332 = vand.u32 %v1249, 2147483648
    %v1333 = vor.u32 1.1754944e-38, %v1332
    %v1334 = vsel %vm1331, %v1333, %v1329
    %v1335 = vmul.f32 1.0, %v1334
    %v1336 = vrcp.pop %v1250
    %v1337 = vmul.f32 %v1250, %v1336
    %v1338 = vsub.f32 1.0, %v1337
    %v1339 = vmul.f32 %v1336, %v1338
    %v1340 = vadd.f32 %v1336, %v1339
    %vm1341 = vweird.f32 %v1250
    %vm1342 = vweird.f32 %v1336
    %vm1343 = vmor %vm1341, %vm1342
    %v1344 = vsel %vm1343, %v1336, %v1340
    %v1345 = vand.u32 2147483647, %v1250
    %vm1346 = vcmp.eq.f32.partialorder %v1345, 8.507059e+37
    %v1347 = vand.u32 %v1250, 2147483648
    %v1348 = vor.u32 1.1754944e-38, %v1347
    %v1349 = vsel %vm1346, %v1348, %v1344
    %v1350 = vmul.f32 1.0, %v1349
    %v1351 = vrcp.pop %v1251
    %v1352 = vmul.f32 %v1251, %v1351
    %v1353 = vsub.f32 1.0, %v1352
    %v1354 = vmul.f32 %v1351, %v1353
    %v1355 = vadd.f32 %v1351, %v1354
    %vm1356 = vweird.f32 %v1251
    %vm1357 = vweird.f32 %v1351
    %vm1358 = vmor %vm1356, %vm1357
    %v1359 = vsel %vm1358, %v1351, %v1355
    %v1360 = vand.u32 2147483647, %v1251
    %vm1361 = vcmp.eq.f32.partialorder %v1360, 8.507059e+37
    %v1362 = vand.u32 %v1251, 2147483648
    %v1363 = vor.u32 1.1754944e-38, %v1362
    %v1364 = vsel %vm1361, %v1363, %v1359
    %v1365 = vmul.f32 1.0, %v1364
    %v1366 = vrcp.pop %v1252
    %v1367 = vmul.f32 %v1252, %v1366
    %v1368 = vsub.f32 1.0, %v1367
    %v1369 = vmul.f32 %v1366, %v1368
    %v1370 = vadd.f32 %v1366, %v1369
    %vm1371 = vweird.f32 %v1252
    %vm1372 = vweird.f32 %v1366
    %vm1373 = vmor %vm1371, %vm1372
    %v1374 = vsel %vm1373, %v1366, %v1370
    %v1375 = vand.u32 2147483647, %v1252
    %vm1376 = vcmp.eq.f32.partialorder %v1375, 8.507059e+37
    %v1377 = vand.u32 %v1252, 2147483648
    %v1378 = vor.u32 1.1754944e-38, %v1377
    %v1379 = vsel %vm1376, %v1378, %v1374
    %v1380 = vmul.f32 1.0, %v1379
    %v1381 = vrcp.pop %v1253
    %v1382 = vmul.f32 %v1253, %v1381
    %v1383 = vsub.f32 1.0, %v1382
    %v1384 = vmul.f32 %v1381, %v1383
    %v1385 = vadd.f32 %v1381, %v1384
    %vm1386 = vweird.f32 %v1253
    %vm1387 = vweird.f32 %v1381
    %vm1388 = vmor %vm1386, %vm1387
    %v1389 = vsel %vm1388, %v1381, %v1385
    %v1390 = vand.u32 2147483647, %v1253
    %vm1391 = vcmp.eq.f32.partialorder %v1390, 8.507059e+37
    %v1392 = vand.u32 %v1253, 2147483648
    %v1393 = vor.u32 1.1754944e-38, %v1392
    %v1394 = vsel %vm1391, %v1393, %v1389
    %v1395 = vmul.f32 1.0, %v1394
    %v1396 = vrcp.pop %v1254
    %v1397 = vmul.f32 %v1254, %v1396
    %v1398 = vsub.f32 1.0, %v1397
    %v1399 = vmul.f32 %v1396, %v1398
    %v1400 = vadd.f32 %v1396, %v1399
    %vm1401 = vweird.f32 %v1254
    %vm1402 = vweird.f32 %v1396
    %vm1403 = vmor %vm1401, %vm1402
    %v1404 = vsel %vm1403, %v1396, %v1400
    %v1405 = vand.u32 2147483647, %v1254
    %vm1406 = vcmp.eq.f32.partialorder %v1405, 8.507059e+37
    %v1407 = vand.u32 %v1254, 2147483648
    %v1408 = vor.u32 1.1754944e-38, %v1407
    %v1409 = vsel %vm1406, %v1408, %v1404
    %v1410 = vmul.f32 1.0, %v1409
    %v1411 = vrcp.pop %v1255
    %v1412 = vmul.f32 %v1255, %v1411
    %v1413 = vsub.f32 1.0, %v1412
    %v1414 = vmul.f32 %v1411, %v1413
    %v1415 = vadd.f32 %v1411, %v1414
    %vm1416 = vweird.f32 %v1255
    %vm1417 = vweird.f32 %v1411
    %vm1418 = vmor %vm1416, %vm1417
    %v1419 = vsel %vm1418, %v1411, %v1415
    %v1420 = vand.u32 2147483647, %v1255
    %vm1421 = vcmp.eq.f32.partialorder %v1420, 8.507059e+37
    %v1422 = vand.u32 %v1255, 2147483648
    %v1423 = vor.u32 1.1754944e-38, %v1422
    %v1424 = vsel %vm1421, %v1423, %v1419
    %v1425 = vmul.f32 1.0, %v1424
    %v1426 = vrcp.pop %v1256
    %v1427 = vmul.f32 %v1256, %v1426
    %v1428 = vsub.f32 1.0, %v1427
    %v1429 = vmul.f32 %v1426, %v1428
    %v1430 = vadd.f32 %v1426, %v1429
    %vm1431 = vweird.f32 %v1256
    %vm1432 = vweird.f32 %v1426
    %vm1433 = vmor %vm1431, %vm1432
    %v1434 = vsel %vm1433, %v1426, %v1430
    %v1435 = vand.u32 2147483647, %v1256
    %vm1436 = vcmp.eq.f32.partialorder %v1435, 8.507059e+37
    %v1437 = vand.u32 %v1256, 2147483648
    %v1438 = vor.u32 1.1754944e-38, %v1437
    %v1439 = vsel %vm1436, %v1438, %v1434
    %v1440 = vmul.f32 1.0, %v1439
    %v1441 = vrcp.pop %v1257
    %v1442 = vmul.f32 %v1257, %v1441
    %v1443 = vsub.f32 1.0, %v1442
    %v1444 = vmul.f32 %v1441, %v1443
    %v1445 = vadd.f32 %v1441, %v1444
    %vm1446 = vweird.f32 %v1257
    %vm1447 = vweird.f32 %v1441
    %vm1448 = vmor %vm1446, %vm1447
    %v1449 = vsel %vm1448, %v1441, %v1445
    %v1450 = vand.u32 2147483647, %v1257
    %vm1451 = vcmp.eq.f32.partialorder %v1450, 8.507059e+37
    %v1452 = vand.u32 %v1257, 2147483648
    %v1453 = vor.u32 1.1754944e-38, %v1452
    %v1454 = vsel %vm1451, %v1453, %v1449
    %v1455 = vmul.f32 1.0, %v1454
    %v1456 = vrcp.pop %v1258
    %v1457 = vmul.f32 %v1258, %v1456
    %v1458 = vsub.f32 1.0, %v1457
    %v1459 = vmul.f32 %v1456, %v1458
    %v1460 = vadd.f32 %v1456, %v1459
    %vm1461 = vweird.f32 %v1258
    %vm1462 = vweird.f32 %v1456
    %vm1463 = vmor %vm1461, %vm1462
    %v1464 = vsel %vm1463, %v1456, %v1460
    %v1465 = vand.u32 2147483647, %v1258
    %vm1466 = vcmp.eq.f32.partialorder %v1465, 8.507059e+37
    %v1467 = vand.u32 %v1258, 2147483648
    %v1468 = vor.u32 1.1754944e-38, %v1467
    %v1469 = vsel %vm1466, %v1468, %v1464
    %v1470 = vmul.f32 1.0, %v1469
    %v1471 = vrcp.pop %v1259
    %v1472 = vmul.f32 %v1259, %v1471
    %v1473 = vsub.f32 1.0, %v1472
    %v1474 = vmul.f32 %v1471, %v1473
    %v1475 = vadd.f32 %v1471, %v1474
    %vm1476 = vweird.f32 %v1259
    %vm1477 = vweird.f32 %v1471
    %vm1478 = vmor %vm1476, %vm1477
    %v1479 = vsel %vm1478, %v1471, %v1475
    %v1480 = vand.u32 2147483647, %v1259
    %vm1481 = vcmp.eq.f32.partialorder %v1480, 8.507059e+37
    %v1482 = vand.u32 %v1259, 2147483648
    %v1483 = vor.u32 1.1754944e-38, %v1482
    %v1484 = vsel %vm1481, %v1483, %v1479
    %v1485 = vmul.f32 1.0, %v1484
    %v1486 = vrcp.pop %v1260
    %v1487 = vmul.f32 %v1260, %v1486
    %v1488 = vsub.f32 1.0, %v1487
    %v1489 = vmul.f32 %v1486, %v1488
    %v1490 = vadd.f32 %v1486, %v1489
    %vm1491 = vweird.f32 %v1260
    %vm1492 = vweird.f32 %v1486
    %vm1493 = vmor %vm1491, %vm1492
    %v1494 = vsel %vm1493, %v1486, %v1490
    %v1495 = vand.u32 2147483647, %v1260
    %vm1496 = vcmp.eq.f32.partialorder %v1495, 8.507059e+37
    %v1497 = vand.u32 %v1260, 2147483648
    %v1498 = vor.u32 1.1754944e-38, %v1497
    %v1499 = vsel %vm1496, %v1498, %v1494
    %v1500 = vmul.f32 1.0, %v1499
    %v1501 = vxor.u32 %v1134, 2147483648
    %v1502 = vxor.u32 %v1138, 2147483648
    %v1503 = vxor.u32 %v1142, 2147483648
    %v1504 = vxor.u32 %v1146, 2147483648
    %v1505 = vxor.u32 %v1150, 2147483648
    %v1506 = vxor.u32 %v1154, 2147483648
    %v1507 = vxor.u32 %v1158, 2147483648
    %v1508 = vxor.u32 %v1162, 2147483648
    %v1509 = vxor.u32 %v1166, 2147483648
    %v1510 = vxor.u32 %v1170, 2147483648
    %v1511 = vxor.u32 %v1174, 2147483648
    %v1512 = vxor.u32 %v1178, 2147483648
    %v1513 = vxor.u32 %v1182, 2147483648
    %v1514 = vxor.u32 %v1186, 2147483648
    %v1515 = vxor.u32 %v1190, 2147483648
    %v1516 = vxor.u32 %v1194, 2147483648
    %v1517 = vmul.f32 %v1501, 1.442695
    %v1518 = vpow.pop %v1517
    %v1519 = vmul.f32 %v1502, 1.442695
    %v1520 = vpow.pop %v1519
    %v1521 = vmul.f32 %v1503, 1.442695
    %v1522 = vpow.pop %v1521
    %v1523 = vmul.f32 %v1504, 1.442695
    %v1524 = vpow.pop %v1523
    %v1525 = vmul.f32 %v1505, 1.442695
    %v1526 = vpow.pop %v1525
    %v1527 = vmul.f32 %v1506, 1.442695
    %v1528 = vpow.pop %v1527
    %v1529 = vmul.f32 %v1507, 1.442695
    %v1530 = vpow.pop %v1529
    %v1531 = vmul.f32 %v1508, 1.442695
    %v1532 = vpow.pop %v1531
    %v1533 = vmul.f32 %v1509, 1.442695
    %v1534 = vpow.pop %v1533
    %v1535 = vmul.f32 %v1510, 1.442695
    %v1536 = vpow.pop %v1535
    %v1537 = vmul.f32 %v1511, 1.442695
    %v1538 = vpow.pop %v1537
    %v1539 = vmul.f32 %v1512, 1.442695
    %v1540 = vpow.pop %v1539
    %v1541 = vmul.f32 %v1513, 1.442695
    %v1542 = vpow.pop %v1541
    %v1543 = vmul.f32 %v1514, 1.442695
    %v1544 = vpow.pop %v1543
    %v1545 = vmul.f32 %v1515, 1.442695
    %v1546 = vpow.pop %v1545
    %v1547 = vmul.f32 %v1516, 1.442695
    %v1548 = vpow.pop %v1547
    %v1549 = vadd.f32 %v1518, 1.0
    %v1550 = vadd.f32 %v1520, 1.0
    %v1551 = vadd.f32 %v1522, 1.0
    %v1552 = vadd.f32 %v1524, 1.0
    %v1553 = vadd.f32 %v1526, 1.0
    %v1554 = vadd.f32 %v1528, 1.0
    %v1555 = vadd.f32 %v1530, 1.0
    %v1556 = vadd.f32 %v1532, 1.0
    %v1557 = vadd.f32 %v1534, 1.0
    %v1558 = vadd.f32 %v1536, 1.0
    %v1559 = vadd.f32 %v1538, 1.0
    %v1560 = vadd.f32 %v1540, 1.0
    %v1561 = vadd.f32 %v1542, 1.0
    %v1562 = vadd.f32 %v1544, 1.0
    %v1563 = vadd.f32 %v1546, 1.0
    %v1564 = vadd.f32 %v1548, 1.0
    %v1565 = vrcp.pop %v1549
    %v1566 = vmul.f32 %v1549, %v1565
    %v1567 = vsub.f32 1.0, %v1566
    %v1568 = vmul.f32 %v1565, %v1567
    %v1569 = vadd.f32 %v1565, %v1568
    %vm1570 = vweird.f32 %v1549
    %vm1571 = vweird.f32 %v1565
    %vm1572 = vmor %vm1570, %vm1571
    %v1573 = vsel %vm1572, %v1565, %v1569
    %v1574 = vand.u32 2147483647, %v1549
    %vm1575 = vcmp.eq.f32.partialorder %v1574, 8.507059e+37
    %v1576 = vand.u32 %v1549, 2147483648
    %v1577 = vor.u32 1.1754944e-38, %v1576
    %v1578 = vsel %vm1575, %v1577, %v1573
    %v1579 = vmul.f32 1.0, %v1578
    %v1580 = vrcp.pop %v1550
    %v1581 = vmul.f32 %v1550, %v1580
    %v1582 = vsub.f32 1.0, %v1581
    %v1583 = vmul.f32 %v1580, %v1582
    %v1584 = vadd.f32 %v1580, %v1583
    %vm1585 = vweird.f32 %v1550
    %vm1586 = vweird.f32 %v1580
    %vm1587 = vmor %vm1585, %vm1586
    %v1588 = vsel %vm1587, %v1580, %v1584
    %v1589 = vand.u32 2147483647, %v1550
    %vm1590 = vcmp.eq.f32.partialorder %v1589, 8.507059e+37
    %v1591 = vand.u32 %v1550, 2147483648
    %v1592 = vor.u32 1.1754944e-38, %v1591
    %v1593 = vsel %vm1590, %v1592, %v1588
    %v1594 = vmul.f32 1.0, %v1593
    %v1595 = vrcp.pop %v1551
    %v1596 = vmul.f32 %v1551, %v1595
    %v1597 = vsub.f32 1.0, %v1596
    %v1598 = vmul.f32 %v1595, %v1597
    %v1599 = vadd.f32 %v1595, %v1598
    %vm1600 = vweird.f32 %v1551
    %vm1601 = vweird.f32 %v1595
    %vm1602 = vmor %vm1600, %vm1601
    %v1603 = vsel %vm1602, %v1595, %v1599
    %v1604 = vand.u32 2147483647, %v1551
    %vm1605 = vcmp.eq.f32.partialorder %v1604, 8.507059e+37
    %v1606 = vand.u32 %v1551, 2147483648
    %v1607 = vor.u32 1.1754944e-38, %v1606
    %v1608 = vsel %vm1605, %v1607, %v1603
    %v1609 = vmul.f32 1.0, %v1608
    %v1610 = vrcp.pop %v1552
    %v1611 = vmul.f32 %v1552, %v1610
    %v1612 = vsub.f32 1.0, %v1611
    %v1613 = vmul.f32 %v1610, %v1612
    %v1614 = vadd.f32 %v1610, %v1613
    %vm1615 = vweird.f32 %v1552
    %vm1616 = vweird.f32 %v1610
    %vm1617 = vmor %vm1615, %vm1616
    %v1618 = vsel %vm1617, %v1610, %v1614
    %v1619 = vand.u32 2147483647, %v1552
    %vm1620 = vcmp.eq.f32.partialorder %v1619, 8.507059e+37
    %v1621 = vand.u32 %v1552, 2147483648
    %v1622 = vor.u32 1.1754944e-38, %v1621
    %v1623 = vsel %vm1620, %v1622, %v1618
    %v1624 = vmul.f32 1.0, %v1623
    %v1625 = vrcp.pop %v1553
    %v1626 = vmul.f32 %v1553, %v1625
    %v1627 = vsub.f32 1.0, %v1626
    %v1628 = vmul.f32 %v1625, %v1627
    %v1629 = vadd.f32 %v1625, %v1628
    %vm1630 = vweird.f32 %v1553
    %vm1631 = vweird.f32 %v1625
    %vm1632 = vmor %vm1630, %vm1631
    %v1633 = vsel %vm1632, %v1625, %v1629
    %v1634 = vand.u32 2147483647, %v1553
    %vm1635 = vcmp.eq.f32.partialorder %v1634, 8.507059e+37
    %v1636 = vand.u32 %v1553, 2147483648
    %v1637 = vor.u32 1.1754944e-38, %v1636
    %v1638 = vsel %vm1635, %v1637, %v1633
    %v1639 = vmul.f32 1.0, %v1638
    %v1640 = vrcp.pop %v1554
    %v1641 = vmul.f32 %v1554, %v1640
    %v1642 = vsub.f32 1.0, %v1641
    %v1643 = vmul.f32 %v1640, %v1642
    %v1644 = vadd.f32 %v1640, %v1643
    %vm1645 = vweird.f32 %v1554
    %vm1646 = vweird.f32 %v1640
    %vm1647 = vmor %vm1645, %vm1646
    %v1648 = vsel %vm1647, %v1640, %v1644
    %v1649 = vand.u32 2147483647, %v1554
    %vm1650 = vcmp.eq.f32.partialorder %v1649, 8.507059e+37
    %v1651 = vand.u32 %v1554, 2147483648
    %v1652 = vor.u32 1.1754944e-38, %v1651
    %v1653 = vsel %vm1650, %v1652, %v1648
    %v1654 = vmul.f32 1.0, %v1653
    %v1655 = vrcp.pop %v1555
    %v1656 = vmul.f32 %v1555, %v1655
    %v1657 = vsub.f32 1.0, %v1656
    %v1658 = vmul.f32 %v1655, %v1657
    %v1659 = vadd.f32 %v1655, %v1658
    %vm1660 = vweird.f32 %v1555
    %vm1661 = vweird.f32 %v1655
    %vm1662 = vmor %vm1660, %vm1661
    %v1663 = vsel %vm1662, %v1655, %v1659
    %v1664 = vand.u32 2147483647, %v1555
    %vm1665 = vcmp.eq.f32.partialorder %v1664, 8.507059e+37
    %v1666 = vand.u32 %v1555, 2147483648
    %v1667 = vor.u32 1.1754944e-38, %v1666
    %v1668 = vsel %vm1665, %v1667, %v1663
    %v1669 = vmul.f32 1.0, %v1668
    %v1670 = vrcp.pop %v1556
    %v1671 = vmul.f32 %v1556, %v1670
    %v1672 = vsub.f32 1.0, %v1671
    %v1673 = vmul.f32 %v1670, %v1672
    %v1674 = vadd.f32 %v1670, %v1673
    %vm1675 = vweird.f32 %v1556
    %vm1676 = vweird.f32 %v1670
    %vm1677 = vmor %vm1675, %vm1676
    %v1678 = vsel %vm1677, %v1670, %v1674
    %v1679 = vand.u32 2147483647, %v1556
    %vm1680 = vcmp.eq.f32.partialorder %v1679, 8.507059e+37
    %v1681 = vand.u32 %v1556, 2147483648
    %v1682 = vor.u32 1.1754944e-38, %v1681
    %v1683 = vsel %vm1680, %v1682, %v1678
    %v1684 = vmul.f32 1.0, %v1683
    %v1685 = vrcp.pop %v1557
    %v1686 = vmul.f32 %v1557, %v1685
    %v1687 = vsub.f32 1.0, %v1686
    %v1688 = vmul.f32 %v1685, %v1687
    %v1689 = vadd.f32 %v1685, %v1688
    %vm1690 = vweird.f32 %v1557
    %vm1691 = vweird.f32 %v1685
    %vm1692 = vmor %vm1690, %vm1691
    %v1693 = vsel %vm1692, %v1685, %v1689
    %v1694 = vand.u32 2147483647, %v1557
    %vm1695 = vcmp.eq.f32.partialorder %v1694, 8.507059e+37
    %v1696 = vand.u32 %v1557, 2147483648
    %v1697 = vor.u32 1.1754944e-38, %v1696
    %v1698 = vsel %vm1695, %v1697, %v1693
    %v1699 = vmul.f32 1.0, %v1698
    %v1700 = vrcp.pop %v1558
    %v1701 = vmul.f32 %v1558, %v1700
    %v1702 = vsub.f32 1.0, %v1701
    %v1703 = vmul.f32 %v1700, %v1702
    %v1704 = vadd.f32 %v1700, %v1703
    %vm1705 = vweird.f32 %v1558
    %vm1706 = vweird.f32 %v1700
    %vm1707 = vmor %vm1705, %vm1706
    %v1708 = vsel %vm1707, %v1700, %v1704
    %v1709 = vand.u32 2147483647, %v1558
    %vm1710 = vcmp.eq.f32.partialorder %v1709, 8.507059e+37
    %v1711 = vand.u32 %v1558, 2147483648
    %v1712 = vor.u32 1.1754944e-38, %v1711
    %v1713 = vsel %vm1710, %v1712, %v1708
    %v1714 = vmul.f32 1.0, %v1713
    %v1715 = vrcp.pop %v1559
    %v1716 = vmul.f32 %v1559, %v1715
    %v1717 = vsub.f32 1.0, %v1716
    %v1718 = vmul.f32 %v1715, %v1717
    %v1719 = vadd.f32 %v1715, %v1718
    %vm1720 = vweird.f32 %v1559
    %vm1721 = vweird.f32 %v1715
    %vm1722 = vmor %vm1720, %vm1721
    %v1723 = vsel %vm1722, %v1715, %v1719
    %v1724 = vand.u32 2147483647, %v1559
    %vm1725 = vcmp.eq.f32.partialorder %v1724, 8.507059e+37
    %v1726 = vand.u32 %v1559, 2147483648
    %v1727 = vor.u32 1.1754944e-38, %v1726
    %v1728 = vsel %vm1725, %v1727, %v1723
    %v1729 = vmul.f32 1.0, %v1728
    %v1730 = vrcp.pop %v1560
    %v1731 = vmul.f32 %v1560, %v1730
    %v1732 = vsub.f32 1.0, %v1731
    %v1733 = vmul.f32 %v1730, %v1732
    %v1734 = vadd.f32 %v1730, %v1733
    %vm1735 = vweird.f32 %v1560
    %vm1736 = vweird.f32 %v1730
    %vm1737 = vmor %vm1735, %vm1736
    %v1738 = vsel %vm1737, %v1730, %v1734
    %v1739 = vand.u32 2147483647, %v1560
    %vm1740 = vcmp.eq.f32.partialorder %v1739, 8.507059e+37
    %v1741 = vand.u32 %v1560, 2147483648
    %v1742 = vor.u32 1.1754944e-38, %v1741
    %v1743 = vsel %vm1740, %v1742, %v1738
    %v1744 = vmul.f32 1.0, %v1743
    %v1745 = vrcp.pop %v1561
    %v1746 = vmul.f32 %v1561, %v1745
    %v1747 = vsub.f32 1.0, %v1746
    %v1748 = vmul.f32 %v1745, %v1747
    %v1749 = vadd.f32 %v1745, %v1748
    %vm1750 = vweird.f32 %v1561
    %vm1751 = vweird.f32 %v1745
    %vm1752 = vmor %vm1750, %vm1751
    %v1753 = vsel %vm1752, %v1745, %v1749
    %v1754 = vand.u32 2147483647, %v1561
    %vm1755 = vcmp.eq.f32.partialorder %v1754, 8.507059e+37
    %v1756 = vand.u32 %v1561, 2147483648
    %v1757 = vor.u32 1.1754944e-38, %v1756
    %v1758 = vsel %vm1755, %v1757, %v1753
    %v1759 = vmul.f32 1.0, %v1758
    %v1760 = vrcp.pop %v1562
    %v1761 = vmul.f32 %v1562, %v1760
    %v1762 = vsub.f32 1.0, %v1761
    %v1763 = vmul.f32 %v1760, %v1762
    %v1764 = vadd.f32 %v1760, %v1763
    %vm1765 = vweird.f32 %v1562
    %vm1766 = vweird.f32 %v1760
    %vm1767 = vmor %vm1765, %vm1766
    %v1768 = vsel %vm1767, %v1760, %v1764
    %v1769 = vand.u32 2147483647, %v1562
    %vm1770 = vcmp.eq.f32.partialorder %v1769, 8.507059e+37
    %v1771 = vand.u32 %v1562, 2147483648
    %v1772 = vor.u32 1.1754944e-38, %v1771
    %v1773 = vsel %vm1770, %v1772, %v1768
    %v1774 = vmul.f32 1.0, %v1773
    %v1775 = vrcp.pop %v1563
    %v1776 = vmul.f32 %v1563, %v1775
    %v1777 = vsub.f32 1.0, %v1776
    %v1778 = vmul.f32 %v1775, %v1777
    %v1779 = vadd.f32 %v1775, %v1778
    %vm1780 = vweird.f32 %v1563
    %vm1781 = vweird.f32 %v1775
    %vm1782 = vmor %vm1780, %vm1781
    %v1783 = vsel %vm1782, %v1775, %v1779
    %v1784 = vand.u32 2147483647, %v1563
    %vm1785 = vcmp.eq.f32.partialorder %v1784, 8.507059e+37
    %v1786 = vand.u32 %v1563, 2147483648
    %v1787 = vor.u32 1.1754944e-38, %v1786
    %v1788 = vsel %vm1785, %v1787, %v1783
    %v1789 = vmul.f32 1.0, %v1788
    %v1790 = vrcp.pop %v1564
    %v1791 = vmul.f32 %v1564, %v1790
    %v1792 = vsub.f32 1.0, %v1791
    %v1793 = vmul.f32 %v1790, %v1792
    %v1794 = vadd.f32 %v1790, %v1793
    %vm1795 = vweird.f32 %v1564
    %vm1796 = vweird.f32 %v1790
    %vm1797 = vmor %vm1795, %vm1796
    %v1798 = vsel %vm1797, %v1790, %v1794
    %v1799 = vand.u32 2147483647, %v1564
    %vm1800 = vcmp.eq.f32.partialorder %v1799, 8.507059e+37
    %v1801 = vand.u32 %v1564, 2147483648
    %v1802 = vor.u32 1.1754944e-38, %v1801
    %v1803 = vsel %vm1800, %v1802, %v1798
    %v1804 = vmul.f32 1.0, %v1803
    %v1805 = vtanh.pop %v1135
    %v1806 = vtanh.pop %v1139
    %v1807 = vtanh.pop %v1143
    %v1808 = vtanh.pop %v1147
    %v1809 = vtanh.pop %v1151
    %v1810 = vtanh.pop %v1155
    %v1811 = vtanh.pop %v1159
    %v1812 = vtanh.pop %v1163
    %v1813 = vtanh.pop %v1167
    %v1814 = vtanh.pop %v1171
    %v1815 = vtanh.pop %v1175
    %v1816 = vtanh.pop %v1179
    %v1817 = vtanh.pop %v1183
    %v1818 = vtanh.pop %v1187
    %v1819 = vtanh.pop %v1191
    %v1820 = vtanh.pop %v1195
    %v1821 = vxor.u32 %v1136, 2147483648
    %v1822 = vxor.u32 %v1140, 2147483648
    %v1823 = vxor.u32 %v1144, 2147483648
    %v1824 = vxor.u32 %v1148, 2147483648
    %v1825 = vxor.u32 %v1152, 2147483648
    %v1826 = vxor.u32 %v1156, 2147483648
    %v1827 = vxor.u32 %v1160, 2147483648
    %v1828 = vxor.u32 %v1164, 2147483648
    %v1829 = vxor.u32 %v1168, 2147483648
    %v1830 = vxor.u32 %v1172, 2147483648
    %v1831 = vxor.u32 %v1176, 2147483648
    %v1832 = vxor.u32 %v1180, 2147483648
    %v1833 = vxor.u32 %v1184, 2147483648
    %v1834 = vxor.u32 %v1188, 2147483648
    %v1835 = vxor.u32 %v1192, 2147483648
    %v1836 = vxor.u32 %v1196, 2147483648
    %v1837 = vmul.f32 %v1821, 1.442695
    %v1838 = vpow.pop %v1837
    %v1839 = vmul.f32 %v1822, 1.442695
    %v1840 = vpow.pop %v1839
    %v1841 = vmul.f32 %v1823, 1.442695
    %v1842 = vpow.pop %v1841
    %v1843 = vmul.f32 %v1824, 1.442695
    %v1844 = vpow.pop %v1843
    %v1845 = vmul.f32 %v1825, 1.442695
    %v1846 = vpow.pop %v1845
    %v1847 = vmul.f32 %v1826, 1.442695
    %v1848 = vpow.pop %v1847
    %v1849 = vmul.f32 %v1827, 1.442695
    %v1850 = vpow.pop %v1849
    %v1851 = vmul.f32 %v1828, 1.442695
    %v1852 = vpow.pop %v1851
    %v1853 = vmul.f32 %v1829, 1.442695
    %v1854 = vpow.pop %v1853
    %v1855 = vmul.f32 %v1830, 1.442695
    %v1856 = vpow.pop %v1855
    %v1857 = vmul.f32 %v1831, 1.442695
    %v1858 = vpow.pop %v1857
    %v1859 = vmul.f32 %v1832, 1.442695
    %v1860 = vpow.pop %v1859
    %v1861 = vmul.f32 %v1833, 1.442695
    %v1862 = vpow.pop %v1861
    %v1863 = vmul.f32 %v1834, 1.442695
    %v1864 = vpow.pop %v1863
    %v1865 = vmul.f32 %v1835, 1.442695
    %v1866 = vpow.pop %v1865
    %v1867 = vmul.f32 %v1836, 1.442695
    %v1868 = vpow.pop %v1867
    %v1869 = vadd.f32 %v1838, 1.0
    %v1870 = vadd.f32 %v1840, 1.0
    %v1871 = vadd.f32 %v1842, 1.0
    %v1872 = vadd.f32 %v1844, 1.0
    %v1873 = vadd.f32 %v1846, 1.0
    %v1874 = vadd.f32 %v1848, 1.0
    %v1875 = vadd.f32 %v1850, 1.0
    %v1876 = vadd.f32 %v1852, 1.0
    %v1877 = vadd.f32 %v1854, 1.0
    %v1878 = vadd.f32 %v1856, 1.0
    %v1879 = vadd.f32 %v1858, 1.0
    %v1880 = vadd.f32 %v1860, 1.0
    %v1881 = vadd.f32 %v1862, 1.0
    %v1882 = vadd.f32 %v1864, 1.0
    %v1883 = vadd.f32 %v1866, 1.0
    %v1884 = vadd.f32 %v1868, 1.0
    %v1885 = vrcp.pop %v1869
    %v1886 = vmul.f32 %v1869, %v1885
    %v1887 = vsub.f32 1.0, %v1886
    %v1888 = vmul.f32 %v1885, %v1887
    %v1889 = vadd.f32 %v1885, %v1888
    %vm1890 = vweird.f32 %v1869
    %vm1891 = vweird.f32 %v1885
    %vm1892 = vmor %vm1890, %vm1891
    %v1893 = vsel %vm1892, %v1885, %v1889
    %v1894 = vand.u32 2147483647, %v1869
    %vm1895 = vcmp.eq.f32.partialorder %v1894, 8.507059e+37
    %v1896 = vand.u32 %v1869, 2147483648
    %v1897 = vor.u32 1.1754944e-38, %v1896
    %v1898 = vsel %vm1895, %v1897, %v1893
    %v1899 = vmul.f32 1.0, %v1898
    %v1900 = vrcp.pop %v1870
    %v1901 = vmul.f32 %v1870, %v1900
    %v1902 = vsub.f32 1.0, %v1901
    %v1903 = vmul.f32 %v1900, %v1902
    %v1904 = vadd.f32 %v1900, %v1903
    %vm1905 = vweird.f32 %v1870
    %vm1906 = vweird.f32 %v1900
    %vm1907 = vmor %vm1905, %vm1906
    %v1908 = vsel %vm1907, %v1900, %v1904
    %v1909 = vand.u32 2147483647, %v1870
    %vm1910 = vcmp.eq.f32.partialorder %v1909, 8.507059e+37
    %v1911 = vand.u32 %v1870, 2147483648
    %v1912 = vor.u32 1.1754944e-38, %v1911
    %v1913 = vsel %vm1910, %v1912, %v1908
    %v1914 = vmul.f32 1.0, %v1913
    %v1915 = vrcp.pop %v1871
    %v1916 = vmul.f32 %v1871, %v1915
    %v1917 = vsub.f32 1.0, %v1916
    %v1918 = vmul.f32 %v1915, %v1917
    %v1919 = vadd.f32 %v1915, %v1918
    %vm1920 = vweird.f32 %v1871
    %vm1921 = vweird.f32 %v1915
    %vm1922 = vmor %vm1920, %vm1921
    %v1923 = vsel %vm1922, %v1915, %v1919
    %v1924 = vand.u32 2147483647, %v1871
    %vm1925 = vcmp.eq.f32.partialorder %v1924, 8.507059e+37
    %v1926 = vand.u32 %v1871, 2147483648
    %v1927 = vor.u32 1.1754944e-38, %v1926
    %v1928 = vsel %vm1925, %v1927, %v1923
    %v1929 = vmul.f32 1.0, %v1928
    %v1930 = vrcp.pop %v1872
    %v1931 = vmul.f32 %v1872, %v1930
    %v1932 = vsub.f32 1.0, %v1931
    %v1933 = vmul.f32 %v1930, %v1932
    %v1934 = vadd.f32 %v1930, %v1933
    %vm1935 = vweird.f32 %v1872
    %vm1936 = vweird.f32 %v1930
    %vm1937 = vmor %vm1935, %vm1936
    %v1938 = vsel %vm1937, %v1930, %v1934
    %v1939 = vand.u32 2147483647, %v1872
    %vm1940 = vcmp.eq.f32.partialorder %v1939, 8.507059e+37
    %v1941 = vand.u32 %v1872, 2147483648
    %v1942 = vor.u32 1.1754944e-38, %v1941
    %v1943 = vsel %vm1940, %v1942, %v1938
    %v1944 = vmul.f32 1.0, %v1943
    %v1945 = vrcp.pop %v1873
    %v1946 = vmul.f32 %v1873, %v1945
    %v1947 = vsub.f32 1.0, %v1946
    %v1948 = vmul.f32 %v1945, %v1947
    %v1949 = vadd.f32 %v1945, %v1948
    %vm1950 = vweird.f32 %v1873
    %vm1951 = vweird.f32 %v1945
    %vm1952 = vmor %vm1950, %vm1951
    %v1953 = vsel %vm1952, %v1945, %v1949
    %v1954 = vand.u32 2147483647, %v1873
    %vm1955 = vcmp.eq.f32.partialorder %v1954, 8.507059e+37
    %v1956 = vand.u32 %v1873, 2147483648
    %v1957 = vor.u32 1.1754944e-38, %v1956
    %v1958 = vsel %vm1955, %v1957, %v1953
    %v1959 = vmul.f32 1.0, %v1958
    %v1960 = vrcp.pop %v1874
    %v1961 = vmul.f32 %v1874, %v1960
    %v1962 = vsub.f32 1.0, %v1961
    %v1963 = vmul.f32 %v1960, %v1962
    %v1964 = vadd.f32 %v1960, %v1963
    %vm1965 = vweird.f32 %v1874
    %vm1966 = vweird.f32 %v1960
    %vm1967 = vmor %vm1965, %vm1966
    %v1968 = vsel %vm1967, %v1960, %v1964
    %v1969 = vand.u32 2147483647, %v1874
    %vm1970 = vcmp.eq.f32.partialorder %v1969, 8.507059e+37
    %v1971 = vand.u32 %v1874, 2147483648
    %v1972 = vor.u32 1.1754944e-38, %v1971
    %v1973 = vsel %vm1970, %v1972, %v1968
    %v1974 = vmul.f32 1.0, %v1973
    %v1975 = vrcp.pop %v1875
    %v1976 = vmul.f32 %v1875, %v1975
    %v1977 = vsub.f32 1.0, %v1976
    %v1978 = vmul.f32 %v1975, %v1977
    %v1979 = vadd.f32 %v1975, %v1978
    %vm1980 = vweird.f32 %v1875
    %vm1981 = vweird.f32 %v1975
    %vm1982 = vmor %vm1980, %vm1981
    %v1983 = vsel %vm1982, %v1975, %v1979
    %v1984 = vand.u32 2147483647, %v1875
    %vm1985 = vcmp.eq.f32.partialorder %v1984, 8.507059e+37
    %v1986 = vand.u32 %v1875, 2147483648
    %v1987 = vor.u32 1.1754944e-38, %v1986
    %v1988 = vsel %vm1985, %v1987, %v1983
    %v1989 = vmul.f32 1.0, %v1988
    %v1990 = vrcp.pop %v1876
    %v1991 = vmul.f32 %v1876, %v1990
    %v1992 = vsub.f32 1.0, %v1991
    %v1993 = vmul.f32 %v1990, %v1992
    %v1994 = vadd.f32 %v1990, %v1993
    %vm1995 = vweird.f32 %v1876
    %vm1996 = vweird.f32 %v1990
    %vm1997 = vmor %vm1995, %vm1996
    %v1998 = vsel %vm1997, %v1990, %v1994
    %v1999 = vand.u32 2147483647, %v1876
    %vm2000 = vcmp.eq.f32.partialorder %v1999, 8.507059e+37
    %v2001 = vand.u32 %v1876, 2147483648
    %v2002 = vor.u32 1.1754944e-38, %v2001
    %v2003 = vsel %vm2000, %v2002, %v1998
    %v2004 = vmul.f32 1.0, %v2003
    %v2005 = vrcp.pop %v1877
    %v2006 = vmul.f32 %v1877, %v2005
    %v2007 = vsub.f32 1.0, %v2006
    %v2008 = vmul.f32 %v2005, %v2007
    %v2009 = vadd.f32 %v2005, %v2008
    %vm2010 = vweird.f32 %v1877
    %vm2011 = vweird.f32 %v2005
    %vm2012 = vmor %vm2010, %vm2011
    %v2013 = vsel %vm2012, %v2005, %v2009
    %v2014 = vand.u32 2147483647, %v1877
    %vm2015 = vcmp.eq.f32.partialorder %v2014, 8.507059e+37
    %v2016 = vand.u32 %v1877, 2147483648
    %v2017 = vor.u32 1.1754944e-38, %v2016
    %v2018 = vsel %vm2015, %v2017, %v2013
    %v2019 = vmul.f32 1.0, %v2018
    %v2020 = vrcp.pop %v1878
    %v2021 = vmul.f32 %v1878, %v2020
    %v2022 = vsub.f32 1.0, %v2021
    %v2023 = vmul.f32 %v2020, %v2022
    %v2024 = vadd.f32 %v2020, %v2023
    %vm2025 = vweird.f32 %v1878
    %vm2026 = vweird.f32 %v2020
    %vm2027 = vmor %vm2025, %vm2026
    %v2028 = vsel %vm2027, %v2020, %v2024
    %v2029 = vand.u32 2147483647, %v1878
    %vm2030 = vcmp.eq.f32.partialorder %v2029, 8.507059e+37
    %v2031 = vand.u32 %v1878, 2147483648
    %v2032 = vor.u32 1.1754944e-38, %v2031
    %v2033 = vsel %vm2030, %v2032, %v2028
    %v2034 = vmul.f32 1.0, %v2033
    %v2035 = vrcp.pop %v1879
    %v2036 = vmul.f32 %v1879, %v2035
    %v2037 = vsub.f32 1.0, %v2036
    %v2038 = vmul.f32 %v2035, %v2037
    %v2039 = vadd.f32 %v2035, %v2038
    %vm2040 = vweird.f32 %v1879
    %vm2041 = vweird.f32 %v2035
    %vm2042 = vmor %vm2040, %vm2041
    %v2043 = vsel %vm2042, %v2035, %v2039
    %v2044 = vand.u32 2147483647, %v1879
    %vm2045 = vcmp.eq.f32.partialorder %v2044, 8.507059e+37
    %v2046 = vand.u32 %v1879, 2147483648
    %v2047 = vor.u32 1.1754944e-38, %v2046
    %v2048 = vsel %vm2045, %v2047, %v2043
    %v2049 = vmul.f32 1.0, %v2048
    %v2050 = vrcp.pop %v1880
    %v2051 = vmul.f32 %v1880, %v2050
    %v2052 = vsub.f32 1.0, %v2051
    %v2053 = vmul.f32 %v2050, %v2052
    %v2054 = vadd.f32 %v2050, %v2053
    %vm2055 = vweird.f32 %v1880
    %vm2056 = vweird.f32 %v2050
    %vm2057 = vmor %vm2055, %vm2056
    %v2058 = vsel %vm2057, %v2050, %v2054
    %v2059 = vand.u32 2147483647, %v1880
    %vm2060 = vcmp.eq.f32.partialorder %v2059, 8.507059e+37
    %v2061 = vand.u32 %v1880, 2147483648
    %v2062 = vor.u32 1.1754944e-38, %v2061
    %v2063 = vsel %vm2060, %v2062, %v2058
    %v2064 = vmul.f32 1.0, %v2063
    %v2065 = vrcp.pop %v1881
    %v2066 = vmul.f32 %v1881, %v2065
    %v2067 = vsub.f32 1.0, %v2066
    %v2068 = vmul.f32 %v2065, %v2067
    %v2069 = vadd.f32 %v2065, %v2068
    %vm2070 = vweird.f32 %v1881
    %vm2071 = vweird.f32 %v2065
    %vm2072 = vmor %vm2070, %vm2071
    %v2073 = vsel %vm2072, %v2065, %v2069
    %v2074 = vand.u32 2147483647, %v1881
    %vm2075 = vcmp.eq.f32.partialorder %v2074, 8.507059e+37
    %v2076 = vand.u32 %v1881, 2147483648
    %v2077 = vor.u32 1.1754944e-38, %v2076
    %v2078 = vsel %vm2075, %v2077, %v2073
    %v2079 = vmul.f32 1.0, %v2078
    %v2080 = vrcp.pop %v1882
    %v2081 = vmul.f32 %v1882, %v2080
    %v2082 = vsub.f32 1.0, %v2081
    %v2083 = vmul.f32 %v2080, %v2082
    %v2084 = vadd.f32 %v2080, %v2083
    %vm2085 = vweird.f32 %v1882
    %vm2086 = vweird.f32 %v2080
    %vm2087 = vmor %vm2085, %vm2086
    %v2088 = vsel %vm2087, %v2080, %v2084
    %v2089 = vand.u32 2147483647, %v1882
    %vm2090 = vcmp.eq.f32.partialorder %v2089, 8.507059e+37
    %v2091 = vand.u32 %v1882, 2147483648
    %v2092 = vor.u32 1.1754944e-38, %v2091
    %v2093 = vsel %vm2090, %v2092, %v2088
    %v2094 = vmul.f32 1.0, %v2093
    %v2095 = vrcp.pop %v1883
    %v2096 = vmul.f32 %v1883, %v2095
    %v2097 = vsub.f32 1.0, %v2096
    %v2098 = vmul.f32 %v2095, %v2097
    %v2099 = vadd.f32 %v2095, %v2098
    %vm2100 = vweird.f32 %v1883
    %vm2101 = vweird.f32 %v2095
    %vm2102 = vmor %vm2100, %vm2101
    %v2103 = vsel %vm2102, %v2095, %v2099
    %v2104 = vand.u32 2147483647, %v1883
    %vm2105 = vcmp.eq.f32.partialorder %v2104, 8.507059e+37
    %v2106 = vand.u32 %v1883, 2147483648
    %v2107 = vor.u32 1.1754944e-38, %v2106
    %v2108 = vsel %vm2105, %v2107, %v2103
    %v2109 = vmul.f32 1.0, %v2108
    %v2110 = vrcp.pop %v1884
    %v2111 = vmul.f32 %v1884, %v2110
    %v2112 = vsub.f32 1.0, %v2111
    %v2113 = vmul.f32 %v2110, %v2112
    %v2114 = vadd.f32 %v2110, %v2113
    %vm2115 = vweird.f32 %v1884
    %vm2116 = vweird.f32 %v2110
    %vm2117 = vmor %vm2115, %vm2116
    %v2118 = vsel %vm2117, %v2110, %v2114
    %v2119 = vand.u32 2147483647, %v1884
    %vm2120 = vcmp.eq.f32.partialorder %v2119, 8.507059e+37
    %v2121 = vand.u32 %v1884, 2147483648
    %v2122 = vor.u32 1.1754944e-38, %v2121
    %v2123 = vsel %vm2120, %v2122, %v2118
    %v2124 = vmul.f32 1.0, %v2123
    %v2125 = vmul.f32 %v1275, %v1805
    %v2126 = vmul.f32 %v1290, %v1806
    %v2127 = vmul.f32 %v1305, %v1807
    %v2128 = vmul.f32 %v1320, %v1808
    %v2129 = vmul.f32 %v1335, %v1809
    %v2130 = vmul.f32 %v1350, %v1810
    %v2131 = vmul.f32 %v1365, %v1811
    %v2132 = vmul.f32 %v1380, %v1812
    %v2133 = vmul.f32 %v1395, %v1813
    %v2134 = vmul.f32 %v1410, %v1814
    %v2135 = vmul.f32 %v1425, %v1815
    %v2136 = vmul.f32 %v1440, %v1816
    %v2137 = vmul.f32 %v1455, %v1817
    %v2138 = vmul.f32 %v1470, %v1818
    %v2139 = vmul.f32 %v1485, %v1819
    %v2140 = vmul.f32 %v1500, %v1820
    %v2141 = vmul.f32 %v1899, %v730
    %v2142 = vmul.f32 %v1914, %v732
    %v2143 = vmul.f32 %v1929, %v735
    %v2144 = vmul.f32 %v1944, %v737
    %v2145 = vmul.f32 %v1959, %v740
    %v2146 = vmul.f32 %v1974, %v742
    %v2147 = vmul.f32 %v1989, %v745
    %v2148 = vmul.f32 %v2004, %v747
    %v2149 = vmul.f32 %v2019, %v750
    %v2150 = vmul.f32 %v2034, %v752
    %v2151 = vmul.f32 %v2049, %v755
    %v2152 = vmul.f32 %v2064, %v757
    %v2153 = vmul.f32 %v2079, %v760
    %v2154 = vmul.f32 %v2094, %v762
    %v2155 = vmul.f32 %v2109, %v765
    %v2156 = vmul.f32 %v2124, %v767
    %v2157 = vadd.f32 %v2125, %v2141
    %v2158 = vadd.f32 %v2126, %v2142
    %v2159 = vadd.f32 %v2127, %v2143
    %v2160 = vadd.f32 %v2128, %v2144
    %v2161 = vadd.f32 %v2129, %v2145
    %v2162 = vadd.f32 %v2130, %v2146
    %v2163 = vadd.f32 %v2131, %v2147
    %v2164 = vadd.f32 %v2132, %v2148
    %v2165 = vadd.f32 %v2133, %v2149
    %v2166 = vadd.f32 %v2134, %v2150
    %v2167 = vadd.f32 %v2135, %v2151
    %v2168 = vadd.f32 %v2136, %v2152
    %v2169 = vadd.f32 %v2137, %v2153
    %v2170 = vadd.f32 %v2138, %v2154
    %v2171 = vadd.f32 %v2139, %v2155
    %v2172 = vadd.f32 %v2140, %v2156
    %v2173 = vtanh.pop %v2157
    %v2174 = vtanh.pop %v2158
    %v2175 = vtanh.pop %v2159
    %v2176 = vtanh.pop %v2160
    %v2177 = vtanh.pop %v2161
    %v2178 = vtanh.pop %v2162
    %v2179 = vtanh.pop %v2163
    %v2180 = vtanh.pop %v2164
    %v2181 = vtanh.pop %v2165
    %v2182 = vtanh.pop %v2166
    %v2183 = vtanh.pop %v2167
    %v2184 = vtanh.pop %v2168
    %v2185 = vtanh.pop %v2169
    %v2186 = vtanh.pop %v2170
    %v2187 = vtanh.pop %v2171
    %v2188 = vtanh.pop %v2172
    %v2189 = vmul.f32 %v1579, %v2173
    %v2190 = vmul.f32 %v1594, %v2174
    %v2191 = vmul.f32 %v1609, %v2175
    %v2192 = vmul.f32 %v1624, %v2176
    %v2193 = vmul.f32 %v1639, %v2177
    %v2194 = vmul.f32 %v1654, %v2178
    %v2195 = vmul.f32 %v1669, %v2179
    %v2196 = vmul.f32 %v1684, %v2180
    %v2197 = vmul.f32 %v1699, %v2181
    %v2198 = vmul.f32 %v1714, %v2182
    %v2199 = vmul.f32 %v1729, %v2183
    %v2200 = vmul.f32 %v1744, %v2184
    %v2201 = vmul.f32 %v1759, %v2185
    %v2202 = vmul.f32 %v1774, %v2186
    %v2203 = vmul.f32 %v1789, %v2187
    %v2204 = vmul.f32 %v1804, %v2188
    %vm2205 = vcmp.eq.s32.totalorder %v656, 0
    %vm2206 = vcmp.eq.s32.totalorder %v657, 0
    %vm2207 = vcmp.eq.s32.totalorder %v658, 0
    %vm2208 = vcmp.eq.s32.totalorder %v659, 0
    %vm2209 = vcmp.eq.s32.totalorder %v660, 0
    %vm2210 = vcmp.eq.s32.totalorder %v661, 0
    %vm2211 = vcmp.eq.s32.totalorder %v662, 0
    %vm2212 = vcmp.eq.s32.totalorder %v663, 0
    %vm2213 = vcmp.eq.s32.totalorder %v664, 0
    %vm2214 = vcmp.eq.s32.totalorder %v665, 0
    %vm2215 = vcmp.eq.s32.totalorder %v666, 0
    %vm2216 = vcmp.eq.s32.totalorder %v667, 0
    %vm2217 = vcmp.eq.s32.totalorder %v668, 0
    %vm2218 = vcmp.eq.s32.totalorder %v669, 0
    %vm2219 = vcmp.eq.s32.totalorder %v670, 0
    %vm2220 = vcmp.eq.s32.totalorder %v671, 0
    %v2221 = vsel %vm2205, 1, 0
    %v2222 = vsel %vm2206, 1, 0
    %v2223 = vsel %vm2207, 1, 0
    %v2224 = vsel %vm2208, 1, 0
    %v2225 = vsel %vm2209, 1, 0
    %v2226 = vsel %vm2210, 1, 0
    %v2227 = vsel %vm2211, 1, 0
    %v2228 = vsel %vm2212, 1, 0
    %v2229 = vsel %vm2213, 1, 0
    %v2230 = vsel %vm2214, 1, 0
    %v2231 = vsel %vm2215, 1, 0
    %v2232 = vsel %vm2216, 1, 0
    %v2233 = vsel %vm2217, 1, 0
    %v2234 = vsel %vm2218, 1, 0
    %v2235 = vsel %vm2219, 1, 0
    %v2236 = vsel %vm2220, 1, 0
    %2237 = vset.pattern.permute.xlu0 0
    %2238 = vperm.xlu0 %2237, %v2221
    %v2239 = vpop.permute.xlu0 %2238
    %2240 = vset.pattern.permute.xlu0 0
    %2241 = vperm.xlu0 %2240, %v2222
    %v2242 = vpop.permute.xlu0 %2241
    %2243 = vset.pattern.permute.xlu0 0
    %2244 = vperm.xlu0 %2243, %v2223
    %v2245 = vpop.permute.xlu0 %2244
    %2246 = vset.pattern.permute.xlu0 0
    %2247 = vperm.xlu0 %2246, %v2224
    %v2248 = vpop.permute.xlu0 %2247
    %2249 = vset.pattern.permute.xlu0 0
    %2250 = vperm.xlu0 %2249, %v2225
    %v2251 = vpop.permute.xlu0 %2250
    %2252 = vset.pattern.permute.xlu0 0
    %2253 = vperm.xlu0 %2252, %v2226
    %v2254 = vpop.permute.xlu0 %2253
    %2255 = vset.pattern.permute.xlu0 0
    %2256 = vperm.xlu0 %2255, %v2227
    %v2257 = vpop.permute.xlu0 %2256
    %2258 = vset.pattern.permute.xlu0 0
    %2259 = vperm.xlu0 %2258, %v2228
    %v2260 = vpop.permute.xlu0 %2259
    %2261 = vset.pattern.permute.xlu0 0
    %2262 = vperm.xlu0 %2261, %v2229
    %v2263 = vpop.permute.xlu0 %2262
    %2264 = vset.pattern.permute.xlu0 0
    %2265 = vperm.xlu0 %2264, %v2230
    %v2266 = vpop.permute.xlu0 %2265
    %2267 = vset.pattern.permute.xlu0 0
    %2268 = vperm.xlu0 %2267, %v2231
    %v2269 = vpop.permute.xlu0 %2268
    %2270 = vset.pattern.permute.xlu0 0
    %2271 = vperm.xlu0 %2270, %v2232
    %v2272 = vpop.permute.xlu0 %2271
    %2273 = vset.pattern.permute.xlu0 0
    %2274 = vperm.xlu0 %2273, %v2233
    %v2275 = vpop.permute.xlu0 %2274
    %2276 = vset.pattern.permute.xlu0 0
    %2277 = vperm.xlu0 %2276, %v2234
    %v2278 = vpop.permute.xlu0 %2277
    %2279 = vset.pattern.permute.xlu0 0
    %2280 = vperm.xlu0 %2279, %v2235
    %v2281 = vpop.permute.xlu0 %2280
    %2282 = vset.pattern.permute.xlu0 0
    %2283 = vperm.xlu0 %2282, %v2236
    %v2284 = vpop.permute.xlu0 %2283
    %vm2285 = vcmp.eq.s32.totalorder %v2239, 1
    %vm2286 = vcmp.eq.s32.totalorder %v2242, 1
    %vm2287 = vcmp.eq.s32.totalorder %v2245, 1
    %vm2288 = vcmp.eq.s32.totalorder %v2248, 1
    %vm2289 = vcmp.eq.s32.totalorder %v2251, 1
    %vm2290 = vcmp.eq.s32.totalorder %v2254, 1
    %vm2291 = vcmp.eq.s32.totalorder %v2257, 1
    %vm2292 = vcmp.eq.s32.totalorder %v2260, 1
    %vm2293 = vcmp.eq.s32.totalorder %v2263, 1
    %vm2294 = vcmp.eq.s32.totalorder %v2266, 1
    %vm2295 = vcmp.eq.s32.totalorder %v2269, 1
    %vm2296 = vcmp.eq.s32.totalorder %v2272, 1
    %vm2297 = vcmp.eq.s32.totalorder %v2275, 1
    %vm2298 = vcmp.eq.s32.totalorder %v2278, 1
    %vm2299 = vcmp.eq.s32.totalorder %v2281, 1
    %vm2300 = vcmp.eq.s32.totalorder %v2284, 1
    %v2301 = vsel %vm2285, %v2189, 0.0
    %v2302 = vsel %vm2286, %v2190, 0.0
    %v2303 = vsel %vm2287, %v2191, 0.0
    %v2304 = vsel %vm2288, %v2192, 0.0
    %v2305 = vsel %vm2289, %v2193, 0.0
    %v2306 = vsel %vm2290, %v2194, 0.0
    %v2307 = vsel %vm2291, %v2195, 0.0
    %v2308 = vsel %vm2292, %v2196, 0.0
    %v2309 = vsel %vm2293, %v2197, 0.0
    %v2310 = vsel %vm2294, %v2198, 0.0
    %v2311 = vsel %vm2295, %v2199, 0.0
    %v2312 = vsel %vm2296, %v2200, 0.0
    %v2313 = vsel %vm2297, %v2201, 0.0
    %v2314 = vsel %vm2298, %v2202, 0.0
    %v2315 = vsel %vm2299, %v2203, 0.0
    %v2316 = vsel %vm2300, %v2204, 0.0
    %v2317 = vsel %vm2285, %v2157, 0.0
    %v2318 = vsel %vm2286, %v2158, 0.0
    %v2319 = vsel %vm2287, %v2159, 0.0
    %v2320 = vsel %vm2288, %v2160, 0.0
    %v2321 = vsel %vm2289, %v2161, 0.0
    %v2322 = vsel %vm2290, %v2162, 0.0
    %v2323 = vsel %vm2291, %v2163, 0.0
    %v2324 = vsel %vm2292, %v2164, 0.0
    %v2325 = vsel %vm2293, %v2165, 0.0
    %v2326 = vsel %vm2294, %v2166, 0.0
    %v2327 = vsel %vm2295, %v2167, 0.0
    %v2328 = vsel %vm2296, %v2168, 0.0
    %v2329 = vsel %vm2297, %v2169, 0.0
    %v2330 = vsel %vm2298, %v2170, 0.0
    %v2331 = vsel %vm2299, %v2171, 0.0
    %v2332 = vsel %vm2300, %v2172, 0.0
    %v2333 = vpack.c.bf16 %v2301, %v2301
    %v2334 = vpack.c.bf16 %v2302, %v2302
    %v2335 = vpack.c.bf16 %v2303, %v2303
    %v2336 = vpack.c.bf16 %v2304, %v2304
    %v2337 = vpack.c.bf16 %v2305, %v2305
    %v2338 = vpack.c.bf16 %v2306, %v2306
    %v2339 = vpack.c.bf16 %v2307, %v2307
    %v2340 = vpack.c.bf16 %v2308, %v2308
    %v2341 = vpack.c.bf16 %v2309, %v2309
    %v2342 = vpack.c.bf16 %v2310, %v2310
    %v2343 = vpack.c.bf16 %v2311, %v2311
    %v2344 = vpack.c.bf16 %v2312, %v2312
    %v2345 = vpack.c.bf16 %v2313, %v2313
    %v2346 = vpack.c.bf16 %v2314, %v2314
    %v2347 = vpack.c.bf16 %v2315, %v2315
    %v2348 = vpack.c.bf16 %v2316, %v2316
    %v2349 = vpack.c.bf16 %v2317, %v2317
    %v2350 = vpack.c.bf16 %v2318, %v2318
    %v2351 = vpack.c.bf16 %v2319, %v2319
    %v2352 = vpack.c.bf16 %v2320, %v2320
    %v2353 = vpack.c.bf16 %v2321, %v2321
    %v2354 = vpack.c.bf16 %v2322, %v2322
    %v2355 = vpack.c.bf16 %v2323, %v2323
    %v2356 = vpack.c.bf16 %v2324, %v2324
    %v2357 = vpack.c.bf16 %v2325, %v2325
    %v2358 = vpack.c.bf16 %v2326, %v2326
    %v2359 = vpack.c.bf16 %v2327, %v2327
    %v2360 = vpack.c.bf16 %v2328, %v2328
    %v2361 = vpack.c.bf16 %v2329, %v2329
    %v2362 = vpack.c.bf16 %v2330, %v2330
    %v2363 = vpack.c.bf16 %v2331, %v2331
    %v2364 = vpack.c.bf16 %v2332, %v2332
    %v2381 = vunpack.c.l.b16 %v2333
    %v2382 = vunpack.c.l.b16 %v2334
    %v2383 = vunpack.c.l.b16 %v2335
    %v2384 = vunpack.c.l.b16 %v2336
    %v2385 = vunpack.c.l.b16 %v2337
    %v2386 = vunpack.c.l.b16 %v2338
    %v2387 = vunpack.c.l.b16 %v2339
    %v2388 = vunpack.c.l.b16 %v2340
    %v2389 = vunpack.c.l.b16 %v2341
    %v2390 = vunpack.c.l.b16 %v2342
    %v2391 = vunpack.c.l.b16 %v2343
    %v2392 = vunpack.c.l.b16 %v2344
    %v2393 = vunpack.c.l.b16 %v2345
    %v2394 = vunpack.c.l.b16 %v2346
    %v2395 = vunpack.c.l.b16 %v2347
    %v2396 = vunpack.c.l.b16 %v2348
    %v2397 = vpack.c.b16 %v2382, %v2381
    %v2398 = vpack.c.b16 %v2384, %v2383
    %v2399 = vpack.c.b16 %v2386, %v2385
    %v2400 = vpack.c.b16 %v2388, %v2387
    %v2401 = vpack.c.b16 %v2390, %v2389
    %v2402 = vpack.c.b16 %v2392, %v2391
    %v2403 = vpack.c.b16 %v2394, %v2393
    %v2404 = vpack.c.b16 %v2396, %v2395
    %v2429 = vunpack.c.l.b16 %v2349
    %v2430 = vunpack.c.l.b16 %v2350
    %v2431 = vunpack.c.l.b16 %v2351
    %v2432 = vunpack.c.l.b16 %v2352
    %v2433 = vunpack.c.l.b16 %v2353
    %v2434 = vunpack.c.l.b16 %v2354
    %v2435 = vunpack.c.l.b16 %v2355
    %v2436 = vunpack.c.l.b16 %v2356
    %v2437 = vunpack.c.l.b16 %v2357
    %v2438 = vunpack.c.l.b16 %v2358
    %v2439 = vunpack.c.l.b16 %v2359
    %v2440 = vunpack.c.l.b16 %v2360
    %v2441 = vunpack.c.l.b16 %v2361
    %v2442 = vunpack.c.l.b16 %v2362
    %v2443 = vunpack.c.l.b16 %v2363
    %v2444 = vunpack.c.l.b16 %v2364
    %v2445 = vpack.c.b16 %v2430, %v2429
    %v2446 = vpack.c.b16 %v2432, %v2431
    %v2447 = vpack.c.b16 %v2434, %v2433
    %v2448 = vpack.c.b16 %v2436, %v2435
    %v2449 = vpack.c.b16 %v2438, %v2437
    %v2450 = vpack.c.b16 %v2440, %v2439
    %v2451 = vpack.c.b16 %v2442, %v2441
    %v2452 = vpack.c.b16 %v2444, %v2443
    %2461 = vmatpush.bf16.msra.mxu0 %v2404
    %2462 = vmatpush.bf16.msra.mxu0 %v2403
    %2463 = vmatpush.bf16.msra.mxu0 %v2402
    %2464 = vmatpush.bf16.msra.mxu0 %v2401
    %2465 = vmatpush.bf16.msra.mxu0 %v2400
    %2466 = vmatpush.bf16.msra.mxu0 %v2399
    %2467 = vmatpush.bf16.msra.mxu0 %v2398
    %2468 = vmatpush.bf16.msra.mxu0 %v2397
    %2469 = vmatmul.bf16.gmra.mxu0 %v704
    %v2470 = vpop.f32.mrf.mxu0
    %v2471 = vadd.f32 0.0, %v2470
    %v2472 = vpop.f32.mrf.mxu0
    %v2473 = vadd.f32 0.0, %v2472
    %2474 = vmatmul.bf16.gmra.mxu0 %v705
    %v2475 = vpop.f32.mrf.mxu0
    %v2476 = vadd.f32 0.0, %v2475
    %v2477 = vpop.f32.mrf.mxu0
    %v2478 = vadd.f32 0.0, %v2477
    %2479 = vmatmul.bf16.gmra.mxu0 %v706
    %v2480 = vpop.f32.mrf.mxu0
    %v2481 = vadd.f32 0.0, %v2480
    %v2482 = vpop.f32.mrf.mxu0
    %v2483 = vadd.f32 0.0, %v2482
    %2484 = vmatmul.bf16.gmra.mxu0 %v707
    %v2485 = vpop.f32.mrf.mxu0
    %v2486 = vadd.f32 0.0, %v2485
    %v2487 = vpop.f32.mrf.mxu0
    %v2488 = vadd.f32 0.0, %v2487
    %2489 = vmatmul.bf16.gmra.mxu0 %v708
    %v2490 = vpop.f32.mrf.mxu0
    %v2491 = vadd.f32 0.0, %v2490
    %v2492 = vpop.f32.mrf.mxu0
    %v2493 = vadd.f32 0.0, %v2492
    %2494 = vmatmul.bf16.gmra.mxu0 %v709
    %v2495 = vpop.f32.mrf.mxu0
    %v2496 = vadd.f32 0.0, %v2495
    %v2497 = vpop.f32.mrf.mxu0
    %v2498 = vadd.f32 0.0, %v2497
    %2499 = vmatmul.bf16.gmra.mxu0 %v710
    %v2500 = vpop.f32.mrf.mxu0
    %v2501 = vadd.f32 0.0, %v2500
    %v2502 = vpop.f32.mrf.mxu0
    %v2503 = vadd.f32 0.0, %v2502
    %2504 = vmatmul.bf16.gmra.mxu0 %v711
    %v2505 = vpop.f32.mrf.mxu0
    %v2506 = vadd.f32 0.0, %v2505
    %v2507 = vpop.f32.mrf.mxu0
    %v2508 = vadd.f32 0.0, %v2507
    %2509 = vdwg.mxu0
    %2510 = vmatpush.bf16.msra.mxu0 %v2452
    %2511 = vmatpush.bf16.msra.mxu0 %v2451
    %2512 = vmatpush.bf16.msra.mxu0 %v2450
    %2513 = vmatpush.bf16.msra.mxu0 %v2449
    %2514 = vmatpush.bf16.msra.mxu0 %v2448
    %2515 = vmatpush.bf16.msra.mxu0 %v2447
    %2516 = vmatpush.bf16.msra.mxu0 %v2446
    %2517 = vmatpush.bf16.msra.mxu0 %v2445
    %2518 = vmatmul.bf16.gmra.mxu0 %v704
    %v2519 = vpop.f32.mrf.mxu0
    %v2520 = vadd.f32 0.0, %v2519
    %v2521 = vpop.f32.mrf.mxu0
    %v2522 = vadd.f32 0.0, %v2521
    %2523 = vmatmul.bf16.gmra.mxu0 %v705
    %v2524 = vpop.f32.mrf.mxu0
    %v2525 = vadd.f32 0.0, %v2524
    %v2526 = vpop.f32.mrf.mxu0
    %v2527 = vadd.f32 0.0, %v2526
    %2528 = vmatmul.bf16.gmra.mxu0 %v706
    %v2529 = vpop.f32.mrf.mxu0
    %v2530 = vadd.f32 0.0, %v2529
    %v2531 = vpop.f32.mrf.mxu0
    %v2532 = vadd.f32 0.0, %v2531
    %2533 = vmatmul.bf16.gmra.mxu0 %v707
    %v2534 = vpop.f32.mrf.mxu0
    %v2535 = vadd.f32 0.0, %v2534
    %v2536 = vpop.f32.mrf.mxu0
    %v2537 = vadd.f32 0.0, %v2536
    %2538 = vmatmul.bf16.gmra.mxu0 %v708
    %v2539 = vpop.f32.mrf.mxu0
    %v2540 = vadd.f32 0.0, %v2539
    %v2541 = vpop.f32.mrf.mxu0
    %v2542 = vadd.f32 0.0, %v2541
    %2543 = vmatmul.bf16.gmra.mxu0 %v709
    %v2544 = vpop.f32.mrf.mxu0
    %v2545 = vadd.f32 0.0, %v2544
    %v2546 = vpop.f32.mrf.mxu0
    %v2547 = vadd.f32 0.0, %v2546
    %2548 = vmatmul.bf16.gmra.mxu0 %v710
    %v2549 = vpop.f32.mrf.mxu0
    %v2550 = vadd.f32 0.0, %v2549
    %v2551 = vpop.f32.mrf.mxu0
    %v2552 = vadd.f32 0.0, %v2551
    %2553 = vmatmul.bf16.gmra.mxu0 %v711
    %v2554 = vpop.f32.mrf.mxu0
    %v2555 = vadd.f32 0.0, %v2554
    %v2556 = vpop.f32.mrf.mxu0
    %v2557 = vadd.f32 0.0, %v2556
    %2558 = vdwg.mxu0
    %v2559 = vpack.c.bf16 %v2473, %v2471
    %v2560 = vpack.c.bf16 %v2478, %v2476
    %v2561 = vpack.c.bf16 %v2483, %v2481
    %v2562 = vpack.c.bf16 %v2488, %v2486
    %v2563 = vpack.c.bf16 %v2493, %v2491
    %v2564 = vpack.c.bf16 %v2498, %v2496
    %v2565 = vpack.c.bf16 %v2503, %v2501
    %v2566 = vpack.c.bf16 %v2508, %v2506
    %2567 = vmatpush.bf16.msra.mxu0 %v901
    %2568 = vmatpush.bf16.msra.mxu0 %v897
    %2569 = vmatpush.bf16.msra.mxu0 %v893
    %2570 = vmatpush.bf16.msra.mxu0 %v889
    %2571 = vmatpush.bf16.msra.mxu0 %v885
    %2572 = vmatpush.bf16.msra.mxu0 %v881
    %2573 = vmatpush.bf16.msra.mxu0 %v877
    %2574 = vmatpush.bf16.msra.mxu0 %v873
    %2575 = vmatmul.bf16.gmra.mxu0 %v2559
    %v2576 = vpop.f32.mrf.mxu0
    %v2577 = vadd.f32 0.0, %v2576
    %v2578 = vpop.f32.mrf.mxu0
    %v2579 = vadd.f32 0.0, %v2578
    %2580 = vmatmul.bf16.gmra.mxu0 %v2560
    %v2581 = vpop.f32.mrf.mxu0
    %v2582 = vadd.f32 0.0, %v2581
    %v2583 = vpop.f32.mrf.mxu0
    %v2584 = vadd.f32 0.0, %v2583
    %2585 = vmatmul.bf16.gmra.mxu0 %v2561
    %v2586 = vpop.f32.mrf.mxu0
    %v2587 = vadd.f32 0.0, %v2586
    %v2588 = vpop.f32.mrf.mxu0
    %v2589 = vadd.f32 0.0, %v2588
    %2590 = vmatmul.bf16.gmra.mxu0 %v2562
    %v2591 = vpop.f32.mrf.mxu0
    %v2592 = vadd.f32 0.0, %v2591
    %v2593 = vpop.f32.mrf.mxu0
    %v2594 = vadd.f32 0.0, %v2593
    %2595 = vmatmul.bf16.gmra.mxu0 %v2563
    %v2596 = vpop.f32.mrf.mxu0
    %v2597 = vadd.f32 0.0, %v2596
    %v2598 = vpop.f32.mrf.mxu0
    %v2599 = vadd.f32 0.0, %v2598
    %2600 = vmatmul.bf16.gmra.mxu0 %v2564
    %v2601 = vpop.f32.mrf.mxu0
    %v2602 = vadd.f32 0.0, %v2601
    %v2603 = vpop.f32.mrf.mxu0
    %v2604 = vadd.f32 0.0, %v2603
    %2605 = vmatmul.bf16.gmra.mxu0 %v2565
    %v2606 = vpop.f32.mrf.mxu0
    %v2607 = vadd.f32 0.0, %v2606
    %v2608 = vpop.f32.mrf.mxu0
    %v2609 = vadd.f32 0.0, %v2608
    %2610 = vmatmul.bf16.gmra.mxu0 %v2566
    %v2611 = vpop.f32.mrf.mxu0
    %v2612 = vadd.f32 0.0, %v2611
    %v2613 = vpop.f32.mrf.mxu0
    %v2614 = vadd.f32 0.0, %v2613
    %2615 = vdwg.mxu0
    %2616 = vmatpush.bf16.msra.mxu0 %v902
    %2617 = vmatpush.bf16.msra.mxu0 %v898
    %2618 = vmatpush.bf16.msra.mxu0 %v894
    %2619 = vmatpush.bf16.msra.mxu0 %v890
    %2620 = vmatpush.bf16.msra.mxu0 %v886
    %2621 = vmatpush.bf16.msra.mxu0 %v882
    %2622 = vmatpush.bf16.msra.mxu0 %v878
    %2623 = vmatpush.bf16.msra.mxu0 %v874
    %2624 = vmatmul.bf16.gmra.mxu0 %v2559
    %v2625 = vpop.f32.mrf.mxu0
    %v2626 = vadd.f32 0.0, %v2625
    %v2627 = vpop.f32.mrf.mxu0
    %v2628 = vadd.f32 0.0, %v2627
    %2629 = vmatmul.bf16.gmra.mxu0 %v2560
    %v2630 = vpop.f32.mrf.mxu0
    %v2631 = vadd.f32 0.0, %v2630
    %v2632 = vpop.f32.mrf.mxu0
    %v2633 = vadd.f32 0.0, %v2632
    %2634 = vmatmul.bf16.gmra.mxu0 %v2561
    %v2635 = vpop.f32.mrf.mxu0
    %v2636 = vadd.f32 0.0, %v2635
    %v2637 = vpop.f32.mrf.mxu0
    %v2638 = vadd.f32 0.0, %v2637
    %2639 = vmatmul.bf16.gmra.mxu0 %v2562
    %v2640 = vpop.f32.mrf.mxu0
    %v2641 = vadd.f32 0.0, %v2640
    %v2642 = vpop.f32.mrf.mxu0
    %v2643 = vadd.f32 0.0, %v2642
    %2644 = vmatmul.bf16.gmra.mxu0 %v2563
    %v2645 = vpop.f32.mrf.mxu0
    %v2646 = vadd.f32 0.0, %v2645
    %v2647 = vpop.f32.mrf.mxu0
    %v2648 = vadd.f32 0.0, %v2647
    %2649 = vmatmul.bf16.gmra.mxu0 %v2564
    %v2650 = vpop.f32.mrf.mxu0
    %v2651 = vadd.f32 0.0, %v2650
    %v2652 = vpop.f32.mrf.mxu0
    %v2653 = vadd.f32 0.0, %v2652
    %2654 = vmatmul.bf16.gmra.mxu0 %v2565
    %v2655 = vpop.f32.mrf.mxu0
    %v2656 = vadd.f32 0.0, %v2655
    %v2657 = vpop.f32.mrf.mxu0
    %v2658 = vadd.f32 0.0, %v2657
    %2659 = vmatmul.bf16.gmra.mxu0 %v2566
    %v2660 = vpop.f32.mrf.mxu0
    %v2661 = vadd.f32 0.0, %v2660
    %v2662 = vpop.f32.mrf.mxu0
    %v2663 = vadd.f32 0.0, %v2662
    %2664 = vdwg.mxu0
    %2665 = vmatpush.bf16.msra.mxu0 %v903
    %2666 = vmatpush.bf16.msra.mxu0 %v899
    %2667 = vmatpush.bf16.msra.mxu0 %v895
    %2668 = vmatpush.bf16.msra.mxu0 %v891
    %2669 = vmatpush.bf16.msra.mxu0 %v887
    %2670 = vmatpush.bf16.msra.mxu0 %v883
    %2671 = vmatpush.bf16.msra.mxu0 %v879
    %2672 = vmatpush.bf16.msra.mxu0 %v875
    %2673 = vmatmul.bf16.gmra.mxu0 %v2559
    %v2674 = vpop.f32.mrf.mxu0
    %v2675 = vadd.f32 0.0, %v2674
    %v2676 = vpop.f32.mrf.mxu0
    %v2677 = vadd.f32 0.0, %v2676
    %2678 = vmatmul.bf16.gmra.mxu0 %v2560
    %v2679 = vpop.f32.mrf.mxu0
    %v2680 = vadd.f32 0.0, %v2679
    %v2681 = vpop.f32.mrf.mxu0
    %v2682 = vadd.f32 0.0, %v2681
    %2683 = vmatmul.bf16.gmra.mxu0 %v2561
    %v2684 = vpop.f32.mrf.mxu0
    %v2685 = vadd.f32 0.0, %v2684
    %v2686 = vpop.f32.mrf.mxu0
    %v2687 = vadd.f32 0.0, %v2686
    %2688 = vmatmul.bf16.gmra.mxu0 %v2562
    %v2689 = vpop.f32.mrf.mxu0
    %v2690 = vadd.f32 0.0, %v2689
    %v2691 = vpop.f32.mrf.mxu0
    %v2692 = vadd.f32 0.0, %v2691
    %2693 = vmatmul.bf16.gmra.mxu0 %v2563
    %v2694 = vpop.f32.mrf.mxu0
    %v2695 = vadd.f32 0.0, %v2694
    %v2696 = vpop.f32.mrf.mxu0
    %v2697 = vadd.f32 0.0, %v2696
    %2698 = vmatmul.bf16.gmra.mxu0 %v2564
    %v2699 = vpop.f32.mrf.mxu0
    %v2700 = vadd.f32 0.0, %v2699
    %v2701 = vpop.f32.mrf.mxu0
    %v2702 = vadd.f32 0.0, %v2701
    %2703 = vmatmul.bf16.gmra.mxu0 %v2565
    %v2704 = vpop.f32.mrf.mxu0
    %v2705 = vadd.f32 0.0, %v2704
    %v2706 = vpop.f32.mrf.mxu0
    %v2707 = vadd.f32 0.0, %v2706
    %2708 = vmatmul.bf16.gmra.mxu0 %v2566
    %v2709 = vpop.f32.mrf.mxu0
    %v2710 = vadd.f32 0.0, %v2709
    %v2711 = vpop.f32.mrf.mxu0
    %v2712 = vadd.f32 0.0, %v2711
    %2713 = vdwg.mxu0
    %2714 = vmatpush.bf16.msra.mxu0 %v904
    %2715 = vmatpush.bf16.msra.mxu0 %v900
    %2716 = vmatpush.bf16.msra.mxu0 %v896
    %2717 = vmatpush.bf16.msra.mxu0 %v892
    %2718 = vmatpush.bf16.msra.mxu0 %v888
    %2719 = vmatpush.bf16.msra.mxu0 %v884
    %2720 = vmatpush.bf16.msra.mxu0 %v880
    %2721 = vmatpush.bf16.msra.mxu0 %v876
    %2722 = vmatmul.bf16.gmra.mxu0 %v2559
    %v2723 = vpop.f32.mrf.mxu0
    %v2724 = vadd.f32 0.0, %v2723
    %v2725 = vpop.f32.mrf.mxu0
    %v2726 = vadd.f32 0.0, %v2725
    %2727 = vmatmul.bf16.gmra.mxu0 %v2560
    %v2728 = vpop.f32.mrf.mxu0
    %v2729 = vadd.f32 0.0, %v2728
    %v2730 = vpop.f32.mrf.mxu0
    %v2731 = vadd.f32 0.0, %v2730
    %2732 = vmatmul.bf16.gmra.mxu0 %v2561
    %v2733 = vpop.f32.mrf.mxu0
    %v2734 = vadd.f32 0.0, %v2733
    %v2735 = vpop.f32.mrf.mxu0
    %v2736 = vadd.f32 0.0, %v2735
    %2737 = vmatmul.bf16.gmra.mxu0 %v2562
    %v2738 = vpop.f32.mrf.mxu0
    %v2739 = vadd.f32 0.0, %v2738
    %v2740 = vpop.f32.mrf.mxu0
    %v2741 = vadd.f32 0.0, %v2740
    %2742 = vmatmul.bf16.gmra.mxu0 %v2563
    %v2743 = vpop.f32.mrf.mxu0
    %v2744 = vadd.f32 0.0, %v2743
    %v2745 = vpop.f32.mrf.mxu0
    %v2746 = vadd.f32 0.0, %v2745
    %2747 = vmatmul.bf16.gmra.mxu0 %v2564
    %v2748 = vpop.f32.mrf.mxu0
    %v2749 = vadd.f32 0.0, %v2748
    %v2750 = vpop.f32.mrf.mxu0
    %v2751 = vadd.f32 0.0, %v2750
    %2752 = vmatmul.bf16.gmra.mxu0 %v2565
    %v2753 = vpop.f32.mrf.mxu0
    %v2754 = vadd.f32 0.0, %v2753
    %v2755 = vpop.f32.mrf.mxu0
    %v2756 = vadd.f32 0.0, %v2755
    %2757 = vmatmul.bf16.gmra.mxu0 %v2566
    %v2758 = vpop.f32.mrf.mxu0
    %v2759 = vadd.f32 0.0, %v2758
    %v2760 = vpop.f32.mrf.mxu0
    %v2761 = vadd.f32 0.0, %v2760
    %2762 = vdwg.mxu0
    %v2763 = vadd.f32 %v422, %v2577
    %v2764 = vadd.f32 %v471, %v2626
    %v2765 = vadd.f32 %v520, %v2675
    %v2766 = vadd.f32 %v569, %v2724
    %v2767 = vadd.f32 %v424, %v2579
    %v2768 = vadd.f32 %v473, %v2628
    %v2769 = vadd.f32 %v522, %v2677
    %v2770 = vadd.f32 %v571, %v2726
    %v2771 = vadd.f32 %v427, %v2582
    %v2772 = vadd.f32 %v476, %v2631
    %v2773 = vadd.f32 %v525, %v2680
    %v2774 = vadd.f32 %v574, %v2729
    %v2775 = vadd.f32 %v429, %v2584
    %v2776 = vadd.f32 %v478, %v2633
    %v2777 = vadd.f32 %v527, %v2682
    %v2778 = vadd.f32 %v576, %v2731
    %v2779 = vadd.f32 %v432, %v2587
    %v2780 = vadd.f32 %v481, %v2636
    %v2781 = vadd.f32 %v530, %v2685
    %v2782 = vadd.f32 %v579, %v2734
    %v2783 = vadd.f32 %v434, %v2589
    %v2784 = vadd.f32 %v483, %v2638
    %v2785 = vadd.f32 %v532, %v2687
    %v2786 = vadd.f32 %v581, %v2736
    %v2787 = vadd.f32 %v437, %v2592
    %v2788 = vadd.f32 %v486, %v2641
    %v2789 = vadd.f32 %v535, %v2690
    %v2790 = vadd.f32 %v584, %v2739
    %v2791 = vadd.f32 %v439, %v2594
    %v2792 = vadd.f32 %v488, %v2643
    %v2793 = vadd.f32 %v537, %v2692
    %v2794 = vadd.f32 %v586, %v2741
    %v2795 = vadd.f32 %v442, %v2597
    %v2796 = vadd.f32 %v491, %v2646
    %v2797 = vadd.f32 %v540, %v2695
    %v2798 = vadd.f32 %v589, %v2744
    %v2799 = vadd.f32 %v444, %v2599
    %v2800 = vadd.f32 %v493, %v2648
    %v2801 = vadd.f32 %v542, %v2697
    %v2802 = vadd.f32 %v591, %v2746
    %v2803 = vadd.f32 %v447, %v2602
    %v2804 = vadd.f32 %v496, %v2651
    %v2805 = vadd.f32 %v545, %v2700
    %v2806 = vadd.f32 %v594, %v2749
    %v2807 = vadd.f32 %v449, %v2604
    %v2808 = vadd.f32 %v498, %v2653
    %v2809 = vadd.f32 %v547, %v2702
    %v2810 = vadd.f32 %v596, %v2751
    %v2811 = vadd.f32 %v452, %v2607
    %v2812 = vadd.f32 %v501, %v2656
    %v2813 = vadd.f32 %v550, %v2705
    %v2814 = vadd.f32 %v599, %v2754
    %v2815 = vadd.f32 %v454, %v2609
    %v2816 = vadd.f32 %v503, %v2658
    %v2817 = vadd.f32 %v552, %v2707
    %v2818 = vadd.f32 %v601, %v2756
    %v2819 = vadd.f32 %v457, %v2612
    %v2820 = vadd.f32 %v506, %v2661
    %v2821 = vadd.f32 %v555, %v2710
    %v2822 = vadd.f32 %v604, %v2759
    %v2823 = vadd.f32 %v459, %v2614
    %v2824 = vadd.f32 %v508, %v2663
    %v2825 = vadd.f32 %v557, %v2712
    %v2826 = vadd.f32 %v606, %v2761
    %v2827 = vxor.u32 %v2763, 2147483648
    %v2828 = vxor.u32 %v2767, 2147483648
    %v2829 = vxor.u32 %v2771, 2147483648
    %v2830 = vxor.u32 %v2775, 2147483648
    %v2831 = vxor.u32 %v2779, 2147483648
    %v2832 = vxor.u32 %v2783, 2147483648
    %v2833 = vxor.u32 %v2787, 2147483648
    %v2834 = vxor.u32 %v2791, 2147483648
    %v2835 = vxor.u32 %v2795, 2147483648
    %v2836 = vxor.u32 %v2799, 2147483648
    %v2837 = vxor.u32 %v2803, 2147483648
    %v2838 = vxor.u32 %v2807, 2147483648
    %v2839 = vxor.u32 %v2811, 2147483648
    %v2840 = vxor.u32 %v2815, 2147483648
    %v2841 = vxor.u32 %v2819, 2147483648
    %v2842 = vxor.u32 %v2823, 2147483648
    %v2843 = vmul.f32 %v2827, 1.442695
    %v2844 = vpow.pop %v2843
    %v2845 = vmul.f32 %v2828, 1.442695
    %v2846 = vpow.pop %v2845
    %v2847 = vmul.f32 %v2829, 1.442695
    %v2848 = vpow.pop %v2847
    %v2849 = vmul.f32 %v2830, 1.442695
    %v2850 = vpow.pop %v2849
    %v2851 = vmul.f32 %v2831, 1.442695
    %v2852 = vpow.pop %v2851
    %v2853 = vmul.f32 %v2832, 1.442695
    %v2854 = vpow.pop %v2853
    %v2855 = vmul.f32 %v2833, 1.442695
    %v2856 = vpow.pop %v2855
    %v2857 = vmul.f32 %v2834, 1.442695
    %v2858 = vpow.pop %v2857
    %v2859 = vmul.f32 %v2835, 1.442695
    %v2860 = vpow.pop %v2859
    %v2861 = vmul.f32 %v2836, 1.442695
    %v2862 = vpow.pop %v2861
    %v2863 = vmul.f32 %v2837, 1.442695
    %v2864 = vpow.pop %v2863
    %v2865 = vmul.f32 %v2838, 1.442695
    %v2866 = vpow.pop %v2865
    %v2867 = vmul.f32 %v2839, 1.442695
    %v2868 = vpow.pop %v2867
    %v2869 = vmul.f32 %v2840, 1.442695
    %v2870 = vpow.pop %v2869
    %v2871 = vmul.f32 %v2841, 1.442695
    %v2872 = vpow.pop %v2871
    %v2873 = vmul.f32 %v2842, 1.442695
    %v2874 = vpow.pop %v2873
    %v2875 = vadd.f32 %v2844, 1.0
    %v2876 = vadd.f32 %v2846, 1.0
    %v2877 = vadd.f32 %v2848, 1.0
    %v2878 = vadd.f32 %v2850, 1.0
    %v2879 = vadd.f32 %v2852, 1.0
    %v2880 = vadd.f32 %v2854, 1.0
    %v2881 = vadd.f32 %v2856, 1.0
    %v2882 = vadd.f32 %v2858, 1.0
    %v2883 = vadd.f32 %v2860, 1.0
    %v2884 = vadd.f32 %v2862, 1.0
    %v2885 = vadd.f32 %v2864, 1.0
    %v2886 = vadd.f32 %v2866, 1.0
    %v2887 = vadd.f32 %v2868, 1.0
    %v2888 = vadd.f32 %v2870, 1.0
    %v2889 = vadd.f32 %v2872, 1.0
    %v2890 = vadd.f32 %v2874, 1.0
    %v2891 = vrcp.pop %v2875
    %v2892 = vmul.f32 %v2875, %v2891
    %v2893 = vsub.f32 1.0, %v2892
    %v2894 = vmul.f32 %v2891, %v2893
    %v2895 = vadd.f32 %v2891, %v2894
    %vm2896 = vweird.f32 %v2875
    %vm2897 = vweird.f32 %v2891
    %vm2898 = vmor %vm2896, %vm2897
    %v2899 = vsel %vm2898, %v2891, %v2895
    %v2900 = vand.u32 2147483647, %v2875
    %vm2901 = vcmp.eq.f32.partialorder %v2900, 8.507059e+37
    %v2902 = vand.u32 %v2875, 2147483648
    %v2903 = vor.u32 1.1754944e-38, %v2902
    %v2904 = vsel %vm2901, %v2903, %v2899
    %v2905 = vmul.f32 1.0, %v2904
    %v2906 = vrcp.pop %v2876
    %v2907 = vmul.f32 %v2876, %v2906
    %v2908 = vsub.f32 1.0, %v2907
    %v2909 = vmul.f32 %v2906, %v2908
    %v2910 = vadd.f32 %v2906, %v2909
    %vm2911 = vweird.f32 %v2876
    %vm2912 = vweird.f32 %v2906
    %vm2913 = vmor %vm2911, %vm2912
    %v2914 = vsel %vm2913, %v2906, %v2910
    %v2915 = vand.u32 2147483647, %v2876
    %vm2916 = vcmp.eq.f32.partialorder %v2915, 8.507059e+37
    %v2917 = vand.u32 %v2876, 2147483648
    %v2918 = vor.u32 1.1754944e-38, %v2917
    %v2919 = vsel %vm2916, %v2918, %v2914
    %v2920 = vmul.f32 1.0, %v2919
    %v2921 = vrcp.pop %v2877
    %v2922 = vmul.f32 %v2877, %v2921
    %v2923 = vsub.f32 1.0, %v2922
    %v2924 = vmul.f32 %v2921, %v2923
    %v2925 = vadd.f32 %v2921, %v2924
    %vm2926 = vweird.f32 %v2877
    %vm2927 = vweird.f32 %v2921
    %vm2928 = vmor %vm2926, %vm2927
    %v2929 = vsel %vm2928, %v2921, %v2925
    %v2930 = vand.u32 2147483647, %v2877
    %vm2931 = vcmp.eq.f32.partialorder %v2930, 8.507059e+37
    %v2932 = vand.u32 %v2877, 2147483648
    %v2933 = vor.u32 1.1754944e-38, %v2932
    %v2934 = vsel %vm2931, %v2933, %v2929
    %v2935 = vmul.f32 1.0, %v2934
    %v2936 = vrcp.pop %v2878
    %v2937 = vmul.f32 %v2878, %v2936
    %v2938 = vsub.f32 1.0, %v2937
    %v2939 = vmul.f32 %v2936, %v2938
    %v2940 = vadd.f32 %v2936, %v2939
    %vm2941 = vweird.f32 %v2878
    %vm2942 = vweird.f32 %v2936
    %vm2943 = vmor %vm2941, %vm2942
    %v2944 = vsel %vm2943, %v2936, %v2940
    %v2945 = vand.u32 2147483647, %v2878
    %vm2946 = vcmp.eq.f32.partialorder %v2945, 8.507059e+37
    %v2947 = vand.u32 %v2878, 2147483648
    %v2948 = vor.u32 1.1754944e-38, %v2947
    %v2949 = vsel %vm2946, %v2948, %v2944
    %v2950 = vmul.f32 1.0, %v2949
    %v2951 = vrcp.pop %v2879
    %v2952 = vmul.f32 %v2879, %v2951
    %v2953 = vsub.f32 1.0, %v2952
    %v2954 = vmul.f32 %v2951, %v2953
    %v2955 = vadd.f32 %v2951, %v2954
    %vm2956 = vweird.f32 %v2879
    %vm2957 = vweird.f32 %v2951
    %vm2958 = vmor %vm2956, %vm2957
    %v2959 = vsel %vm2958, %v2951, %v2955
    %v2960 = vand.u32 2147483647, %v2879
    %vm2961 = vcmp.eq.f32.partialorder %v2960, 8.507059e+37
    %v2962 = vand.u32 %v2879, 2147483648
    %v2963 = vor.u32 1.1754944e-38, %v2962
    %v2964 = vsel %vm2961, %v2963, %v2959
    %v2965 = vmul.f32 1.0, %v2964
    %v2966 = vrcp.pop %v2880
    %v2967 = vmul.f32 %v2880, %v2966
    %v2968 = vsub.f32 1.0, %v2967
    %v2969 = vmul.f32 %v2966, %v2968
    %v2970 = vadd.f32 %v2966, %v2969
    %vm2971 = vweird.f32 %v2880
    %vm2972 = vweird.f32 %v2966
    %vm2973 = vmor %vm2971, %vm2972
    %v2974 = vsel %vm2973, %v2966, %v2970
    %v2975 = vand.u32 2147483647, %v2880
    %vm2976 = vcmp.eq.f32.partialorder %v2975, 8.507059e+37
    %v2977 = vand.u32 %v2880, 2147483648
    %v2978 = vor.u32 1.1754944e-38, %v2977
    %v2979 = vsel %vm2976, %v2978, %v2974
    %v2980 = vmul.f32 1.0, %v2979
    %v2981 = vrcp.pop %v2881
    %v2982 = vmul.f32 %v2881, %v2981
    %v2983 = vsub.f32 1.0, %v2982
    %v2984 = vmul.f32 %v2981, %v2983
    %v2985 = vadd.f32 %v2981, %v2984
    %vm2986 = vweird.f32 %v2881
    %vm2987 = vweird.f32 %v2981
    %vm2988 = vmor %vm2986, %vm2987
    %v2989 = vsel %vm2988, %v2981, %v2985
    %v2990 = vand.u32 2147483647, %v2881
    %vm2991 = vcmp.eq.f32.partialorder %v2990, 8.507059e+37
    %v2992 = vand.u32 %v2881, 2147483648
    %v2993 = vor.u32 1.1754944e-38, %v2992
    %v2994 = vsel %vm2991, %v2993, %v2989
    %v2995 = vmul.f32 1.0, %v2994
    %v2996 = vrcp.pop %v2882
    %v2997 = vmul.f32 %v2882, %v2996
    %v2998 = vsub.f32 1.0, %v2997
    %v2999 = vmul.f32 %v2996, %v2998
    %v3000 = vadd.f32 %v2996, %v2999
    %vm3001 = vweird.f32 %v2882
    %vm3002 = vweird.f32 %v2996
    %vm3003 = vmor %vm3001, %vm3002
    %v3004 = vsel %vm3003, %v2996, %v3000
    %v3005 = vand.u32 2147483647, %v2882
    %vm3006 = vcmp.eq.f32.partialorder %v3005, 8.507059e+37
    %v3007 = vand.u32 %v2882, 2147483648
    %v3008 = vor.u32 1.1754944e-38, %v3007
    %v3009 = vsel %vm3006, %v3008, %v3004
    %v3010 = vmul.f32 1.0, %v3009
    %v3011 = vrcp.pop %v2883
    %v3012 = vmul.f32 %v2883, %v3011
    %v3013 = vsub.f32 1.0, %v3012
    %v3014 = vmul.f32 %v3011, %v3013
    %v3015 = vadd.f32 %v3011, %v3014
    %vm3016 = vweird.f32 %v2883
    %vm3017 = vweird.f32 %v3011
    %vm3018 = vmor %vm3016, %vm3017
    %v3019 = vsel %vm3018, %v3011, %v3015
    %v3020 = vand.u32 2147483647, %v2883
    %vm3021 = vcmp.eq.f32.partialorder %v3020, 8.507059e+37
    %v3022 = vand.u32 %v2883, 2147483648
    %v3023 = vor.u32 1.1754944e-38, %v3022
    %v3024 = vsel %vm3021, %v3023, %v3019
    %v3025 = vmul.f32 1.0, %v3024
    %v3026 = vrcp.pop %v2884
    %v3027 = vmul.f32 %v2884, %v3026
    %v3028 = vsub.f32 1.0, %v3027
    %v3029 = vmul.f32 %v3026, %v3028
    %v3030 = vadd.f32 %v3026, %v3029
    %vm3031 = vweird.f32 %v2884
    %vm3032 = vweird.f32 %v3026
    %vm3033 = vmor %vm3031, %vm3032
    %v3034 = vsel %vm3033, %v3026, %v3030
    %v3035 = vand.u32 2147483647, %v2884
    %vm3036 = vcmp.eq.f32.partialorder %v3035, 8.507059e+37
    %v3037 = vand.u32 %v2884, 2147483648
    %v3038 = vor.u32 1.1754944e-38, %v3037
    %v3039 = vsel %vm3036, %v3038, %v3034
    %v3040 = vmul.f32 1.0, %v3039
    %v3041 = vrcp.pop %v2885
    %v3042 = vmul.f32 %v2885, %v3041
    %v3043 = vsub.f32 1.0, %v3042
    %v3044 = vmul.f32 %v3041, %v3043
    %v3045 = vadd.f32 %v3041, %v3044
    %vm3046 = vweird.f32 %v2885
    %vm3047 = vweird.f32 %v3041
    %vm3048 = vmor %vm3046, %vm3047
    %v3049 = vsel %vm3048, %v3041, %v3045
    %v3050 = vand.u32 2147483647, %v2885
    %vm3051 = vcmp.eq.f32.partialorder %v3050, 8.507059e+37
    %v3052 = vand.u32 %v2885, 2147483648
    %v3053 = vor.u32 1.1754944e-38, %v3052
    %v3054 = vsel %vm3051, %v3053, %v3049
    %v3055 = vmul.f32 1.0, %v3054
    %v3056 = vrcp.pop %v2886
    %v3057 = vmul.f32 %v2886, %v3056
    %v3058 = vsub.f32 1.0, %v3057
    %v3059 = vmul.f32 %v3056, %v3058
    %v3060 = vadd.f32 %v3056, %v3059
    %vm3061 = vweird.f32 %v2886
    %vm3062 = vweird.f32 %v3056
    %vm3063 = vmor %vm3061, %vm3062
    %v3064 = vsel %vm3063, %v3056, %v3060
    %v3065 = vand.u32 2147483647, %v2886
    %vm3066 = vcmp.eq.f32.partialorder %v3065, 8.507059e+37
    %v3067 = vand.u32 %v2886, 2147483648
    %v3068 = vor.u32 1.1754944e-38, %v3067
    %v3069 = vsel %vm3066, %v3068, %v3064
    %v3070 = vmul.f32 1.0, %v3069
    %v3071 = vrcp.pop %v2887
    %v3072 = vmul.f32 %v2887, %v3071
    %v3073 = vsub.f32 1.0, %v3072
    %v3074 = vmul.f32 %v3071, %v3073
    %v3075 = vadd.f32 %v3071, %v3074
    %vm3076 = vweird.f32 %v2887
    %vm3077 = vweird.f32 %v3071
    %vm3078 = vmor %vm3076, %vm3077
    %v3079 = vsel %vm3078, %v3071, %v3075
    %v3080 = vand.u32 2147483647, %v2887
    %vm3081 = vcmp.eq.f32.partialorder %v3080, 8.507059e+37
    %v3082 = vand.u32 %v2887, 2147483648
    %v3083 = vor.u32 1.1754944e-38, %v3082
    %v3084 = vsel %vm3081, %v3083, %v3079
    %v3085 = vmul.f32 1.0, %v3084
    %v3086 = vrcp.pop %v2888
    %v3087 = vmul.f32 %v2888, %v3086
    %v3088 = vsub.f32 1.0, %v3087
    %v3089 = vmul.f32 %v3086, %v3088
    %v3090 = vadd.f32 %v3086, %v3089
    %vm3091 = vweird.f32 %v2888
    %vm3092 = vweird.f32 %v3086
    %vm3093 = vmor %vm3091, %vm3092
    %v3094 = vsel %vm3093, %v3086, %v3090
    %v3095 = vand.u32 2147483647, %v2888
    %vm3096 = vcmp.eq.f32.partialorder %v3095, 8.507059e+37
    %v3097 = vand.u32 %v2888, 2147483648
    %v3098 = vor.u32 1.1754944e-38, %v3097
    %v3099 = vsel %vm3096, %v3098, %v3094
    %v3100 = vmul.f32 1.0, %v3099
    %v3101 = vrcp.pop %v2889
    %v3102 = vmul.f32 %v2889, %v3101
    %v3103 = vsub.f32 1.0, %v3102
    %v3104 = vmul.f32 %v3101, %v3103
    %v3105 = vadd.f32 %v3101, %v3104
    %vm3106 = vweird.f32 %v2889
    %vm3107 = vweird.f32 %v3101
    %vm3108 = vmor %vm3106, %vm3107
    %v3109 = vsel %vm3108, %v3101, %v3105
    %v3110 = vand.u32 2147483647, %v2889
    %vm3111 = vcmp.eq.f32.partialorder %v3110, 8.507059e+37
    %v3112 = vand.u32 %v2889, 2147483648
    %v3113 = vor.u32 1.1754944e-38, %v3112
    %v3114 = vsel %vm3111, %v3113, %v3109
    %v3115 = vmul.f32 1.0, %v3114
    %v3116 = vrcp.pop %v2890
    %v3117 = vmul.f32 %v2890, %v3116
    %v3118 = vsub.f32 1.0, %v3117
    %v3119 = vmul.f32 %v3116, %v3118
    %v3120 = vadd.f32 %v3116, %v3119
    %vm3121 = vweird.f32 %v2890
    %vm3122 = vweird.f32 %v3116
    %vm3123 = vmor %vm3121, %vm3122
    %v3124 = vsel %vm3123, %v3116, %v3120
    %v3125 = vand.u32 2147483647, %v2890
    %vm3126 = vcmp.eq.f32.partialorder %v3125, 8.507059e+37
    %v3127 = vand.u32 %v2890, 2147483648
    %v3128 = vor.u32 1.1754944e-38, %v3127
    %v3129 = vsel %vm3126, %v3128, %v3124
    %v3130 = vmul.f32 1.0, %v3129
    %v3131 = vxor.u32 %v2764, 2147483648
    %v3132 = vxor.u32 %v2768, 2147483648
    %v3133 = vxor.u32 %v2772, 2147483648
    %v3134 = vxor.u32 %v2776, 2147483648
    %v3135 = vxor.u32 %v2780, 2147483648
    %v3136 = vxor.u32 %v2784, 2147483648
    %v3137 = vxor.u32 %v2788, 2147483648
    %v3138 = vxor.u32 %v2792, 2147483648
    %v3139 = vxor.u32 %v2796, 2147483648
    %v3140 = vxor.u32 %v2800, 2147483648
    %v3141 = vxor.u32 %v2804, 2147483648
    %v3142 = vxor.u32 %v2808, 2147483648
    %v3143 = vxor.u32 %v2812, 2147483648
    %v3144 = vxor.u32 %v2816, 2147483648
    %v3145 = vxor.u32 %v2820, 2147483648
    %v3146 = vxor.u32 %v2824, 2147483648
    %v3147 = vmul.f32 %v3131, 1.442695
    %v3148 = vpow.pop %v3147
    %v3149 = vmul.f32 %v3132, 1.442695
    %v3150 = vpow.pop %v3149
    %v3151 = vmul.f32 %v3133, 1.442695
    %v3152 = vpow.pop %v3151
    %v3153 = vmul.f32 %v3134, 1.442695
    %v3154 = vpow.pop %v3153
    %v3155 = vmul.f32 %v3135, 1.442695
    %v3156 = vpow.pop %v3155
    %v3157 = vmul.f32 %v3136, 1.442695
    %v3158 = vpow.pop %v3157
    %v3159 = vmul.f32 %v3137, 1.442695
    %v3160 = vpow.pop %v3159
    %v3161 = vmul.f32 %v3138, 1.442695
    %v3162 = vpow.pop %v3161
    %v3163 = vmul.f32 %v3139, 1.442695
    %v3164 = vpow.pop %v3163
    %v3165 = vmul.f32 %v3140, 1.442695
    %v3166 = vpow.pop %v3165
    %v3167 = vmul.f32 %v3141, 1.442695
    %v3168 = vpow.pop %v3167
    %v3169 = vmul.f32 %v3142, 1.442695
    %v3170 = vpow.pop %v3169
    %v3171 = vmul.f32 %v3143, 1.442695
    %v3172 = vpow.pop %v3171
    %v3173 = vmul.f32 %v3144, 1.442695
    %v3174 = vpow.pop %v3173
    %v3175 = vmul.f32 %v3145, 1.442695
    %v3176 = vpow.pop %v3175
    %v3177 = vmul.f32 %v3146, 1.442695
    %v3178 = vpow.pop %v3177
    %v3179 = vadd.f32 %v3148, 1.0
    %v3180 = vadd.f32 %v3150, 1.0
    %v3181 = vadd.f32 %v3152, 1.0
    %v3182 = vadd.f32 %v3154, 1.0
    %v3183 = vadd.f32 %v3156, 1.0
    %v3184 = vadd.f32 %v3158, 1.0
    %v3185 = vadd.f32 %v3160, 1.0
    %v3186 = vadd.f32 %v3162, 1.0
    %v3187 = vadd.f32 %v3164, 1.0
    %v3188 = vadd.f32 %v3166, 1.0
    %v3189 = vadd.f32 %v3168, 1.0
    %v3190 = vadd.f32 %v3170, 1.0
    %v3191 = vadd.f32 %v3172, 1.0
    %v3192 = vadd.f32 %v3174, 1.0
    %v3193 = vadd.f32 %v3176, 1.0
    %v3194 = vadd.f32 %v3178, 1.0
    %v3195 = vrcp.pop %v3179
    %v3196 = vmul.f32 %v3179, %v3195
    %v3197 = vsub.f32 1.0, %v3196
    %v3198 = vmul.f32 %v3195, %v3197
    %v3199 = vadd.f32 %v3195, %v3198
    %vm3200 = vweird.f32 %v3179
    %vm3201 = vweird.f32 %v3195
    %vm3202 = vmor %vm3200, %vm3201
    %v3203 = vsel %vm3202, %v3195, %v3199
    %v3204 = vand.u32 2147483647, %v3179
    %vm3205 = vcmp.eq.f32.partialorder %v3204, 8.507059e+37
    %v3206 = vand.u32 %v3179, 2147483648
    %v3207 = vor.u32 1.1754944e-38, %v3206
    %v3208 = vsel %vm3205, %v3207, %v3203
    %v3209 = vmul.f32 1.0, %v3208
    %v3210 = vrcp.pop %v3180
    %v3211 = vmul.f32 %v3180, %v3210
    %v3212 = vsub.f32 1.0, %v3211
    %v3213 = vmul.f32 %v3210, %v3212
    %v3214 = vadd.f32 %v3210, %v3213
    %vm3215 = vweird.f32 %v3180
    %vm3216 = vweird.f32 %v3210
    %vm3217 = vmor %vm3215, %vm3216
    %v3218 = vsel %vm3217, %v3210, %v3214
    %v3219 = vand.u32 2147483647, %v3180
    %vm3220 = vcmp.eq.f32.partialorder %v3219, 8.507059e+37
    %v3221 = vand.u32 %v3180, 2147483648
    %v3222 = vor.u32 1.1754944e-38, %v3221
    %v3223 = vsel %vm3220, %v3222, %v3218
    %v3224 = vmul.f32 1.0, %v3223
    %v3225 = vrcp.pop %v3181
    %v3226 = vmul.f32 %v3181, %v3225
    %v3227 = vsub.f32 1.0, %v3226
    %v3228 = vmul.f32 %v3225, %v3227
    %v3229 = vadd.f32 %v3225, %v3228
    %vm3230 = vweird.f32 %v3181
    %vm3231 = vweird.f32 %v3225
    %vm3232 = vmor %vm3230, %vm3231
    %v3233 = vsel %vm3232, %v3225, %v3229
    %v3234 = vand.u32 2147483647, %v3181
    %vm3235 = vcmp.eq.f32.partialorder %v3234, 8.507059e+37
    %v3236 = vand.u32 %v3181, 2147483648
    %v3237 = vor.u32 1.1754944e-38, %v3236
    %v3238 = vsel %vm3235, %v3237, %v3233
    %v3239 = vmul.f32 1.0, %v3238
    %v3240 = vrcp.pop %v3182
    %v3241 = vmul.f32 %v3182, %v3240
    %v3242 = vsub.f32 1.0, %v3241
    %v3243 = vmul.f32 %v3240, %v3242
    %v3244 = vadd.f32 %v3240, %v3243
    %vm3245 = vweird.f32 %v3182
    %vm3246 = vweird.f32 %v3240
    %vm3247 = vmor %vm3245, %vm3246
    %v3248 = vsel %vm3247, %v3240, %v3244
    %v3249 = vand.u32 2147483647, %v3182
    %vm3250 = vcmp.eq.f32.partialorder %v3249, 8.507059e+37
    %v3251 = vand.u32 %v3182, 2147483648
    %v3252 = vor.u32 1.1754944e-38, %v3251
    %v3253 = vsel %vm3250, %v3252, %v3248
    %v3254 = vmul.f32 1.0, %v3253
    %v3255 = vrcp.pop %v3183
    %v3256 = vmul.f32 %v3183, %v3255
    %v3257 = vsub.f32 1.0, %v3256
    %v3258 = vmul.f32 %v3255, %v3257
    %v3259 = vadd.f32 %v3255, %v3258
    %vm3260 = vweird.f32 %v3183
    %vm3261 = vweird.f32 %v3255
    %vm3262 = vmor %vm3260, %vm3261
    %v3263 = vsel %vm3262, %v3255, %v3259
    %v3264 = vand.u32 2147483647, %v3183
    %vm3265 = vcmp.eq.f32.partialorder %v3264, 8.507059e+37
    %v3266 = vand.u32 %v3183, 2147483648
    %v3267 = vor.u32 1.1754944e-38, %v3266
    %v3268 = vsel %vm3265, %v3267, %v3263
    %v3269 = vmul.f32 1.0, %v3268
    %v3270 = vrcp.pop %v3184
    %v3271 = vmul.f32 %v3184, %v3270
    %v3272 = vsub.f32 1.0, %v3271
    %v3273 = vmul.f32 %v3270, %v3272
    %v3274 = vadd.f32 %v3270, %v3273
    %vm3275 = vweird.f32 %v3184
    %vm3276 = vweird.f32 %v3270
    %vm3277 = vmor %vm3275, %vm3276
    %v3278 = vsel %vm3277, %v3270, %v3274
    %v3279 = vand.u32 2147483647, %v3184
    %vm3280 = vcmp.eq.f32.partialorder %v3279, 8.507059e+37
    %v3281 = vand.u32 %v3184, 2147483648
    %v3282 = vor.u32 1.1754944e-38, %v3281
    %v3283 = vsel %vm3280, %v3282, %v3278
    %v3284 = vmul.f32 1.0, %v3283
    %v3285 = vrcp.pop %v3185
    %v3286 = vmul.f32 %v3185, %v3285
    %v3287 = vsub.f32 1.0, %v3286
    %v3288 = vmul.f32 %v3285, %v3287
    %v3289 = vadd.f32 %v3285, %v3288
    %vm3290 = vweird.f32 %v3185
    %vm3291 = vweird.f32 %v3285
    %vm3292 = vmor %vm3290, %vm3291
    %v3293 = vsel %vm3292, %v3285, %v3289
    %v3294 = vand.u32 2147483647, %v3185
    %vm3295 = vcmp.eq.f32.partialorder %v3294, 8.507059e+37
    %v3296 = vand.u32 %v3185, 2147483648
    %v3297 = vor.u32 1.1754944e-38, %v3296
    %v3298 = vsel %vm3295, %v3297, %v3293
    %v3299 = vmul.f32 1.0, %v3298
    %v3300 = vrcp.pop %v3186
    %v3301 = vmul.f32 %v3186, %v3300
    %v3302 = vsub.f32 1.0, %v3301
    %v3303 = vmul.f32 %v3300, %v3302
    %v3304 = vadd.f32 %v3300, %v3303
    %vm3305 = vweird.f32 %v3186
    %vm3306 = vweird.f32 %v3300
    %vm3307 = vmor %vm3305, %vm3306
    %v3308 = vsel %vm3307, %v3300, %v3304
    %v3309 = vand.u32 2147483647, %v3186
    %vm3310 = vcmp.eq.f32.partialorder %v3309, 8.507059e+37
    %v3311 = vand.u32 %v3186, 2147483648
    %v3312 = vor.u32 1.1754944e-38, %v3311
    %v3313 = vsel %vm3310, %v3312, %v3308
    %v3314 = vmul.f32 1.0, %v3313
    %v3315 = vrcp.pop %v3187
    %v3316 = vmul.f32 %v3187, %v3315
    %v3317 = vsub.f32 1.0, %v3316
    %v3318 = vmul.f32 %v3315, %v3317
    %v3319 = vadd.f32 %v3315, %v3318
    %vm3320 = vweird.f32 %v3187
    %vm3321 = vweird.f32 %v3315
    %vm3322 = vmor %vm3320, %vm3321
    %v3323 = vsel %vm3322, %v3315, %v3319
    %v3324 = vand.u32 2147483647, %v3187
    %vm3325 = vcmp.eq.f32.partialorder %v3324, 8.507059e+37
    %v3326 = vand.u32 %v3187, 2147483648
    %v3327 = vor.u32 1.1754944e-38, %v3326
    %v3328 = vsel %vm3325, %v3327, %v3323
    %v3329 = vmul.f32 1.0, %v3328
    %v3330 = vrcp.pop %v3188
    %v3331 = vmul.f32 %v3188, %v3330
    %v3332 = vsub.f32 1.0, %v3331
    %v3333 = vmul.f32 %v3330, %v3332
    %v3334 = vadd.f32 %v3330, %v3333
    %vm3335 = vweird.f32 %v3188
    %vm3336 = vweird.f32 %v3330
    %vm3337 = vmor %vm3335, %vm3336
    %v3338 = vsel %vm3337, %v3330, %v3334
    %v3339 = vand.u32 2147483647, %v3188
    %vm3340 = vcmp.eq.f32.partialorder %v3339, 8.507059e+37
    %v3341 = vand.u32 %v3188, 2147483648
    %v3342 = vor.u32 1.1754944e-38, %v3341
    %v3343 = vsel %vm3340, %v3342, %v3338
    %v3344 = vmul.f32 1.0, %v3343
    %v3345 = vrcp.pop %v3189
    %v3346 = vmul.f32 %v3189, %v3345
    %v3347 = vsub.f32 1.0, %v3346
    %v3348 = vmul.f32 %v3345, %v3347
    %v3349 = vadd.f32 %v3345, %v3348
    %vm3350 = vweird.f32 %v3189
    %vm3351 = vweird.f32 %v3345
    %vm3352 = vmor %vm3350, %vm3351
    %v3353 = vsel %vm3352, %v3345, %v3349
    %v3354 = vand.u32 2147483647, %v3189
    %vm3355 = vcmp.eq.f32.partialorder %v3354, 8.507059e+37
    %v3356 = vand.u32 %v3189, 2147483648
    %v3357 = vor.u32 1.1754944e-38, %v3356
    %v3358 = vsel %vm3355, %v3357, %v3353
    %v3359 = vmul.f32 1.0, %v3358
    %v3360 = vrcp.pop %v3190
    %v3361 = vmul.f32 %v3190, %v3360
    %v3362 = vsub.f32 1.0, %v3361
    %v3363 = vmul.f32 %v3360, %v3362
    %v3364 = vadd.f32 %v3360, %v3363
    %vm3365 = vweird.f32 %v3190
    %vm3366 = vweird.f32 %v3360
    %vm3367 = vmor %vm3365, %vm3366
    %v3368 = vsel %vm3367, %v3360, %v3364
    %v3369 = vand.u32 2147483647, %v3190
    %vm3370 = vcmp.eq.f32.partialorder %v3369, 8.507059e+37
    %v3371 = vand.u32 %v3190, 2147483648
    %v3372 = vor.u32 1.1754944e-38, %v3371
    %v3373 = vsel %vm3370, %v3372, %v3368
    %v3374 = vmul.f32 1.0, %v3373
    %v3375 = vrcp.pop %v3191
    %v3376 = vmul.f32 %v3191, %v3375
    %v3377 = vsub.f32 1.0, %v3376
    %v3378 = vmul.f32 %v3375, %v3377
    %v3379 = vadd.f32 %v3375, %v3378
    %vm3380 = vweird.f32 %v3191
    %vm3381 = vweird.f32 %v3375
    %vm3382 = vmor %vm3380, %vm3381
    %v3383 = vsel %vm3382, %v3375, %v3379
    %v3384 = vand.u32 2147483647, %v3191
    %vm3385 = vcmp.eq.f32.partialorder %v3384, 8.507059e+37
    %v3386 = vand.u32 %v3191, 2147483648
    %v3387 = vor.u32 1.1754944e-38, %v3386
    %v3388 = vsel %vm3385, %v3387, %v3383
    %v3389 = vmul.f32 1.0, %v3388
    %v3390 = vrcp.pop %v3192
    %v3391 = vmul.f32 %v3192, %v3390
    %v3392 = vsub.f32 1.0, %v3391
    %v3393 = vmul.f32 %v3390, %v3392
    %v3394 = vadd.f32 %v3390, %v3393
    %vm3395 = vweird.f32 %v3192
    %vm3396 = vweird.f32 %v3390
    %vm3397 = vmor %vm3395, %vm3396
    %v3398 = vsel %vm3397, %v3390, %v3394
    %v3399 = vand.u32 2147483647, %v3192
    %vm3400 = vcmp.eq.f32.partialorder %v3399, 8.507059e+37
    %v3401 = vand.u32 %v3192, 2147483648
    %v3402 = vor.u32 1.1754944e-38, %v3401
    %v3403 = vsel %vm3400, %v3402, %v3398
    %v3404 = vmul.f32 1.0, %v3403
    %v3405 = vrcp.pop %v3193
    %v3406 = vmul.f32 %v3193, %v3405
    %v3407 = vsub.f32 1.0, %v3406
    %v3408 = vmul.f32 %v3405, %v3407
    %v3409 = vadd.f32 %v3405, %v3408
    %vm3410 = vweird.f32 %v3193
    %vm3411 = vweird.f32 %v3405
    %vm3412 = vmor %vm3410, %vm3411
    %v3413 = vsel %vm3412, %v3405, %v3409
    %v3414 = vand.u32 2147483647, %v3193
    %vm3415 = vcmp.eq.f32.partialorder %v3414, 8.507059e+37
    %v3416 = vand.u32 %v3193, 2147483648
    %v3417 = vor.u32 1.1754944e-38, %v3416
    %v3418 = vsel %vm3415, %v3417, %v3413
    %v3419 = vmul.f32 1.0, %v3418
    %v3420 = vrcp.pop %v3194
    %v3421 = vmul.f32 %v3194, %v3420
    %v3422 = vsub.f32 1.0, %v3421
    %v3423 = vmul.f32 %v3420, %v3422
    %v3424 = vadd.f32 %v3420, %v3423
    %vm3425 = vweird.f32 %v3194
    %vm3426 = vweird.f32 %v3420
    %vm3427 = vmor %vm3425, %vm3426
    %v3428 = vsel %vm3427, %v3420, %v3424
    %v3429 = vand.u32 2147483647, %v3194
    %vm3430 = vcmp.eq.f32.partialorder %v3429, 8.507059e+37
    %v3431 = vand.u32 %v3194, 2147483648
    %v3432 = vor.u32 1.1754944e-38, %v3431
    %v3433 = vsel %vm3430, %v3432, %v3428
    %v3434 = vmul.f32 1.0, %v3433
    %v3435 = vtanh.pop %v2765
    %v3436 = vtanh.pop %v2769
    %v3437 = vtanh.pop %v2773
    %v3438 = vtanh.pop %v2777
    %v3439 = vtanh.pop %v2781
    %v3440 = vtanh.pop %v2785
    %v3441 = vtanh.pop %v2789
    %v3442 = vtanh.pop %v2793
    %v3443 = vtanh.pop %v2797
    %v3444 = vtanh.pop %v2801
    %v3445 = vtanh.pop %v2805
    %v3446 = vtanh.pop %v2809
    %v3447 = vtanh.pop %v2813
    %v3448 = vtanh.pop %v2817
    %v3449 = vtanh.pop %v2821
    %v3450 = vtanh.pop %v2825
    %v3451 = vxor.u32 %v2766, 2147483648
    %v3452 = vxor.u32 %v2770, 2147483648
    %v3453 = vxor.u32 %v2774, 2147483648
    %v3454 = vxor.u32 %v2778, 2147483648
    %v3455 = vxor.u32 %v2782, 2147483648
    %v3456 = vxor.u32 %v2786, 2147483648
    %v3457 = vxor.u32 %v2790, 2147483648
    %v3458 = vxor.u32 %v2794, 2147483648
    %v3459 = vxor.u32 %v2798, 2147483648
    %v3460 = vxor.u32 %v2802, 2147483648
    %v3461 = vxor.u32 %v2806, 2147483648
    %v3462 = vxor.u32 %v2810, 2147483648
    %v3463 = vxor.u32 %v2814, 2147483648
    %v3464 = vxor.u32 %v2818, 2147483648
    %v3465 = vxor.u32 %v2822, 2147483648
    %v3466 = vxor.u32 %v2826, 2147483648
    %v3467 = vmul.f32 %v3451, 1.442695
    %v3468 = vpow.pop %v3467
    %v3469 = vmul.f32 %v3452, 1.442695
    %v3470 = vpow.pop %v3469
    %v3471 = vmul.f32 %v3453, 1.442695
    %v3472 = vpow.pop %v3471
    %v3473 = vmul.f32 %v3454, 1.442695
    %v3474 = vpow.pop %v3473
    %v3475 = vmul.f32 %v3455, 1.442695
    %v3476 = vpow.pop %v3475
    %v3477 = vmul.f32 %v3456, 1.442695
    %v3478 = vpow.pop %v3477
    %v3479 = vmul.f32 %v3457, 1.442695
    %v3480 = vpow.pop %v3479
    %v3481 = vmul.f32 %v3458, 1.442695
    %v3482 = vpow.pop %v3481
    %v3483 = vmul.f32 %v3459, 1.442695
    %v3484 = vpow.pop %v3483
    %v3485 = vmul.f32 %v3460, 1.442695
    %v3486 = vpow.pop %v3485
    %v3487 = vmul.f32 %v3461, 1.442695
    %v3488 = vpow.pop %v3487
    %v3489 = vmul.f32 %v3462, 1.442695
    %v3490 = vpow.pop %v3489
    %v3491 = vmul.f32 %v3463, 1.442695
    %v3492 = vpow.pop %v3491
    %v3493 = vmul.f32 %v3464, 1.442695
    %v3494 = vpow.pop %v3493
    %v3495 = vmul.f32 %v3465, 1.442695
    %v3496 = vpow.pop %v3495
    %v3497 = vmul.f32 %v3466, 1.442695
    %v3498 = vpow.pop %v3497
    %v3499 = vadd.f32 %v3468, 1.0
    %v3500 = vadd.f32 %v3470, 1.0
    %v3501 = vadd.f32 %v3472, 1.0
    %v3502 = vadd.f32 %v3474, 1.0
    %v3503 = vadd.f32 %v3476, 1.0
    %v3504 = vadd.f32 %v3478, 1.0
    %v3505 = vadd.f32 %v3480, 1.0
    %v3506 = vadd.f32 %v3482, 1.0
    %v3507 = vadd.f32 %v3484, 1.0
    %v3508 = vadd.f32 %v3486, 1.0
    %v3509 = vadd.f32 %v3488, 1.0
    %v3510 = vadd.f32 %v3490, 1.0
    %v3511 = vadd.f32 %v3492, 1.0
    %v3512 = vadd.f32 %v3494, 1.0
    %v3513 = vadd.f32 %v3496, 1.0
    %v3514 = vadd.f32 %v3498, 1.0
    %v3515 = vrcp.pop %v3499
    %v3516 = vmul.f32 %v3499, %v3515
    %v3517 = vsub.f32 1.0, %v3516
    %v3518 = vmul.f32 %v3515, %v3517
    %v3519 = vadd.f32 %v3515, %v3518
    %vm3520 = vweird.f32 %v3499
    %vm3521 = vweird.f32 %v3515
    %vm3522 = vmor %vm3520, %vm3521
    %v3523 = vsel %vm3522, %v3515, %v3519
    %v3524 = vand.u32 2147483647, %v3499
    %vm3525 = vcmp.eq.f32.partialorder %v3524, 8.507059e+37
    %v3526 = vand.u32 %v3499, 2147483648
    %v3527 = vor.u32 1.1754944e-38, %v3526
    %v3528 = vsel %vm3525, %v3527, %v3523
    %v3529 = vmul.f32 1.0, %v3528
    %v3530 = vrcp.pop %v3500
    %v3531 = vmul.f32 %v3500, %v3530
    %v3532 = vsub.f32 1.0, %v3531
    %v3533 = vmul.f32 %v3530, %v3532
    %v3534 = vadd.f32 %v3530, %v3533
    %vm3535 = vweird.f32 %v3500
    %vm3536 = vweird.f32 %v3530
    %vm3537 = vmor %vm3535, %vm3536
    %v3538 = vsel %vm3537, %v3530, %v3534
    %v3539 = vand.u32 2147483647, %v3500
    %vm3540 = vcmp.eq.f32.partialorder %v3539, 8.507059e+37
    %v3541 = vand.u32 %v3500, 2147483648
    %v3542 = vor.u32 1.1754944e-38, %v3541
    %v3543 = vsel %vm3540, %v3542, %v3538
    %v3544 = vmul.f32 1.0, %v3543
    %v3545 = vrcp.pop %v3501
    %v3546 = vmul.f32 %v3501, %v3545
    %v3547 = vsub.f32 1.0, %v3546
    %v3548 = vmul.f32 %v3545, %v3547
    %v3549 = vadd.f32 %v3545, %v3548
    %vm3550 = vweird.f32 %v3501
    %vm3551 = vweird.f32 %v3545
    %vm3552 = vmor %vm3550, %vm3551
    %v3553 = vsel %vm3552, %v3545, %v3549
    %v3554 = vand.u32 2147483647, %v3501
    %vm3555 = vcmp.eq.f32.partialorder %v3554, 8.507059e+37
    %v3556 = vand.u32 %v3501, 2147483648
    %v3557 = vor.u32 1.1754944e-38, %v3556
    %v3558 = vsel %vm3555, %v3557, %v3553
    %v3559 = vmul.f32 1.0, %v3558
    %v3560 = vrcp.pop %v3502
    %v3561 = vmul.f32 %v3502, %v3560
    %v3562 = vsub.f32 1.0, %v3561
    %v3563 = vmul.f32 %v3560, %v3562
    %v3564 = vadd.f32 %v3560, %v3563
    %vm3565 = vweird.f32 %v3502
    %vm3566 = vweird.f32 %v3560
    %vm3567 = vmor %vm3565, %vm3566
    %v3568 = vsel %vm3567, %v3560, %v3564
    %v3569 = vand.u32 2147483647, %v3502
    %vm3570 = vcmp.eq.f32.partialorder %v3569, 8.507059e+37
    %v3571 = vand.u32 %v3502, 2147483648
    %v3572 = vor.u32 1.1754944e-38, %v3571
    %v3573 = vsel %vm3570, %v3572, %v3568
    %v3574 = vmul.f32 1.0, %v3573
    %v3575 = vrcp.pop %v3503
    %v3576 = vmul.f32 %v3503, %v3575
    %v3577 = vsub.f32 1.0, %v3576
    %v3578 = vmul.f32 %v3575, %v3577
    %v3579 = vadd.f32 %v3575, %v3578
    %vm3580 = vweird.f32 %v3503
    %vm3581 = vweird.f32 %v3575
    %vm3582 = vmor %vm3580, %vm3581
    %v3583 = vsel %vm3582, %v3575, %v3579
    %v3584 = vand.u32 2147483647, %v3503
    %vm3585 = vcmp.eq.f32.partialorder %v3584, 8.507059e+37
    %v3586 = vand.u32 %v3503, 2147483648
    %v3587 = vor.u32 1.1754944e-38, %v3586
    %v3588 = vsel %vm3585, %v3587, %v3583
    %v3589 = vmul.f32 1.0, %v3588
    %v3590 = vrcp.pop %v3504
    %v3591 = vmul.f32 %v3504, %v3590
    %v3592 = vsub.f32 1.0, %v3591
    %v3593 = vmul.f32 %v3590, %v3592
    %v3594 = vadd.f32 %v3590, %v3593
    %vm3595 = vweird.f32 %v3504
    %vm3596 = vweird.f32 %v3590
    %vm3597 = vmor %vm3595, %vm3596
    %v3598 = vsel %vm3597, %v3590, %v3594
    %v3599 = vand.u32 2147483647, %v3504
    %vm3600 = vcmp.eq.f32.partialorder %v3599, 8.507059e+37
    %v3601 = vand.u32 %v3504, 2147483648
    %v3602 = vor.u32 1.1754944e-38, %v3601
    %v3603 = vsel %vm3600, %v3602, %v3598
    %v3604 = vmul.f32 1.0, %v3603
    %v3605 = vrcp.pop %v3505
    %v3606 = vmul.f32 %v3505, %v3605
    %v3607 = vsub.f32 1.0, %v3606
    %v3608 = vmul.f32 %v3605, %v3607
    %v3609 = vadd.f32 %v3605, %v3608
    %vm3610 = vweird.f32 %v3505
    %vm3611 = vweird.f32 %v3605
    %vm3612 = vmor %vm3610, %vm3611
    %v3613 = vsel %vm3612, %v3605, %v3609
    %v3614 = vand.u32 2147483647, %v3505
    %vm3615 = vcmp.eq.f32.partialorder %v3614, 8.507059e+37
    %v3616 = vand.u32 %v3505, 2147483648
    %v3617 = vor.u32 1.1754944e-38, %v3616
    %v3618 = vsel %vm3615, %v3617, %v3613
    %v3619 = vmul.f32 1.0, %v3618
    %v3620 = vrcp.pop %v3506
    %v3621 = vmul.f32 %v3506, %v3620
    %v3622 = vsub.f32 1.0, %v3621
    %v3623 = vmul.f32 %v3620, %v3622
    %v3624 = vadd.f32 %v3620, %v3623
    %vm3625 = vweird.f32 %v3506
    %vm3626 = vweird.f32 %v3620
    %vm3627 = vmor %vm3625, %vm3626
    %v3628 = vsel %vm3627, %v3620, %v3624
    %v3629 = vand.u32 2147483647, %v3506
    %vm3630 = vcmp.eq.f32.partialorder %v3629, 8.507059e+37
    %v3631 = vand.u32 %v3506, 2147483648
    %v3632 = vor.u32 1.1754944e-38, %v3631
    %v3633 = vsel %vm3630, %v3632, %v3628
    %v3634 = vmul.f32 1.0, %v3633
    %v3635 = vrcp.pop %v3507
    %v3636 = vmul.f32 %v3507, %v3635
    %v3637 = vsub.f32 1.0, %v3636
    %v3638 = vmul.f32 %v3635, %v3637
    %v3639 = vadd.f32 %v3635, %v3638
    %vm3640 = vweird.f32 %v3507
    %vm3641 = vweird.f32 %v3635
    %vm3642 = vmor %vm3640, %vm3641
    %v3643 = vsel %vm3642, %v3635, %v3639
    %v3644 = vand.u32 2147483647, %v3507
    %vm3645 = vcmp.eq.f32.partialorder %v3644, 8.507059e+37
    %v3646 = vand.u32 %v3507, 2147483648
    %v3647 = vor.u32 1.1754944e-38, %v3646
    %v3648 = vsel %vm3645, %v3647, %v3643
    %v3649 = vmul.f32 1.0, %v3648
    %v3650 = vrcp.pop %v3508
    %v3651 = vmul.f32 %v3508, %v3650
    %v3652 = vsub.f32 1.0, %v3651
    %v3653 = vmul.f32 %v3650, %v3652
    %v3654 = vadd.f32 %v3650, %v3653
    %vm3655 = vweird.f32 %v3508
    %vm3656 = vweird.f32 %v3650
    %vm3657 = vmor %vm3655, %vm3656
    %v3658 = vsel %vm3657, %v3650, %v3654
    %v3659 = vand.u32 2147483647, %v3508
    %vm3660 = vcmp.eq.f32.partialorder %v3659, 8.507059e+37
    %v3661 = vand.u32 %v3508, 2147483648
    %v3662 = vor.u32 1.1754944e-38, %v3661
    %v3663 = vsel %vm3660, %v3662, %v3658
    %v3664 = vmul.f32 1.0, %v3663
    %v3665 = vrcp.pop %v3509
    %v3666 = vmul.f32 %v3509, %v3665
    %v3667 = vsub.f32 1.0, %v3666
    %v3668 = vmul.f32 %v3665, %v3667
    %v3669 = vadd.f32 %v3665, %v3668
    %vm3670 = vweird.f32 %v3509
    %vm3671 = vweird.f32 %v3665
    %vm3672 = vmor %vm3670, %vm3671
    %v3673 = vsel %vm3672, %v3665, %v3669
    %v3674 = vand.u32 2147483647, %v3509
    %vm3675 = vcmp.eq.f32.partialorder %v3674, 8.507059e+37
    %v3676 = vand.u32 %v3509, 2147483648
    %v3677 = vor.u32 1.1754944e-38, %v3676
    %v3678 = vsel %vm3675, %v3677, %v3673
    %v3679 = vmul.f32 1.0, %v3678
    %v3680 = vrcp.pop %v3510
    %v3681 = vmul.f32 %v3510, %v3680
    %v3682 = vsub.f32 1.0, %v3681
    %v3683 = vmul.f32 %v3680, %v3682
    %v3684 = vadd.f32 %v3680, %v3683
    %vm3685 = vweird.f32 %v3510
    %vm3686 = vweird.f32 %v3680
    %vm3687 = vmor %vm3685, %vm3686
    %v3688 = vsel %vm3687, %v3680, %v3684
    %v3689 = vand.u32 2147483647, %v3510
    %vm3690 = vcmp.eq.f32.partialorder %v3689, 8.507059e+37
    %v3691 = vand.u32 %v3510, 2147483648
    %v3692 = vor.u32 1.1754944e-38, %v3691
    %v3693 = vsel %vm3690, %v3692, %v3688
    %v3694 = vmul.f32 1.0, %v3693
    %v3695 = vrcp.pop %v3511
    %v3696 = vmul.f32 %v3511, %v3695
    %v3697 = vsub.f32 1.0, %v3696
    %v3698 = vmul.f32 %v3695, %v3697
    %v3699 = vadd.f32 %v3695, %v3698
    %vm3700 = vweird.f32 %v3511
    %vm3701 = vweird.f32 %v3695
    %vm3702 = vmor %vm3700, %vm3701
    %v3703 = vsel %vm3702, %v3695, %v3699
    %v3704 = vand.u32 2147483647, %v3511
    %vm3705 = vcmp.eq.f32.partialorder %v3704, 8.507059e+37
    %v3706 = vand.u32 %v3511, 2147483648
    %v3707 = vor.u32 1.1754944e-38, %v3706
    %v3708 = vsel %vm3705, %v3707, %v3703
    %v3709 = vmul.f32 1.0, %v3708
    %v3710 = vrcp.pop %v3512
    %v3711 = vmul.f32 %v3512, %v3710
    %v3712 = vsub.f32 1.0, %v3711
    %v3713 = vmul.f32 %v3710, %v3712
    %v3714 = vadd.f32 %v3710, %v3713
    %vm3715 = vweird.f32 %v3512
    %vm3716 = vweird.f32 %v3710
    %vm3717 = vmor %vm3715, %vm3716
    %v3718 = vsel %vm3717, %v3710, %v3714
    %v3719 = vand.u32 2147483647, %v3512
    %vm3720 = vcmp.eq.f32.partialorder %v3719, 8.507059e+37
    %v3721 = vand.u32 %v3512, 2147483648
    %v3722 = vor.u32 1.1754944e-38, %v3721
    %v3723 = vsel %vm3720, %v3722, %v3718
    %v3724 = vmul.f32 1.0, %v3723
    %v3725 = vrcp.pop %v3513
    %v3726 = vmul.f32 %v3513, %v3725
    %v3727 = vsub.f32 1.0, %v3726
    %v3728 = vmul.f32 %v3725, %v3727
    %v3729 = vadd.f32 %v3725, %v3728
    %vm3730 = vweird.f32 %v3513
    %vm3731 = vweird.f32 %v3725
    %vm3732 = vmor %vm3730, %vm3731
    %v3733 = vsel %vm3732, %v3725, %v3729
    %v3734 = vand.u32 2147483647, %v3513
    %vm3735 = vcmp.eq.f32.partialorder %v3734, 8.507059e+37
    %v3736 = vand.u32 %v3513, 2147483648
    %v3737 = vor.u32 1.1754944e-38, %v3736
    %v3738 = vsel %vm3735, %v3737, %v3733
    %v3739 = vmul.f32 1.0, %v3738
    %v3740 = vrcp.pop %v3514
    %v3741 = vmul.f32 %v3514, %v3740
    %v3742 = vsub.f32 1.0, %v3741
    %v3743 = vmul.f32 %v3740, %v3742
    %v3744 = vadd.f32 %v3740, %v3743
    %vm3745 = vweird.f32 %v3514
    %vm3746 = vweird.f32 %v3740
    %vm3747 = vmor %vm3745, %vm3746
    %v3748 = vsel %vm3747, %v3740, %v3744
    %v3749 = vand.u32 2147483647, %v3514
    %vm3750 = vcmp.eq.f32.partialorder %v3749, 8.507059e+37
    %v3751 = vand.u32 %v3514, 2147483648
    %v3752 = vor.u32 1.1754944e-38, %v3751
    %v3753 = vsel %vm3750, %v3752, %v3748
    %v3754 = vmul.f32 1.0, %v3753
    %v3755 = vmul.f32 %v2905, %v3435
    %v3756 = vmul.f32 %v2920, %v3436
    %v3757 = vmul.f32 %v2935, %v3437
    %v3758 = vmul.f32 %v2950, %v3438
    %v3759 = vmul.f32 %v2965, %v3439
    %v3760 = vmul.f32 %v2980, %v3440
    %v3761 = vmul.f32 %v2995, %v3441
    %v3762 = vmul.f32 %v3010, %v3442
    %v3763 = vmul.f32 %v3025, %v3443
    %v3764 = vmul.f32 %v3040, %v3444
    %v3765 = vmul.f32 %v3055, %v3445
    %v3766 = vmul.f32 %v3070, %v3446
    %v3767 = vmul.f32 %v3085, %v3447
    %v3768 = vmul.f32 %v3100, %v3448
    %v3769 = vmul.f32 %v3115, %v3449
    %v3770 = vmul.f32 %v3130, %v3450
    %v3771 = vmul.f32 %v3529, %v2520
    %v3772 = vmul.f32 %v3544, %v2522
    %v3773 = vmul.f32 %v3559, %v2525
    %v3774 = vmul.f32 %v3574, %v2527
    %v3775 = vmul.f32 %v3589, %v2530
    %v3776 = vmul.f32 %v3604, %v2532
    %v3777 = vmul.f32 %v3619, %v2535
    %v3778 = vmul.f32 %v3634, %v2537
    %v3779 = vmul.f32 %v3649, %v2540
    %v3780 = vmul.f32 %v3664, %v2542
    %v3781 = vmul.f32 %v3679, %v2545
    %v3782 = vmul.f32 %v3694, %v2547
    %v3783 = vmul.f32 %v3709, %v2550
    %v3784 = vmul.f32 %v3724, %v2552
    %v3785 = vmul.f32 %v3739, %v2555
    %v3786 = vmul.f32 %v3754, %v2557
    %v3787 = vadd.f32 %v3755, %v3771
    %v3788 = vadd.f32 %v3756, %v3772
    %v3789 = vadd.f32 %v3757, %v3773
    %v3790 = vadd.f32 %v3758, %v3774
    %v3791 = vadd.f32 %v3759, %v3775
    %v3792 = vadd.f32 %v3760, %v3776
    %v3793 = vadd.f32 %v3761, %v3777
    %v3794 = vadd.f32 %v3762, %v3778
    %v3795 = vadd.f32 %v3763, %v3779
    %v3796 = vadd.f32 %v3764, %v3780
    %v3797 = vadd.f32 %v3765, %v3781
    %v3798 = vadd.f32 %v3766, %v3782
    %v3799 = vadd.f32 %v3767, %v3783
    %v3800 = vadd.f32 %v3768, %v3784
    %v3801 = vadd.f32 %v3769, %v3785
    %v3802 = vadd.f32 %v3770, %v3786
    %v3803 = vtanh.pop %v3787
    %v3804 = vtanh.pop %v3788
    %v3805 = vtanh.pop %v3789
    %v3806 = vtanh.pop %v3790
    %v3807 = vtanh.pop %v3791
    %v3808 = vtanh.pop %v3792
    %v3809 = vtanh.pop %v3793
    %v3810 = vtanh.pop %v3794
    %v3811 = vtanh.pop %v3795
    %v3812 = vtanh.pop %v3796
    %v3813 = vtanh.pop %v3797
    %v3814 = vtanh.pop %v3798
    %v3815 = vtanh.pop %v3799
    %v3816 = vtanh.pop %v3800
    %v3817 = vtanh.pop %v3801
    %v3818 = vtanh.pop %v3802
    %v3819 = vmul.f32 %v3209, %v3803
    %v3820 = vmul.f32 %v3224, %v3804
    %v3821 = vmul.f32 %v3239, %v3805
    %v3822 = vmul.f32 %v3254, %v3806
    %v3823 = vmul.f32 %v3269, %v3807
    %v3824 = vmul.f32 %v3284, %v3808
    %v3825 = vmul.f32 %v3299, %v3809
    %v3826 = vmul.f32 %v3314, %v3810
    %v3827 = vmul.f32 %v3329, %v3811
    %v3828 = vmul.f32 %v3344, %v3812
    %v3829 = vmul.f32 %v3359, %v3813
    %v3830 = vmul.f32 %v3374, %v3814
    %v3831 = vmul.f32 %v3389, %v3815
    %v3832 = vmul.f32 %v3404, %v3816
    %v3833 = vmul.f32 %v3419, %v3817
    %v3834 = vmul.f32 %v3434, %v3818
    %vm3835 = vcmp.eq.s32.totalorder %v656, 1
    %vm3836 = vcmp.eq.s32.totalorder %v657, 1
    %vm3837 = vcmp.eq.s32.totalorder %v658, 1
    %vm3838 = vcmp.eq.s32.totalorder %v659, 1
    %vm3839 = vcmp.eq.s32.totalorder %v660, 1
    %vm3840 = vcmp.eq.s32.totalorder %v661, 1
    %vm3841 = vcmp.eq.s32.totalorder %v662, 1
    %vm3842 = vcmp.eq.s32.totalorder %v663, 1
    %vm3843 = vcmp.eq.s32.totalorder %v664, 1
    %vm3844 = vcmp.eq.s32.totalorder %v665, 1
    %vm3845 = vcmp.eq.s32.totalorder %v666, 1
    %vm3846 = vcmp.eq.s32.totalorder %v667, 1
    %vm3847 = vcmp.eq.s32.totalorder %v668, 1
    %vm3848 = vcmp.eq.s32.totalorder %v669, 1
    %vm3849 = vcmp.eq.s32.totalorder %v670, 1
    %vm3850 = vcmp.eq.s32.totalorder %v671, 1
    %v3851 = vsel %vm3835, 1, 0
    %v3852 = vsel %vm3836, 1, 0
    %v3853 = vsel %vm3837, 1, 0
    %v3854 = vsel %vm3838, 1, 0
    %v3855 = vsel %vm3839, 1, 0
    %v3856 = vsel %vm3840, 1, 0
    %v3857 = vsel %vm3841, 1, 0
    %v3858 = vsel %vm3842, 1, 0
    %v3859 = vsel %vm3843, 1, 0
    %v3860 = vsel %vm3844, 1, 0
    %v3861 = vsel %vm3845, 1, 0
    %v3862 = vsel %vm3846, 1, 0
    %v3863 = vsel %vm3847, 1, 0
    %v3864 = vsel %vm3848, 1, 0
    %v3865 = vsel %vm3849, 1, 0
    %v3866 = vsel %vm3850, 1, 0
    %3867 = vset.pattern.permute.xlu0 0
    %3868 = vperm.xlu0 %3867, %v3851
    %v3869 = vpop.permute.xlu0 %3868
    %3870 = vset.pattern.permute.xlu0 0
    %3871 = vperm.xlu0 %3870, %v3852
    %v3872 = vpop.permute.xlu0 %3871
    %3873 = vset.pattern.permute.xlu0 0
    %3874 = vperm.xlu0 %3873, %v3853
    %v3875 = vpop.permute.xlu0 %3874
    %3876 = vset.pattern.permute.xlu0 0
    %3877 = vperm.xlu0 %3876, %v3854
    %v3878 = vpop.permute.xlu0 %3877
    %3879 = vset.pattern.permute.xlu0 0
    %3880 = vperm.xlu0 %3879, %v3855
    %v3881 = vpop.permute.xlu0 %3880
    %3882 = vset.pattern.permute.xlu0 0
    %3883 = vperm.xlu0 %3882, %v3856
    %v3884 = vpop.permute.xlu0 %3883
    %3885 = vset.pattern.permute.xlu0 0
    %3886 = vperm.xlu0 %3885, %v3857
    %v3887 = vpop.permute.xlu0 %3886
    %3888 = vset.pattern.permute.xlu0 0
    %3889 = vperm.xlu0 %3888, %v3858
    %v3890 = vpop.permute.xlu0 %3889
    %3891 = vset.pattern.permute.xlu0 0
    %3892 = vperm.xlu0 %3891, %v3859
    %v3893 = vpop.permute.xlu0 %3892
    %3894 = vset.pattern.permute.xlu0 0
    %3895 = vperm.xlu0 %3894, %v3860
    %v3896 = vpop.permute.xlu0 %3895
    %3897 = vset.pattern.permute.xlu0 0
    %3898 = vperm.xlu0 %3897, %v3861
    %v3899 = vpop.permute.xlu0 %3898
    %3900 = vset.pattern.permute.xlu0 0
    %3901 = vperm.xlu0 %3900, %v3862
    %v3902 = vpop.permute.xlu0 %3901
    %3903 = vset.pattern.permute.xlu0 0
    %3904 = vperm.xlu0 %3903, %v3863
    %v3905 = vpop.permute.xlu0 %3904
    %3906 = vset.pattern.permute.xlu0 0
    %3907 = vperm.xlu0 %3906, %v3864
    %v3908 = vpop.permute.xlu0 %3907
    %3909 = vset.pattern.permute.xlu0 0
    %3910 = vperm.xlu0 %3909, %v3865
    %v3911 = vpop.permute.xlu0 %3910
    %3912 = vset.pattern.permute.xlu0 0
    %3913 = vperm.xlu0 %3912, %v3866
    %v3914 = vpop.permute.xlu0 %3913
    %vm3915 = vcmp.eq.s32.totalorder %v3869, 1
    %vm3916 = vcmp.eq.s32.totalorder %v3872, 1
    %vm3917 = vcmp.eq.s32.totalorder %v3875, 1
    %vm3918 = vcmp.eq.s32.totalorder %v3878, 1
    %vm3919 = vcmp.eq.s32.totalorder %v3881, 1
    %vm3920 = vcmp.eq.s32.totalorder %v3884, 1
    %vm3921 = vcmp.eq.s32.totalorder %v3887, 1
    %vm3922 = vcmp.eq.s32.totalorder %v3890, 1
    %vm3923 = vcmp.eq.s32.totalorder %v3893, 1
    %vm3924 = vcmp.eq.s32.totalorder %v3896, 1
    %vm3925 = vcmp.eq.s32.totalorder %v3899, 1
    %vm3926 = vcmp.eq.s32.totalorder %v3902, 1
    %vm3927 = vcmp.eq.s32.totalorder %v3905, 1
    %vm3928 = vcmp.eq.s32.totalorder %v3908, 1
    %vm3929 = vcmp.eq.s32.totalorder %v3911, 1
    %vm3930 = vcmp.eq.s32.totalorder %v3914, 1
    %v3931 = vsel %vm3915, %v3819, %v2301
    %v3932 = vsel %vm3916, %v3820, %v2302
    %v3933 = vsel %vm3917, %v3821, %v2303
    %v3934 = vsel %vm3918, %v3822, %v2304
    %v3935 = vsel %vm3919, %v3823, %v2305
    %v3936 = vsel %vm3920, %v3824, %v2306
    %v3937 = vsel %vm3921, %v3825, %v2307
    %v3938 = vsel %vm3922, %v3826, %v2308
    %v3939 = vsel %vm3923, %v3827, %v2309
    %v3940 = vsel %vm3924, %v3828, %v2310
    %v3941 = vsel %vm3925, %v3829, %v2311
    %v3942 = vsel %vm3926, %v3830, %v2312
    %v3943 = vsel %vm3927, %v3831, %v2313
    %v3944 = vsel %vm3928, %v3832, %v2314
    %v3945 = vsel %vm3929, %v3833, %v2315
    %v3946 = vsel %vm3930, %v3834, %v2316
    %v3947 = vsel %vm3915, %v3787, %v2317
    %v3948 = vsel %vm3916, %v3788, %v2318
    %v3949 = vsel %vm3917, %v3789, %v2319
    %v3950 = vsel %vm3918, %v3790, %v2320
    %v3951 = vsel %vm3919, %v3791, %v2321
    %v3952 = vsel %vm3920, %v3792, %v2322
    %v3953 = vsel %vm3921, %v3793, %v2323
    %v3954 = vsel %vm3922, %v3794, %v2324
    %v3955 = vsel %vm3923, %v3795, %v2325
    %v3956 = vsel %vm3924, %v3796, %v2326
    %v3957 = vsel %vm3925, %v3797, %v2327
    %v3958 = vsel %vm3926, %v3798, %v2328
    %v3959 = vsel %vm3927, %v3799, %v2329
    %v3960 = vsel %vm3928, %v3800, %v2330
    %v3961 = vsel %vm3929, %v3801, %v2331
    %v3962 = vsel %vm3930, %v3802, %v2332
    %v3963 = vpack.c.bf16 %v3931, %v3931
    %v3964 = vpack.c.bf16 %v3932, %v3932
    %v3965 = vpack.c.bf16 %v3933, %v3933
    %v3966 = vpack.c.bf16 %v3934, %v3934
    %v3967 = vpack.c.bf16 %v3935, %v3935
    %v3968 = vpack.c.bf16 %v3936, %v3936
    %v3969 = vpack.c.bf16 %v3937, %v3937
    %v3970 = vpack.c.bf16 %v3938, %v3938
    %v3971 = vpack.c.bf16 %v3939, %v3939
    %v3972 = vpack.c.bf16 %v3940, %v3940
    %v3973 = vpack.c.bf16 %v3941, %v3941
    %v3974 = vpack.c.bf16 %v3942, %v3942
    %v3975 = vpack.c.bf16 %v3943, %v3943
    %v3976 = vpack.c.bf16 %v3944, %v3944
    %v3977 = vpack.c.bf16 %v3945, %v3945
    %v3978 = vpack.c.bf16 %v3946, %v3946
    %v3979 = vpack.c.bf16 %v3947, %v3947
    %v3980 = vpack.c.bf16 %v3948, %v3948
    %v3981 = vpack.c.bf16 %v3949, %v3949
    %v3982 = vpack.c.bf16 %v3950, %v3950
    %v3983 = vpack.c.bf16 %v3951, %v3951
    %v3984 = vpack.c.bf16 %v3952, %v3952
    %v3985 = vpack.c.bf16 %v3953, %v3953
    %v3986 = vpack.c.bf16 %v3954, %v3954
    %v3987 = vpack.c.bf16 %v3955, %v3955
    %v3988 = vpack.c.bf16 %v3956, %v3956
    %v3989 = vpack.c.bf16 %v3957, %v3957
    %v3990 = vpack.c.bf16 %v3958, %v3958
    %v3991 = vpack.c.bf16 %v3959, %v3959
    %v3992 = vpack.c.bf16 %v3960, %v3960
    %v3993 = vpack.c.bf16 %v3961, %v3961
    %v3994 = vpack.c.bf16 %v3962, %v3962
    %v4011 = vunpack.c.l.b16 %v3963
    %v4012 = vunpack.c.l.b16 %v3964
    %v4013 = vunpack.c.l.b16 %v3965
    %v4014 = vunpack.c.l.b16 %v3966
    %v4015 = vunpack.c.l.b16 %v3967
    %v4016 = vunpack.c.l.b16 %v3968
    %v4017 = vunpack.c.l.b16 %v3969
    %v4018 = vunpack.c.l.b16 %v3970
    %v4019 = vunpack.c.l.b16 %v3971
    %v4020 = vunpack.c.l.b16 %v3972
    %v4021 = vunpack.c.l.b16 %v3973
    %v4022 = vunpack.c.l.b16 %v3974
    %v4023 = vunpack.c.l.b16 %v3975
    %v4024 = vunpack.c.l.b16 %v3976
    %v4025 = vunpack.c.l.b16 %v3977
    %v4026 = vunpack.c.l.b16 %v3978
    %v4027 = vpack.c.b16 %v4012, %v4011
    %v4028 = vpack.c.b16 %v4014, %v4013
    %v4029 = vpack.c.b16 %v4016, %v4015
    %v4030 = vpack.c.b16 %v4018, %v4017
    %v4031 = vpack.c.b16 %v4020, %v4019
    %v4032 = vpack.c.b16 %v4022, %v4021
    %v4033 = vpack.c.b16 %v4024, %v4023
    %v4034 = vpack.c.b16 %v4026, %v4025
    %v4059 = vunpack.c.l.b16 %v3979
    %v4060 = vunpack.c.l.b16 %v3980
    %v4061 = vunpack.c.l.b16 %v3981
    %v4062 = vunpack.c.l.b16 %v3982
    %v4063 = vunpack.c.l.b16 %v3983
    %v4064 = vunpack.c.l.b16 %v3984
    %v4065 = vunpack.c.l.b16 %v3985
    %v4066 = vunpack.c.l.b16 %v3986
    %v4067 = vunpack.c.l.b16 %v3987
    %v4068 = vunpack.c.l.b16 %v3988
    %v4069 = vunpack.c.l.b16 %v3989
    %v4070 = vunpack.c.l.b16 %v3990
    %v4071 = vunpack.c.l.b16 %v3991
    %v4072 = vunpack.c.l.b16 %v3992
    %v4073 = vunpack.c.l.b16 %v3993
    %v4074 = vunpack.c.l.b16 %v3994
    %v4075 = vpack.c.b16 %v4060, %v4059
    %v4076 = vpack.c.b16 %v4062, %v4061
    %v4077 = vpack.c.b16 %v4064, %v4063
    %v4078 = vpack.c.b16 %v4066, %v4065
    %v4079 = vpack.c.b16 %v4068, %v4067
    %v4080 = vpack.c.b16 %v4070, %v4069
    %v4081 = vpack.c.b16 %v4072, %v4071
    %v4082 = vpack.c.b16 %v4074, %v4073
    %4091 = vmatpush.bf16.msra.mxu0 %v4034
    %4092 = vmatpush.bf16.msra.mxu0 %v4033
    %4093 = vmatpush.bf16.msra.mxu0 %v4032
    %4094 = vmatpush.bf16.msra.mxu0 %v4031
    %4095 = vmatpush.bf16.msra.mxu0 %v4030
    %4096 = vmatpush.bf16.msra.mxu0 %v4029
    %4097 = vmatpush.bf16.msra.mxu0 %v4028
    %4098 = vmatpush.bf16.msra.mxu0 %v4027
    %4099 = vmatmul.bf16.gmra.mxu0 %v704
    %v4100 = vpop.f32.mrf.mxu0
    %v4101 = vadd.f32 0.0, %v4100
    %v4102 = vpop.f32.mrf.mxu0
    %v4103 = vadd.f32 0.0, %v4102
    %4104 = vmatmul.bf16.gmra.mxu0 %v705
    %v4105 = vpop.f32.mrf.mxu0
    %v4106 = vadd.f32 0.0, %v4105
    %v4107 = vpop.f32.mrf.mxu0
    %v4108 = vadd.f32 0.0, %v4107
    %4109 = vmatmul.bf16.gmra.mxu0 %v706
    %v4110 = vpop.f32.mrf.mxu0
    %v4111 = vadd.f32 0.0, %v4110
    %v4112 = vpop.f32.mrf.mxu0
    %v4113 = vadd.f32 0.0, %v4112
    %4114 = vmatmul.bf16.gmra.mxu0 %v707
    %v4115 = vpop.f32.mrf.mxu0
    %v4116 = vadd.f32 0.0, %v4115
    %v4117 = vpop.f32.mrf.mxu0
    %v4118 = vadd.f32 0.0, %v4117
    %4119 = vmatmul.bf16.gmra.mxu0 %v708
    %v4120 = vpop.f32.mrf.mxu0
    %v4121 = vadd.f32 0.0, %v4120
    %v4122 = vpop.f32.mrf.mxu0
    %v4123 = vadd.f32 0.0, %v4122
    %4124 = vmatmul.bf16.gmra.mxu0 %v709
    %v4125 = vpop.f32.mrf.mxu0
    %v4126 = vadd.f32 0.0, %v4125
    %v4127 = vpop.f32.mrf.mxu0
    %v4128 = vadd.f32 0.0, %v4127
    %4129 = vmatmul.bf16.gmra.mxu0 %v710
    %v4130 = vpop.f32.mrf.mxu0
    %v4131 = vadd.f32 0.0, %v4130
    %v4132 = vpop.f32.mrf.mxu0
    %v4133 = vadd.f32 0.0, %v4132
    %4134 = vmatmul.bf16.gmra.mxu0 %v711
    %v4135 = vpop.f32.mrf.mxu0
    %v4136 = vadd.f32 0.0, %v4135
    %v4137 = vpop.f32.mrf.mxu0
    %v4138 = vadd.f32 0.0, %v4137
    %4139 = vdwg.mxu0
    %4140 = vmatpush.bf16.msra.mxu0 %v4082
    %4141 = vmatpush.bf16.msra.mxu0 %v4081
    %4142 = vmatpush.bf16.msra.mxu0 %v4080
    %4143 = vmatpush.bf16.msra.mxu0 %v4079
    %4144 = vmatpush.bf16.msra.mxu0 %v4078
    %4145 = vmatpush.bf16.msra.mxu0 %v4077
    %4146 = vmatpush.bf16.msra.mxu0 %v4076
    %4147 = vmatpush.bf16.msra.mxu0 %v4075
    %4148 = vmatmul.bf16.gmra.mxu0 %v704
    %v4149 = vpop.f32.mrf.mxu0
    %v4150 = vadd.f32 0.0, %v4149
    %v4151 = vpop.f32.mrf.mxu0
    %v4152 = vadd.f32 0.0, %v4151
    %4153 = vmatmul.bf16.gmra.mxu0 %v705
    %v4154 = vpop.f32.mrf.mxu0
    %v4155 = vadd.f32 0.0, %v4154
    %v4156 = vpop.f32.mrf.mxu0
    %v4157 = vadd.f32 0.0, %v4156
    %4158 = vmatmul.bf16.gmra.mxu0 %v706
    %v4159 = vpop.f32.mrf.mxu0
    %v4160 = vadd.f32 0.0, %v4159
    %v4161 = vpop.f32.mrf.mxu0
    %v4162 = vadd.f32 0.0, %v4161
    %4163 = vmatmul.bf16.gmra.mxu0 %v707
    %v4164 = vpop.f32.mrf.mxu0
    %v4165 = vadd.f32 0.0, %v4164
    %v4166 = vpop.f32.mrf.mxu0
    %v4167 = vadd.f32 0.0, %v4166
    %4168 = vmatmul.bf16.gmra.mxu0 %v708
    %v4169 = vpop.f32.mrf.mxu0
    %v4170 = vadd.f32 0.0, %v4169
    %v4171 = vpop.f32.mrf.mxu0
    %v4172 = vadd.f32 0.0, %v4171
    %4173 = vmatmul.bf16.gmra.mxu0 %v709
    %v4174 = vpop.f32.mrf.mxu0
    %v4175 = vadd.f32 0.0, %v4174
    %v4176 = vpop.f32.mrf.mxu0
    %v4177 = vadd.f32 0.0, %v4176
    %4178 = vmatmul.bf16.gmra.mxu0 %v710
    %v4179 = vpop.f32.mrf.mxu0
    %v4180 = vadd.f32 0.0, %v4179
    %v4181 = vpop.f32.mrf.mxu0
    %v4182 = vadd.f32 0.0, %v4181
    %4183 = vmatmul.bf16.gmra.mxu0 %v711
    %v4184 = vpop.f32.mrf.mxu0
    %v4185 = vadd.f32 0.0, %v4184
    %v4186 = vpop.f32.mrf.mxu0
    %v4187 = vadd.f32 0.0, %v4186
    %4188 = vdwg.mxu0
    %v4189 = vpack.c.bf16 %v4103, %v4101
    %v4190 = vpack.c.bf16 %v4108, %v4106
    %v4191 = vpack.c.bf16 %v4113, %v4111
    %v4192 = vpack.c.bf16 %v4118, %v4116
    %v4193 = vpack.c.bf16 %v4123, %v4121
    %v4194 = vpack.c.bf16 %v4128, %v4126
    %v4195 = vpack.c.bf16 %v4133, %v4131
    %v4196 = vpack.c.bf16 %v4138, %v4136
    %4197 = vmatpush.bf16.msra.mxu0 %v901
    %4198 = vmatpush.bf16.msra.mxu0 %v897
    %4199 = vmatpush.bf16.msra.mxu0 %v893
    %4200 = vmatpush.bf16.msra.mxu0 %v889
    %4201 = vmatpush.bf16.msra.mxu0 %v885
    %4202 = vmatpush.bf16.msra.mxu0 %v881
    %4203 = vmatpush.bf16.msra.mxu0 %v877
    %4204 = vmatpush.bf16.msra.mxu0 %v873
    %4205 = vmatmul.bf16.gmra.mxu0 %v4189
    %v4206 = vpop.f32.mrf.mxu0
    %v4207 = vadd.f32 0.0, %v4206
    %v4208 = vpop.f32.mrf.mxu0
    %v4209 = vadd.f32 0.0, %v4208
    %4210 = vmatmul.bf16.gmra.mxu0 %v4190
    %v4211 = vpop.f32.mrf.mxu0
    %v4212 = vadd.f32 0.0, %v4211
    %v4213 = vpop.f32.mrf.mxu0
    %v4214 = vadd.f32 0.0, %v4213
    %4215 = vmatmul.bf16.gmra.mxu0 %v4191
    %v4216 = vpop.f32.mrf.mxu0
    %v4217 = vadd.f32 0.0, %v4216
    %v4218 = vpop.f32.mrf.mxu0
    %v4219 = vadd.f32 0.0, %v4218
    %4220 = vmatmul.bf16.gmra.mxu0 %v4192
    %v4221 = vpop.f32.mrf.mxu0
    %v4222 = vadd.f32 0.0, %v4221
    %v4223 = vpop.f32.mrf.mxu0
    %v4224 = vadd.f32 0.0, %v4223
    %4225 = vmatmul.bf16.gmra.mxu0 %v4193
    %v4226 = vpop.f32.mrf.mxu0
    %v4227 = vadd.f32 0.0, %v4226
    %v4228 = vpop.f32.mrf.mxu0
    %v4229 = vadd.f32 0.0, %v4228
    %4230 = vmatmul.bf16.gmra.mxu0 %v4194
    %v4231 = vpop.f32.mrf.mxu0
    %v4232 = vadd.f32 0.0, %v4231
    %v4233 = vpop.f32.mrf.mxu0
    %v4234 = vadd.f32 0.0, %v4233
    %4235 = vmatmul.bf16.gmra.mxu0 %v4195
    %v4236 = vpop.f32.mrf.mxu0
    %v4237 = vadd.f32 0.0, %v4236
    %v4238 = vpop.f32.mrf.mxu0
    %v4239 = vadd.f32 0.0, %v4238
    %4240 = vmatmul.bf16.gmra.mxu0 %v4196
    %v4241 = vpop.f32.mrf.mxu0
    %v4242 = vadd.f32 0.0, %v4241
    %v4243 = vpop.f32.mrf.mxu0
    %v4244 = vadd.f32 0.0, %v4243
    %4245 = vdwg.mxu0
    %4246 = vmatpush.bf16.msra.mxu0 %v902
    %4247 = vmatpush.bf16.msra.mxu0 %v898
    %4248 = vmatpush.bf16.msra.mxu0 %v894
    %4249 = vmatpush.bf16.msra.mxu0 %v890
    %4250 = vmatpush.bf16.msra.mxu0 %v886
    %4251 = vmatpush.bf16.msra.mxu0 %v882
    %4252 = vmatpush.bf16.msra.mxu0 %v878
    %4253 = vmatpush.bf16.msra.mxu0 %v874
    %4254 = vmatmul.bf16.gmra.mxu0 %v4189
    %v4255 = vpop.f32.mrf.mxu0
    %v4256 = vadd.f32 0.0, %v4255
    %v4257 = vpop.f32.mrf.mxu0
    %v4258 = vadd.f32 0.0, %v4257
    %4259 = vmatmul.bf16.gmra.mxu0 %v4190
    %v4260 = vpop.f32.mrf.mxu0
    %v4261 = vadd.f32 0.0, %v4260
    %v4262 = vpop.f32.mrf.mxu0
    %v4263 = vadd.f32 0.0, %v4262
    %4264 = vmatmul.bf16.gmra.mxu0 %v4191
    %v4265 = vpop.f32.mrf.mxu0
    %v4266 = vadd.f32 0.0, %v4265
    %v4267 = vpop.f32.mrf.mxu0
    %v4268 = vadd.f32 0.0, %v4267
    %4269 = vmatmul.bf16.gmra.mxu0 %v4192
    %v4270 = vpop.f32.mrf.mxu0
    %v4271 = vadd.f32 0.0, %v4270
    %v4272 = vpop.f32.mrf.mxu0
    %v4273 = vadd.f32 0.0, %v4272
    %4274 = vmatmul.bf16.gmra.mxu0 %v4193
    %v4275 = vpop.f32.mrf.mxu0
    %v4276 = vadd.f32 0.0, %v4275
    %v4277 = vpop.f32.mrf.mxu0
    %v4278 = vadd.f32 0.0, %v4277
    %4279 = vmatmul.bf16.gmra.mxu0 %v4194
    %v4280 = vpop.f32.mrf.mxu0
    %v4281 = vadd.f32 0.0, %v4280
    %v4282 = vpop.f32.mrf.mxu0
    %v4283 = vadd.f32 0.0, %v4282
    %4284 = vmatmul.bf16.gmra.mxu0 %v4195
    %v4285 = vpop.f32.mrf.mxu0
    %v4286 = vadd.f32 0.0, %v4285
    %v4287 = vpop.f32.mrf.mxu0
    %v4288 = vadd.f32 0.0, %v4287
    %4289 = vmatmul.bf16.gmra.mxu0 %v4196
    %v4290 = vpop.f32.mrf.mxu0
    %v4291 = vadd.f32 0.0, %v4290
    %v4292 = vpop.f32.mrf.mxu0
    %v4293 = vadd.f32 0.0, %v4292
    %4294 = vdwg.mxu0
    %4295 = vmatpush.bf16.msra.mxu0 %v903
    %4296 = vmatpush.bf16.msra.mxu0 %v899
    %4297 = vmatpush.bf16.msra.mxu0 %v895
    %4298 = vmatpush.bf16.msra.mxu0 %v891
    %4299 = vmatpush.bf16.msra.mxu0 %v887
    %4300 = vmatpush.bf16.msra.mxu0 %v883
    %4301 = vmatpush.bf16.msra.mxu0 %v879
    %4302 = vmatpush.bf16.msra.mxu0 %v875
    %4303 = vmatmul.bf16.gmra.mxu0 %v4189
    %v4304 = vpop.f32.mrf.mxu0
    %v4305 = vadd.f32 0.0, %v4304
    %v4306 = vpop.f32.mrf.mxu0
    %v4307 = vadd.f32 0.0, %v4306
    %4308 = vmatmul.bf16.gmra.mxu0 %v4190
    %v4309 = vpop.f32.mrf.mxu0
    %v4310 = vadd.f32 0.0, %v4309
    %v4311 = vpop.f32.mrf.mxu0
    %v4312 = vadd.f32 0.0, %v4311
    %4313 = vmatmul.bf16.gmra.mxu0 %v4191
    %v4314 = vpop.f32.mrf.mxu0
    %v4315 = vadd.f32 0.0, %v4314
    %v4316 = vpop.f32.mrf.mxu0
    %v4317 = vadd.f32 0.0, %v4316
    %4318 = vmatmul.bf16.gmra.mxu0 %v4192
    %v4319 = vpop.f32.mrf.mxu0
    %v4320 = vadd.f32 0.0, %v4319
    %v4321 = vpop.f32.mrf.mxu0
    %v4322 = vadd.f32 0.0, %v4321
    %4323 = vmatmul.bf16.gmra.mxu0 %v4193
    %v4324 = vpop.f32.mrf.mxu0
    %v4325 = vadd.f32 0.0, %v4324
    %v4326 = vpop.f32.mrf.mxu0
    %v4327 = vadd.f32 0.0, %v4326
    %4328 = vmatmul.bf16.gmra.mxu0 %v4194
    %v4329 = vpop.f32.mrf.mxu0
    %v4330 = vadd.f32 0.0, %v4329
    %v4331 = vpop.f32.mrf.mxu0
    %v4332 = vadd.f32 0.0, %v4331
    %4333 = vmatmul.bf16.gmra.mxu0 %v4195
    %v4334 = vpop.f32.mrf.mxu0
    %v4335 = vadd.f32 0.0, %v4334
    %v4336 = vpop.f32.mrf.mxu0
    %v4337 = vadd.f32 0.0, %v4336
    %4338 = vmatmul.bf16.gmra.mxu0 %v4196
    %v4339 = vpop.f32.mrf.mxu0
    %v4340 = vadd.f32 0.0, %v4339
    %v4341 = vpop.f32.mrf.mxu0
    %v4342 = vadd.f32 0.0, %v4341
    %4343 = vdwg.mxu0
    %4344 = vmatpush.bf16.msra.mxu0 %v904
    %4345 = vmatpush.bf16.msra.mxu0 %v900
    %4346 = vmatpush.bf16.msra.mxu0 %v896
    %4347 = vmatpush.bf16.msra.mxu0 %v892
    %4348 = vmatpush.bf16.msra.mxu0 %v888
    %4349 = vmatpush.bf16.msra.mxu0 %v884
    %4350 = vmatpush.bf16.msra.mxu0 %v880
    %4351 = vmatpush.bf16.msra.mxu0 %v876
    %4352 = vmatmul.bf16.gmra.mxu0 %v4189
    %v4353 = vpop.f32.mrf.mxu0
    %v4354 = vadd.f32 0.0, %v4353
    %v4355 = vpop.f32.mrf.mxu0
    %v4356 = vadd.f32 0.0, %v4355
    %4357 = vmatmul.bf16.gmra.mxu0 %v4190
    %v4358 = vpop.f32.mrf.mxu0
    %v4359 = vadd.f32 0.0, %v4358
    %v4360 = vpop.f32.mrf.mxu0
    %v4361 = vadd.f32 0.0, %v4360
    %4362 = vmatmul.bf16.gmra.mxu0 %v4191
    %v4363 = vpop.f32.mrf.mxu0
    %v4364 = vadd.f32 0.0, %v4363
    %v4365 = vpop.f32.mrf.mxu0
    %v4366 = vadd.f32 0.0, %v4365
    %4367 = vmatmul.bf16.gmra.mxu0 %v4192
    %v4368 = vpop.f32.mrf.mxu0
    %v4369 = vadd.f32 0.0, %v4368
    %v4370 = vpop.f32.mrf.mxu0
    %v4371 = vadd.f32 0.0, %v4370
    %4372 = vmatmul.bf16.gmra.mxu0 %v4193
    %v4373 = vpop.f32.mrf.mxu0
    %v4374 = vadd.f32 0.0, %v4373
    %v4375 = vpop.f32.mrf.mxu0
    %v4376 = vadd.f32 0.0, %v4375
    %4377 = vmatmul.bf16.gmra.mxu0 %v4194
    %v4378 = vpop.f32.mrf.mxu0
    %v4379 = vadd.f32 0.0, %v4378
    %v4380 = vpop.f32.mrf.mxu0
    %v4381 = vadd.f32 0.0, %v4380
    %4382 = vmatmul.bf16.gmra.mxu0 %v4195
    %v4383 = vpop.f32.mrf.mxu0
    %v4384 = vadd.f32 0.0, %v4383
    %v4385 = vpop.f32.mrf.mxu0
    %v4386 = vadd.f32 0.0, %v4385
    %4387 = vmatmul.bf16.gmra.mxu0 %v4196
    %v4388 = vpop.f32.mrf.mxu0
    %v4389 = vadd.f32 0.0, %v4388
    %v4390 = vpop.f32.mrf.mxu0
    %v4391 = vadd.f32 0.0, %v4390
    %4392 = vdwg.mxu0
    %v4393 = vadd.f32 %v422, %v4207
    %v4394 = vadd.f32 %v471, %v4256
    %v4395 = vadd.f32 %v520, %v4305
    %v4396 = vadd.f32 %v569, %v4354
    %v4397 = vadd.f32 %v424, %v4209
    %v4398 = vadd.f32 %v473, %v4258
    %v4399 = vadd.f32 %v522, %v4307
    %v4400 = vadd.f32 %v571, %v4356
    %v4401 = vadd.f32 %v427, %v4212
    %v4402 = vadd.f32 %v476, %v4261
    %v4403 = vadd.f32 %v525, %v4310
    %v4404 = vadd.f32 %v574, %v4359
    %v4405 = vadd.f32 %v429, %v4214
    %v4406 = vadd.f32 %v478, %v4263
    %v4407 = vadd.f32 %v527, %v4312
    %v4408 = vadd.f32 %v576, %v4361
    %v4409 = vadd.f32 %v432, %v4217
    %v4410 = vadd.f32 %v481, %v4266
    %v4411 = vadd.f32 %v530, %v4315
    %v4412 = vadd.f32 %v579, %v4364
    %v4413 = vadd.f32 %v434, %v4219
    %v4414 = vadd.f32 %v483, %v4268
    %v4415 = vadd.f32 %v532, %v4317
    %v4416 = vadd.f32 %v581, %v4366
    %v4417 = vadd.f32 %v437, %v4222
    %v4418 = vadd.f32 %v486, %v4271
    %v4419 = vadd.f32 %v535, %v4320
    %v4420 = vadd.f32 %v584, %v4369
    %v4421 = vadd.f32 %v439, %v4224
    %v4422 = vadd.f32 %v488, %v4273
    %v4423 = vadd.f32 %v537, %v4322
    %v4424 = vadd.f32 %v586, %v4371
    %v4425 = vadd.f32 %v442, %v4227
    %v4426 = vadd.f32 %v491, %v4276
    %v4427 = vadd.f32 %v540, %v4325
    %v4428 = vadd.f32 %v589, %v4374
    %v4429 = vadd.f32 %v444, %v4229
    %v4430 = vadd.f32 %v493, %v4278
    %v4431 = vadd.f32 %v542, %v4327
    %v4432 = vadd.f32 %v591, %v4376
    %v4433 = vadd.f32 %v447, %v4232
    %v4434 = vadd.f32 %v496, %v4281
    %v4435 = vadd.f32 %v545, %v4330
    %v4436 = vadd.f32 %v594, %v4379
    %v4437 = vadd.f32 %v449, %v4234
    %v4438 = vadd.f32 %v498, %v4283
    %v4439 = vadd.f32 %v547, %v4332
    %v4440 = vadd.f32 %v596, %v4381
    %v4441 = vadd.f32 %v452, %v4237
    %v4442 = vadd.f32 %v501, %v4286
    %v4443 = vadd.f32 %v550, %v4335
    %v4444 = vadd.f32 %v599, %v4384
    %v4445 = vadd.f32 %v454, %v4239
    %v4446 = vadd.f32 %v503, %v4288
    %v4447 = vadd.f32 %v552, %v4337
    %v4448 = vadd.f32 %v601, %v4386
    %v4449 = vadd.f32 %v457, %v4242
    %v4450 = vadd.f32 %v506, %v4291
    %v4451 = vadd.f32 %v555, %v4340
    %v4452 = vadd.f32 %v604, %v4389
    %v4453 = vadd.f32 %v459, %v4244
    %v4454 = vadd.f32 %v508, %v4293
    %v4455 = vadd.f32 %v557, %v4342
    %v4456 = vadd.f32 %v606, %v4391
    %v4457 = vxor.u32 %v4393, 2147483648
    %v4458 = vxor.u32 %v4397, 2147483648
    %v4459 = vxor.u32 %v4401, 2147483648
    %v4460 = vxor.u32 %v4405, 2147483648
    %v4461 = vxor.u32 %v4409, 2147483648
    %v4462 = vxor.u32 %v4413, 2147483648
    %v4463 = vxor.u32 %v4417, 2147483648
    %v4464 = vxor.u32 %v4421, 2147483648
    %v4465 = vxor.u32 %v4425, 2147483648
    %v4466 = vxor.u32 %v4429, 2147483648
    %v4467 = vxor.u32 %v4433, 2147483648
    %v4468 = vxor.u32 %v4437, 2147483648
    %v4469 = vxor.u32 %v4441, 2147483648
    %v4470 = vxor.u32 %v4445, 2147483648
    %v4471 = vxor.u32 %v4449, 2147483648
    %v4472 = vxor.u32 %v4453, 2147483648
    %v4473 = vmul.f32 %v4457, 1.442695
    %v4474 = vpow.pop %v4473
    %v4475 = vmul.f32 %v4458, 1.442695
    %v4476 = vpow.pop %v4475
    %v4477 = vmul.f32 %v4459, 1.442695
    %v4478 = vpow.pop %v4477
    %v4479 = vmul.f32 %v4460, 1.442695
    %v4480 = vpow.pop %v4479
    %v4481 = vmul.f32 %v4461, 1.442695
    %v4482 = vpow.pop %v4481
    %v4483 = vmul.f32 %v4462, 1.442695
    %v4484 = vpow.pop %v4483
    %v4485 = vmul.f32 %v4463, 1.442695
    %v4486 = vpow.pop %v4485
    %v4487 = vmul.f32 %v4464, 1.442695
    %v4488 = vpow.pop %v4487
    %v4489 = vmul.f32 %v4465, 1.442695
    %v4490 = vpow.pop %v4489
    %v4491 = vmul.f32 %v4466, 1.442695
    %v4492 = vpow.pop %v4491
    %v4493 = vmul.f32 %v4467, 1.442695
    %v4494 = vpow.pop %v4493
    %v4495 = vmul.f32 %v4468, 1.442695
    %v4496 = vpow.pop %v4495
    %v4497 = vmul.f32 %v4469, 1.442695
    %v4498 = vpow.pop %v4497
    %v4499 = vmul.f32 %v4470, 1.442695
    %v4500 = vpow.pop %v4499
    %v4501 = vmul.f32 %v4471, 1.442695
    %v4502 = vpow.pop %v4501
    %v4503 = vmul.f32 %v4472, 1.442695
    %v4504 = vpow.pop %v4503
    %v4505 = vadd.f32 %v4474, 1.0
    %v4506 = vadd.f32 %v4476, 1.0
    %v4507 = vadd.f32 %v4478, 1.0
    %v4508 = vadd.f32 %v4480, 1.0
    %v4509 = vadd.f32 %v4482, 1.0
    %v4510 = vadd.f32 %v4484, 1.0
    %v4511 = vadd.f32 %v4486, 1.0
    %v4512 = vadd.f32 %v4488, 1.0
    %v4513 = vadd.f32 %v4490, 1.0
    %v4514 = vadd.f32 %v4492, 1.0
    %v4515 = vadd.f32 %v4494, 1.0
    %v4516 = vadd.f32 %v4496, 1.0
    %v4517 = vadd.f32 %v4498, 1.0
    %v4518 = vadd.f32 %v4500, 1.0
    %v4519 = vadd.f32 %v4502, 1.0
    %v4520 = vadd.f32 %v4504, 1.0
    %v4521 = vrcp.pop %v4505
    %v4522 = vmul.f32 %v4505, %v4521
    %v4523 = vsub.f32 1.0, %v4522
    %v4524 = vmul.f32 %v4521, %v4523
    %v4525 = vadd.f32 %v4521, %v4524
    %vm4526 = vweird.f32 %v4505
    %vm4527 = vweird.f32 %v4521
    %vm4528 = vmor %vm4526, %vm4527
    %v4529 = vsel %vm4528, %v4521, %v4525
    %v4530 = vand.u32 2147483647, %v4505
    %vm4531 = vcmp.eq.f32.partialorder %v4530, 8.507059e+37
    %v4532 = vand.u32 %v4505, 2147483648
    %v4533 = vor.u32 1.1754944e-38, %v4532
    %v4534 = vsel %vm4531, %v4533, %v4529
    %v4535 = vmul.f32 1.0, %v4534
    %v4536 = vrcp.pop %v4506
    %v4537 = vmul.f32 %v4506, %v4536
    %v4538 = vsub.f32 1.0, %v4537
    %v4539 = vmul.f32 %v4536, %v4538
    %v4540 = vadd.f32 %v4536, %v4539
    %vm4541 = vweird.f32 %v4506
    %vm4542 = vweird.f32 %v4536
    %vm4543 = vmor %vm4541, %vm4542
    %v4544 = vsel %vm4543, %v4536, %v4540
    %v4545 = vand.u32 2147483647, %v4506
    %vm4546 = vcmp.eq.f32.partialorder %v4545, 8.507059e+37
    %v4547 = vand.u32 %v4506, 2147483648
    %v4548 = vor.u32 1.1754944e-38, %v4547
    %v4549 = vsel %vm4546, %v4548, %v4544
    %v4550 = vmul.f32 1.0, %v4549
    %v4551 = vrcp.pop %v4507
    %v4552 = vmul.f32 %v4507, %v4551
    %v4553 = vsub.f32 1.0, %v4552
    %v4554 = vmul.f32 %v4551, %v4553
    %v4555 = vadd.f32 %v4551, %v4554
    %vm4556 = vweird.f32 %v4507
    %vm4557 = vweird.f32 %v4551
    %vm4558 = vmor %vm4556, %vm4557
    %v4559 = vsel %vm4558, %v4551, %v4555
    %v4560 = vand.u32 2147483647, %v4507
    %vm4561 = vcmp.eq.f32.partialorder %v4560, 8.507059e+37
    %v4562 = vand.u32 %v4507, 2147483648
    %v4563 = vor.u32 1.1754944e-38, %v4562
    %v4564 = vsel %vm4561, %v4563, %v4559
    %v4565 = vmul.f32 1.0, %v4564
    %v4566 = vrcp.pop %v4508
    %v4567 = vmul.f32 %v4508, %v4566
    %v4568 = vsub.f32 1.0, %v4567
    %v4569 = vmul.f32 %v4566, %v4568
    %v4570 = vadd.f32 %v4566, %v4569
    %vm4571 = vweird.f32 %v4508
    %vm4572 = vweird.f32 %v4566
    %vm4573 = vmor %vm4571, %vm4572
    %v4574 = vsel %vm4573, %v4566, %v4570
    %v4575 = vand.u32 2147483647, %v4508
    %vm4576 = vcmp.eq.f32.partialorder %v4575, 8.507059e+37
    %v4577 = vand.u32 %v4508, 2147483648
    %v4578 = vor.u32 1.1754944e-38, %v4577
    %v4579 = vsel %vm4576, %v4578, %v4574
    %v4580 = vmul.f32 1.0, %v4579
    %v4581 = vrcp.pop %v4509
    %v4582 = vmul.f32 %v4509, %v4581
    %v4583 = vsub.f32 1.0, %v4582
    %v4584 = vmul.f32 %v4581, %v4583
    %v4585 = vadd.f32 %v4581, %v4584
    %vm4586 = vweird.f32 %v4509
    %vm4587 = vweird.f32 %v4581
    %vm4588 = vmor %vm4586, %vm4587
    %v4589 = vsel %vm4588, %v4581, %v4585
    %v4590 = vand.u32 2147483647, %v4509
    %vm4591 = vcmp.eq.f32.partialorder %v4590, 8.507059e+37
    %v4592 = vand.u32 %v4509, 2147483648
    %v4593 = vor.u32 1.1754944e-38, %v4592
    %v4594 = vsel %vm4591, %v4593, %v4589
    %v4595 = vmul.f32 1.0, %v4594
    %v4596 = vrcp.pop %v4510
    %v4597 = vmul.f32 %v4510, %v4596
    %v4598 = vsub.f32 1.0, %v4597
    %v4599 = vmul.f32 %v4596, %v4598
    %v4600 = vadd.f32 %v4596, %v4599
    %vm4601 = vweird.f32 %v4510
    %vm4602 = vweird.f32 %v4596
    %vm4603 = vmor %vm4601, %vm4602
    %v4604 = vsel %vm4603, %v4596, %v4600
    %v4605 = vand.u32 2147483647, %v4510
    %vm4606 = vcmp.eq.f32.partialorder %v4605, 8.507059e+37
    %v4607 = vand.u32 %v4510, 2147483648
    %v4608 = vor.u32 1.1754944e-38, %v4607
    %v4609 = vsel %vm4606, %v4608, %v4604
    %v4610 = vmul.f32 1.0, %v4609
    %v4611 = vrcp.pop %v4511
    %v4612 = vmul.f32 %v4511, %v4611
    %v4613 = vsub.f32 1.0, %v4612
    %v4614 = vmul.f32 %v4611, %v4613
    %v4615 = vadd.f32 %v4611, %v4614
    %vm4616 = vweird.f32 %v4511
    %vm4617 = vweird.f32 %v4611
    %vm4618 = vmor %vm4616, %vm4617
    %v4619 = vsel %vm4618, %v4611, %v4615
    %v4620 = vand.u32 2147483647, %v4511
    %vm4621 = vcmp.eq.f32.partialorder %v4620, 8.507059e+37
    %v4622 = vand.u32 %v4511, 2147483648
    %v4623 = vor.u32 1.1754944e-38, %v4622
    %v4624 = vsel %vm4621, %v4623, %v4619
    %v4625 = vmul.f32 1.0, %v4624
    %v4626 = vrcp.pop %v4512
    %v4627 = vmul.f32 %v4512, %v4626
    %v4628 = vsub.f32 1.0, %v4627
    %v4629 = vmul.f32 %v4626, %v4628
    %v4630 = vadd.f32 %v4626, %v4629
    %vm4631 = vweird.f32 %v4512
    %vm4632 = vweird.f32 %v4626
    %vm4633 = vmor %vm4631, %vm4632
    %v4634 = vsel %vm4633, %v4626, %v4630
    %v4635 = vand.u32 2147483647, %v4512
    %vm4636 = vcmp.eq.f32.partialorder %v4635, 8.507059e+37
    %v4637 = vand.u32 %v4512, 2147483648
    %v4638 = vor.u32 1.1754944e-38, %v4637
    %v4639 = vsel %vm4636, %v4638, %v4634
    %v4640 = vmul.f32 1.0, %v4639
    %v4641 = vrcp.pop %v4513
    %v4642 = vmul.f32 %v4513, %v4641
    %v4643 = vsub.f32 1.0, %v4642
    %v4644 = vmul.f32 %v4641, %v4643
    %v4645 = vadd.f32 %v4641, %v4644
    %vm4646 = vweird.f32 %v4513
    %vm4647 = vweird.f32 %v4641
    %vm4648 = vmor %vm4646, %vm4647
    %v4649 = vsel %vm4648, %v4641, %v4645
    %v4650 = vand.u32 2147483647, %v4513
    %vm4651 = vcmp.eq.f32.partialorder %v4650, 8.507059e+37
    %v4652 = vand.u32 %v4513, 2147483648
    %v4653 = vor.u32 1.1754944e-38, %v4652
    %v4654 = vsel %vm4651, %v4653, %v4649
    %v4655 = vmul.f32 1.0, %v4654
    %v4656 = vrcp.pop %v4514
    %v4657 = vmul.f32 %v4514, %v4656
    %v4658 = vsub.f32 1.0, %v4657
    %v4659 = vmul.f32 %v4656, %v4658
    %v4660 = vadd.f32 %v4656, %v4659
    %vm4661 = vweird.f32 %v4514
    %vm4662 = vweird.f32 %v4656
    %vm4663 = vmor %vm4661, %vm4662
    %v4664 = vsel %vm4663, %v4656, %v4660
    %v4665 = vand.u32 2147483647, %v4514
    %vm4666 = vcmp.eq.f32.partialorder %v4665, 8.507059e+37
    %v4667 = vand.u32 %v4514, 2147483648
    %v4668 = vor.u32 1.1754944e-38, %v4667
    %v4669 = vsel %vm4666, %v4668, %v4664
    %v4670 = vmul.f32 1.0, %v4669
    %v4671 = vrcp.pop %v4515
    %v4672 = vmul.f32 %v4515, %v4671
    %v4673 = vsub.f32 1.0, %v4672
    %v4674 = vmul.f32 %v4671, %v4673
    %v4675 = vadd.f32 %v4671, %v4674
    %vm4676 = vweird.f32 %v4515
    %vm4677 = vweird.f32 %v4671
    %vm4678 = vmor %vm4676, %vm4677
    %v4679 = vsel %vm4678, %v4671, %v4675
    %v4680 = vand.u32 2147483647, %v4515
    %vm4681 = vcmp.eq.f32.partialorder %v4680, 8.507059e+37
    %v4682 = vand.u32 %v4515, 2147483648
    %v4683 = vor.u32 1.1754944e-38, %v4682
    %v4684 = vsel %vm4681, %v4683, %v4679
    %v4685 = vmul.f32 1.0, %v4684
    %v4686 = vrcp.pop %v4516
    %v4687 = vmul.f32 %v4516, %v4686
    %v4688 = vsub.f32 1.0, %v4687
    %v4689 = vmul.f32 %v4686, %v4688
    %v4690 = vadd.f32 %v4686, %v4689
    %vm4691 = vweird.f32 %v4516
    %vm4692 = vweird.f32 %v4686
    %vm4693 = vmor %vm4691, %vm4692
    %v4694 = vsel %vm4693, %v4686, %v4690
    %v4695 = vand.u32 2147483647, %v4516
    %vm4696 = vcmp.eq.f32.partialorder %v4695, 8.507059e+37
    %v4697 = vand.u32 %v4516, 2147483648
    %v4698 = vor.u32 1.1754944e-38, %v4697
    %v4699 = vsel %vm4696, %v4698, %v4694
    %v4700 = vmul.f32 1.0, %v4699
    %v4701 = vrcp.pop %v4517
    %v4702 = vmul.f32 %v4517, %v4701
    %v4703 = vsub.f32 1.0, %v4702
    %v4704 = vmul.f32 %v4701, %v4703
    %v4705 = vadd.f32 %v4701, %v4704
    %vm4706 = vweird.f32 %v4517
    %vm4707 = vweird.f32 %v4701
    %vm4708 = vmor %vm4706, %vm4707
    %v4709 = vsel %vm4708, %v4701, %v4705
    %v4710 = vand.u32 2147483647, %v4517
    %vm4711 = vcmp.eq.f32.partialorder %v4710, 8.507059e+37
    %v4712 = vand.u32 %v4517, 2147483648
    %v4713 = vor.u32 1.1754944e-38, %v4712
    %v4714 = vsel %vm4711, %v4713, %v4709
    %v4715 = vmul.f32 1.0, %v4714
    %v4716 = vrcp.pop %v4518
    %v4717 = vmul.f32 %v4518, %v4716
    %v4718 = vsub.f32 1.0, %v4717
    %v4719 = vmul.f32 %v4716, %v4718
    %v4720 = vadd.f32 %v4716, %v4719
    %vm4721 = vweird.f32 %v4518
    %vm4722 = vweird.f32 %v4716
    %vm4723 = vmor %vm4721, %vm4722
    %v4724 = vsel %vm4723, %v4716, %v4720
    %v4725 = vand.u32 2147483647, %v4518
    %vm4726 = vcmp.eq.f32.partialorder %v4725, 8.507059e+37
    %v4727 = vand.u32 %v4518, 2147483648
    %v4728 = vor.u32 1.1754944e-38, %v4727
    %v4729 = vsel %vm4726, %v4728, %v4724
    %v4730 = vmul.f32 1.0, %v4729
    %v4731 = vrcp.pop %v4519
    %v4732 = vmul.f32 %v4519, %v4731
    %v4733 = vsub.f32 1.0, %v4732
    %v4734 = vmul.f32 %v4731, %v4733
    %v4735 = vadd.f32 %v4731, %v4734
    %vm4736 = vweird.f32 %v4519
    %vm4737 = vweird.f32 %v4731
    %vm4738 = vmor %vm4736, %vm4737
    %v4739 = vsel %vm4738, %v4731, %v4735
    %v4740 = vand.u32 2147483647, %v4519
    %vm4741 = vcmp.eq.f32.partialorder %v4740, 8.507059e+37
    %v4742 = vand.u32 %v4519, 2147483648
    %v4743 = vor.u32 1.1754944e-38, %v4742
    %v4744 = vsel %vm4741, %v4743, %v4739
    %v4745 = vmul.f32 1.0, %v4744
    %v4746 = vrcp.pop %v4520
    %v4747 = vmul.f32 %v4520, %v4746
    %v4748 = vsub.f32 1.0, %v4747
    %v4749 = vmul.f32 %v4746, %v4748
    %v4750 = vadd.f32 %v4746, %v4749
    %vm4751 = vweird.f32 %v4520
    %vm4752 = vweird.f32 %v4746
    %vm4753 = vmor %vm4751, %vm4752
    %v4754 = vsel %vm4753, %v4746, %v4750
    %v4755 = vand.u32 2147483647, %v4520
    %vm4756 = vcmp.eq.f32.partialorder %v4755, 8.507059e+37
    %v4757 = vand.u32 %v4520, 2147483648
    %v4758 = vor.u32 1.1754944e-38, %v4757
    %v4759 = vsel %vm4756, %v4758, %v4754
    %v4760 = vmul.f32 1.0, %v4759
    %v4761 = vxor.u32 %v4394, 2147483648
    %v4762 = vxor.u32 %v4398, 2147483648
    %v4763 = vxor.u32 %v4402, 2147483648
    %v4764 = vxor.u32 %v4406, 2147483648
    %v4765 = vxor.u32 %v4410, 2147483648
    %v4766 = vxor.u32 %v4414, 2147483648
    %v4767 = vxor.u32 %v4418, 2147483648
    %v4768 = vxor.u32 %v4422, 2147483648
    %v4769 = vxor.u32 %v4426, 2147483648
    %v4770 = vxor.u32 %v4430, 2147483648
    %v4771 = vxor.u32 %v4434, 2147483648
    %v4772 = vxor.u32 %v4438, 2147483648
    %v4773 = vxor.u32 %v4442, 2147483648
    %v4774 = vxor.u32 %v4446, 2147483648
    %v4775 = vxor.u32 %v4450, 2147483648
    %v4776 = vxor.u32 %v4454, 2147483648
    %v4777 = vmul.f32 %v4761, 1.442695
    %v4778 = vpow.pop %v4777
    %v4779 = vmul.f32 %v4762, 1.442695
    %v4780 = vpow.pop %v4779
    %v4781 = vmul.f32 %v4763, 1.442695
    %v4782 = vpow.pop %v4781
    %v4783 = vmul.f32 %v4764, 1.442695
    %v4784 = vpow.pop %v4783
    %v4785 = vmul.f32 %v4765, 1.442695
    %v4786 = vpow.pop %v4785
    %v4787 = vmul.f32 %v4766, 1.442695
    %v4788 = vpow.pop %v4787
    %v4789 = vmul.f32 %v4767, 1.442695
    %v4790 = vpow.pop %v4789
    %v4791 = vmul.f32 %v4768, 1.442695
    %v4792 = vpow.pop %v4791
    %v4793 = vmul.f32 %v4769, 1.442695
    %v4794 = vpow.pop %v4793
    %v4795 = vmul.f32 %v4770, 1.442695
    %v4796 = vpow.pop %v4795
    %v4797 = vmul.f32 %v4771, 1.442695
    %v4798 = vpow.pop %v4797
    %v4799 = vmul.f32 %v4772, 1.442695
    %v4800 = vpow.pop %v4799
    %v4801 = vmul.f32 %v4773, 1.442695
    %v4802 = vpow.pop %v4801
    %v4803 = vmul.f32 %v4774, 1.442695
    %v4804 = vpow.pop %v4803
    %v4805 = vmul.f32 %v4775, 1.442695
    %v4806 = vpow.pop %v4805
    %v4807 = vmul.f32 %v4776, 1.442695
    %v4808 = vpow.pop %v4807
    %v4809 = vadd.f32 %v4778, 1.0
    %v4810 = vadd.f32 %v4780, 1.0
    %v4811 = vadd.f32 %v4782, 1.0
    %v4812 = vadd.f32 %v4784, 1.0
    %v4813 = vadd.f32 %v4786, 1.0
    %v4814 = vadd.f32 %v4788, 1.0
    %v4815 = vadd.f32 %v4790, 1.0
    %v4816 = vadd.f32 %v4792, 1.0
    %v4817 = vadd.f32 %v4794, 1.0
    %v4818 = vadd.f32 %v4796, 1.0
    %v4819 = vadd.f32 %v4798, 1.0
    %v4820 = vadd.f32 %v4800, 1.0
    %v4821 = vadd.f32 %v4802, 1.0
    %v4822 = vadd.f32 %v4804, 1.0
    %v4823 = vadd.f32 %v4806, 1.0
    %v4824 = vadd.f32 %v4808, 1.0
    %v4825 = vrcp.pop %v4809
    %v4826 = vmul.f32 %v4809, %v4825
    %v4827 = vsub.f32 1.0, %v4826
    %v4828 = vmul.f32 %v4825, %v4827
    %v4829 = vadd.f32 %v4825, %v4828
    %vm4830 = vweird.f32 %v4809
    %vm4831 = vweird.f32 %v4825
    %vm4832 = vmor %vm4830, %vm4831
    %v4833 = vsel %vm4832, %v4825, %v4829
    %v4834 = vand.u32 2147483647, %v4809
    %vm4835 = vcmp.eq.f32.partialorder %v4834, 8.507059e+37
    %v4836 = vand.u32 %v4809, 2147483648
    %v4837 = vor.u32 1.1754944e-38, %v4836
    %v4838 = vsel %vm4835, %v4837, %v4833
    %v4839 = vmul.f32 1.0, %v4838
    %v4840 = vrcp.pop %v4810
    %v4841 = vmul.f32 %v4810, %v4840
    %v4842 = vsub.f32 1.0, %v4841
    %v4843 = vmul.f32 %v4840, %v4842
    %v4844 = vadd.f32 %v4840, %v4843
    %vm4845 = vweird.f32 %v4810
    %vm4846 = vweird.f32 %v4840
    %vm4847 = vmor %vm4845, %vm4846
    %v4848 = vsel %vm4847, %v4840, %v4844
    %v4849 = vand.u32 2147483647, %v4810
    %vm4850 = vcmp.eq.f32.partialorder %v4849, 8.507059e+37
    %v4851 = vand.u32 %v4810, 2147483648
    %v4852 = vor.u32 1.1754944e-38, %v4851
    %v4853 = vsel %vm4850, %v4852, %v4848
    %v4854 = vmul.f32 1.0, %v4853
    %v4855 = vrcp.pop %v4811
    %v4856 = vmul.f32 %v4811, %v4855
    %v4857 = vsub.f32 1.0, %v4856
    %v4858 = vmul.f32 %v4855, %v4857
    %v4859 = vadd.f32 %v4855, %v4858
    %vm4860 = vweird.f32 %v4811
    %vm4861 = vweird.f32 %v4855
    %vm4862 = vmor %vm4860, %vm4861
    %v4863 = vsel %vm4862, %v4855, %v4859
    %v4864 = vand.u32 2147483647, %v4811
    %vm4865 = vcmp.eq.f32.partialorder %v4864, 8.507059e+37
    %v4866 = vand.u32 %v4811, 2147483648
    %v4867 = vor.u32 1.1754944e-38, %v4866
    %v4868 = vsel %vm4865, %v4867, %v4863
    %v4869 = vmul.f32 1.0, %v4868
    %v4870 = vrcp.pop %v4812
    %v4871 = vmul.f32 %v4812, %v4870
    %v4872 = vsub.f32 1.0, %v4871
    %v4873 = vmul.f32 %v4870, %v4872
    %v4874 = vadd.f32 %v4870, %v4873
    %vm4875 = vweird.f32 %v4812
    %vm4876 = vweird.f32 %v4870
    %vm4877 = vmor %vm4875, %vm4876
    %v4878 = vsel %vm4877, %v4870, %v4874
    %v4879 = vand.u32 2147483647, %v4812
    %vm4880 = vcmp.eq.f32.partialorder %v4879, 8.507059e+37
    %v4881 = vand.u32 %v4812, 2147483648
    %v4882 = vor.u32 1.1754944e-38, %v4881
    %v4883 = vsel %vm4880, %v4882, %v4878
    %v4884 = vmul.f32 1.0, %v4883
    %v4885 = vrcp.pop %v4813
    %v4886 = vmul.f32 %v4813, %v4885
    %v4887 = vsub.f32 1.0, %v4886
    %v4888 = vmul.f32 %v4885, %v4887
    %v4889 = vadd.f32 %v4885, %v4888
    %vm4890 = vweird.f32 %v4813
    %vm4891 = vweird.f32 %v4885
    %vm4892 = vmor %vm4890, %vm4891
    %v4893 = vsel %vm4892, %v4885, %v4889
    %v4894 = vand.u32 2147483647, %v4813
    %vm4895 = vcmp.eq.f32.partialorder %v4894, 8.507059e+37
    %v4896 = vand.u32 %v4813, 2147483648
    %v4897 = vor.u32 1.1754944e-38, %v4896
    %v4898 = vsel %vm4895, %v4897, %v4893
    %v4899 = vmul.f32 1.0, %v4898
    %v4900 = vrcp.pop %v4814
    %v4901 = vmul.f32 %v4814, %v4900
    %v4902 = vsub.f32 1.0, %v4901
    %v4903 = vmul.f32 %v4900, %v4902
    %v4904 = vadd.f32 %v4900, %v4903
    %vm4905 = vweird.f32 %v4814
    %vm4906 = vweird.f32 %v4900
    %vm4907 = vmor %vm4905, %vm4906
    %v4908 = vsel %vm4907, %v4900, %v4904
    %v4909 = vand.u32 2147483647, %v4814
    %vm4910 = vcmp.eq.f32.partialorder %v4909, 8.507059e+37
    %v4911 = vand.u32 %v4814, 2147483648
    %v4912 = vor.u32 1.1754944e-38, %v4911
    %v4913 = vsel %vm4910, %v4912, %v4908
    %v4914 = vmul.f32 1.0, %v4913
    %v4915 = vrcp.pop %v4815
    %v4916 = vmul.f32 %v4815, %v4915
    %v4917 = vsub.f32 1.0, %v4916
    %v4918 = vmul.f32 %v4915, %v4917
    %v4919 = vadd.f32 %v4915, %v4918
    %vm4920 = vweird.f32 %v4815
    %vm4921 = vweird.f32 %v4915
    %vm4922 = vmor %vm4920, %vm4921
    %v4923 = vsel %vm4922, %v4915, %v4919
    %v4924 = vand.u32 2147483647, %v4815
    %vm4925 = vcmp.eq.f32.partialorder %v4924, 8.507059e+37
    %v4926 = vand.u32 %v4815, 2147483648
    %v4927 = vor.u32 1.1754944e-38, %v4926
    %v4928 = vsel %vm4925, %v4927, %v4923
    %v4929 = vmul.f32 1.0, %v4928
    %v4930 = vrcp.pop %v4816
    %v4931 = vmul.f32 %v4816, %v4930
    %v4932 = vsub.f32 1.0, %v4931
    %v4933 = vmul.f32 %v4930, %v4932
    %v4934 = vadd.f32 %v4930, %v4933
    %vm4935 = vweird.f32 %v4816
    %vm4936 = vweird.f32 %v4930
    %vm4937 = vmor %vm4935, %vm4936
    %v4938 = vsel %vm4937, %v4930, %v4934
    %v4939 = vand.u32 2147483647, %v4816
    %vm4940 = vcmp.eq.f32.partialorder %v4939, 8.507059e+37
    %v4941 = vand.u32 %v4816, 2147483648
    %v4942 = vor.u32 1.1754944e-38, %v4941
    %v4943 = vsel %vm4940, %v4942, %v4938
    %v4944 = vmul.f32 1.0, %v4943
    %v4945 = vrcp.pop %v4817
    %v4946 = vmul.f32 %v4817, %v4945
    %v4947 = vsub.f32 1.0, %v4946
    %v4948 = vmul.f32 %v4945, %v4947
    %v4949 = vadd.f32 %v4945, %v4948
    %vm4950 = vweird.f32 %v4817
    %vm4951 = vweird.f32 %v4945
    %vm4952 = vmor %vm4950, %vm4951
    %v4953 = vsel %vm4952, %v4945, %v4949
    %v4954 = vand.u32 2147483647, %v4817
    %vm4955 = vcmp.eq.f32.partialorder %v4954, 8.507059e+37
    %v4956 = vand.u32 %v4817, 2147483648
    %v4957 = vor.u32 1.1754944e-38, %v4956
    %v4958 = vsel %vm4955, %v4957, %v4953
    %v4959 = vmul.f32 1.0, %v4958
    %v4960 = vrcp.pop %v4818
    %v4961 = vmul.f32 %v4818, %v4960
    %v4962 = vsub.f32 1.0, %v4961
    %v4963 = vmul.f32 %v4960, %v4962
    %v4964 = vadd.f32 %v4960, %v4963
    %vm4965 = vweird.f32 %v4818
    %vm4966 = vweird.f32 %v4960
    %vm4967 = vmor %vm4965, %vm4966
    %v4968 = vsel %vm4967, %v4960, %v4964
    %v4969 = vand.u32 2147483647, %v4818
    %vm4970 = vcmp.eq.f32.partialorder %v4969, 8.507059e+37
    %v4971 = vand.u32 %v4818, 2147483648
    %v4972 = vor.u32 1.1754944e-38, %v4971
    %v4973 = vsel %vm4970, %v4972, %v4968
    %v4974 = vmul.f32 1.0, %v4973
    %v4975 = vrcp.pop %v4819
    %v4976 = vmul.f32 %v4819, %v4975
    %v4977 = vsub.f32 1.0, %v4976
    %v4978 = vmul.f32 %v4975, %v4977
    %v4979 = vadd.f32 %v4975, %v4978
    %vm4980 = vweird.f32 %v4819
    %vm4981 = vweird.f32 %v4975
    %vm4982 = vmor %vm4980, %vm4981
    %v4983 = vsel %vm4982, %v4975, %v4979
    %v4984 = vand.u32 2147483647, %v4819
    %vm4985 = vcmp.eq.f32.partialorder %v4984, 8.507059e+37
    %v4986 = vand.u32 %v4819, 2147483648
    %v4987 = vor.u32 1.1754944e-38, %v4986
    %v4988 = vsel %vm4985, %v4987, %v4983
    %v4989 = vmul.f32 1.0, %v4988
    %v4990 = vrcp.pop %v4820
    %v4991 = vmul.f32 %v4820, %v4990
    %v4992 = vsub.f32 1.0, %v4991
    %v4993 = vmul.f32 %v4990, %v4992
    %v4994 = vadd.f32 %v4990, %v4993
    %vm4995 = vweird.f32 %v4820
    %vm4996 = vweird.f32 %v4990
    %vm4997 = vmor %vm4995, %vm4996
    %v4998 = vsel %vm4997, %v4990, %v4994
    %v4999 = vand.u32 2147483647, %v4820
    %vm5000 = vcmp.eq.f32.partialorder %v4999, 8.507059e+37
    %v5001 = vand.u32 %v4820, 2147483648
    %v5002 = vor.u32 1.1754944e-38, %v5001
    %v5003 = vsel %vm5000, %v5002, %v4998
    %v5004 = vmul.f32 1.0, %v5003
    %v5005 = vrcp.pop %v4821
    %v5006 = vmul.f32 %v4821, %v5005
    %v5007 = vsub.f32 1.0, %v5006
    %v5008 = vmul.f32 %v5005, %v5007
    %v5009 = vadd.f32 %v5005, %v5008
    %vm5010 = vweird.f32 %v4821
    %vm5011 = vweird.f32 %v5005
    %vm5012 = vmor %vm5010, %vm5011
    %v5013 = vsel %vm5012, %v5005, %v5009
    %v5014 = vand.u32 2147483647, %v4821
    %vm5015 = vcmp.eq.f32.partialorder %v5014, 8.507059e+37
    %v5016 = vand.u32 %v4821, 2147483648
    %v5017 = vor.u32 1.1754944e-38, %v5016
    %v5018 = vsel %vm5015, %v5017, %v5013
    %v5019 = vmul.f32 1.0, %v5018
    %v5020 = vrcp.pop %v4822
    %v5021 = vmul.f32 %v4822, %v5020
    %v5022 = vsub.f32 1.0, %v5021
    %v5023 = vmul.f32 %v5020, %v5022
    %v5024 = vadd.f32 %v5020, %v5023
    %vm5025 = vweird.f32 %v4822
    %vm5026 = vweird.f32 %v5020
    %vm5027 = vmor %vm5025, %vm5026
    %v5028 = vsel %vm5027, %v5020, %v5024
    %v5029 = vand.u32 2147483647, %v4822
    %vm5030 = vcmp.eq.f32.partialorder %v5029, 8.507059e+37
    %v5031 = vand.u32 %v4822, 2147483648
    %v5032 = vor.u32 1.1754944e-38, %v5031
    %v5033 = vsel %vm5030, %v5032, %v5028
    %v5034 = vmul.f32 1.0, %v5033
    %v5035 = vrcp.pop %v4823
    %v5036 = vmul.f32 %v4823, %v5035
    %v5037 = vsub.f32 1.0, %v5036
    %v5038 = vmul.f32 %v5035, %v5037
    %v5039 = vadd.f32 %v5035, %v5038
    %vm5040 = vweird.f32 %v4823
    %vm5041 = vweird.f32 %v5035
    %vm5042 = vmor %vm5040, %vm5041
    %v5043 = vsel %vm5042, %v5035, %v5039
    %v5044 = vand.u32 2147483647, %v4823
    %vm5045 = vcmp.eq.f32.partialorder %v5044, 8.507059e+37
    %v5046 = vand.u32 %v4823, 2147483648
    %v5047 = vor.u32 1.1754944e-38, %v5046
    %v5048 = vsel %vm5045, %v5047, %v5043
    %v5049 = vmul.f32 1.0, %v5048
    %v5050 = vrcp.pop %v4824
    %v5051 = vmul.f32 %v4824, %v5050
    %v5052 = vsub.f32 1.0, %v5051
    %v5053 = vmul.f32 %v5050, %v5052
    %v5054 = vadd.f32 %v5050, %v5053
    %vm5055 = vweird.f32 %v4824
    %vm5056 = vweird.f32 %v5050
    %vm5057 = vmor %vm5055, %vm5056
    %v5058 = vsel %vm5057, %v5050, %v5054
    %v5059 = vand.u32 2147483647, %v4824
    %vm5060 = vcmp.eq.f32.partialorder %v5059, 8.507059e+37
    %v5061 = vand.u32 %v4824, 2147483648
    %v5062 = vor.u32 1.1754944e-38, %v5061
    %v5063 = vsel %vm5060, %v5062, %v5058
    %v5064 = vmul.f32 1.0, %v5063
    %v5065 = vtanh.pop %v4395
    %v5066 = vtanh.pop %v4399
    %v5067 = vtanh.pop %v4403
    %v5068 = vtanh.pop %v4407
    %v5069 = vtanh.pop %v4411
    %v5070 = vtanh.pop %v4415
    %v5071 = vtanh.pop %v4419
    %v5072 = vtanh.pop %v4423
    %v5073 = vtanh.pop %v4427
    %v5074 = vtanh.pop %v4431
    %v5075 = vtanh.pop %v4435
    %v5076 = vtanh.pop %v4439
    %v5077 = vtanh.pop %v4443
    %v5078 = vtanh.pop %v4447
    %v5079 = vtanh.pop %v4451
    %v5080 = vtanh.pop %v4455
    %v5081 = vxor.u32 %v4396, 2147483648
    %v5082 = vxor.u32 %v4400, 2147483648
    %v5083 = vxor.u32 %v4404, 2147483648
    %v5084 = vxor.u32 %v4408, 2147483648
    %v5085 = vxor.u32 %v4412, 2147483648
    %v5086 = vxor.u32 %v4416, 2147483648
    %v5087 = vxor.u32 %v4420, 2147483648
    %v5088 = vxor.u32 %v4424, 2147483648
    %v5089 = vxor.u32 %v4428, 2147483648
    %v5090 = vxor.u32 %v4432, 2147483648
    %v5091 = vxor.u32 %v4436, 2147483648
    %v5092 = vxor.u32 %v4440, 2147483648
    %v5093 = vxor.u32 %v4444, 2147483648
    %v5094 = vxor.u32 %v4448, 2147483648
    %v5095 = vxor.u32 %v4452, 2147483648
    %v5096 = vxor.u32 %v4456, 2147483648
    %v5097 = vmul.f32 %v5081, 1.442695
    %v5098 = vpow.pop %v5097
    %v5099 = vmul.f32 %v5082, 1.442695
    %v5100 = vpow.pop %v5099
    %v5101 = vmul.f32 %v5083, 1.442695
    %v5102 = vpow.pop %v5101
    %v5103 = vmul.f32 %v5084, 1.442695
    %v5104 = vpow.pop %v5103
    %v5105 = vmul.f32 %v5085, 1.442695
    %v5106 = vpow.pop %v5105
    %v5107 = vmul.f32 %v5086, 1.442695
    %v5108 = vpow.pop %v5107
    %v5109 = vmul.f32 %v5087, 1.442695
    %v5110 = vpow.pop %v5109
    %v5111 = vmul.f32 %v5088, 1.442695
    %v5112 = vpow.pop %v5111
    %v5113 = vmul.f32 %v5089, 1.442695
    %v5114 = vpow.pop %v5113
    %v5115 = vmul.f32 %v5090, 1.442695
    %v5116 = vpow.pop %v5115
    %v5117 = vmul.f32 %v5091, 1.442695
    %v5118 = vpow.pop %v5117
    %v5119 = vmul.f32 %v5092, 1.442695
    %v5120 = vpow.pop %v5119
    %v5121 = vmul.f32 %v5093, 1.442695
    %v5122 = vpow.pop %v5121
    %v5123 = vmul.f32 %v5094, 1.442695
    %v5124 = vpow.pop %v5123
    %v5125 = vmul.f32 %v5095, 1.442695
    %v5126 = vpow.pop %v5125
    %v5127 = vmul.f32 %v5096, 1.442695
    %v5128 = vpow.pop %v5127
    %v5129 = vadd.f32 %v5098, 1.0
    %v5130 = vadd.f32 %v5100, 1.0
    %v5131 = vadd.f32 %v5102, 1.0
    %v5132 = vadd.f32 %v5104, 1.0
    %v5133 = vadd.f32 %v5106, 1.0
    %v5134 = vadd.f32 %v5108, 1.0
    %v5135 = vadd.f32 %v5110, 1.0
    %v5136 = vadd.f32 %v5112, 1.0
    %v5137 = vadd.f32 %v5114, 1.0
    %v5138 = vadd.f32 %v5116, 1.0
    %v5139 = vadd.f32 %v5118, 1.0
    %v5140 = vadd.f32 %v5120, 1.0
    %v5141 = vadd.f32 %v5122, 1.0
    %v5142 = vadd.f32 %v5124, 1.0
    %v5143 = vadd.f32 %v5126, 1.0
    %v5144 = vadd.f32 %v5128, 1.0
    %v5145 = vrcp.pop %v5129
    %v5146 = vmul.f32 %v5129, %v5145
    %v5147 = vsub.f32 1.0, %v5146
    %v5148 = vmul.f32 %v5145, %v5147
    %v5149 = vadd.f32 %v5145, %v5148
    %vm5150 = vweird.f32 %v5129
    %vm5151 = vweird.f32 %v5145
    %vm5152 = vmor %vm5150, %vm5151
    %v5153 = vsel %vm5152, %v5145, %v5149
    %v5154 = vand.u32 2147483647, %v5129
    %vm5155 = vcmp.eq.f32.partialorder %v5154, 8.507059e+37
    %v5156 = vand.u32 %v5129, 2147483648
    %v5157 = vor.u32 1.1754944e-38, %v5156
    %v5158 = vsel %vm5155, %v5157, %v5153
    %v5159 = vmul.f32 1.0, %v5158
    %v5160 = vrcp.pop %v5130
    %v5161 = vmul.f32 %v5130, %v5160
    %v5162 = vsub.f32 1.0, %v5161
    %v5163 = vmul.f32 %v5160, %v5162
    %v5164 = vadd.f32 %v5160, %v5163
    %vm5165 = vweird.f32 %v5130
    %vm5166 = vweird.f32 %v5160
    %vm5167 = vmor %vm5165, %vm5166
    %v5168 = vsel %vm5167, %v5160, %v5164
    %v5169 = vand.u32 2147483647, %v5130
    %vm5170 = vcmp.eq.f32.partialorder %v5169, 8.507059e+37
    %v5171 = vand.u32 %v5130, 2147483648
    %v5172 = vor.u32 1.1754944e-38, %v5171
    %v5173 = vsel %vm5170, %v5172, %v5168
    %v5174 = vmul.f32 1.0, %v5173
    %v5175 = vrcp.pop %v5131
    %v5176 = vmul.f32 %v5131, %v5175
    %v5177 = vsub.f32 1.0, %v5176
    %v5178 = vmul.f32 %v5175, %v5177
    %v5179 = vadd.f32 %v5175, %v5178
    %vm5180 = vweird.f32 %v5131
    %vm5181 = vweird.f32 %v5175
    %vm5182 = vmor %vm5180, %vm5181
    %v5183 = vsel %vm5182, %v5175, %v5179
    %v5184 = vand.u32 2147483647, %v5131
    %vm5185 = vcmp.eq.f32.partialorder %v5184, 8.507059e+37
    %v5186 = vand.u32 %v5131, 2147483648
    %v5187 = vor.u32 1.1754944e-38, %v5186
    %v5188 = vsel %vm5185, %v5187, %v5183
    %v5189 = vmul.f32 1.0, %v5188
    %v5190 = vrcp.pop %v5132
    %v5191 = vmul.f32 %v5132, %v5190
    %v5192 = vsub.f32 1.0, %v5191
    %v5193 = vmul.f32 %v5190, %v5192
    %v5194 = vadd.f32 %v5190, %v5193
    %vm5195 = vweird.f32 %v5132
    %vm5196 = vweird.f32 %v5190
    %vm5197 = vmor %vm5195, %vm5196
    %v5198 = vsel %vm5197, %v5190, %v5194
    %v5199 = vand.u32 2147483647, %v5132
    %vm5200 = vcmp.eq.f32.partialorder %v5199, 8.507059e+37
    %v5201 = vand.u32 %v5132, 2147483648
    %v5202 = vor.u32 1.1754944e-38, %v5201
    %v5203 = vsel %vm5200, %v5202, %v5198
    %v5204 = vmul.f32 1.0, %v5203
    %v5205 = vrcp.pop %v5133
    %v5206 = vmul.f32 %v5133, %v5205
    %v5207 = vsub.f32 1.0, %v5206
    %v5208 = vmul.f32 %v5205, %v5207
    %v5209 = vadd.f32 %v5205, %v5208
    %vm5210 = vweird.f32 %v5133
    %vm5211 = vweird.f32 %v5205
    %vm5212 = vmor %vm5210, %vm5211
    %v5213 = vsel %vm5212, %v5205, %v5209
    %v5214 = vand.u32 2147483647, %v5133
    %vm5215 = vcmp.eq.f32.partialorder %v5214, 8.507059e+37
    %v5216 = vand.u32 %v5133, 2147483648
    %v5217 = vor.u32 1.1754944e-38, %v5216
    %v5218 = vsel %vm5215, %v5217, %v5213
    %v5219 = vmul.f32 1.0, %v5218
    %v5220 = vrcp.pop %v5134
    %v5221 = vmul.f32 %v5134, %v5220
    %v5222 = vsub.f32 1.0, %v5221
    %v5223 = vmul.f32 %v5220, %v5222
    %v5224 = vadd.f32 %v5220, %v5223
    %vm5225 = vweird.f32 %v5134
    %vm5226 = vweird.f32 %v5220
    %vm5227 = vmor %vm5225, %vm5226
    %v5228 = vsel %vm5227, %v5220, %v5224
    %v5229 = vand.u32 2147483647, %v5134
    %vm5230 = vcmp.eq.f32.partialorder %v5229, 8.507059e+37
    %v5231 = vand.u32 %v5134, 2147483648
    %v5232 = vor.u32 1.1754944e-38, %v5231
    %v5233 = vsel %vm5230, %v5232, %v5228
    %v5234 = vmul.f32 1.0, %v5233
    %v5235 = vrcp.pop %v5135
    %v5236 = vmul.f32 %v5135, %v5235
    %v5237 = vsub.f32 1.0, %v5236
    %v5238 = vmul.f32 %v5235, %v5237
    %v5239 = vadd.f32 %v5235, %v5238
    %vm5240 = vweird.f32 %v5135
    %vm5241 = vweird.f32 %v5235
    %vm5242 = vmor %vm5240, %vm5241
    %v5243 = vsel %vm5242, %v5235, %v5239
    %v5244 = vand.u32 2147483647, %v5135
    %vm5245 = vcmp.eq.f32.partialorder %v5244, 8.507059e+37
    %v5246 = vand.u32 %v5135, 2147483648
    %v5247 = vor.u32 1.1754944e-38, %v5246
    %v5248 = vsel %vm5245, %v5247, %v5243
    %v5249 = vmul.f32 1.0, %v5248
    %v5250 = vrcp.pop %v5136
    %v5251 = vmul.f32 %v5136, %v5250
    %v5252 = vsub.f32 1.0, %v5251
    %v5253 = vmul.f32 %v5250, %v5252
    %v5254 = vadd.f32 %v5250, %v5253
    %vm5255 = vweird.f32 %v5136
    %vm5256 = vweird.f32 %v5250
    %vm5257 = vmor %vm5255, %vm5256
    %v5258 = vsel %vm5257, %v5250, %v5254
    %v5259 = vand.u32 2147483647, %v5136
    %vm5260 = vcmp.eq.f32.partialorder %v5259, 8.507059e+37
    %v5261 = vand.u32 %v5136, 2147483648
    %v5262 = vor.u32 1.1754944e-38, %v5261
    %v5263 = vsel %vm5260, %v5262, %v5258
    %v5264 = vmul.f32 1.0, %v5263
    %v5265 = vrcp.pop %v5137
    %v5266 = vmul.f32 %v5137, %v5265
    %v5267 = vsub.f32 1.0, %v5266
    %v5268 = vmul.f32 %v5265, %v5267
    %v5269 = vadd.f32 %v5265, %v5268
    %vm5270 = vweird.f32 %v5137
    %vm5271 = vweird.f32 %v5265
    %vm5272 = vmor %vm5270, %vm5271
    %v5273 = vsel %vm5272, %v5265, %v5269
    %v5274 = vand.u32 2147483647, %v5137
    %vm5275 = vcmp.eq.f32.partialorder %v5274, 8.507059e+37
    %v5276 = vand.u32 %v5137, 2147483648
    %v5277 = vor.u32 1.1754944e-38, %v5276
    %v5278 = vsel %vm5275, %v5277, %v5273
    %v5279 = vmul.f32 1.0, %v5278
    %v5280 = vrcp.pop %v5138
    %v5281 = vmul.f32 %v5138, %v5280
    %v5282 = vsub.f32 1.0, %v5281
    %v5283 = vmul.f32 %v5280, %v5282
    %v5284 = vadd.f32 %v5280, %v5283
    %vm5285 = vweird.f32 %v5138
    %vm5286 = vweird.f32 %v5280
    %vm5287 = vmor %vm5285, %vm5286
    %v5288 = vsel %vm5287, %v5280, %v5284
    %v5289 = vand.u32 2147483647, %v5138
    %vm5290 = vcmp.eq.f32.partialorder %v5289, 8.507059e+37
    %v5291 = vand.u32 %v5138, 2147483648
    %v5292 = vor.u32 1.1754944e-38, %v5291
    %v5293 = vsel %vm5290, %v5292, %v5288
    %v5294 = vmul.f32 1.0, %v5293
    %v5295 = vrcp.pop %v5139
    %v5296 = vmul.f32 %v5139, %v5295
    %v5297 = vsub.f32 1.0, %v5296
    %v5298 = vmul.f32 %v5295, %v5297
    %v5299 = vadd.f32 %v5295, %v5298
    %vm5300 = vweird.f32 %v5139
    %vm5301 = vweird.f32 %v5295
    %vm5302 = vmor %vm5300, %vm5301
    %v5303 = vsel %vm5302, %v5295, %v5299
    %v5304 = vand.u32 2147483647, %v5139
    %vm5305 = vcmp.eq.f32.partialorder %v5304, 8.507059e+37
    %v5306 = vand.u32 %v5139, 2147483648
    %v5307 = vor.u32 1.1754944e-38, %v5306
    %v5308 = vsel %vm5305, %v5307, %v5303
    %v5309 = vmul.f32 1.0, %v5308
    %v5310 = vrcp.pop %v5140
    %v5311 = vmul.f32 %v5140, %v5310
    %v5312 = vsub.f32 1.0, %v5311
    %v5313 = vmul.f32 %v5310, %v5312
    %v5314 = vadd.f32 %v5310, %v5313
    %vm5315 = vweird.f32 %v5140
    %vm5316 = vweird.f32 %v5310
    %vm5317 = vmor %vm5315, %vm5316
    %v5318 = vsel %vm5317, %v5310, %v5314
    %v5319 = vand.u32 2147483647, %v5140
    %vm5320 = vcmp.eq.f32.partialorder %v5319, 8.507059e+37
    %v5321 = vand.u32 %v5140, 2147483648
    %v5322 = vor.u32 1.1754944e-38, %v5321
    %v5323 = vsel %vm5320, %v5322, %v5318
    %v5324 = vmul.f32 1.0, %v5323
    %v5325 = vrcp.pop %v5141
    %v5326 = vmul.f32 %v5141, %v5325
    %v5327 = vsub.f32 1.0, %v5326
    %v5328 = vmul.f32 %v5325, %v5327
    %v5329 = vadd.f32 %v5325, %v5328
    %vm5330 = vweird.f32 %v5141
    %vm5331 = vweird.f32 %v5325
    %vm5332 = vmor %vm5330, %vm5331
    %v5333 = vsel %vm5332, %v5325, %v5329
    %v5334 = vand.u32 2147483647, %v5141
    %vm5335 = vcmp.eq.f32.partialorder %v5334, 8.507059e+37
    %v5336 = vand.u32 %v5141, 2147483648
    %v5337 = vor.u32 1.1754944e-38, %v5336
    %v5338 = vsel %vm5335, %v5337, %v5333
    %v5339 = vmul.f32 1.0, %v5338
    %v5340 = vrcp.pop %v5142
    %v5341 = vmul.f32 %v5142, %v5340
    %v5342 = vsub.f32 1.0, %v5341
    %v5343 = vmul.f32 %v5340, %v5342
    %v5344 = vadd.f32 %v5340, %v5343
    %vm5345 = vweird.f32 %v5142
    %vm5346 = vweird.f32 %v5340
    %vm5347 = vmor %vm5345, %vm5346
    %v5348 = vsel %vm5347, %v5340, %v5344
    %v5349 = vand.u32 2147483647, %v5142
    %vm5350 = vcmp.eq.f32.partialorder %v5349, 8.507059e+37
    %v5351 = vand.u32 %v5142, 2147483648
    %v5352 = vor.u32 1.1754944e-38, %v5351
    %v5353 = vsel %vm5350, %v5352, %v5348
    %v5354 = vmul.f32 1.0, %v5353
    %v5355 = vrcp.pop %v5143
    %v5356 = vmul.f32 %v5143, %v5355
    %v5357 = vsub.f32 1.0, %v5356
    %v5358 = vmul.f32 %v5355, %v5357
    %v5359 = vadd.f32 %v5355, %v5358
    %vm5360 = vweird.f32 %v5143
    %vm5361 = vweird.f32 %v5355
    %vm5362 = vmor %vm5360, %vm5361
    %v5363 = vsel %vm5362, %v5355, %v5359
    %v5364 = vand.u32 2147483647, %v5143
    %vm5365 = vcmp.eq.f32.partialorder %v5364, 8.507059e+37
    %v5366 = vand.u32 %v5143, 2147483648
    %v5367 = vor.u32 1.1754944e-38, %v5366
    %v5368 = vsel %vm5365, %v5367, %v5363
    %v5369 = vmul.f32 1.0, %v5368
    %v5370 = vrcp.pop %v5144
    %v5371 = vmul.f32 %v5144, %v5370
    %v5372 = vsub.f32 1.0, %v5371
    %v5373 = vmul.f32 %v5370, %v5372
    %v5374 = vadd.f32 %v5370, %v5373
    %vm5375 = vweird.f32 %v5144
    %vm5376 = vweird.f32 %v5370
    %vm5377 = vmor %vm5375, %vm5376
    %v5378 = vsel %vm5377, %v5370, %v5374
    %v5379 = vand.u32 2147483647, %v5144
    %vm5380 = vcmp.eq.f32.partialorder %v5379, 8.507059e+37
    %v5381 = vand.u32 %v5144, 2147483648
    %v5382 = vor.u32 1.1754944e-38, %v5381
    %v5383 = vsel %vm5380, %v5382, %v5378
    %v5384 = vmul.f32 1.0, %v5383
    %v5385 = vmul.f32 %v4535, %v5065
    %v5386 = vmul.f32 %v4550, %v5066
    %v5387 = vmul.f32 %v4565, %v5067
    %v5388 = vmul.f32 %v4580, %v5068
    %v5389 = vmul.f32 %v4595, %v5069
    %v5390 = vmul.f32 %v4610, %v5070
    %v5391 = vmul.f32 %v4625, %v5071
    %v5392 = vmul.f32 %v4640, %v5072
    %v5393 = vmul.f32 %v4655, %v5073
    %v5394 = vmul.f32 %v4670, %v5074
    %v5395 = vmul.f32 %v4685, %v5075
    %v5396 = vmul.f32 %v4700, %v5076
    %v5397 = vmul.f32 %v4715, %v5077
    %v5398 = vmul.f32 %v4730, %v5078
    %v5399 = vmul.f32 %v4745, %v5079
    %v5400 = vmul.f32 %v4760, %v5080
    %v5401 = vmul.f32 %v5159, %v4150
    %v5402 = vmul.f32 %v5174, %v4152
    %v5403 = vmul.f32 %v5189, %v4155
    %v5404 = vmul.f32 %v5204, %v4157
    %v5405 = vmul.f32 %v5219, %v4160
    %v5406 = vmul.f32 %v5234, %v4162
    %v5407 = vmul.f32 %v5249, %v4165
    %v5408 = vmul.f32 %v5264, %v4167
    %v5409 = vmul.f32 %v5279, %v4170
    %v5410 = vmul.f32 %v5294, %v4172
    %v5411 = vmul.f32 %v5309, %v4175
    %v5412 = vmul.f32 %v5324, %v4177
    %v5413 = vmul.f32 %v5339, %v4180
    %v5414 = vmul.f32 %v5354, %v4182
    %v5415 = vmul.f32 %v5369, %v4185
    %v5416 = vmul.f32 %v5384, %v4187
    %v5417 = vadd.f32 %v5385, %v5401
    %v5418 = vadd.f32 %v5386, %v5402
    %v5419 = vadd.f32 %v5387, %v5403
    %v5420 = vadd.f32 %v5388, %v5404
    %v5421 = vadd.f32 %v5389, %v5405
    %v5422 = vadd.f32 %v5390, %v5406
    %v5423 = vadd.f32 %v5391, %v5407
    %v5424 = vadd.f32 %v5392, %v5408
    %v5425 = vadd.f32 %v5393, %v5409
    %v5426 = vadd.f32 %v5394, %v5410
    %v5427 = vadd.f32 %v5395, %v5411
    %v5428 = vadd.f32 %v5396, %v5412
    %v5429 = vadd.f32 %v5397, %v5413
    %v5430 = vadd.f32 %v5398, %v5414
    %v5431 = vadd.f32 %v5399, %v5415
    %v5432 = vadd.f32 %v5400, %v5416
    %v5433 = vtanh.pop %v5417
    %v5434 = vtanh.pop %v5418
    %v5435 = vtanh.pop %v5419
    %v5436 = vtanh.pop %v5420
    %v5437 = vtanh.pop %v5421
    %v5438 = vtanh.pop %v5422
    %v5439 = vtanh.pop %v5423
    %v5440 = vtanh.pop %v5424
    %v5441 = vtanh.pop %v5425
    %v5442 = vtanh.pop %v5426
    %v5443 = vtanh.pop %v5427
    %v5444 = vtanh.pop %v5428
    %v5445 = vtanh.pop %v5429
    %v5446 = vtanh.pop %v5430
    %v5447 = vtanh.pop %v5431
    %v5448 = vtanh.pop %v5432
    %v5449 = vmul.f32 %v4839, %v5433
    %v5450 = vmul.f32 %v4854, %v5434
    %v5451 = vmul.f32 %v4869, %v5435
    %v5452 = vmul.f32 %v4884, %v5436
    %v5453 = vmul.f32 %v4899, %v5437
    %v5454 = vmul.f32 %v4914, %v5438
    %v5455 = vmul.f32 %v4929, %v5439
    %v5456 = vmul.f32 %v4944, %v5440
    %v5457 = vmul.f32 %v4959, %v5441
    %v5458 = vmul.f32 %v4974, %v5442
    %v5459 = vmul.f32 %v4989, %v5443
    %v5460 = vmul.f32 %v5004, %v5444
    %v5461 = vmul.f32 %v5019, %v5445
    %v5462 = vmul.f32 %v5034, %v5446
    %v5463 = vmul.f32 %v5049, %v5447
    %v5464 = vmul.f32 %v5064, %v5448
    %vm5465 = vcmp.eq.s32.totalorder %v656, 2
    %vm5466 = vcmp.eq.s32.totalorder %v657, 2
    %vm5467 = vcmp.eq.s32.totalorder %v658, 2
    %vm5468 = vcmp.eq.s32.totalorder %v659, 2
    %vm5469 = vcmp.eq.s32.totalorder %v660, 2
    %vm5470 = vcmp.eq.s32.totalorder %v661, 2
    %vm5471 = vcmp.eq.s32.totalorder %v662, 2
    %vm5472 = vcmp.eq.s32.totalorder %v663, 2
    %vm5473 = vcmp.eq.s32.totalorder %v664, 2
    %vm5474 = vcmp.eq.s32.totalorder %v665, 2
    %vm5475 = vcmp.eq.s32.totalorder %v666, 2
    %vm5476 = vcmp.eq.s32.totalorder %v667, 2
    %vm5477 = vcmp.eq.s32.totalorder %v668, 2
    %vm5478 = vcmp.eq.s32.totalorder %v669, 2
    %vm5479 = vcmp.eq.s32.totalorder %v670, 2
    %vm5480 = vcmp.eq.s32.totalorder %v671, 2
    %v5481 = vsel %vm5465, 1, 0
    %v5482 = vsel %vm5466, 1, 0
    %v5483 = vsel %vm5467, 1, 0
    %v5484 = vsel %vm5468, 1, 0
    %v5485 = vsel %vm5469, 1, 0
    %v5486 = vsel %vm5470, 1, 0
    %v5487 = vsel %vm5471, 1, 0
    %v5488 = vsel %vm5472, 1, 0
    %v5489 = vsel %vm5473, 1, 0
    %v5490 = vsel %vm5474, 1, 0
    %v5491 = vsel %vm5475, 1, 0
    %v5492 = vsel %vm5476, 1, 0
    %v5493 = vsel %vm5477, 1, 0
    %v5494 = vsel %vm5478, 1, 0
    %v5495 = vsel %vm5479, 1, 0
    %v5496 = vsel %vm5480, 1, 0
    %5497 = vset.pattern.permute.xlu0 0
    %5498 = vperm.xlu0 %5497, %v5481
    %v5499 = vpop.permute.xlu0 %5498
    %5500 = vset.pattern.permute.xlu0 0
    %5501 = vperm.xlu0 %5500, %v5482
    %v5502 = vpop.permute.xlu0 %5501
    %5503 = vset.pattern.permute.xlu0 0
    %5504 = vperm.xlu0 %5503, %v5483
    %v5505 = vpop.permute.xlu0 %5504
    %5506 = vset.pattern.permute.xlu0 0
    %5507 = vperm.xlu0 %5506, %v5484
    %v5508 = vpop.permute.xlu0 %5507
    %5509 = vset.pattern.permute.xlu0 0
    %5510 = vperm.xlu0 %5509, %v5485
    %v5511 = vpop.permute.xlu0 %5510
    %5512 = vset.pattern.permute.xlu0 0
    %5513 = vperm.xlu0 %5512, %v5486
    %v5514 = vpop.permute.xlu0 %5513
    %5515 = vset.pattern.permute.xlu0 0
    %5516 = vperm.xlu0 %5515, %v5487
    %v5517 = vpop.permute.xlu0 %5516
    %5518 = vset.pattern.permute.xlu0 0
    %5519 = vperm.xlu0 %5518, %v5488
    %v5520 = vpop.permute.xlu0 %5519
    %5521 = vset.pattern.permute.xlu0 0
    %5522 = vperm.xlu0 %5521, %v5489
    %v5523 = vpop.permute.xlu0 %5522
    %5524 = vset.pattern.permute.xlu0 0
    %5525 = vperm.xlu0 %5524, %v5490
    %v5526 = vpop.permute.xlu0 %5525
    %5527 = vset.pattern.permute.xlu0 0
    %5528 = vperm.xlu0 %5527, %v5491
    %v5529 = vpop.permute.xlu0 %5528
    %5530 = vset.pattern.permute.xlu0 0
    %5531 = vperm.xlu0 %5530, %v5492
    %v5532 = vpop.permute.xlu0 %5531
    %5533 = vset.pattern.permute.xlu0 0
    %5534 = vperm.xlu0 %5533, %v5493
    %v5535 = vpop.permute.xlu0 %5534
    %5536 = vset.pattern.permute.xlu0 0
    %5537 = vperm.xlu0 %5536, %v5494
    %v5538 = vpop.permute.xlu0 %5537
    %5539 = vset.pattern.permute.xlu0 0
    %5540 = vperm.xlu0 %5539, %v5495
    %v5541 = vpop.permute.xlu0 %5540
    %5542 = vset.pattern.permute.xlu0 0
    %5543 = vperm.xlu0 %5542, %v5496
    %v5544 = vpop.permute.xlu0 %5543
    %vm5545 = vcmp.eq.s32.totalorder %v5499, 1
    %vm5546 = vcmp.eq.s32.totalorder %v5502, 1
    %vm5547 = vcmp.eq.s32.totalorder %v5505, 1
    %vm5548 = vcmp.eq.s32.totalorder %v5508, 1
    %vm5549 = vcmp.eq.s32.totalorder %v5511, 1
    %vm5550 = vcmp.eq.s32.totalorder %v5514, 1
    %vm5551 = vcmp.eq.s32.totalorder %v5517, 1
    %vm5552 = vcmp.eq.s32.totalorder %v5520, 1
    %vm5553 = vcmp.eq.s32.totalorder %v5523, 1
    %vm5554 = vcmp.eq.s32.totalorder %v5526, 1
    %vm5555 = vcmp.eq.s32.totalorder %v5529, 1
    %vm5556 = vcmp.eq.s32.totalorder %v5532, 1
    %vm5557 = vcmp.eq.s32.totalorder %v5535, 1
    %vm5558 = vcmp.eq.s32.totalorder %v5538, 1
    %vm5559 = vcmp.eq.s32.totalorder %v5541, 1
    %vm5560 = vcmp.eq.s32.totalorder %v5544, 1
    %v5561 = vsel %vm5545, %v5449, %v3931
    %v5562 = vsel %vm5546, %v5450, %v3932
    %v5563 = vsel %vm5547, %v5451, %v3933
    %v5564 = vsel %vm5548, %v5452, %v3934
    %v5565 = vsel %vm5549, %v5453, %v3935
    %v5566 = vsel %vm5550, %v5454, %v3936
    %v5567 = vsel %vm5551, %v5455, %v3937
    %v5568 = vsel %vm5552, %v5456, %v3938
    %v5569 = vsel %vm5553, %v5457, %v3939
    %v5570 = vsel %vm5554, %v5458, %v3940
    %v5571 = vsel %vm5555, %v5459, %v3941
    %v5572 = vsel %vm5556, %v5460, %v3942
    %v5573 = vsel %vm5557, %v5461, %v3943
    %v5574 = vsel %vm5558, %v5462, %v3944
    %v5575 = vsel %vm5559, %v5463, %v3945
    %v5576 = vsel %vm5560, %v5464, %v3946
    %v5577 = vsel %vm5545, %v5417, %v3947
    %v5578 = vsel %vm5546, %v5418, %v3948
    %v5579 = vsel %vm5547, %v5419, %v3949
    %v5580 = vsel %vm5548, %v5420, %v3950
    %v5581 = vsel %vm5549, %v5421, %v3951
    %v5582 = vsel %vm5550, %v5422, %v3952
    %v5583 = vsel %vm5551, %v5423, %v3953
    %v5584 = vsel %vm5552, %v5424, %v3954
    %v5585 = vsel %vm5553, %v5425, %v3955
    %v5586 = vsel %vm5554, %v5426, %v3956
    %v5587 = vsel %vm5555, %v5427, %v3957
    %v5588 = vsel %vm5556, %v5428, %v3958
    %v5589 = vsel %vm5557, %v5429, %v3959
    %v5590 = vsel %vm5558, %v5430, %v3960
    %v5591 = vsel %vm5559, %v5431, %v3961
    %v5592 = vsel %vm5560, %v5432, %v3962
    %v5593 = vpack.c.bf16 %v5561, %v5561
    %v5594 = vpack.c.bf16 %v5562, %v5562
    %v5595 = vpack.c.bf16 %v5563, %v5563
    %v5596 = vpack.c.bf16 %v5564, %v5564
    %v5597 = vpack.c.bf16 %v5565, %v5565
    %v5598 = vpack.c.bf16 %v5566, %v5566
    %v5599 = vpack.c.bf16 %v5567, %v5567
    %v5600 = vpack.c.bf16 %v5568, %v5568
    %v5601 = vpack.c.bf16 %v5569, %v5569
    %v5602 = vpack.c.bf16 %v5570, %v5570
    %v5603 = vpack.c.bf16 %v5571, %v5571
    %v5604 = vpack.c.bf16 %v5572, %v5572
    %v5605 = vpack.c.bf16 %v5573, %v5573
    %v5606 = vpack.c.bf16 %v5574, %v5574
    %v5607 = vpack.c.bf16 %v5575, %v5575
    %v5608 = vpack.c.bf16 %v5576, %v5576
    %v5609 = vpack.c.bf16 %v5577, %v5577
    %v5610 = vpack.c.bf16 %v5578, %v5578
    %v5611 = vpack.c.bf16 %v5579, %v5579
    %v5612 = vpack.c.bf16 %v5580, %v5580
    %v5613 = vpack.c.bf16 %v5581, %v5581
    %v5614 = vpack.c.bf16 %v5582, %v5582
    %v5615 = vpack.c.bf16 %v5583, %v5583
    %v5616 = vpack.c.bf16 %v5584, %v5584
    %v5617 = vpack.c.bf16 %v5585, %v5585
    %v5618 = vpack.c.bf16 %v5586, %v5586
    %v5619 = vpack.c.bf16 %v5587, %v5587
    %v5620 = vpack.c.bf16 %v5588, %v5588
    %v5621 = vpack.c.bf16 %v5589, %v5589
    %v5622 = vpack.c.bf16 %v5590, %v5590
    %v5623 = vpack.c.bf16 %v5591, %v5591
    %v5624 = vpack.c.bf16 %v5592, %v5592
    %v5641 = vunpack.c.l.b16 %v5593
    %v5642 = vunpack.c.l.b16 %v5594
    %v5643 = vunpack.c.l.b16 %v5595
    %v5644 = vunpack.c.l.b16 %v5596
    %v5645 = vunpack.c.l.b16 %v5597
    %v5646 = vunpack.c.l.b16 %v5598
    %v5647 = vunpack.c.l.b16 %v5599
    %v5648 = vunpack.c.l.b16 %v5600
    %v5649 = vunpack.c.l.b16 %v5601
    %v5650 = vunpack.c.l.b16 %v5602
    %v5651 = vunpack.c.l.b16 %v5603
    %v5652 = vunpack.c.l.b16 %v5604
    %v5653 = vunpack.c.l.b16 %v5605
    %v5654 = vunpack.c.l.b16 %v5606
    %v5655 = vunpack.c.l.b16 %v5607
    %v5656 = vunpack.c.l.b16 %v5608
    %v5657 = vpack.c.b16 %v5642, %v5641
    %v5658 = vpack.c.b16 %v5644, %v5643
    %v5659 = vpack.c.b16 %v5646, %v5645
    %v5660 = vpack.c.b16 %v5648, %v5647
    %v5661 = vpack.c.b16 %v5650, %v5649
    %v5662 = vpack.c.b16 %v5652, %v5651
    %v5663 = vpack.c.b16 %v5654, %v5653
    %v5664 = vpack.c.b16 %v5656, %v5655
    %v5689 = vunpack.c.l.b16 %v5609
    %v5690 = vunpack.c.l.b16 %v5610
    %v5691 = vunpack.c.l.b16 %v5611
    %v5692 = vunpack.c.l.b16 %v5612
    %v5693 = vunpack.c.l.b16 %v5613
    %v5694 = vunpack.c.l.b16 %v5614
    %v5695 = vunpack.c.l.b16 %v5615
    %v5696 = vunpack.c.l.b16 %v5616
    %v5697 = vunpack.c.l.b16 %v5617
    %v5698 = vunpack.c.l.b16 %v5618
    %v5699 = vunpack.c.l.b16 %v5619
    %v5700 = vunpack.c.l.b16 %v5620
    %v5701 = vunpack.c.l.b16 %v5621
    %v5702 = vunpack.c.l.b16 %v5622
    %v5703 = vunpack.c.l.b16 %v5623
    %v5704 = vunpack.c.l.b16 %v5624
    %v5705 = vpack.c.b16 %v5690, %v5689
    %v5706 = vpack.c.b16 %v5692, %v5691
    %v5707 = vpack.c.b16 %v5694, %v5693
    %v5708 = vpack.c.b16 %v5696, %v5695
    %v5709 = vpack.c.b16 %v5698, %v5697
    %v5710 = vpack.c.b16 %v5700, %v5699
    %v5711 = vpack.c.b16 %v5702, %v5701
    %v5712 = vpack.c.b16 %v5704, %v5703
    %5721 = vmatpush.bf16.msra.mxu0 %v5664
    %5722 = vmatpush.bf16.msra.mxu0 %v5663
    %5723 = vmatpush.bf16.msra.mxu0 %v5662
    %5724 = vmatpush.bf16.msra.mxu0 %v5661
    %5725 = vmatpush.bf16.msra.mxu0 %v5660
    %5726 = vmatpush.bf16.msra.mxu0 %v5659
    %5727 = vmatpush.bf16.msra.mxu0 %v5658
    %5728 = vmatpush.bf16.msra.mxu0 %v5657
    %5729 = vmatmul.bf16.gmra.mxu0 %v704
    %v5730 = vpop.f32.mrf.mxu0
    %v5731 = vadd.f32 0.0, %v5730
    %v5732 = vpop.f32.mrf.mxu0
    %v5733 = vadd.f32 0.0, %v5732
    %5734 = vmatmul.bf16.gmra.mxu0 %v705
    %v5735 = vpop.f32.mrf.mxu0
    %v5736 = vadd.f32 0.0, %v5735
    %v5737 = vpop.f32.mrf.mxu0
    %v5738 = vadd.f32 0.0, %v5737
    %5739 = vmatmul.bf16.gmra.mxu0 %v706
    %v5740 = vpop.f32.mrf.mxu0
    %v5741 = vadd.f32 0.0, %v5740
    %v5742 = vpop.f32.mrf.mxu0
    %v5743 = vadd.f32 0.0, %v5742
    %5744 = vmatmul.bf16.gmra.mxu0 %v707
    %v5745 = vpop.f32.mrf.mxu0
    %v5746 = vadd.f32 0.0, %v5745
    %v5747 = vpop.f32.mrf.mxu0
    %v5748 = vadd.f32 0.0, %v5747
    %5749 = vmatmul.bf16.gmra.mxu0 %v708
    %v5750 = vpop.f32.mrf.mxu0
    %v5751 = vadd.f32 0.0, %v5750
    %v5752 = vpop.f32.mrf.mxu0
    %v5753 = vadd.f32 0.0, %v5752
    %5754 = vmatmul.bf16.gmra.mxu0 %v709
    %v5755 = vpop.f32.mrf.mxu0
    %v5756 = vadd.f32 0.0, %v5755
    %v5757 = vpop.f32.mrf.mxu0
    %v5758 = vadd.f32 0.0, %v5757
    %5759 = vmatmul.bf16.gmra.mxu0 %v710
    %v5760 = vpop.f32.mrf.mxu0
    %v5761 = vadd.f32 0.0, %v5760
    %v5762 = vpop.f32.mrf.mxu0
    %v5763 = vadd.f32 0.0, %v5762
    %5764 = vmatmul.bf16.gmra.mxu0 %v711
    %v5765 = vpop.f32.mrf.mxu0
    %v5766 = vadd.f32 0.0, %v5765
    %v5767 = vpop.f32.mrf.mxu0
    %v5768 = vadd.f32 0.0, %v5767
    %5769 = vdwg.mxu0
    %5770 = vmatpush.bf16.msra.mxu0 %v5712
    %5771 = vmatpush.bf16.msra.mxu0 %v5711
    %5772 = vmatpush.bf16.msra.mxu0 %v5710
    %5773 = vmatpush.bf16.msra.mxu0 %v5709
    %5774 = vmatpush.bf16.msra.mxu0 %v5708
    %5775 = vmatpush.bf16.msra.mxu0 %v5707
    %5776 = vmatpush.bf16.msra.mxu0 %v5706
    %5777 = vmatpush.bf16.msra.mxu0 %v5705
    %5778 = vmatmul.bf16.gmra.mxu0 %v704
    %v5779 = vpop.f32.mrf.mxu0
    %v5780 = vadd.f32 0.0, %v5779
    %v5781 = vpop.f32.mrf.mxu0
    %v5782 = vadd.f32 0.0, %v5781
    %5783 = vmatmul.bf16.gmra.mxu0 %v705
    %v5784 = vpop.f32.mrf.mxu0
    %v5785 = vadd.f32 0.0, %v5784
    %v5786 = vpop.f32.mrf.mxu0
    %v5787 = vadd.f32 0.0, %v5786
    %5788 = vmatmul.bf16.gmra.mxu0 %v706
    %v5789 = vpop.f32.mrf.mxu0
    %v5790 = vadd.f32 0.0, %v5789
    %v5791 = vpop.f32.mrf.mxu0
    %v5792 = vadd.f32 0.0, %v5791
    %5793 = vmatmul.bf16.gmra.mxu0 %v707
    %v5794 = vpop.f32.mrf.mxu0
    %v5795 = vadd.f32 0.0, %v5794
    %v5796 = vpop.f32.mrf.mxu0
    %v5797 = vadd.f32 0.0, %v5796
    %5798 = vmatmul.bf16.gmra.mxu0 %v708
    %v5799 = vpop.f32.mrf.mxu0
    %v5800 = vadd.f32 0.0, %v5799
    %v5801 = vpop.f32.mrf.mxu0
    %v5802 = vadd.f32 0.0, %v5801
    %5803 = vmatmul.bf16.gmra.mxu0 %v709
    %v5804 = vpop.f32.mrf.mxu0
    %v5805 = vadd.f32 0.0, %v5804
    %v5806 = vpop.f32.mrf.mxu0
    %v5807 = vadd.f32 0.0, %v5806
    %5808 = vmatmul.bf16.gmra.mxu0 %v710
    %v5809 = vpop.f32.mrf.mxu0
    %v5810 = vadd.f32 0.0, %v5809
    %v5811 = vpop.f32.mrf.mxu0
    %v5812 = vadd.f32 0.0, %v5811
    %5813 = vmatmul.bf16.gmra.mxu0 %v711
    %v5814 = vpop.f32.mrf.mxu0
    %v5815 = vadd.f32 0.0, %v5814
    %v5816 = vpop.f32.mrf.mxu0
    %v5817 = vadd.f32 0.0, %v5816
    %5818 = vdwg.mxu0
    %v5819 = vpack.c.bf16 %v5733, %v5731
    %v5820 = vpack.c.bf16 %v5738, %v5736
    %v5821 = vpack.c.bf16 %v5743, %v5741
    %v5822 = vpack.c.bf16 %v5748, %v5746
    %v5823 = vpack.c.bf16 %v5753, %v5751
    %v5824 = vpack.c.bf16 %v5758, %v5756
    %v5825 = vpack.c.bf16 %v5763, %v5761
    %v5826 = vpack.c.bf16 %v5768, %v5766
    %5827 = vmatpush.bf16.msra.mxu0 %v901
    %5828 = vmatpush.bf16.msra.mxu0 %v897
    %5829 = vmatpush.bf16.msra.mxu0 %v893
    %5830 = vmatpush.bf16.msra.mxu0 %v889
    %5831 = vmatpush.bf16.msra.mxu0 %v885
    %5832 = vmatpush.bf16.msra.mxu0 %v881
    %5833 = vmatpush.bf16.msra.mxu0 %v877
    %5834 = vmatpush.bf16.msra.mxu0 %v873
    %5835 = vmatmul.bf16.gmra.mxu0 %v5819
    %v5836 = vpop.f32.mrf.mxu0
    %v5837 = vadd.f32 0.0, %v5836
    %v5838 = vpop.f32.mrf.mxu0
    %v5839 = vadd.f32 0.0, %v5838
    %5840 = vmatmul.bf16.gmra.mxu0 %v5820
    %v5841 = vpop.f32.mrf.mxu0
    %v5842 = vadd.f32 0.0, %v5841
    %v5843 = vpop.f32.mrf.mxu0
    %v5844 = vadd.f32 0.0, %v5843
    %5845 = vmatmul.bf16.gmra.mxu0 %v5821
    %v5846 = vpop.f32.mrf.mxu0
    %v5847 = vadd.f32 0.0, %v5846
    %v5848 = vpop.f32.mrf.mxu0
    %v5849 = vadd.f32 0.0, %v5848
    %5850 = vmatmul.bf16.gmra.mxu0 %v5822
    %v5851 = vpop.f32.mrf.mxu0
    %v5852 = vadd.f32 0.0, %v5851
    %v5853 = vpop.f32.mrf.mxu0
    %v5854 = vadd.f32 0.0, %v5853
    %5855 = vmatmul.bf16.gmra.mxu0 %v5823
    %v5856 = vpop.f32.mrf.mxu0
    %v5857 = vadd.f32 0.0, %v5856
    %v5858 = vpop.f32.mrf.mxu0
    %v5859 = vadd.f32 0.0, %v5858
    %5860 = vmatmul.bf16.gmra.mxu0 %v5824
    %v5861 = vpop.f32.mrf.mxu0
    %v5862 = vadd.f32 0.0, %v5861
    %v5863 = vpop.f32.mrf.mxu0
    %v5864 = vadd.f32 0.0, %v5863
    %5865 = vmatmul.bf16.gmra.mxu0 %v5825
    %v5866 = vpop.f32.mrf.mxu0
    %v5867 = vadd.f32 0.0, %v5866
    %v5868 = vpop.f32.mrf.mxu0
    %v5869 = vadd.f32 0.0, %v5868
    %5870 = vmatmul.bf16.gmra.mxu0 %v5826
    %v5871 = vpop.f32.mrf.mxu0
    %v5872 = vadd.f32 0.0, %v5871
    %v5873 = vpop.f32.mrf.mxu0
    %v5874 = vadd.f32 0.0, %v5873
    %5875 = vdwg.mxu0
    %5876 = vmatpush.bf16.msra.mxu0 %v902
    %5877 = vmatpush.bf16.msra.mxu0 %v898
    %5878 = vmatpush.bf16.msra.mxu0 %v894
    %5879 = vmatpush.bf16.msra.mxu0 %v890
    %5880 = vmatpush.bf16.msra.mxu0 %v886
    %5881 = vmatpush.bf16.msra.mxu0 %v882
    %5882 = vmatpush.bf16.msra.mxu0 %v878
    %5883 = vmatpush.bf16.msra.mxu0 %v874
    %5884 = vmatmul.bf16.gmra.mxu0 %v5819
    %v5885 = vpop.f32.mrf.mxu0
    %v5886 = vadd.f32 0.0, %v5885
    %v5887 = vpop.f32.mrf.mxu0
    %v5888 = vadd.f32 0.0, %v5887
    %5889 = vmatmul.bf16.gmra.mxu0 %v5820
    %v5890 = vpop.f32.mrf.mxu0
    %v5891 = vadd.f32 0.0, %v5890
    %v5892 = vpop.f32.mrf.mxu0
    %v5893 = vadd.f32 0.0, %v5892
    %5894 = vmatmul.bf16.gmra.mxu0 %v5821
    %v5895 = vpop.f32.mrf.mxu0
    %v5896 = vadd.f32 0.0, %v5895
    %v5897 = vpop.f32.mrf.mxu0
    %v5898 = vadd.f32 0.0, %v5897
    %5899 = vmatmul.bf16.gmra.mxu0 %v5822
    %v5900 = vpop.f32.mrf.mxu0
    %v5901 = vadd.f32 0.0, %v5900
    %v5902 = vpop.f32.mrf.mxu0
    %v5903 = vadd.f32 0.0, %v5902
    %5904 = vmatmul.bf16.gmra.mxu0 %v5823
    %v5905 = vpop.f32.mrf.mxu0
    %v5906 = vadd.f32 0.0, %v5905
    %v5907 = vpop.f32.mrf.mxu0
    %v5908 = vadd.f32 0.0, %v5907
    %5909 = vmatmul.bf16.gmra.mxu0 %v5824
    %v5910 = vpop.f32.mrf.mxu0
    %v5911 = vadd.f32 0.0, %v5910
    %v5912 = vpop.f32.mrf.mxu0
    %v5913 = vadd.f32 0.0, %v5912
    %5914 = vmatmul.bf16.gmra.mxu0 %v5825
    %v5915 = vpop.f32.mrf.mxu0
    %v5916 = vadd.f32 0.0, %v5915
    %v5917 = vpop.f32.mrf.mxu0
    %v5918 = vadd.f32 0.0, %v5917
    %5919 = vmatmul.bf16.gmra.mxu0 %v5826
    %v5920 = vpop.f32.mrf.mxu0
    %v5921 = vadd.f32 0.0, %v5920
    %v5922 = vpop.f32.mrf.mxu0
    %v5923 = vadd.f32 0.0, %v5922
    %5924 = vdwg.mxu0
    %5925 = vmatpush.bf16.msra.mxu0 %v903
    %5926 = vmatpush.bf16.msra.mxu0 %v899
    %5927 = vmatpush.bf16.msra.mxu0 %v895
    %5928 = vmatpush.bf16.msra.mxu0 %v891
    %5929 = vmatpush.bf16.msra.mxu0 %v887
    %5930 = vmatpush.bf16.msra.mxu0 %v883
    %5931 = vmatpush.bf16.msra.mxu0 %v879
    %5932 = vmatpush.bf16.msra.mxu0 %v875
    %5933 = vmatmul.bf16.gmra.mxu0 %v5819
    %v5934 = vpop.f32.mrf.mxu0
    %v5935 = vadd.f32 0.0, %v5934
    %v5936 = vpop.f32.mrf.mxu0
    %v5937 = vadd.f32 0.0, %v5936
    %5938 = vmatmul.bf16.gmra.mxu0 %v5820
    %v5939 = vpop.f32.mrf.mxu0
    %v5940 = vadd.f32 0.0, %v5939
    %v5941 = vpop.f32.mrf.mxu0
    %v5942 = vadd.f32 0.0, %v5941
    %5943 = vmatmul.bf16.gmra.mxu0 %v5821
    %v5944 = vpop.f32.mrf.mxu0
    %v5945 = vadd.f32 0.0, %v5944
    %v5946 = vpop.f32.mrf.mxu0
    %v5947 = vadd.f32 0.0, %v5946
    %5948 = vmatmul.bf16.gmra.mxu0 %v5822
    %v5949 = vpop.f32.mrf.mxu0
    %v5950 = vadd.f32 0.0, %v5949
    %v5951 = vpop.f32.mrf.mxu0
    %v5952 = vadd.f32 0.0, %v5951
    %5953 = vmatmul.bf16.gmra.mxu0 %v5823
    %v5954 = vpop.f32.mrf.mxu0
    %v5955 = vadd.f32 0.0, %v5954
    %v5956 = vpop.f32.mrf.mxu0
    %v5957 = vadd.f32 0.0, %v5956
    %5958 = vmatmul.bf16.gmra.mxu0 %v5824
    %v5959 = vpop.f32.mrf.mxu0
    %v5960 = vadd.f32 0.0, %v5959
    %v5961 = vpop.f32.mrf.mxu0
    %v5962 = vadd.f32 0.0, %v5961
    %5963 = vmatmul.bf16.gmra.mxu0 %v5825
    %v5964 = vpop.f32.mrf.mxu0
    %v5965 = vadd.f32 0.0, %v5964
    %v5966 = vpop.f32.mrf.mxu0
    %v5967 = vadd.f32 0.0, %v5966
    %5968 = vmatmul.bf16.gmra.mxu0 %v5826
    %v5969 = vpop.f32.mrf.mxu0
    %v5970 = vadd.f32 0.0, %v5969
    %v5971 = vpop.f32.mrf.mxu0
    %v5972 = vadd.f32 0.0, %v5971
    %5973 = vdwg.mxu0
    %5974 = vmatpush.bf16.msra.mxu0 %v904
    %5975 = vmatpush.bf16.msra.mxu0 %v900
    %5976 = vmatpush.bf16.msra.mxu0 %v896
    %5977 = vmatpush.bf16.msra.mxu0 %v892
    %5978 = vmatpush.bf16.msra.mxu0 %v888
    %5979 = vmatpush.bf16.msra.mxu0 %v884
    %5980 = vmatpush.bf16.msra.mxu0 %v880
    %5981 = vmatpush.bf16.msra.mxu0 %v876
    %5982 = vmatmul.bf16.gmra.mxu0 %v5819
    %v5983 = vpop.f32.mrf.mxu0
    %v5984 = vadd.f32 0.0, %v5983
    %v5985 = vpop.f32.mrf.mxu0
    %v5986 = vadd.f32 0.0, %v5985
    %5987 = vmatmul.bf16.gmra.mxu0 %v5820
    %v5988 = vpop.f32.mrf.mxu0
    %v5989 = vadd.f32 0.0, %v5988
    %v5990 = vpop.f32.mrf.mxu0
    %v5991 = vadd.f32 0.0, %v5990
    %5992 = vmatmul.bf16.gmra.mxu0 %v5821
    %v5993 = vpop.f32.mrf.mxu0
    %v5994 = vadd.f32 0.0, %v5993
    %v5995 = vpop.f32.mrf.mxu0
    %v5996 = vadd.f32 0.0, %v5995
    %5997 = vmatmul.bf16.gmra.mxu0 %v5822
    %v5998 = vpop.f32.mrf.mxu0
    %v5999 = vadd.f32 0.0, %v5998
    %v6000 = vpop.f32.mrf.mxu0
    %v6001 = vadd.f32 0.0, %v6000
    %6002 = vmatmul.bf16.gmra.mxu0 %v5823
    %v6003 = vpop.f32.mrf.mxu0
    %v6004 = vadd.f32 0.0, %v6003
    %v6005 = vpop.f32.mrf.mxu0
    %v6006 = vadd.f32 0.0, %v6005
    %6007 = vmatmul.bf16.gmra.mxu0 %v5824
    %v6008 = vpop.f32.mrf.mxu0
    %v6009 = vadd.f32 0.0, %v6008
    %v6010 = vpop.f32.mrf.mxu0
    %v6011 = vadd.f32 0.0, %v6010
    %6012 = vmatmul.bf16.gmra.mxu0 %v5825
    %v6013 = vpop.f32.mrf.mxu0
    %v6014 = vadd.f32 0.0, %v6013
    %v6015 = vpop.f32.mrf.mxu0
    %v6016 = vadd.f32 0.0, %v6015
    %6017 = vmatmul.bf16.gmra.mxu0 %v5826
    %v6018 = vpop.f32.mrf.mxu0
    %v6019 = vadd.f32 0.0, %v6018
    %v6020 = vpop.f32.mrf.mxu0
    %v6021 = vadd.f32 0.0, %v6020
    %6022 = vdwg.mxu0
    %v6023 = vadd.f32 %v422, %v5837
    %v6024 = vadd.f32 %v471, %v5886
    %v6025 = vadd.f32 %v520, %v5935
    %v6026 = vadd.f32 %v569, %v5984
    %v6027 = vadd.f32 %v424, %v5839
    %v6028 = vadd.f32 %v473, %v5888
    %v6029 = vadd.f32 %v522, %v5937
    %v6030 = vadd.f32 %v571, %v5986
    %v6031 = vadd.f32 %v427, %v5842
    %v6032 = vadd.f32 %v476, %v5891
    %v6033 = vadd.f32 %v525, %v5940
    %v6034 = vadd.f32 %v574, %v5989
    %v6035 = vadd.f32 %v429, %v5844
    %v6036 = vadd.f32 %v478, %v5893
    %v6037 = vadd.f32 %v527, %v5942
    %v6038 = vadd.f32 %v576, %v5991
    %v6039 = vadd.f32 %v432, %v5847
    %v6040 = vadd.f32 %v481, %v5896
    %v6041 = vadd.f32 %v530, %v5945
    %v6042 = vadd.f32 %v579, %v5994
    %v6043 = vadd.f32 %v434, %v5849
    %v6044 = vadd.f32 %v483, %v5898
    %v6045 = vadd.f32 %v532, %v5947
    %v6046 = vadd.f32 %v581, %v5996
    %v6047 = vadd.f32 %v437, %v5852
    %v6048 = vadd.f32 %v486, %v5901
    %v6049 = vadd.f32 %v535, %v5950
    %v6050 = vadd.f32 %v584, %v5999
    %v6051 = vadd.f32 %v439, %v5854
    %v6052 = vadd.f32 %v488, %v5903
    %v6053 = vadd.f32 %v537, %v5952
    %v6054 = vadd.f32 %v586, %v6001
    %v6055 = vadd.f32 %v442, %v5857
    %v6056 = vadd.f32 %v491, %v5906
    %v6057 = vadd.f32 %v540, %v5955
    %v6058 = vadd.f32 %v589, %v6004
    %v6059 = vadd.f32 %v444, %v5859
    %v6060 = vadd.f32 %v493, %v5908
    %v6061 = vadd.f32 %v542, %v5957
    %v6062 = vadd.f32 %v591, %v6006
    %v6063 = vadd.f32 %v447, %v5862
    %v6064 = vadd.f32 %v496, %v5911
    %v6065 = vadd.f32 %v545, %v5960
    %v6066 = vadd.f32 %v594, %v6009
    %v6067 = vadd.f32 %v449, %v5864
    %v6068 = vadd.f32 %v498, %v5913
    %v6069 = vadd.f32 %v547, %v5962
    %v6070 = vadd.f32 %v596, %v6011
    %v6071 = vadd.f32 %v452, %v5867
    %v6072 = vadd.f32 %v501, %v5916
    %v6073 = vadd.f32 %v550, %v5965
    %v6074 = vadd.f32 %v599, %v6014
    %v6075 = vadd.f32 %v454, %v5869
    %v6076 = vadd.f32 %v503, %v5918
    %v6077 = vadd.f32 %v552, %v5967
    %v6078 = vadd.f32 %v601, %v6016
    %v6079 = vadd.f32 %v457, %v5872
    %v6080 = vadd.f32 %v506, %v5921
    %v6081 = vadd.f32 %v555, %v5970
    %v6082 = vadd.f32 %v604, %v6019
    %v6083 = vadd.f32 %v459, %v5874
    %v6084 = vadd.f32 %v508, %v5923
    %v6085 = vadd.f32 %v557, %v5972
    %v6086 = vadd.f32 %v606, %v6021
    %v6087 = vxor.u32 %v6023, 2147483648
    %v6088 = vxor.u32 %v6027, 2147483648
    %v6089 = vxor.u32 %v6031, 2147483648
    %v6090 = vxor.u32 %v6035, 2147483648
    %v6091 = vxor.u32 %v6039, 2147483648
    %v6092 = vxor.u32 %v6043, 2147483648
    %v6093 = vxor.u32 %v6047, 2147483648
    %v6094 = vxor.u32 %v6051, 2147483648
    %v6095 = vxor.u32 %v6055, 2147483648
    %v6096 = vxor.u32 %v6059, 2147483648
    %v6097 = vxor.u32 %v6063, 2147483648
    %v6098 = vxor.u32 %v6067, 2147483648
    %v6099 = vxor.u32 %v6071, 2147483648
    %v6100 = vxor.u32 %v6075, 2147483648
    %v6101 = vxor.u32 %v6079, 2147483648
    %v6102 = vxor.u32 %v6083, 2147483648
    %v6103 = vmul.f32 %v6087, 1.442695
    %v6104 = vpow.pop %v6103
    %v6105 = vmul.f32 %v6088, 1.442695
    %v6106 = vpow.pop %v6105
    %v6107 = vmul.f32 %v6089, 1.442695
    %v6108 = vpow.pop %v6107
    %v6109 = vmul.f32 %v6090, 1.442695
    %v6110 = vpow.pop %v6109
    %v6111 = vmul.f32 %v6091, 1.442695
    %v6112 = vpow.pop %v6111
    %v6113 = vmul.f32 %v6092, 1.442695
    %v6114 = vpow.pop %v6113
    %v6115 = vmul.f32 %v6093, 1.442695
    %v6116 = vpow.pop %v6115
    %v6117 = vmul.f32 %v6094, 1.442695
    %v6118 = vpow.pop %v6117
    %v6119 = vmul.f32 %v6095, 1.442695
    %v6120 = vpow.pop %v6119
    %v6121 = vmul.f32 %v6096, 1.442695
    %v6122 = vpow.pop %v6121
    %v6123 = vmul.f32 %v6097, 1.442695
    %v6124 = vpow.pop %v6123
    %v6125 = vmul.f32 %v6098, 1.442695
    %v6126 = vpow.pop %v6125
    %v6127 = vmul.f32 %v6099, 1.442695
    %v6128 = vpow.pop %v6127
    %v6129 = vmul.f32 %v6100, 1.442695
    %v6130 = vpow.pop %v6129
    %v6131 = vmul.f32 %v6101, 1.442695
    %v6132 = vpow.pop %v6131
    %v6133 = vmul.f32 %v6102, 1.442695
    %v6134 = vpow.pop %v6133
    %v6135 = vadd.f32 %v6104, 1.0
    %v6136 = vadd.f32 %v6106, 1.0
    %v6137 = vadd.f32 %v6108, 1.0
    %v6138 = vadd.f32 %v6110, 1.0
    %v6139 = vadd.f32 %v6112, 1.0
    %v6140 = vadd.f32 %v6114, 1.0
    %v6141 = vadd.f32 %v6116, 1.0
    %v6142 = vadd.f32 %v6118, 1.0
    %v6143 = vadd.f32 %v6120, 1.0
    %v6144 = vadd.f32 %v6122, 1.0
    %v6145 = vadd.f32 %v6124, 1.0
    %v6146 = vadd.f32 %v6126, 1.0
    %v6147 = vadd.f32 %v6128, 1.0
    %v6148 = vadd.f32 %v6130, 1.0
    %v6149 = vadd.f32 %v6132, 1.0
    %v6150 = vadd.f32 %v6134, 1.0
    %v6151 = vrcp.pop %v6135
    %v6152 = vmul.f32 %v6135, %v6151
    %v6153 = vsub.f32 1.0, %v6152
    %v6154 = vmul.f32 %v6151, %v6153
    %v6155 = vadd.f32 %v6151, %v6154
    %vm6156 = vweird.f32 %v6135
    %vm6157 = vweird.f32 %v6151
    %vm6158 = vmor %vm6156, %vm6157
    %v6159 = vsel %vm6158, %v6151, %v6155
    %v6160 = vand.u32 2147483647, %v6135
    %vm6161 = vcmp.eq.f32.partialorder %v6160, 8.507059e+37
    %v6162 = vand.u32 %v6135, 2147483648
    %v6163 = vor.u32 1.1754944e-38, %v6162
    %v6164 = vsel %vm6161, %v6163, %v6159
    %v6165 = vmul.f32 1.0, %v6164
    %v6166 = vrcp.pop %v6136
    %v6167 = vmul.f32 %v6136, %v6166
    %v6168 = vsub.f32 1.0, %v6167
    %v6169 = vmul.f32 %v6166, %v6168
    %v6170 = vadd.f32 %v6166, %v6169
    %vm6171 = vweird.f32 %v6136
    %vm6172 = vweird.f32 %v6166
    %vm6173 = vmor %vm6171, %vm6172
    %v6174 = vsel %vm6173, %v6166, %v6170
    %v6175 = vand.u32 2147483647, %v6136
    %vm6176 = vcmp.eq.f32.partialorder %v6175, 8.507059e+37
    %v6177 = vand.u32 %v6136, 2147483648
    %v6178 = vor.u32 1.1754944e-38, %v6177
    %v6179 = vsel %vm6176, %v6178, %v6174
    %v6180 = vmul.f32 1.0, %v6179
    %v6181 = vrcp.pop %v6137
    %v6182 = vmul.f32 %v6137, %v6181
    %v6183 = vsub.f32 1.0, %v6182
    %v6184 = vmul.f32 %v6181, %v6183
    %v6185 = vadd.f32 %v6181, %v6184
    %vm6186 = vweird.f32 %v6137
    %vm6187 = vweird.f32 %v6181
    %vm6188 = vmor %vm6186, %vm6187
    %v6189 = vsel %vm6188, %v6181, %v6185
    %v6190 = vand.u32 2147483647, %v6137
    %vm6191 = vcmp.eq.f32.partialorder %v6190, 8.507059e+37
    %v6192 = vand.u32 %v6137, 2147483648
    %v6193 = vor.u32 1.1754944e-38, %v6192
    %v6194 = vsel %vm6191, %v6193, %v6189
    %v6195 = vmul.f32 1.0, %v6194
    %v6196 = vrcp.pop %v6138
    %v6197 = vmul.f32 %v6138, %v6196
    %v6198 = vsub.f32 1.0, %v6197
    %v6199 = vmul.f32 %v6196, %v6198
    %v6200 = vadd.f32 %v6196, %v6199
    %vm6201 = vweird.f32 %v6138
    %vm6202 = vweird.f32 %v6196
    %vm6203 = vmor %vm6201, %vm6202
    %v6204 = vsel %vm6203, %v6196, %v6200
    %v6205 = vand.u32 2147483647, %v6138
    %vm6206 = vcmp.eq.f32.partialorder %v6205, 8.507059e+37
    %v6207 = vand.u32 %v6138, 2147483648
    %v6208 = vor.u32 1.1754944e-38, %v6207
    %v6209 = vsel %vm6206, %v6208, %v6204
    %v6210 = vmul.f32 1.0, %v6209
    %v6211 = vrcp.pop %v6139
    %v6212 = vmul.f32 %v6139, %v6211
    %v6213 = vsub.f32 1.0, %v6212
    %v6214 = vmul.f32 %v6211, %v6213
    %v6215 = vadd.f32 %v6211, %v6214
    %vm6216 = vweird.f32 %v6139
    %vm6217 = vweird.f32 %v6211
    %vm6218 = vmor %vm6216, %vm6217
    %v6219 = vsel %vm6218, %v6211, %v6215
    %v6220 = vand.u32 2147483647, %v6139
    %vm6221 = vcmp.eq.f32.partialorder %v6220, 8.507059e+37
    %v6222 = vand.u32 %v6139, 2147483648
    %v6223 = vor.u32 1.1754944e-38, %v6222
    %v6224 = vsel %vm6221, %v6223, %v6219
    %v6225 = vmul.f32 1.0, %v6224
    %v6226 = vrcp.pop %v6140
    %v6227 = vmul.f32 %v6140, %v6226
    %v6228 = vsub.f32 1.0, %v6227
    %v6229 = vmul.f32 %v6226, %v6228
    %v6230 = vadd.f32 %v6226, %v6229
    %vm6231 = vweird.f32 %v6140
    %vm6232 = vweird.f32 %v6226
    %vm6233 = vmor %vm6231, %vm6232
    %v6234 = vsel %vm6233, %v6226, %v6230
    %v6235 = vand.u32 2147483647, %v6140
    %vm6236 = vcmp.eq.f32.partialorder %v6235, 8.507059e+37
    %v6237 = vand.u32 %v6140, 2147483648
    %v6238 = vor.u32 1.1754944e-38, %v6237
    %v6239 = vsel %vm6236, %v6238, %v6234
    %v6240 = vmul.f32 1.0, %v6239
    %v6241 = vrcp.pop %v6141
    %v6242 = vmul.f32 %v6141, %v6241
    %v6243 = vsub.f32 1.0, %v6242
    %v6244 = vmul.f32 %v6241, %v6243
    %v6245 = vadd.f32 %v6241, %v6244
    %vm6246 = vweird.f32 %v6141
    %vm6247 = vweird.f32 %v6241
    %vm6248 = vmor %vm6246, %vm6247
    %v6249 = vsel %vm6248, %v6241, %v6245
    %v6250 = vand.u32 2147483647, %v6141
    %vm6251 = vcmp.eq.f32.partialorder %v6250, 8.507059e+37
    %v6252 = vand.u32 %v6141, 2147483648
    %v6253 = vor.u32 1.1754944e-38, %v6252
    %v6254 = vsel %vm6251, %v6253, %v6249
    %v6255 = vmul.f32 1.0, %v6254
    %v6256 = vrcp.pop %v6142
    %v6257 = vmul.f32 %v6142, %v6256
    %v6258 = vsub.f32 1.0, %v6257
    %v6259 = vmul.f32 %v6256, %v6258
    %v6260 = vadd.f32 %v6256, %v6259
    %vm6261 = vweird.f32 %v6142
    %vm6262 = vweird.f32 %v6256
    %vm6263 = vmor %vm6261, %vm6262
    %v6264 = vsel %vm6263, %v6256, %v6260
    %v6265 = vand.u32 2147483647, %v6142
    %vm6266 = vcmp.eq.f32.partialorder %v6265, 8.507059e+37
    %v6267 = vand.u32 %v6142, 2147483648
    %v6268 = vor.u32 1.1754944e-38, %v6267
    %v6269 = vsel %vm6266, %v6268, %v6264
    %v6270 = vmul.f32 1.0, %v6269
    %v6271 = vrcp.pop %v6143
    %v6272 = vmul.f32 %v6143, %v6271
    %v6273 = vsub.f32 1.0, %v6272
    %v6274 = vmul.f32 %v6271, %v6273
    %v6275 = vadd.f32 %v6271, %v6274
    %vm6276 = vweird.f32 %v6143
    %vm6277 = vweird.f32 %v6271
    %vm6278 = vmor %vm6276, %vm6277
    %v6279 = vsel %vm6278, %v6271, %v6275
    %v6280 = vand.u32 2147483647, %v6143
    %vm6281 = vcmp.eq.f32.partialorder %v6280, 8.507059e+37
    %v6282 = vand.u32 %v6143, 2147483648
    %v6283 = vor.u32 1.1754944e-38, %v6282
    %v6284 = vsel %vm6281, %v6283, %v6279
    %v6285 = vmul.f32 1.0, %v6284
    %v6286 = vrcp.pop %v6144
    %v6287 = vmul.f32 %v6144, %v6286
    %v6288 = vsub.f32 1.0, %v6287
    %v6289 = vmul.f32 %v6286, %v6288
    %v6290 = vadd.f32 %v6286, %v6289
    %vm6291 = vweird.f32 %v6144
    %vm6292 = vweird.f32 %v6286
    %vm6293 = vmor %vm6291, %vm6292
    %v6294 = vsel %vm6293, %v6286, %v6290
    %v6295 = vand.u32 2147483647, %v6144
    %vm6296 = vcmp.eq.f32.partialorder %v6295, 8.507059e+37
    %v6297 = vand.u32 %v6144, 2147483648
    %v6298 = vor.u32 1.1754944e-38, %v6297
    %v6299 = vsel %vm6296, %v6298, %v6294
    %v6300 = vmul.f32 1.0, %v6299
    %v6301 = vrcp.pop %v6145
    %v6302 = vmul.f32 %v6145, %v6301
    %v6303 = vsub.f32 1.0, %v6302
    %v6304 = vmul.f32 %v6301, %v6303
    %v6305 = vadd.f32 %v6301, %v6304
    %vm6306 = vweird.f32 %v6145
    %vm6307 = vweird.f32 %v6301
    %vm6308 = vmor %vm6306, %vm6307
    %v6309 = vsel %vm6308, %v6301, %v6305
    %v6310 = vand.u32 2147483647, %v6145
    %vm6311 = vcmp.eq.f32.partialorder %v6310, 8.507059e+37
    %v6312 = vand.u32 %v6145, 2147483648
    %v6313 = vor.u32 1.1754944e-38, %v6312
    %v6314 = vsel %vm6311, %v6313, %v6309
    %v6315 = vmul.f32 1.0, %v6314
    %v6316 = vrcp.pop %v6146
    %v6317 = vmul.f32 %v6146, %v6316
    %v6318 = vsub.f32 1.0, %v6317
    %v6319 = vmul.f32 %v6316, %v6318
    %v6320 = vadd.f32 %v6316, %v6319
    %vm6321 = vweird.f32 %v6146
    %vm6322 = vweird.f32 %v6316
    %vm6323 = vmor %vm6321, %vm6322
    %v6324 = vsel %vm6323, %v6316, %v6320
    %v6325 = vand.u32 2147483647, %v6146
    %vm6326 = vcmp.eq.f32.partialorder %v6325, 8.507059e+37
    %v6327 = vand.u32 %v6146, 2147483648
    %v6328 = vor.u32 1.1754944e-38, %v6327
    %v6329 = vsel %vm6326, %v6328, %v6324
    %v6330 = vmul.f32 1.0, %v6329
    %v6331 = vrcp.pop %v6147
    %v6332 = vmul.f32 %v6147, %v6331
    %v6333 = vsub.f32 1.0, %v6332
    %v6334 = vmul.f32 %v6331, %v6333
    %v6335 = vadd.f32 %v6331, %v6334
    %vm6336 = vweird.f32 %v6147
    %vm6337 = vweird.f32 %v6331
    %vm6338 = vmor %vm6336, %vm6337
    %v6339 = vsel %vm6338, %v6331, %v6335
    %v6340 = vand.u32 2147483647, %v6147
    %vm6341 = vcmp.eq.f32.partialorder %v6340, 8.507059e+37
    %v6342 = vand.u32 %v6147, 2147483648
    %v6343 = vor.u32 1.1754944e-38, %v6342
    %v6344 = vsel %vm6341, %v6343, %v6339
    %v6345 = vmul.f32 1.0, %v6344
    %v6346 = vrcp.pop %v6148
    %v6347 = vmul.f32 %v6148, %v6346
    %v6348 = vsub.f32 1.0, %v6347
    %v6349 = vmul.f32 %v6346, %v6348
    %v6350 = vadd.f32 %v6346, %v6349
    %vm6351 = vweird.f32 %v6148
    %vm6352 = vweird.f32 %v6346
    %vm6353 = vmor %vm6351, %vm6352
    %v6354 = vsel %vm6353, %v6346, %v6350
    %v6355 = vand.u32 2147483647, %v6148
    %vm6356 = vcmp.eq.f32.partialorder %v6355, 8.507059e+37
    %v6357 = vand.u32 %v6148, 2147483648
    %v6358 = vor.u32 1.1754944e-38, %v6357
    %v6359 = vsel %vm6356, %v6358, %v6354
    %v6360 = vmul.f32 1.0, %v6359
    %v6361 = vrcp.pop %v6149
    %v6362 = vmul.f32 %v6149, %v6361
    %v6363 = vsub.f32 1.0, %v6362
    %v6364 = vmul.f32 %v6361, %v6363
    %v6365 = vadd.f32 %v6361, %v6364
    %vm6366 = vweird.f32 %v6149
    %vm6367 = vweird.f32 %v6361
    %vm6368 = vmor %vm6366, %vm6367
    %v6369 = vsel %vm6368, %v6361, %v6365
    %v6370 = vand.u32 2147483647, %v6149
    %vm6371 = vcmp.eq.f32.partialorder %v6370, 8.507059e+37
    %v6372 = vand.u32 %v6149, 2147483648
    %v6373 = vor.u32 1.1754944e-38, %v6372
    %v6374 = vsel %vm6371, %v6373, %v6369
    %v6375 = vmul.f32 1.0, %v6374
    %v6376 = vrcp.pop %v6150
    %v6377 = vmul.f32 %v6150, %v6376
    %v6378 = vsub.f32 1.0, %v6377
    %v6379 = vmul.f32 %v6376, %v6378
    %v6380 = vadd.f32 %v6376, %v6379
    %vm6381 = vweird.f32 %v6150
    %vm6382 = vweird.f32 %v6376
    %vm6383 = vmor %vm6381, %vm6382
    %v6384 = vsel %vm6383, %v6376, %v6380
    %v6385 = vand.u32 2147483647, %v6150
    %vm6386 = vcmp.eq.f32.partialorder %v6385, 8.507059e+37
    %v6387 = vand.u32 %v6150, 2147483648
    %v6388 = vor.u32 1.1754944e-38, %v6387
    %v6389 = vsel %vm6386, %v6388, %v6384
    %v6390 = vmul.f32 1.0, %v6389
    %v6391 = vxor.u32 %v6024, 2147483648
    %v6392 = vxor.u32 %v6028, 2147483648
    %v6393 = vxor.u32 %v6032, 2147483648
    %v6394 = vxor.u32 %v6036, 2147483648
    %v6395 = vxor.u32 %v6040, 2147483648
    %v6396 = vxor.u32 %v6044, 2147483648
    %v6397 = vxor.u32 %v6048, 2147483648
    %v6398 = vxor.u32 %v6052, 2147483648
    %v6399 = vxor.u32 %v6056, 2147483648
    %v6400 = vxor.u32 %v6060, 2147483648
    %v6401 = vxor.u32 %v6064, 2147483648
    %v6402 = vxor.u32 %v6068, 2147483648
    %v6403 = vxor.u32 %v6072, 2147483648
    %v6404 = vxor.u32 %v6076, 2147483648
    %v6405 = vxor.u32 %v6080, 2147483648
    %v6406 = vxor.u32 %v6084, 2147483648
    %v6407 = vmul.f32 %v6391, 1.442695
    %v6408 = vpow.pop %v6407
    %v6409 = vmul.f32 %v6392, 1.442695
    %v6410 = vpow.pop %v6409
    %v6411 = vmul.f32 %v6393, 1.442695
    %v6412 = vpow.pop %v6411
    %v6413 = vmul.f32 %v6394, 1.442695
    %v6414 = vpow.pop %v6413
    %v6415 = vmul.f32 %v6395, 1.442695
    %v6416 = vpow.pop %v6415
    %v6417 = vmul.f32 %v6396, 1.442695
    %v6418 = vpow.pop %v6417
    %v6419 = vmul.f32 %v6397, 1.442695
    %v6420 = vpow.pop %v6419
    %v6421 = vmul.f32 %v6398, 1.442695
    %v6422 = vpow.pop %v6421
    %v6423 = vmul.f32 %v6399, 1.442695
    %v6424 = vpow.pop %v6423
    %v6425 = vmul.f32 %v6400, 1.442695
    %v6426 = vpow.pop %v6425
    %v6427 = vmul.f32 %v6401, 1.442695
    %v6428 = vpow.pop %v6427
    %v6429 = vmul.f32 %v6402, 1.442695
    %v6430 = vpow.pop %v6429
    %v6431 = vmul.f32 %v6403, 1.442695
    %v6432 = vpow.pop %v6431
    %v6433 = vmul.f32 %v6404, 1.442695
    %v6434 = vpow.pop %v6433
    %v6435 = vmul.f32 %v6405, 1.442695
    %v6436 = vpow.pop %v6435
    %v6437 = vmul.f32 %v6406, 1.442695
    %v6438 = vpow.pop %v6437
    %v6439 = vadd.f32 %v6408, 1.0
    %v6440 = vadd.f32 %v6410, 1.0
    %v6441 = vadd.f32 %v6412, 1.0
    %v6442 = vadd.f32 %v6414, 1.0
    %v6443 = vadd.f32 %v6416, 1.0
    %v6444 = vadd.f32 %v6418, 1.0
    %v6445 = vadd.f32 %v6420, 1.0
    %v6446 = vadd.f32 %v6422, 1.0
    %v6447 = vadd.f32 %v6424, 1.0
    %v6448 = vadd.f32 %v6426, 1.0
    %v6449 = vadd.f32 %v6428, 1.0
    %v6450 = vadd.f32 %v6430, 1.0
    %v6451 = vadd.f32 %v6432, 1.0
    %v6452 = vadd.f32 %v6434, 1.0
    %v6453 = vadd.f32 %v6436, 1.0
    %v6454 = vadd.f32 %v6438, 1.0
    %v6455 = vrcp.pop %v6439
    %v6456 = vmul.f32 %v6439, %v6455
    %v6457 = vsub.f32 1.0, %v6456
    %v6458 = vmul.f32 %v6455, %v6457
    %v6459 = vadd.f32 %v6455, %v6458
    %vm6460 = vweird.f32 %v6439
    %vm6461 = vweird.f32 %v6455
    %vm6462 = vmor %vm6460, %vm6461
    %v6463 = vsel %vm6462, %v6455, %v6459
    %v6464 = vand.u32 2147483647, %v6439
    %vm6465 = vcmp.eq.f32.partialorder %v6464, 8.507059e+37
    %v6466 = vand.u32 %v6439, 2147483648
    %v6467 = vor.u32 1.1754944e-38, %v6466
    %v6468 = vsel %vm6465, %v6467, %v6463
    %v6469 = vmul.f32 1.0, %v6468
    %v6470 = vrcp.pop %v6440
    %v6471 = vmul.f32 %v6440, %v6470
    %v6472 = vsub.f32 1.0, %v6471
    %v6473 = vmul.f32 %v6470, %v6472
    %v6474 = vadd.f32 %v6470, %v6473
    %vm6475 = vweird.f32 %v6440
    %vm6476 = vweird.f32 %v6470
    %vm6477 = vmor %vm6475, %vm6476
    %v6478 = vsel %vm6477, %v6470, %v6474
    %v6479 = vand.u32 2147483647, %v6440
    %vm6480 = vcmp.eq.f32.partialorder %v6479, 8.507059e+37
    %v6481 = vand.u32 %v6440, 2147483648
    %v6482 = vor.u32 1.1754944e-38, %v6481
    %v6483 = vsel %vm6480, %v6482, %v6478
    %v6484 = vmul.f32 1.0, %v6483
    %v6485 = vrcp.pop %v6441
    %v6486 = vmul.f32 %v6441, %v6485
    %v6487 = vsub.f32 1.0, %v6486
    %v6488 = vmul.f32 %v6485, %v6487
    %v6489 = vadd.f32 %v6485, %v6488
    %vm6490 = vweird.f32 %v6441
    %vm6491 = vweird.f32 %v6485
    %vm6492 = vmor %vm6490, %vm6491
    %v6493 = vsel %vm6492, %v6485, %v6489
    %v6494 = vand.u32 2147483647, %v6441
    %vm6495 = vcmp.eq.f32.partialorder %v6494, 8.507059e+37
    %v6496 = vand.u32 %v6441, 2147483648
    %v6497 = vor.u32 1.1754944e-38, %v6496
    %v6498 = vsel %vm6495, %v6497, %v6493
    %v6499 = vmul.f32 1.0, %v6498
    %v6500 = vrcp.pop %v6442
    %v6501 = vmul.f32 %v6442, %v6500
    %v6502 = vsub.f32 1.0, %v6501
    %v6503 = vmul.f32 %v6500, %v6502
    %v6504 = vadd.f32 %v6500, %v6503
    %vm6505 = vweird.f32 %v6442
    %vm6506 = vweird.f32 %v6500
    %vm6507 = vmor %vm6505, %vm6506
    %v6508 = vsel %vm6507, %v6500, %v6504
    %v6509 = vand.u32 2147483647, %v6442
    %vm6510 = vcmp.eq.f32.partialorder %v6509, 8.507059e+37
    %v6511 = vand.u32 %v6442, 2147483648
    %v6512 = vor.u32 1.1754944e-38, %v6511
    %v6513 = vsel %vm6510, %v6512, %v6508
    %v6514 = vmul.f32 1.0, %v6513
    %v6515 = vrcp.pop %v6443
    %v6516 = vmul.f32 %v6443, %v6515
    %v6517 = vsub.f32 1.0, %v6516
    %v6518 = vmul.f32 %v6515, %v6517
    %v6519 = vadd.f32 %v6515, %v6518
    %vm6520 = vweird.f32 %v6443
    %vm6521 = vweird.f32 %v6515
    %vm6522 = vmor %vm6520, %vm6521
    %v6523 = vsel %vm6522, %v6515, %v6519
    %v6524 = vand.u32 2147483647, %v6443
    %vm6525 = vcmp.eq.f32.partialorder %v6524, 8.507059e+37
    %v6526 = vand.u32 %v6443, 2147483648
    %v6527 = vor.u32 1.1754944e-38, %v6526
    %v6528 = vsel %vm6525, %v6527, %v6523
    %v6529 = vmul.f32 1.0, %v6528
    %v6530 = vrcp.pop %v6444
    %v6531 = vmul.f32 %v6444, %v6530
    %v6532 = vsub.f32 1.0, %v6531
    %v6533 = vmul.f32 %v6530, %v6532
    %v6534 = vadd.f32 %v6530, %v6533
    %vm6535 = vweird.f32 %v6444
    %vm6536 = vweird.f32 %v6530
    %vm6537 = vmor %vm6535, %vm6536
    %v6538 = vsel %vm6537, %v6530, %v6534
    %v6539 = vand.u32 2147483647, %v6444
    %vm6540 = vcmp.eq.f32.partialorder %v6539, 8.507059e+37
    %v6541 = vand.u32 %v6444, 2147483648
    %v6542 = vor.u32 1.1754944e-38, %v6541
    %v6543 = vsel %vm6540, %v6542, %v6538
    %v6544 = vmul.f32 1.0, %v6543
    %v6545 = vrcp.pop %v6445
    %v6546 = vmul.f32 %v6445, %v6545
    %v6547 = vsub.f32 1.0, %v6546
    %v6548 = vmul.f32 %v6545, %v6547
    %v6549 = vadd.f32 %v6545, %v6548
    %vm6550 = vweird.f32 %v6445
    %vm6551 = vweird.f32 %v6545
    %vm6552 = vmor %vm6550, %vm6551
    %v6553 = vsel %vm6552, %v6545, %v6549
    %v6554 = vand.u32 2147483647, %v6445
    %vm6555 = vcmp.eq.f32.partialorder %v6554, 8.507059e+37
    %v6556 = vand.u32 %v6445, 2147483648
    %v6557 = vor.u32 1.1754944e-38, %v6556
    %v6558 = vsel %vm6555, %v6557, %v6553
    %v6559 = vmul.f32 1.0, %v6558
    %v6560 = vrcp.pop %v6446
    %v6561 = vmul.f32 %v6446, %v6560
    %v6562 = vsub.f32 1.0, %v6561
    %v6563 = vmul.f32 %v6560, %v6562
    %v6564 = vadd.f32 %v6560, %v6563
    %vm6565 = vweird.f32 %v6446
    %vm6566 = vweird.f32 %v6560
    %vm6567 = vmor %vm6565, %vm6566
    %v6568 = vsel %vm6567, %v6560, %v6564
    %v6569 = vand.u32 2147483647, %v6446
    %vm6570 = vcmp.eq.f32.partialorder %v6569, 8.507059e+37
    %v6571 = vand.u32 %v6446, 2147483648
    %v6572 = vor.u32 1.1754944e-38, %v6571
    %v6573 = vsel %vm6570, %v6572, %v6568
    %v6574 = vmul.f32 1.0, %v6573
    %v6575 = vrcp.pop %v6447
    %v6576 = vmul.f32 %v6447, %v6575
    %v6577 = vsub.f32 1.0, %v6576
    %v6578 = vmul.f32 %v6575, %v6577
    %v6579 = vadd.f32 %v6575, %v6578
    %vm6580 = vweird.f32 %v6447
    %vm6581 = vweird.f32 %v6575
    %vm6582 = vmor %vm6580, %vm6581
    %v6583 = vsel %vm6582, %v6575, %v6579
    %v6584 = vand.u32 2147483647, %v6447
    %vm6585 = vcmp.eq.f32.partialorder %v6584, 8.507059e+37
    %v6586 = vand.u32 %v6447, 2147483648
    %v6587 = vor.u32 1.1754944e-38, %v6586
    %v6588 = vsel %vm6585, %v6587, %v6583
    %v6589 = vmul.f32 1.0, %v6588
    %v6590 = vrcp.pop %v6448
    %v6591 = vmul.f32 %v6448, %v6590
    %v6592 = vsub.f32 1.0, %v6591
    %v6593 = vmul.f32 %v6590, %v6592
    %v6594 = vadd.f32 %v6590, %v6593
    %vm6595 = vweird.f32 %v6448
    %vm6596 = vweird.f32 %v6590
    %vm6597 = vmor %vm6595, %vm6596
    %v6598 = vsel %vm6597, %v6590, %v6594
    %v6599 = vand.u32 2147483647, %v6448
    %vm6600 = vcmp.eq.f32.partialorder %v6599, 8.507059e+37
    %v6601 = vand.u32 %v6448, 2147483648
    %v6602 = vor.u32 1.1754944e-38, %v6601
    %v6603 = vsel %vm6600, %v6602, %v6598
    %v6604 = vmul.f32 1.0, %v6603
    %v6605 = vrcp.pop %v6449
    %v6606 = vmul.f32 %v6449, %v6605
    %v6607 = vsub.f32 1.0, %v6606
    %v6608 = vmul.f32 %v6605, %v6607
    %v6609 = vadd.f32 %v6605, %v6608
    %vm6610 = vweird.f32 %v6449
    %vm6611 = vweird.f32 %v6605
    %vm6612 = vmor %vm6610, %vm6611
    %v6613 = vsel %vm6612, %v6605, %v6609
    %v6614 = vand.u32 2147483647, %v6449
    %vm6615 = vcmp.eq.f32.partialorder %v6614, 8.507059e+37
    %v6616 = vand.u32 %v6449, 2147483648
    %v6617 = vor.u32 1.1754944e-38, %v6616
    %v6618 = vsel %vm6615, %v6617, %v6613
    %v6619 = vmul.f32 1.0, %v6618
    %v6620 = vrcp.pop %v6450
    %v6621 = vmul.f32 %v6450, %v6620
    %v6622 = vsub.f32 1.0, %v6621
    %v6623 = vmul.f32 %v6620, %v6622
    %v6624 = vadd.f32 %v6620, %v6623
    %vm6625 = vweird.f32 %v6450
    %vm6626 = vweird.f32 %v6620
    %vm6627 = vmor %vm6625, %vm6626
    %v6628 = vsel %vm6627, %v6620, %v6624
    %v6629 = vand.u32 2147483647, %v6450
    %vm6630 = vcmp.eq.f32.partialorder %v6629, 8.507059e+37
    %v6631 = vand.u32 %v6450, 2147483648
    %v6632 = vor.u32 1.1754944e-38, %v6631
    %v6633 = vsel %vm6630, %v6632, %v6628
    %v6634 = vmul.f32 1.0, %v6633
    %v6635 = vrcp.pop %v6451
    %v6636 = vmul.f32 %v6451, %v6635
    %v6637 = vsub.f32 1.0, %v6636
    %v6638 = vmul.f32 %v6635, %v6637
    %v6639 = vadd.f32 %v6635, %v6638
    %vm6640 = vweird.f32 %v6451
    %vm6641 = vweird.f32 %v6635
    %vm6642 = vmor %vm6640, %vm6641
    %v6643 = vsel %vm6642, %v6635, %v6639
    %v6644 = vand.u32 2147483647, %v6451
    %vm6645 = vcmp.eq.f32.partialorder %v6644, 8.507059e+37
    %v6646 = vand.u32 %v6451, 2147483648
    %v6647 = vor.u32 1.1754944e-38, %v6646
    %v6648 = vsel %vm6645, %v6647, %v6643
    %v6649 = vmul.f32 1.0, %v6648
    %v6650 = vrcp.pop %v6452
    %v6651 = vmul.f32 %v6452, %v6650
    %v6652 = vsub.f32 1.0, %v6651
    %v6653 = vmul.f32 %v6650, %v6652
    %v6654 = vadd.f32 %v6650, %v6653
    %vm6655 = vweird.f32 %v6452
    %vm6656 = vweird.f32 %v6650
    %vm6657 = vmor %vm6655, %vm6656
    %v6658 = vsel %vm6657, %v6650, %v6654
    %v6659 = vand.u32 2147483647, %v6452
    %vm6660 = vcmp.eq.f32.partialorder %v6659, 8.507059e+37
    %v6661 = vand.u32 %v6452, 2147483648
    %v6662 = vor.u32 1.1754944e-38, %v6661
    %v6663 = vsel %vm6660, %v6662, %v6658
    %v6664 = vmul.f32 1.0, %v6663
    %v6665 = vrcp.pop %v6453
    %v6666 = vmul.f32 %v6453, %v6665
    %v6667 = vsub.f32 1.0, %v6666
    %v6668 = vmul.f32 %v6665, %v6667
    %v6669 = vadd.f32 %v6665, %v6668
    %vm6670 = vweird.f32 %v6453
    %vm6671 = vweird.f32 %v6665
    %vm6672 = vmor %vm6670, %vm6671
    %v6673 = vsel %vm6672, %v6665, %v6669
    %v6674 = vand.u32 2147483647, %v6453
    %vm6675 = vcmp.eq.f32.partialorder %v6674, 8.507059e+37
    %v6676 = vand.u32 %v6453, 2147483648
    %v6677 = vor.u32 1.1754944e-38, %v6676
    %v6678 = vsel %vm6675, %v6677, %v6673
    %v6679 = vmul.f32 1.0, %v6678
    %v6680 = vrcp.pop %v6454
    %v6681 = vmul.f32 %v6454, %v6680
    %v6682 = vsub.f32 1.0, %v6681
    %v6683 = vmul.f32 %v6680, %v6682
    %v6684 = vadd.f32 %v6680, %v6683
    %vm6685 = vweird.f32 %v6454
    %vm6686 = vweird.f32 %v6680
    %vm6687 = vmor %vm6685, %vm6686
    %v6688 = vsel %vm6687, %v6680, %v6684
    %v6689 = vand.u32 2147483647, %v6454
    %vm6690 = vcmp.eq.f32.partialorder %v6689, 8.507059e+37
    %v6691 = vand.u32 %v6454, 2147483648
    %v6692 = vor.u32 1.1754944e-38, %v6691
    %v6693 = vsel %vm6690, %v6692, %v6688
    %v6694 = vmul.f32 1.0, %v6693
    %v6695 = vtanh.pop %v6025
    %v6696 = vtanh.pop %v6029
    %v6697 = vtanh.pop %v6033
    %v6698 = vtanh.pop %v6037
    %v6699 = vtanh.pop %v6041
    %v6700 = vtanh.pop %v6045
    %v6701 = vtanh.pop %v6049
    %v6702 = vtanh.pop %v6053
    %v6703 = vtanh.pop %v6057
    %v6704 = vtanh.pop %v6061
    %v6705 = vtanh.pop %v6065
    %v6706 = vtanh.pop %v6069
    %v6707 = vtanh.pop %v6073
    %v6708 = vtanh.pop %v6077
    %v6709 = vtanh.pop %v6081
    %v6710 = vtanh.pop %v6085
    %v6711 = vxor.u32 %v6026, 2147483648
    %v6712 = vxor.u32 %v6030, 2147483648
    %v6713 = vxor.u32 %v6034, 2147483648
    %v6714 = vxor.u32 %v6038, 2147483648
    %v6715 = vxor.u32 %v6042, 2147483648
    %v6716 = vxor.u32 %v6046, 2147483648
    %v6717 = vxor.u32 %v6050, 2147483648
    %v6718 = vxor.u32 %v6054, 2147483648
    %v6719 = vxor.u32 %v6058, 2147483648
    %v6720 = vxor.u32 %v6062, 2147483648
    %v6721 = vxor.u32 %v6066, 2147483648
    %v6722 = vxor.u32 %v6070, 2147483648
    %v6723 = vxor.u32 %v6074, 2147483648
    %v6724 = vxor.u32 %v6078, 2147483648
    %v6725 = vxor.u32 %v6082, 2147483648
    %v6726 = vxor.u32 %v6086, 2147483648
    %v6727 = vmul.f32 %v6711, 1.442695
    %v6728 = vpow.pop %v6727
    %v6729 = vmul.f32 %v6712, 1.442695
    %v6730 = vpow.pop %v6729
    %v6731 = vmul.f32 %v6713, 1.442695
    %v6732 = vpow.pop %v6731
    %v6733 = vmul.f32 %v6714, 1.442695
    %v6734 = vpow.pop %v6733
    %v6735 = vmul.f32 %v6715, 1.442695
    %v6736 = vpow.pop %v6735
    %v6737 = vmul.f32 %v6716, 1.442695
    %v6738 = vpow.pop %v6737
    %v6739 = vmul.f32 %v6717, 1.442695
    %v6740 = vpow.pop %v6739
    %v6741 = vmul.f32 %v6718, 1.442695
    %v6742 = vpow.pop %v6741
    %v6743 = vmul.f32 %v6719, 1.442695
    %v6744 = vpow.pop %v6743
    %v6745 = vmul.f32 %v6720, 1.442695
    %v6746 = vpow.pop %v6745
    %v6747 = vmul.f32 %v6721, 1.442695
    %v6748 = vpow.pop %v6747
    %v6749 = vmul.f32 %v6722, 1.442695
    %v6750 = vpow.pop %v6749
    %v6751 = vmul.f32 %v6723, 1.442695
    %v6752 = vpow.pop %v6751
    %v6753 = vmul.f32 %v6724, 1.442695
    %v6754 = vpow.pop %v6753
    %v6755 = vmul.f32 %v6725, 1.442695
    %v6756 = vpow.pop %v6755
    %v6757 = vmul.f32 %v6726, 1.442695
    %v6758 = vpow.pop %v6757
    %v6759 = vadd.f32 %v6728, 1.0
    %v6760 = vadd.f32 %v6730, 1.0
    %v6761 = vadd.f32 %v6732, 1.0
    %v6762 = vadd.f32 %v6734, 1.0
    %v6763 = vadd.f32 %v6736, 1.0
    %v6764 = vadd.f32 %v6738, 1.0
    %v6765 = vadd.f32 %v6740, 1.0
    %v6766 = vadd.f32 %v6742, 1.0
    %v6767 = vadd.f32 %v6744, 1.0
    %v6768 = vadd.f32 %v6746, 1.0
    %v6769 = vadd.f32 %v6748, 1.0
    %v6770 = vadd.f32 %v6750, 1.0
    %v6771 = vadd.f32 %v6752, 1.0
    %v6772 = vadd.f32 %v6754, 1.0
    %v6773 = vadd.f32 %v6756, 1.0
    %v6774 = vadd.f32 %v6758, 1.0
    %v6775 = vrcp.pop %v6759
    %v6776 = vmul.f32 %v6759, %v6775
    %v6777 = vsub.f32 1.0, %v6776
    %v6778 = vmul.f32 %v6775, %v6777
    %v6779 = vadd.f32 %v6775, %v6778
    %vm6780 = vweird.f32 %v6759
    %vm6781 = vweird.f32 %v6775
    %vm6782 = vmor %vm6780, %vm6781
    %v6783 = vsel %vm6782, %v6775, %v6779
    %v6784 = vand.u32 2147483647, %v6759
    %vm6785 = vcmp.eq.f32.partialorder %v6784, 8.507059e+37
    %v6786 = vand.u32 %v6759, 2147483648
    %v6787 = vor.u32 1.1754944e-38, %v6786
    %v6788 = vsel %vm6785, %v6787, %v6783
    %v6789 = vmul.f32 1.0, %v6788
    %v6790 = vrcp.pop %v6760
    %v6791 = vmul.f32 %v6760, %v6790
    %v6792 = vsub.f32 1.0, %v6791
    %v6793 = vmul.f32 %v6790, %v6792
    %v6794 = vadd.f32 %v6790, %v6793
    %vm6795 = vweird.f32 %v6760
    %vm6796 = vweird.f32 %v6790
    %vm6797 = vmor %vm6795, %vm6796
    %v6798 = vsel %vm6797, %v6790, %v6794
    %v6799 = vand.u32 2147483647, %v6760
    %vm6800 = vcmp.eq.f32.partialorder %v6799, 8.507059e+37
    %v6801 = vand.u32 %v6760, 2147483648
    %v6802 = vor.u32 1.1754944e-38, %v6801
    %v6803 = vsel %vm6800, %v6802, %v6798
    %v6804 = vmul.f32 1.0, %v6803
    %v6805 = vrcp.pop %v6761
    %v6806 = vmul.f32 %v6761, %v6805
    %v6807 = vsub.f32 1.0, %v6806
    %v6808 = vmul.f32 %v6805, %v6807
    %v6809 = vadd.f32 %v6805, %v6808
    %vm6810 = vweird.f32 %v6761
    %vm6811 = vweird.f32 %v6805
    %vm6812 = vmor %vm6810, %vm6811
    %v6813 = vsel %vm6812, %v6805, %v6809
    %v6814 = vand.u32 2147483647, %v6761
    %vm6815 = vcmp.eq.f32.partialorder %v6814, 8.507059e+37
    %v6816 = vand.u32 %v6761, 2147483648
    %v6817 = vor.u32 1.1754944e-38, %v6816
    %v6818 = vsel %vm6815, %v6817, %v6813
    %v6819 = vmul.f32 1.0, %v6818
    %v6820 = vrcp.pop %v6762
    %v6821 = vmul.f32 %v6762, %v6820
    %v6822 = vsub.f32 1.0, %v6821
    %v6823 = vmul.f32 %v6820, %v6822
    %v6824 = vadd.f32 %v6820, %v6823
    %vm6825 = vweird.f32 %v6762
    %vm6826 = vweird.f32 %v6820
    %vm6827 = vmor %vm6825, %vm6826
    %v6828 = vsel %vm6827, %v6820, %v6824
    %v6829 = vand.u32 2147483647, %v6762
    %vm6830 = vcmp.eq.f32.partialorder %v6829, 8.507059e+37
    %v6831 = vand.u32 %v6762, 2147483648
    %v6832 = vor.u32 1.1754944e-38, %v6831
    %v6833 = vsel %vm6830, %v6832, %v6828
    %v6834 = vmul.f32 1.0, %v6833
    %v6835 = vrcp.pop %v6763
    %v6836 = vmul.f32 %v6763, %v6835
    %v6837 = vsub.f32 1.0, %v6836
    %v6838 = vmul.f32 %v6835, %v6837
    %v6839 = vadd.f32 %v6835, %v6838
    %vm6840 = vweird.f32 %v6763
    %vm6841 = vweird.f32 %v6835
    %vm6842 = vmor %vm6840, %vm6841
    %v6843 = vsel %vm6842, %v6835, %v6839
    %v6844 = vand.u32 2147483647, %v6763
    %vm6845 = vcmp.eq.f32.partialorder %v6844, 8.507059e+37
    %v6846 = vand.u32 %v6763, 2147483648
    %v6847 = vor.u32 1.1754944e-38, %v6846
    %v6848 = vsel %vm6845, %v6847, %v6843
    %v6849 = vmul.f32 1.0, %v6848
    %v6850 = vrcp.pop %v6764
    %v6851 = vmul.f32 %v6764, %v6850
    %v6852 = vsub.f32 1.0, %v6851
    %v6853 = vmul.f32 %v6850, %v6852
    %v6854 = vadd.f32 %v6850, %v6853
    %vm6855 = vweird.f32 %v6764
    %vm6856 = vweird.f32 %v6850
    %vm6857 = vmor %vm6855, %vm6856
    %v6858 = vsel %vm6857, %v6850, %v6854
    %v6859 = vand.u32 2147483647, %v6764
    %vm6860 = vcmp.eq.f32.partialorder %v6859, 8.507059e+37
    %v6861 = vand.u32 %v6764, 2147483648
    %v6862 = vor.u32 1.1754944e-38, %v6861
    %v6863 = vsel %vm6860, %v6862, %v6858
    %v6864 = vmul.f32 1.0, %v6863
    %v6865 = vrcp.pop %v6765
    %v6866 = vmul.f32 %v6765, %v6865
    %v6867 = vsub.f32 1.0, %v6866
    %v6868 = vmul.f32 %v6865, %v6867
    %v6869 = vadd.f32 %v6865, %v6868
    %vm6870 = vweird.f32 %v6765
    %vm6871 = vweird.f32 %v6865
    %vm6872 = vmor %vm6870, %vm6871
    %v6873 = vsel %vm6872, %v6865, %v6869
    %v6874 = vand.u32 2147483647, %v6765
    %vm6875 = vcmp.eq.f32.partialorder %v6874, 8.507059e+37
    %v6876 = vand.u32 %v6765, 2147483648
    %v6877 = vor.u32 1.1754944e-38, %v6876
    %v6878 = vsel %vm6875, %v6877, %v6873
    %v6879 = vmul.f32 1.0, %v6878
    %v6880 = vrcp.pop %v6766
    %v6881 = vmul.f32 %v6766, %v6880
    %v6882 = vsub.f32 1.0, %v6881
    %v6883 = vmul.f32 %v6880, %v6882
    %v6884 = vadd.f32 %v6880, %v6883
    %vm6885 = vweird.f32 %v6766
    %vm6886 = vweird.f32 %v6880
    %vm6887 = vmor %vm6885, %vm6886
    %v6888 = vsel %vm6887, %v6880, %v6884
    %v6889 = vand.u32 2147483647, %v6766
    %vm6890 = vcmp.eq.f32.partialorder %v6889, 8.507059e+37
    %v6891 = vand.u32 %v6766, 2147483648
    %v6892 = vor.u32 1.1754944e-38, %v6891
    %v6893 = vsel %vm6890, %v6892, %v6888
    %v6894 = vmul.f32 1.0, %v6893
    %v6895 = vrcp.pop %v6767
    %v6896 = vmul.f32 %v6767, %v6895
    %v6897 = vsub.f32 1.0, %v6896
    %v6898 = vmul.f32 %v6895, %v6897
    %v6899 = vadd.f32 %v6895, %v6898
    %vm6900 = vweird.f32 %v6767
    %vm6901 = vweird.f32 %v6895
    %vm6902 = vmor %vm6900, %vm6901
    %v6903 = vsel %vm6902, %v6895, %v6899
    %v6904 = vand.u32 2147483647, %v6767
    %vm6905 = vcmp.eq.f32.partialorder %v6904, 8.507059e+37
    %v6906 = vand.u32 %v6767, 2147483648
    %v6907 = vor.u32 1.1754944e-38, %v6906
    %v6908 = vsel %vm6905, %v6907, %v6903
    %v6909 = vmul.f32 1.0, %v6908
    %v6910 = vrcp.pop %v6768
    %v6911 = vmul.f32 %v6768, %v6910
    %v6912 = vsub.f32 1.0, %v6911
    %v6913 = vmul.f32 %v6910, %v6912
    %v6914 = vadd.f32 %v6910, %v6913
    %vm6915 = vweird.f32 %v6768
    %vm6916 = vweird.f32 %v6910
    %vm6917 = vmor %vm6915, %vm6916
    %v6918 = vsel %vm6917, %v6910, %v6914
    %v6919 = vand.u32 2147483647, %v6768
    %vm6920 = vcmp.eq.f32.partialorder %v6919, 8.507059e+37
    %v6921 = vand.u32 %v6768, 2147483648
    %v6922 = vor.u32 1.1754944e-38, %v6921
    %v6923 = vsel %vm6920, %v6922, %v6918
    %v6924 = vmul.f32 1.0, %v6923
    %v6925 = vrcp.pop %v6769
    %v6926 = vmul.f32 %v6769, %v6925
    %v6927 = vsub.f32 1.0, %v6926
    %v6928 = vmul.f32 %v6925, %v6927
    %v6929 = vadd.f32 %v6925, %v6928
    %vm6930 = vweird.f32 %v6769
    %vm6931 = vweird.f32 %v6925
    %vm6932 = vmor %vm6930, %vm6931
    %v6933 = vsel %vm6932, %v6925, %v6929
    %v6934 = vand.u32 2147483647, %v6769
    %vm6935 = vcmp.eq.f32.partialorder %v6934, 8.507059e+37
    %v6936 = vand.u32 %v6769, 2147483648
    %v6937 = vor.u32 1.1754944e-38, %v6936
    %v6938 = vsel %vm6935, %v6937, %v6933
    %v6939 = vmul.f32 1.0, %v6938
    %v6940 = vrcp.pop %v6770
    %v6941 = vmul.f32 %v6770, %v6940
    %v6942 = vsub.f32 1.0, %v6941
    %v6943 = vmul.f32 %v6940, %v6942
    %v6944 = vadd.f32 %v6940, %v6943
    %vm6945 = vweird.f32 %v6770
    %vm6946 = vweird.f32 %v6940
    %vm6947 = vmor %vm6945, %vm6946
    %v6948 = vsel %vm6947, %v6940, %v6944
    %v6949 = vand.u32 2147483647, %v6770
    %vm6950 = vcmp.eq.f32.partialorder %v6949, 8.507059e+37
    %v6951 = vand.u32 %v6770, 2147483648
    %v6952 = vor.u32 1.1754944e-38, %v6951
    %v6953 = vsel %vm6950, %v6952, %v6948
    %v6954 = vmul.f32 1.0, %v6953
    %v6955 = vrcp.pop %v6771
    %v6956 = vmul.f32 %v6771, %v6955
    %v6957 = vsub.f32 1.0, %v6956
    %v6958 = vmul.f32 %v6955, %v6957
    %v6959 = vadd.f32 %v6955, %v6958
    %vm6960 = vweird.f32 %v6771
    %vm6961 = vweird.f32 %v6955
    %vm6962 = vmor %vm6960, %vm6961
    %v6963 = vsel %vm6962, %v6955, %v6959
    %v6964 = vand.u32 2147483647, %v6771
    %vm6965 = vcmp.eq.f32.partialorder %v6964, 8.507059e+37
    %v6966 = vand.u32 %v6771, 2147483648
    %v6967 = vor.u32 1.1754944e-38, %v6966
    %v6968 = vsel %vm6965, %v6967, %v6963
    %v6969 = vmul.f32 1.0, %v6968
    %v6970 = vrcp.pop %v6772
    %v6971 = vmul.f32 %v6772, %v6970
    %v6972 = vsub.f32 1.0, %v6971
    %v6973 = vmul.f32 %v6970, %v6972
    %v6974 = vadd.f32 %v6970, %v6973
    %vm6975 = vweird.f32 %v6772
    %vm6976 = vweird.f32 %v6970
    %vm6977 = vmor %vm6975, %vm6976
    %v6978 = vsel %vm6977, %v6970, %v6974
    %v6979 = vand.u32 2147483647, %v6772
    %vm6980 = vcmp.eq.f32.partialorder %v6979, 8.507059e+37
    %v6981 = vand.u32 %v6772, 2147483648
    %v6982 = vor.u32 1.1754944e-38, %v6981
    %v6983 = vsel %vm6980, %v6982, %v6978
    %v6984 = vmul.f32 1.0, %v6983
    %v6985 = vrcp.pop %v6773
    %v6986 = vmul.f32 %v6773, %v6985
    %v6987 = vsub.f32 1.0, %v6986
    %v6988 = vmul.f32 %v6985, %v6987
    %v6989 = vadd.f32 %v6985, %v6988
    %vm6990 = vweird.f32 %v6773
    %vm6991 = vweird.f32 %v6985
    %vm6992 = vmor %vm6990, %vm6991
    %v6993 = vsel %vm6992, %v6985, %v6989
    %v6994 = vand.u32 2147483647, %v6773
    %vm6995 = vcmp.eq.f32.partialorder %v6994, 8.507059e+37
    %v6996 = vand.u32 %v6773, 2147483648
    %v6997 = vor.u32 1.1754944e-38, %v6996
    %v6998 = vsel %vm6995, %v6997, %v6993
    %v6999 = vmul.f32 1.0, %v6998
    %v7000 = vrcp.pop %v6774
    %v7001 = vmul.f32 %v6774, %v7000
    %v7002 = vsub.f32 1.0, %v7001
    %v7003 = vmul.f32 %v7000, %v7002
    %v7004 = vadd.f32 %v7000, %v7003
    %vm7005 = vweird.f32 %v6774
    %vm7006 = vweird.f32 %v7000
    %vm7007 = vmor %vm7005, %vm7006
    %v7008 = vsel %vm7007, %v7000, %v7004
    %v7009 = vand.u32 2147483647, %v6774
    %vm7010 = vcmp.eq.f32.partialorder %v7009, 8.507059e+37
    %v7011 = vand.u32 %v6774, 2147483648
    %v7012 = vor.u32 1.1754944e-38, %v7011
    %v7013 = vsel %vm7010, %v7012, %v7008
    %v7014 = vmul.f32 1.0, %v7013
    %v7015 = vmul.f32 %v6165, %v6695
    %v7016 = vmul.f32 %v6180, %v6696
    %v7017 = vmul.f32 %v6195, %v6697
    %v7018 = vmul.f32 %v6210, %v6698
    %v7019 = vmul.f32 %v6225, %v6699
    %v7020 = vmul.f32 %v6240, %v6700
    %v7021 = vmul.f32 %v6255, %v6701
    %v7022 = vmul.f32 %v6270, %v6702
    %v7023 = vmul.f32 %v6285, %v6703
    %v7024 = vmul.f32 %v6300, %v6704
    %v7025 = vmul.f32 %v6315, %v6705
    %v7026 = vmul.f32 %v6330, %v6706
    %v7027 = vmul.f32 %v6345, %v6707
    %v7028 = vmul.f32 %v6360, %v6708
    %v7029 = vmul.f32 %v6375, %v6709
    %v7030 = vmul.f32 %v6390, %v6710
    %v7031 = vmul.f32 %v6789, %v5780
    %v7032 = vmul.f32 %v6804, %v5782
    %v7033 = vmul.f32 %v6819, %v5785
    %v7034 = vmul.f32 %v6834, %v5787
    %v7035 = vmul.f32 %v6849, %v5790
    %v7036 = vmul.f32 %v6864, %v5792
    %v7037 = vmul.f32 %v6879, %v5795
    %v7038 = vmul.f32 %v6894, %v5797
    %v7039 = vmul.f32 %v6909, %v5800
    %v7040 = vmul.f32 %v6924, %v5802
    %v7041 = vmul.f32 %v6939, %v5805
    %v7042 = vmul.f32 %v6954, %v5807
    %v7043 = vmul.f32 %v6969, %v5810
    %v7044 = vmul.f32 %v6984, %v5812
    %v7045 = vmul.f32 %v6999, %v5815
    %v7046 = vmul.f32 %v7014, %v5817
    %v7047 = vadd.f32 %v7015, %v7031
    %v7048 = vadd.f32 %v7016, %v7032
    %v7049 = vadd.f32 %v7017, %v7033
    %v7050 = vadd.f32 %v7018, %v7034
    %v7051 = vadd.f32 %v7019, %v7035
    %v7052 = vadd.f32 %v7020, %v7036
    %v7053 = vadd.f32 %v7021, %v7037
    %v7054 = vadd.f32 %v7022, %v7038
    %v7055 = vadd.f32 %v7023, %v7039
    %v7056 = vadd.f32 %v7024, %v7040
    %v7057 = vadd.f32 %v7025, %v7041
    %v7058 = vadd.f32 %v7026, %v7042
    %v7059 = vadd.f32 %v7027, %v7043
    %v7060 = vadd.f32 %v7028, %v7044
    %v7061 = vadd.f32 %v7029, %v7045
    %v7062 = vadd.f32 %v7030, %v7046
    %v7063 = vtanh.pop %v7047
    %v7064 = vtanh.pop %v7048
    %v7065 = vtanh.pop %v7049
    %v7066 = vtanh.pop %v7050
    %v7067 = vtanh.pop %v7051
    %v7068 = vtanh.pop %v7052
    %v7069 = vtanh.pop %v7053
    %v7070 = vtanh.pop %v7054
    %v7071 = vtanh.pop %v7055
    %v7072 = vtanh.pop %v7056
    %v7073 = vtanh.pop %v7057
    %v7074 = vtanh.pop %v7058
    %v7075 = vtanh.pop %v7059
    %v7076 = vtanh.pop %v7060
    %v7077 = vtanh.pop %v7061
    %v7078 = vtanh.pop %v7062
    %v7079 = vmul.f32 %v6469, %v7063
    %v7080 = vmul.f32 %v6484, %v7064
    %v7081 = vmul.f32 %v6499, %v7065
    %v7082 = vmul.f32 %v6514, %v7066
    %v7083 = vmul.f32 %v6529, %v7067
    %v7084 = vmul.f32 %v6544, %v7068
    %v7085 = vmul.f32 %v6559, %v7069
    %v7086 = vmul.f32 %v6574, %v7070
    %v7087 = vmul.f32 %v6589, %v7071
    %v7088 = vmul.f32 %v6604, %v7072
    %v7089 = vmul.f32 %v6619, %v7073
    %v7090 = vmul.f32 %v6634, %v7074
    %v7091 = vmul.f32 %v6649, %v7075
    %v7092 = vmul.f32 %v6664, %v7076
    %v7093 = vmul.f32 %v6679, %v7077
    %v7094 = vmul.f32 %v6694, %v7078
    %vm7095 = vcmp.eq.s32.totalorder %v656, 3
    %vm7096 = vcmp.eq.s32.totalorder %v657, 3
    %vm7097 = vcmp.eq.s32.totalorder %v658, 3
    %vm7098 = vcmp.eq.s32.totalorder %v659, 3
    %vm7099 = vcmp.eq.s32.totalorder %v660, 3
    %vm7100 = vcmp.eq.s32.totalorder %v661, 3
    %vm7101 = vcmp.eq.s32.totalorder %v662, 3
    %vm7102 = vcmp.eq.s32.totalorder %v663, 3
    %vm7103 = vcmp.eq.s32.totalorder %v664, 3
    %vm7104 = vcmp.eq.s32.totalorder %v665, 3
    %vm7105 = vcmp.eq.s32.totalorder %v666, 3
    %vm7106 = vcmp.eq.s32.totalorder %v667, 3
    %vm7107 = vcmp.eq.s32.totalorder %v668, 3
    %vm7108 = vcmp.eq.s32.totalorder %v669, 3
    %vm7109 = vcmp.eq.s32.totalorder %v670, 3
    %vm7110 = vcmp.eq.s32.totalorder %v671, 3
    %v7111 = vsel %vm7095, 1, 0
    %v7112 = vsel %vm7096, 1, 0
    %v7113 = vsel %vm7097, 1, 0
    %v7114 = vsel %vm7098, 1, 0
    %v7115 = vsel %vm7099, 1, 0
    %v7116 = vsel %vm7100, 1, 0
    %v7117 = vsel %vm7101, 1, 0
    %v7118 = vsel %vm7102, 1, 0
    %v7119 = vsel %vm7103, 1, 0
    %v7120 = vsel %vm7104, 1, 0
    %v7121 = vsel %vm7105, 1, 0
    %v7122 = vsel %vm7106, 1, 0
    %v7123 = vsel %vm7107, 1, 0
    %v7124 = vsel %vm7108, 1, 0
    %v7125 = vsel %vm7109, 1, 0
    %v7126 = vsel %vm7110, 1, 0
    %7127 = vset.pattern.permute.xlu0 0
    %7128 = vperm.xlu0 %7127, %v7111
    %v7129 = vpop.permute.xlu0 %7128
    %7130 = vset.pattern.permute.xlu0 0
    %7131 = vperm.xlu0 %7130, %v7112
    %v7132 = vpop.permute.xlu0 %7131
    %7133 = vset.pattern.permute.xlu0 0
    %7134 = vperm.xlu0 %7133, %v7113
    %v7135 = vpop.permute.xlu0 %7134
    %7136 = vset.pattern.permute.xlu0 0
    %7137 = vperm.xlu0 %7136, %v7114
    %v7138 = vpop.permute.xlu0 %7137
    %7139 = vset.pattern.permute.xlu0 0
    %7140 = vperm.xlu0 %7139, %v7115
    %v7141 = vpop.permute.xlu0 %7140
    %7142 = vset.pattern.permute.xlu0 0
    %7143 = vperm.xlu0 %7142, %v7116
    %v7144 = vpop.permute.xlu0 %7143
    %7145 = vset.pattern.permute.xlu0 0
    %7146 = vperm.xlu0 %7145, %v7117
    %v7147 = vpop.permute.xlu0 %7146
    %7148 = vset.pattern.permute.xlu0 0
    %7149 = vperm.xlu0 %7148, %v7118
    %v7150 = vpop.permute.xlu0 %7149
    %7151 = vset.pattern.permute.xlu0 0
    %7152 = vperm.xlu0 %7151, %v7119
    %v7153 = vpop.permute.xlu0 %7152
    %7154 = vset.pattern.permute.xlu0 0
    %7155 = vperm.xlu0 %7154, %v7120
    %v7156 = vpop.permute.xlu0 %7155
    %7157 = vset.pattern.permute.xlu0 0
    %7158 = vperm.xlu0 %7157, %v7121
    %v7159 = vpop.permute.xlu0 %7158
    %7160 = vset.pattern.permute.xlu0 0
    %7161 = vperm.xlu0 %7160, %v7122
    %v7162 = vpop.permute.xlu0 %7161
    %7163 = vset.pattern.permute.xlu0 0
    %7164 = vperm.xlu0 %7163, %v7123
    %v7165 = vpop.permute.xlu0 %7164
    %7166 = vset.pattern.permute.xlu0 0
    %7167 = vperm.xlu0 %7166, %v7124
    %v7168 = vpop.permute.xlu0 %7167
    %7169 = vset.pattern.permute.xlu0 0
    %7170 = vperm.xlu0 %7169, %v7125
    %v7171 = vpop.permute.xlu0 %7170
    %7172 = vset.pattern.permute.xlu0 0
    %7173 = vperm.xlu0 %7172, %v7126
    %v7174 = vpop.permute.xlu0 %7173
    %vm7175 = vcmp.eq.s32.totalorder %v7129, 1
    %vm7176 = vcmp.eq.s32.totalorder %v7132, 1
    %vm7177 = vcmp.eq.s32.totalorder %v7135, 1
    %vm7178 = vcmp.eq.s32.totalorder %v7138, 1
    %vm7179 = vcmp.eq.s32.totalorder %v7141, 1
    %vm7180 = vcmp.eq.s32.totalorder %v7144, 1
    %vm7181 = vcmp.eq.s32.totalorder %v7147, 1
    %vm7182 = vcmp.eq.s32.totalorder %v7150, 1
    %vm7183 = vcmp.eq.s32.totalorder %v7153, 1
    %vm7184 = vcmp.eq.s32.totalorder %v7156, 1
    %vm7185 = vcmp.eq.s32.totalorder %v7159, 1
    %vm7186 = vcmp.eq.s32.totalorder %v7162, 1
    %vm7187 = vcmp.eq.s32.totalorder %v7165, 1
    %vm7188 = vcmp.eq.s32.totalorder %v7168, 1
    %vm7189 = vcmp.eq.s32.totalorder %v7171, 1
    %vm7190 = vcmp.eq.s32.totalorder %v7174, 1
    %v7191 = vsel %vm7175, %v7079, %v5561
    %v7192 = vsel %vm7176, %v7080, %v5562
    %v7193 = vsel %vm7177, %v7081, %v5563
    %v7194 = vsel %vm7178, %v7082, %v5564
    %v7195 = vsel %vm7179, %v7083, %v5565
    %v7196 = vsel %vm7180, %v7084, %v5566
    %v7197 = vsel %vm7181, %v7085, %v5567
    %v7198 = vsel %vm7182, %v7086, %v5568
    %v7199 = vsel %vm7183, %v7087, %v5569
    %v7200 = vsel %vm7184, %v7088, %v5570
    %v7201 = vsel %vm7185, %v7089, %v5571
    %v7202 = vsel %vm7186, %v7090, %v5572
    %v7203 = vsel %vm7187, %v7091, %v5573
    %v7204 = vsel %vm7188, %v7092, %v5574
    %v7205 = vsel %vm7189, %v7093, %v5575
    %v7206 = vsel %vm7190, %v7094, %v5576
    %v7207 = vpack.c.bf16 %v7191, %v7191
    %v7208 = vpack.c.bf16 %v7192, %v7192
    %v7209 = vpack.c.bf16 %v7193, %v7193
    %v7210 = vpack.c.bf16 %v7194, %v7194
    %v7211 = vpack.c.bf16 %v7195, %v7195
    %v7212 = vpack.c.bf16 %v7196, %v7196
    %v7213 = vpack.c.bf16 %v7197, %v7197
    %v7214 = vpack.c.bf16 %v7198, %v7198
    %v7215 = vpack.c.bf16 %v7199, %v7199
    %v7216 = vpack.c.bf16 %v7200, %v7200
    %v7217 = vpack.c.bf16 %v7201, %v7201
    %v7218 = vpack.c.bf16 %v7202, %v7202
    %v7219 = vpack.c.bf16 %v7203, %v7203
    %v7220 = vpack.c.bf16 %v7204, %v7204
    %v7221 = vpack.c.bf16 %v7205, %v7205
    %v7222 = vpack.c.bf16 %v7206, %v7206
    %7223 = vst [vmem:[%s7] sm:$0xf] %v7207
    %7224 = vst [vmem:[%s7 + $0x4] sm:$0xf] %v7208
    %7225 = vst [vmem:[%s7 + $0x8] sm:$0xf] %v7209
    %7226 = vst [vmem:[%s7 + $0xc] sm:$0xf] %v7210
    %7227 = vst [vmem:[%s7 + $0x10] sm:$0xf] %v7211
    %7228 = vst [vmem:[%s7 + $0x14] sm:$0xf] %v7212
    %7229 = vst [vmem:[%s7 + $0x18] sm:$0xf] %v7213
    %7230 = vst [vmem:[%s7 + $0x1c] sm:$0xf] %v7214
    %7231 = vst [vmem:[%s7 + $0x20] sm:$0xf] %v7215
    %7232 = vst [vmem:[%s7 + $0x24] sm:$0xf] %v7216
    %7233 = vst [vmem:[%s7 + $0x28] sm:$0xf] %v7217
    %7234 = vst [vmem:[%s7 + $0x2c] sm:$0xf] %v7218
    %7235 = vst [vmem:[%s7 + $0x30] sm:$0xf] %v7219
    %7236 = vst [vmem:[%s7 + $0x34] sm:$0xf] %v7220
    %7237 = vst [vmem:[%s7 + $0x38] sm:$0xf] %v7221
    %7238 = vst [vmem:[%s7 + $0x3c] sm:$0xf] %v7222
    // Predicated region
    $region42: #{_tree2tree_jit.2} parent=1 // pred_check
      _
    $region43: #{_tree2tree_jit.2} parent=1 // pred_check_branch
      %7240 = sbr.rel (0) target = $region45
    $region44: #{_tree2tree_jit.2} parent=1 // pred_region
      _
    $region45: #{_tree2tree_jit.2} parent=1 // pred_fallthru
      _
    // Predicated region
    $region46: #{_tree2tree_jit.2} parent=1 // pred_check
      _
    $region47: #{_tree2tree_jit.2} parent=1 // pred_check_branch
      %7242 = sbr.rel (0) target = $region49
    $region48: #{_tree2tree_jit.2} parent=1 // pred_region
      _
    $region49: #{_tree2tree_jit.2} parent=1 // pred_fallthru
      _
    %7243 = vsyncpa [#allocation3], 1
    %7244 = vsyncpa [#allocation5], 1

</llo_original>
